<compile_context>
chip_gen: v7x
topology: tpu7x:2x2x1
jax: 0.10.0
libtpu: 0.0.40
codegen_flags: <defaults>
</compile_context>

<pallas_src>
import jax
import jax.numpy as jnp
from jax import lax
from jax.experimental import pallas as pl
from jax.experimental.pallas import tpu as pltpu


def _pick_h_chunk(H):
    hc = min(H, 8)
    while H % hc:
        hc -= 1
    return hc


def _make_fused_kernel(H, W, cins, couts, hc):
    """Builds the fused 4-conv kernel for one batch element per grid step."""
    n_layers = len(couts)
    n_chunks = H // hc

    def kernel(*refs):
        x_ref = refs[0]                                   # (1, H, W, Cin) f32
        w_refs = [refs[1 + 2 * i] for i in range(n_layers)]   # (3, 3*ci, co)
        b_refs = [refs[2 + 2 * i] for i in range(n_layers)]   # (1, co)
        o_ref = refs[1 + 2 * n_layers]                    # (1, H, W, co_last)
        scratch = refs[2 + 2 * n_layers:]
        pad_refs = [scratch[2 * i] for i in range(n_layers)]      # padded act
        cat_refs = [scratch[2 * i + 1] for i in range(n_layers)]  # kw-unrolled

        # Stage this sample's input into a zero-padded VMEM buffer.
        pad_refs[0][...] = jnp.zeros_like(pad_refs[0])
        pad_refs[0][1:1 + H, 1:1 + W, :] = x_ref[0]

        for layer in range(n_layers):
            ci, co = cins[layer], couts[layer]
            pad_ref, cat_ref = pad_refs[layer], cat_refs[layer]
            w_ref, b_ref = w_refs[layer], b_refs[layer]
            is_last = layer == n_layers - 1

            # kw-unrolled view:  cat[h, w, kw*ci + c] = pad[h, w + kw, c]
            # (3 shifted copies instead of 9 per-tap slice+reshape copies).
            for kw in range(3):
                cat_ref[:, :, kw * ci:(kw + 1) * ci] = pad_ref[:, kw:kw + W, :]

            if not is_last:
                nxt = pad_refs[layer + 1]
                nxt[...] = jnp.zeros_like(nxt)   # borders must stay zero

            # Process the output rows in chunks of hc*W so the f32 accumulator
            # stays small (register/VMEM friendly).  Statically unrolled.
            for c in range(n_chunks):
                h0 = c * hc
                acc = jnp.zeros((hc * W, co), jnp.float32)
                for kh in range(3):
                    patch = cat_ref[h0 + kh:h0 + kh + hc, :, :]
                    patch = patch.reshape(hc * W, 3 * ci).astype(jnp.bfloat16)
                    acc = acc + jnp.dot(
                        patch, w_ref[kh].astype(jnp.bfloat16),
                        preferred_element_type=jnp.float32)
                y = acc + b_ref[...]             # f32 epilogue
                if is_last:
                    o_ref[:, h0:h0 + hc, :, :] = y.reshape(1, hc, W, co)
                else:
                    y = jnp.maximum(y, 0.0)
                    pad_refs[layer + 1][1 + h0:1 + h0 + hc, 1:1 + W, :] = (
                        y.reshape(hc, W, co))

    return kernel


def a_get_forward(x_nchw, params):
    """Forward pass matching A_Get: 4x conv3x3(pad=1), ReLU after first 3."""
    N, Cin, H, W = x_nchw.shape
    couts = tuple(w.shape[-1] for w, _ in params)
    cins = (Cin,) + couts[:-1]
    hc = _pick_h_chunk(H)

    x = jnp.transpose(x_nchw, (0, 2, 3, 1))          # NCHW -> NHWC (4 KiB)

    args = [x]
    in_specs = [pl.BlockSpec((1, H, W, Cin), lambda n: (n, 0, 0, 0))]
    for (w, b), ci, co in zip(params, cins, couts):
        args.append(w.reshape(3, 3 * ci, co))        # (kh, kw*ci, co) - free
        in_specs.append(pl.BlockSpec((3, 3 * ci, co), lambda n: (0, 0, 0)))
        args.append(b.reshape(1, co))
        in_specs.append(pl.BlockSpec((1, co), lambda n: (0, 0)))

    scratch_shapes = []
    for ci in cins:
        scratch_shapes.append(pltpu.VMEM((H + 2, W + 2, ci), jnp.float32))
        scratch_shapes.append(pltpu.VMEM((H + 2, W, 3 * ci), jnp.float32))

    out_nhwc = pl.pallas_call(
        _make_fused_kernel(H, W, cins, couts, hc),
        out_shape=jax.ShapeDtypeStruct((N, H, W, couts[-1]), jnp.float32),
        grid_spec=pltpu.PrefetchScalarGridSpec(
            num_scalar_prefetch=0,
            grid=(N,),
            in_specs=in_specs,
            out_specs=pl.BlockSpec((1, H, W, couts[-1]),
                                   lambda n: (n, 0, 0, 0)),
            scratch_shapes=scratch_shapes),
        compiler_params=pltpu.CompilerParams(
            dimension_semantics=("parallel",)),
    )(*args)

    return jnp.transpose(out_nhwc, (0, 3, 1, 2))     # NHWC -> NCHW (C=1: free)


def init_params(key, in_channel, out_channel):
    """Deterministic Kaiming-uniform-ish init matching the PyTorch shapes."""
    chans = [in_channel, 128, 64, 16, out_channel]
    params = []
    for i in range(4):
        cin, cout = chans[i], chans[i + 1]
        key, kw_, kb_ = jax.random.split(key, 3)
        fan_in = cin * 3 * 3
        bound = 1.0 / jnp.sqrt(fan_in)
        w = jax.random.uniform(kw_, (3, 3, cin, cout), jnp.float32,
                               minval=-bound, maxval=bound)
        b = jax.random.uniform(kb_, (cout,), jnp.float32,
                               minval=-bound, maxval=bound)
        params.append((w, b))
    return params


def a_get_reference(x_nchw, params, use_bf16_operands):
    """Pure-JAX reference (lax.conv).  Optionally mirrors bf16 MXU operands."""
    x = x_nchw
    n = len(params)
    for i, (w, b) in enumerate(params):
        w_oihw = jnp.transpose(w, (3, 2, 0, 1))      # (KH,KW,Cin,Cout)->(OIHW)
        lhs, rhs = x, w_oihw
        if use_bf16_operands:
            lhs = lhs.astype(jnp.bfloat16)
            rhs = rhs.astype(jnp.bfloat16)
        y = lax.conv_general_dilated(
            lhs, rhs, window_strides=(1, 1), padding=((1, 1), (1, 1)),
            dimension_numbers=("NCHW", "OIHW", "NCHW"),
            preferred_element_type=jnp.float32)
        x = y + b[None, :, None, None]
        if i < n - 1:
            x = jnp.maximum(x, 0.0)
    return x


if __name__ == "__main__":
    key = jax.random.PRNGKey(0)
    k_in, k_param = jax.random.split(key)

    in_channel, out_channel = 4, 1
    N, H, W = 2, 16, 16
    x = jax.random.normal(k_in, (N, in_channel, H, W), jnp.float32)
    params = init_params(k_param, in_channel, out_channel)

    fwd = jax.jit(a_get_forward)
    out = jax.block_until_ready(fwd(x, params))
    assert out.shape == (N, out_channel, H, W), out.shape

    # Reference that mirrors the kernel's bf16 MXU operands (tight tolerance).
    ref_bf16 = a_get_reference(x, params, use_bf16_operands=True)
    err_b = float(jnp.max(jnp.abs(out - ref_bf16)))
    assert jnp.allclose(out, ref_bf16, atol=2e-2, rtol=2e-2), err_b

    # Pure-f32 reference (module semantics); looser tol for bf16 MXU inputs.
    ref_f32 = a_get_reference(x, params, use_bf16_operands=False)
    err_f = float(jnp.max(jnp.abs(out - ref_f32)))
    assert jnp.allclose(out, ref_f32, atol=5e-2, rtol=5e-2), err_f

    print("KERNEL_OK")
</pallas_src>

<mosaic_0001>
module attributes {stable_mosaic.version = 11 : i64} {
  func.func @kernel(%arg0: i32, %arg1: memref<1x16x16x4xf32, #tpu.memory_space<vmem>>, %arg2: memref<3x12x128xf32, #tpu.memory_space<vmem>>, %arg3: memref<1x128xf32, #tpu.memory_space<vmem>>, %arg4: memref<3x384x64xf32, #tpu.memory_space<vmem>>, %arg5: memref<1x64xf32, #tpu.memory_space<vmem>>, %arg6: memref<3x192x16xf32, #tpu.memory_space<vmem>>, %arg7: memref<1x16xf32, #tpu.memory_space<vmem>>, %arg8: memref<3x48x1xf32, #tpu.memory_space<vmem>>, %arg9: memref<1x1xf32, #tpu.memory_space<vmem>>, %arg10: memref<1x16x16x1xf32, #tpu.memory_space<vmem>>, %arg11: memref<18x18x4xf32, #tpu.memory_space<vmem>>, %arg12: memref<18x16x12xf32, #tpu.memory_space<vmem>>, %arg13: memref<18x18x128xf32, #tpu.memory_space<vmem>>, %arg14: memref<18x16x384xf32, #tpu.memory_space<vmem>>, %arg15: memref<18x18x64xf32, #tpu.memory_space<vmem>>, %arg16: memref<18x16x192xf32, #tpu.memory_space<vmem>>, %arg17: memref<18x18x16xf32, #tpu.memory_space<vmem>>, %arg18: memref<18x16x48xf32, #tpu.memory_space<vmem>>) attributes {dimension_semantics = [#tpu.dimension_semantics<parallel>], iteration_bounds = array<i64: 2>, scalar_prefetch = 0 : i64, scratch_operands = 8 : i64, tpu.core_type = #tpu.core_type<tc>, window_params = [{transform_indices = @transform_0, window_bounds = array<i64: 1, 16, 16, 4>}, {pipeline_mode = #tpu.pipeline_mode<synchronous>, transform_indices = @transform_1, window_bounds = array<i64: 3, 12, 128>}, {pipeline_mode = #tpu.pipeline_mode<synchronous>, transform_indices = @transform_2, window_bounds = array<i64: 1, 128>}, {pipeline_mode = #tpu.pipeline_mode<synchronous>, transform_indices = @transform_3, window_bounds = array<i64: 3, 384, 64>}, {pipeline_mode = #tpu.pipeline_mode<synchronous>, transform_indices = @transform_4, window_bounds = array<i64: 1, 64>}, {pipeline_mode = #tpu.pipeline_mode<synchronous>, transform_indices = @transform_5, window_bounds = array<i64: 3, 192, 16>}, {pipeline_mode = #tpu.pipeline_mode<synchronous>, transform_indices = @transform_6, window_bounds = array<i64: 1, 16>}, {pipeline_mode = #tpu.pipeline_mode<synchronous>, transform_indices = @transform_7, window_bounds = array<i64: 3, 48, 1>}, {pipeline_mode = #tpu.pipeline_mode<synchronous>, transform_indices = @transform_8, window_bounds = array<i64: 1, 1>}, {transform_indices = @transform_9, window_bounds = array<i64: 1, 16, 16, 1>}]} {
    %cst = arith.constant 0.000000e+00 : f32
    %0 = vector.broadcast %cst : f32 to vector<18x18x4xf32>
    %c0 = arith.constant 0 : index
    %c0_0 = arith.constant 0 : index
    %c0_1 = arith.constant 0 : index
    %1 = vector.load %arg11[%c0, %c0_0, %c0_1] : memref<18x18x4xf32, #tpu.memory_space<vmem>>, vector<18x18x4xf32>
    tpu.vector_store %arg11[%c0, %c0_0, %c0_1], %0 {strides = array<i32>} : memref<18x18x4xf32, #tpu.memory_space<vmem>>, vector<18x18x4xf32>,
    %c0_2 = arith.constant 0 : index
    %c0_3 = arith.constant 0 : index
    %c0_4 = arith.constant 0 : index
    %c0_5 = arith.constant 0 : index
    %2 = vector.load %arg1[%c0_2, %c0_3, %c0_4, %c0_5] : memref<1x16x16x4xf32, #tpu.memory_space<vmem>>, vector<1x16x16x4xf32>
    %3 = vector.shape_cast %2 : vector<1x16x16x4xf32> to vector<16x16x4xf32>
    %c1 = arith.constant 1 : index
    %c1_6 = arith.constant 1 : index
    %c0_7 = arith.constant 0 : index
    %4 = vector.load %arg11[%c1, %c1_6, %c0_7] : memref<18x18x4xf32, #tpu.memory_space<vmem>>, vector<16x16x4xf32>
    tpu.vector_store %arg11[%c1, %c1_6, %c0_7], %3 {strides = array<i32>} : memref<18x18x4xf32, #tpu.memory_space<vmem>>, vector<16x16x4xf32>,
    %c0_8 = arith.constant 0 : index
    %c0_9 = arith.constant 0 : index
    %c0_10 = arith.constant 0 : index
    %5 = vector.load %arg11[%c0_8, %c0_9, %c0_10] : memref<18x18x4xf32, #tpu.memory_space<vmem>>, vector<18x16x4xf32>
    %c0_11 = arith.constant 0 : index
    %c0_12 = arith.constant 0 : index
    %c0_13 = arith.constant 0 : index
    %6 = vector.load %arg12[%c0_11, %c0_12, %c0_13] : memref<18x16x12xf32, #tpu.memory_space<vmem>>, vector<18x16x4xf32>
    tpu.vector_store %arg12[%c0_11, %c0_12, %c0_13], %5 {strides = array<i32>} : memref<18x16x12xf32, #tpu.memory_space<vmem>>, vector<18x16x4xf32>,
    %c0_14 = arith.constant 0 : index
    %c1_15 = arith.constant 1 : index
    %c0_16 = arith.constant 0 : index
    %7 = vector.load %arg11[%c0_14, %c1_15, %c0_16] : memref<18x18x4xf32, #tpu.memory_space<vmem>>, vector<18x16x4xf32>
    %c0_17 = arith.constant 0 : index
    %c0_18 = arith.constant 0 : index
    %c4 = arith.constant 4 : index
    %8 = vector.load %arg12[%c0_17, %c0_18, %c4] : memref<18x16x12xf32, #tpu.memory_space<vmem>>, vector<18x16x4xf32>
    tpu.vector_store %arg12[%c0_17, %c0_18, %c4], %7 {strides = array<i32>} : memref<18x16x12xf32, #tpu.memory_space<vmem>>, vector<18x16x4xf32>,
    %c0_19 = arith.constant 0 : index
    %c2 = arith.constant 2 : index
    %c0_20 = arith.constant 0 : index
    %9 = vector.load %arg11[%c0_19, %c2, %c0_20] : memref<18x18x4xf32, #tpu.memory_space<vmem>>, vector<18x16x4xf32>
    %c0_21 = arith.constant 0 : index
    %c0_22 = arith.constant 0 : index
    %c8 = arith.constant 8 : index
    %10 = vector.load %arg12[%c0_21, %c0_22, %c8] : memref<18x16x12xf32, #tpu.memory_space<vmem>>, vector<18x16x4xf32>
    tpu.vector_store %arg12[%c0_21, %c0_22, %c8], %9 {strides = array<i32>} : memref<18x16x12xf32, #tpu.memory_space<vmem>>, vector<18x16x4xf32>,
    %cst_23 = arith.constant 0.000000e+00 : f32
    %11 = vector.broadcast %cst_23 : f32 to vector<18x18x128xf32>
    %c0_24 = arith.constant 0 : index
    %c0_25 = arith.constant 0 : index
    %c0_26 = arith.constant 0 : index
    %12 = vector.load %arg13[%c0_24, %c0_25, %c0_26] : memref<18x18x128xf32, #tpu.memory_space<vmem>>, vector<18x18x128xf32>
    tpu.vector_store %arg13[%c0_24, %c0_25, %c0_26], %11 {strides = array<i32>} : memref<18x18x128xf32, #tpu.memory_space<vmem>>, vector<18x18x128xf32>,
    %cst_27 = arith.constant 0.000000e+00 : f32
    %13 = vector.broadcast %cst_27 : f32 to vector<128x128xf32>
    %c0_28 = arith.constant 0 : index
    %c0_29 = arith.constant 0 : index
    %c0_30 = arith.constant 0 : index
    %14 = vector.load %arg12[%c0_28, %c0_29, %c0_30] : memref<18x16x12xf32, #tpu.memory_space<vmem>>, vector<8x16x12xf32>
    %15 = vector.shape_cast %14 : vector<8x16x12xf32> to vector<128x12xf32>
    %16 = arith.truncf %15 : vector<128x12xf32> to vector<128x12xbf16>
    %c0_31 = arith.constant 0 : index
    %c0_32 = arith.constant 0 : index
    %c0_33 = arith.constant 0 : index
    %17 = vector.load %arg2[%c0_31, %c0_32, %c0_33] : memref<3x12x128xf32, #tpu.memory_space<vmem>>, vector<1x12x128xf32>
    %18 = vector.shape_cast %17 : vector<1x12x128xf32> to vector<12x128xf32>
    %19 = arith.truncf %18 : vector<12x128xf32> to vector<12x128xbf16>
    %cst_34 = arith.constant dense<0.000000e+00> : vector<128x128xf32>
    %20 = tpu.matmul %16, %19, %cst_34 {dimension_numbers = #tpu.dot_dimension_numbers<[1], [0], [0], [1], [0, 0, 1, 1], [], []>} : vector<128x12xbf16>, vector<12x128xbf16>, vector<128x128xf32> -> vector<128x128xf32>
    %21 = arith.addf %13, %20 : vector<128x128xf32>
    %c1_35 = arith.constant 1 : index
    %c0_36 = arith.constant 0 : index
    %c0_37 = arith.constant 0 : index
    %22 = vector.load %arg12[%c1_35, %c0_36, %c0_37] : memref<18x16x12xf32, #tpu.memory_space<vmem>>, vector<8x16x12xf32>
    %23 = vector.shape_cast %22 : vector<8x16x12xf32> to vector<128x12xf32>
    %24 = arith.truncf %23 : vector<128x12xf32> to vector<128x12xbf16>
    %c1_38 = arith.constant 1 : index
    %c0_39 = arith.constant 0 : index
    %c0_40 = arith.constant 0 : index
    %25 = vector.load %arg2[%c1_38, %c0_39, %c0_40] : memref<3x12x128xf32, #tpu.memory_space<vmem>>, vector<1x12x128xf32>
    %26 = vector.shape_cast %25 : vector<1x12x128xf32> to vector<12x128xf32>
    %27 = arith.truncf %26 : vector<12x128xf32> to vector<12x128xbf16>
    %cst_41 = arith.constant dense<0.000000e+00> : vector<128x128xf32>
    %28 = tpu.matmul %24, %27, %cst_41 {dimension_numbers = #tpu.dot_dimension_numbers<[1], [0], [0], [1], [0, 0, 1, 1], [], []>} : vector<128x12xbf16>, vector<12x128xbf16>, vector<128x128xf32> -> vector<128x128xf32>
    %29 = arith.addf %21, %28 : vector<128x128xf32>
    %c2_42 = arith.constant 2 : index
    %c0_43 = arith.constant 0 : index
    %c0_44 = arith.constant 0 : index
    %30 = vector.load %arg12[%c2_42, %c0_43, %c0_44] : memref<18x16x12xf32, #tpu.memory_space<vmem>>, vector<8x16x12xf32>
    %31 = vector.shape_cast %30 : vector<8x16x12xf32> to vector<128x12xf32>
    %32 = arith.truncf %31 : vector<128x12xf32> to vector<128x12xbf16>
    %c2_45 = arith.constant 2 : index
    %c0_46 = arith.constant 0 : index
    %c0_47 = arith.constant 0 : index
    %33 = vector.load %arg2[%c2_45, %c0_46, %c0_47] : memref<3x12x128xf32, #tpu.memory_space<vmem>>, vector<1x12x128xf32>
    %34 = vector.shape_cast %33 : vector<1x12x128xf32> to vector<12x128xf32>
    %35 = arith.truncf %34 : vector<12x128xf32> to vector<12x128xbf16>
    %cst_48 = arith.constant dense<0.000000e+00> : vector<128x128xf32>
    %36 = tpu.matmul %32, %35, %cst_48 {dimension_numbers = #tpu.dot_dimension_numbers<[1], [0], [0], [1], [0, 0, 1, 1], [], []>} : vector<128x12xbf16>, vector<12x128xbf16>, vector<128x128xf32> -> vector<128x128xf32>
    %37 = arith.addf %29, %36 : vector<128x128xf32>
    %c0_49 = arith.constant 0 : index
    %c0_50 = arith.constant 0 : index
    %38 = vector.load %arg3[%c0_49, %c0_50] : memref<1x128xf32, #tpu.memory_space<vmem>>, vector<1x128xf32>
    %39 = vector.broadcast %38 : vector<1x128xf32> to vector<128x128xf32>
    %40 = arith.addf %37, %39 : vector<128x128xf32>
    %cst_51 = arith.constant 0.000000e+00 : f32
    %41 = vector.broadcast %cst_51 : f32 to vector<128x128xf32>
    %42 = arith.maximumf %40, %41 : vector<128x128xf32>
    %43 = vector.shape_cast %42 : vector<128x128xf32> to vector<8x16x128xf32>
    %c1_52 = arith.constant 1 : index
    %c1_53 = arith.constant 1 : index
    %c0_54 = arith.constant 0 : index
    %44 = vector.load %arg13[%c1_52, %c1_53, %c0_54] : memref<18x18x128xf32, #tpu.memory_space<vmem>>, vector<8x16x128xf32>
    tpu.vector_store %arg13[%c1_52, %c1_53, %c0_54], %43 {strides = array<i32>} : memref<18x18x128xf32, #tpu.memory_space<vmem>>, vector<8x16x128xf32>,
    %cst_55 = arith.constant 0.000000e+00 : f32
    %45 = vector.broadcast %cst_55 : f32 to vector<128x128xf32>
    %c8_56 = arith.constant 8 : index
    %c0_57 = arith.constant 0 : index
    %c0_58 = arith.constant 0 : index
    %46 = vector.load %arg12[%c8_56, %c0_57, %c0_58] : memref<18x16x12xf32, #tpu.memory_space<vmem>>, vector<8x16x12xf32>
    %47 = vector.shape_cast %46 : vector<8x16x12xf32> to vector<128x12xf32>
    %48 = arith.truncf %47 : vector<128x12xf32> to vector<128x12xbf16>
    %c0_59 = arith.constant 0 : index
    %c0_60 = arith.constant 0 : index
    %c0_61 = arith.constant 0 : index
    %49 = vector.load %arg2[%c0_59, %c0_60, %c0_61] : memref<3x12x128xf32, #tpu.memory_space<vmem>>, vector<1x12x128xf32>
    %50 = vector.shape_cast %49 : vector<1x12x128xf32> to vector<12x128xf32>
    %51 = arith.truncf %50 : vector<12x128xf32> to vector<12x128xbf16>
    %cst_62 = arith.constant dense<0.000000e+00> : vector<128x128xf32>
    %52 = tpu.matmul %48, %51, %cst_62 {dimension_numbers = #tpu.dot_dimension_numbers<[1], [0], [0], [1], [0, 0, 1, 1], [], []>} : vector<128x12xbf16>, vector<12x128xbf16>, vector<128x128xf32> -> vector<128x128xf32>
    %53 = arith.addf %45, %52 : vector<128x128xf32>
    %c9 = arith.constant 9 : index
    %c0_63 = arith.constant 0 : index
    %c0_64 = arith.constant 0 : index
    %54 = vector.load %arg12[%c9, %c0_63, %c0_64] : memref<18x16x12xf32, #tpu.memory_space<vmem>>, vector<8x16x12xf32>
    %55 = vector.shape_cast %54 : vector<8x16x12xf32> to vector<128x12xf32>
    %56 = arith.truncf %55 : vector<128x12xf32> to vector<128x12xbf16>
    %c1_65 = arith.constant 1 : index
    %c0_66 = arith.constant 0 : index
    %c0_67 = arith.constant 0 : index
    %57 = vector.load %arg2[%c1_65, %c0_66, %c0_67] : memref<3x12x128xf32, #tpu.memory_space<vmem>>, vector<1x12x128xf32>
    %58 = vector.shape_cast %57 : vector<1x12x128xf32> to vector<12x128xf32>
    %59 = arith.truncf %58 : vector<12x128xf32> to vector<12x128xbf16>
    %cst_68 = arith.constant dense<0.000000e+00> : vector<128x128xf32>
    %60 = tpu.matmul %56, %59, %cst_68 {dimension_numbers = #tpu.dot_dimension_numbers<[1], [0], [0], [1], [0, 0, 1, 1], [], []>} : vector<128x12xbf16>, vector<12x128xbf16>, vector<128x128xf32> -> vector<128x128xf32>
    %61 = arith.addf %53, %60 : vector<128x128xf32>
    %c10 = arith.constant 10 : index
    %c0_69 = arith.constant 0 : index
    %c0_70 = arith.constant 0 : index
    %62 = vector.load %arg12[%c10, %c0_69, %c0_70] : memref<18x16x12xf32, #tpu.memory_space<vmem>>, vector<8x16x12xf32>
    %63 = vector.shape_cast %62 : vector<8x16x12xf32> to vector<128x12xf32>
    %64 = arith.truncf %63 : vector<128x12xf32> to vector<128x12xbf16>
    %c2_71 = arith.constant 2 : index
    %c0_72 = arith.constant 0 : index
    %c0_73 = arith.constant 0 : index
    %65 = vector.load %arg2[%c2_71, %c0_72, %c0_73] : memref<3x12x128xf32, #tpu.memory_space<vmem>>, vector<1x12x128xf32>
    %66 = vector.shape_cast %65 : vector<1x12x128xf32> to vector<12x128xf32>
    %67 = arith.truncf %66 : vector<12x128xf32> to vector<12x128xbf16>
    %cst_74 = arith.constant dense<0.000000e+00> : vector<128x128xf32>
    %68 = tpu.matmul %64, %67, %cst_74 {dimension_numbers = #tpu.dot_dimension_numbers<[1], [0], [0], [1], [0, 0, 1, 1], [], []>} : vector<128x12xbf16>, vector<12x128xbf16>, vector<128x128xf32> -> vector<128x128xf32>
    %69 = arith.addf %61, %68 : vector<128x128xf32>
    %c0_75 = arith.constant 0 : index
    %c0_76 = arith.constant 0 : index
    %70 = vector.load %arg3[%c0_75, %c0_76] : memref<1x128xf32, #tpu.memory_space<vmem>>, vector<1x128xf32>
    %71 = vector.broadcast %70 : vector<1x128xf32> to vector<128x128xf32>
    %72 = arith.addf %69, %71 : vector<128x128xf32>
    %cst_77 = arith.constant 0.000000e+00 : f32
    %73 = vector.broadcast %cst_77 : f32 to vector<128x128xf32>
    %74 = arith.maximumf %72, %73 : vector<128x128xf32>
    %75 = vector.shape_cast %74 : vector<128x128xf32> to vector<8x16x128xf32>
    %c9_78 = arith.constant 9 : index
    %c1_79 = arith.constant 1 : index
    %c0_80 = arith.constant 0 : index
    %76 = vector.load %arg13[%c9_78, %c1_79, %c0_80] : memref<18x18x128xf32, #tpu.memory_space<vmem>>, vector<8x16x128xf32>
    tpu.vector_store %arg13[%c9_78, %c1_79, %c0_80], %75 {strides = array<i32>} : memref<18x18x128xf32, #tpu.memory_space<vmem>>, vector<8x16x128xf32>,
    %c0_81 = arith.constant 0 : index
    %c0_82 = arith.constant 0 : index
    %c0_83 = arith.constant 0 : index
    %77 = vector.load %arg13[%c0_81, %c0_82, %c0_83] : memref<18x18x128xf32, #tpu.memory_space<vmem>>, vector<18x16x128xf32>
    %c0_84 = arith.constant 0 : index
    %c0_85 = arith.constant 0 : index
    %c0_86 = arith.constant 0 : index
    %78 = vector.load %arg14[%c0_84, %c0_85, %c0_86] : memref<18x16x384xf32, #tpu.memory_space<vmem>>, vector<18x16x128xf32>
    tpu.vector_store %arg14[%c0_84, %c0_85, %c0_86], %77 {strides = array<i32>} : memref<18x16x384xf32, #tpu.memory_space<vmem>>, vector<18x16x128xf32>,
    %c0_87 = arith.constant 0 : index
    %c1_88 = arith.constant 1 : index
    %c0_89 = arith.constant 0 : index
    %79 = vector.load %arg13[%c0_87, %c1_88, %c0_89] : memref<18x18x128xf32, #tpu.memory_space<vmem>>, vector<18x16x128xf32>
    %c0_90 = arith.constant 0 : index
    %c0_91 = arith.constant 0 : index
    %c128 = arith.constant 128 : index
    %80 = vector.load %arg14[%c0_90, %c0_91, %c128] : memref<18x16x384xf32, #tpu.memory_space<vmem>>, vector<18x16x128xf32>
    tpu.vector_store %arg14[%c0_90, %c0_91, %c128], %79 {strides = array<i32>} : memref<18x16x384xf32, #tpu.memory_space<vmem>>, vector<18x16x128xf32>,
    %c0_92 = arith.constant 0 : index
    %c2_93 = arith.constant 2 : index
    %c0_94 = arith.constant 0 : index
    %81 = vector.load %arg13[%c0_92, %c2_93, %c0_94] : memref<18x18x128xf32, #tpu.memory_space<vmem>>, vector<18x16x128xf32>
    %c0_95 = arith.constant 0 : index
    %c0_96 = arith.constant 0 : index
    %c256 = arith.constant 256 : index
    %82 = vector.load %arg14[%c0_95, %c0_96, %c256] : memref<18x16x384xf32, #tpu.memory_space<vmem>>, vector<18x16x128xf32>
    tpu.vector_store %arg14[%c0_95, %c0_96, %c256], %81 {strides = array<i32>} : memref<18x16x384xf32, #tpu.memory_space<vmem>>, vector<18x16x128xf32>,
    %cst_97 = arith.constant 0.000000e+00 : f32
    %83 = vector.broadcast %cst_97 : f32 to vector<18x18x64xf32>
    %c0_98 = arith.constant 0 : index
    %c0_99 = arith.constant 0 : index
    %c0_100 = arith.constant 0 : index
    %84 = vector.load %arg15[%c0_98, %c0_99, %c0_100] : memref<18x18x64xf32, #tpu.memory_space<vmem>>, vector<18x18x64xf32>
    tpu.vector_store %arg15[%c0_98, %c0_99, %c0_100], %83 {strides = array<i32>} : memref<18x18x64xf32, #tpu.memory_space<vmem>>, vector<18x18x64xf32>,
    %cst_101 = arith.constant 0.000000e+00 : f32
    %85 = vector.broadcast %cst_101 : f32 to vector<128x64xf32>
    %c0_102 = arith.constant 0 : index
    %c0_103 = arith.constant 0 : index
    %c0_104 = arith.constant 0 : index
    %86 = vector.load %arg14[%c0_102, %c0_103, %c0_104] : memref<18x16x384xf32, #tpu.memory_space<vmem>>, vector<8x16x384xf32>
    %87 = vector.shape_cast %86 : vector<8x16x384xf32> to vector<128x384xf32>
    %88 = arith.truncf %87 : vector<128x384xf32> to vector<128x384xbf16>
    %c0_105 = arith.constant 0 : index
    %c0_106 = arith.constant 0 : index
    %c0_107 = arith.constant 0 : index
    %89 = vector.load %arg4[%c0_105, %c0_106, %c0_107] : memref<3x384x64xf32, #tpu.memory_space<vmem>>, vector<1x384x64xf32>
    %90 = vector.shape_cast %89 : vector<1x384x64xf32> to vector<384x64xf32>
    %91 = arith.truncf %90 : vector<384x64xf32> to vector<384x64xbf16>
    %cst_108 = arith.constant dense<0.000000e+00> : vector<128x64xf32>
    %92 = tpu.matmul %88, %91, %cst_108 {dimension_numbers = #tpu.dot_dimension_numbers<[1], [0], [0], [1], [0, 0, 1, 1], [], []>} : vector<128x384xbf16>, vector<384x64xbf16>, vector<128x64xf32> -> vector<128x64xf32>
    %93 = arith.addf %85, %92 : vector<128x64xf32>
    %c1_109 = arith.constant 1 : index
    %c0_110 = arith.constant 0 : index
    %c0_111 = arith.constant 0 : index
    %94 = vector.load %arg14[%c1_109, %c0_110, %c0_111] : memref<18x16x384xf32, #tpu.memory_space<vmem>>, vector<8x16x384xf32>
    %95 = vector.shape_cast %94 : vector<8x16x384xf32> to vector<128x384xf32>
    %96 = arith.truncf %95 : vector<128x384xf32> to vector<128x384xbf16>
    %c1_112 = arith.constant 1 : index
    %c0_113 = arith.constant 0 : index
    %c0_114 = arith.constant 0 : index
    %97 = vector.load %arg4[%c1_112, %c0_113, %c0_114] : memref<3x384x64xf32, #tpu.memory_space<vmem>>, vector<1x384x64xf32>
    %98 = vector.shape_cast %97 : vector<1x384x64xf32> to vector<384x64xf32>
    %99 = arith.truncf %98 : vector<384x64xf32> to vector<384x64xbf16>
    %cst_115 = arith.constant dense<0.000000e+00> : vector<128x64xf32>
    %100 = tpu.matmul %96, %99, %cst_115 {dimension_numbers = #tpu.dot_dimension_numbers<[1], [0], [0], [1], [0, 0, 1, 1], [], []>} : vector<128x384xbf16>, vector<384x64xbf16>, vector<128x64xf32> -> vector<128x64xf32>
    %101 = arith.addf %93, %100 : vector<128x64xf32>
    %c2_116 = arith.constant 2 : index
    %c0_117 = arith.constant 0 : index
    %c0_118 = arith.constant 0 : index
    %102 = vector.load %arg14[%c2_116, %c0_117, %c0_118] : memref<18x16x384xf32, #tpu.memory_space<vmem>>, vector<8x16x384xf32>
    %103 = vector.shape_cast %102 : vector<8x16x384xf32> to vector<128x384xf32>
    %104 = arith.truncf %103 : vector<128x384xf32> to vector<128x384xbf16>
    %c2_119 = arith.constant 2 : index
    %c0_120 = arith.constant 0 : index
    %c0_121 = arith.constant 0 : index
    %105 = vector.load %arg4[%c2_119, %c0_120, %c0_121] : memref<3x384x64xf32, #tpu.memory_space<vmem>>, vector<1x384x64xf32>
    %106 = vector.shape_cast %105 : vector<1x384x64xf32> to vector<384x64xf32>
    %107 = arith.truncf %106 : vector<384x64xf32> to vector<384x64xbf16>
    %cst_122 = arith.constant dense<0.000000e+00> : vector<128x64xf32>
    %108 = tpu.matmul %104, %107, %cst_122 {dimension_numbers = #tpu.dot_dimension_numbers<[1], [0], [0], [1], [0, 0, 1, 1], [], []>} : vector<128x384xbf16>, vector<384x64xbf16>, vector<128x64xf32> -> vector<128x64xf32>
    %109 = arith.addf %101, %108 : vector<128x64xf32>
    %c0_123 = arith.constant 0 : index
    %c0_124 = arith.constant 0 : index
    %110 = vector.load %arg5[%c0_123, %c0_124] : memref<1x64xf32, #tpu.memory_space<vmem>>, vector<1x64xf32>
    %111 = vector.broadcast %110 : vector<1x64xf32> to vector<128x64xf32>
    %112 = arith.addf %109, %111 : vector<128x64xf32>
    %cst_125 = arith.constant 0.000000e+00 : f32
    %113 = vector.broadcast %cst_125 : f32 to vector<128x64xf32>
    %114 = arith.maximumf %112, %113 : vector<128x64xf32>
    %115 = vector.shape_cast %114 : vector<128x64xf32> to vector<8x16x64xf32>
    %c1_126 = arith.constant 1 : index
    %c1_127 = arith.constant 1 : index
    %c0_128 = arith.constant 0 : index
    %116 = vector.load %arg15[%c1_126, %c1_127, %c0_128] : memref<18x18x64xf32, #tpu.memory_space<vmem>>, vector<8x16x64xf32>
    tpu.vector_store %arg15[%c1_126, %c1_127, %c0_128], %115 {strides = array<i32>} : memref<18x18x64xf32, #tpu.memory_space<vmem>>, vector<8x16x64xf32>,
    %cst_129 = arith.constant 0.000000e+00 : f32
    %117 = vector.broadcast %cst_129 : f32 to vector<128x64xf32>
    %c8_130 = arith.constant 8 : index
    %c0_131 = arith.constant 0 : index
    %c0_132 = arith.constant 0 : index
    %118 = vector.load %arg14[%c8_130, %c0_131, %c0_132] : memref<18x16x384xf32, #tpu.memory_space<vmem>>, vector<8x16x384xf32>
    %119 = vector.shape_cast %118 : vector<8x16x384xf32> to vector<128x384xf32>
    %120 = arith.truncf %119 : vector<128x384xf32> to vector<128x384xbf16>
    %c0_133 = arith.constant 0 : index
    %c0_134 = arith.constant 0 : index
    %c0_135 = arith.constant 0 : index
    %121 = vector.load %arg4[%c0_133, %c0_134, %c0_135] : memref<3x384x64xf32, #tpu.memory_space<vmem>>, vector<1x384x64xf32>
    %122 = vector.shape_cast %121 : vector<1x384x64xf32> to vector<384x64xf32>
    %123 = arith.truncf %122 : vector<384x64xf32> to vector<384x64xbf16>
    %cst_136 = arith.constant dense<0.000000e+00> : vector<128x64xf32>
    %124 = tpu.matmul %120, %123, %cst_136 {dimension_numbers = #tpu.dot_dimension_numbers<[1], [0], [0], [1], [0, 0, 1, 1], [], []>} : vector<128x384xbf16>, vector<384x64xbf16>, vector<128x64xf32> -> vector<128x64xf32>
    %125 = arith.addf %117, %124 : vector<128x64xf32>
    %c9_137 = arith.constant 9 : index
    %c0_138 = arith.constant 0 : index
    %c0_139 = arith.constant 0 : index
    %126 = vector.load %arg14[%c9_137, %c0_138, %c0_139] : memref<18x16x384xf32, #tpu.memory_space<vmem>>, vector<8x16x384xf32>
    %127 = vector.shape_cast %126 : vector<8x16x384xf32> to vector<128x384xf32>
    %128 = arith.truncf %127 : vector<128x384xf32> to vector<128x384xbf16>
    %c1_140 = arith.constant 1 : index
    %c0_141 = arith.constant 0 : index
    %c0_142 = arith.constant 0 : index
    %129 = vector.load %arg4[%c1_140, %c0_141, %c0_142] : memref<3x384x64xf32, #tpu.memory_space<vmem>>, vector<1x384x64xf32>
    %130 = vector.shape_cast %129 : vector<1x384x64xf32> to vector<384x64xf32>
    %131 = arith.truncf %130 : vector<384x64xf32> to vector<384x64xbf16>
    %cst_143 = arith.constant dense<0.000000e+00> : vector<128x64xf32>
    %132 = tpu.matmul %128, %131, %cst_143 {dimension_numbers = #tpu.dot_dimension_numbers<[1], [0], [0], [1], [0, 0, 1, 1], [], []>} : vector<128x384xbf16>, vector<384x64xbf16>, vector<128x64xf32> -> vector<128x64xf32>
    %133 = arith.addf %125, %132 : vector<128x64xf32>
    %c10_144 = arith.constant 10 : index
    %c0_145 = arith.constant 0 : index
    %c0_146 = arith.constant 0 : index
    %134 = vector.load %arg14[%c10_144, %c0_145, %c0_146] : memref<18x16x384xf32, #tpu.memory_space<vmem>>, vector<8x16x384xf32>
    %135 = vector.shape_cast %134 : vector<8x16x384xf32> to vector<128x384xf32>
    %136 = arith.truncf %135 : vector<128x384xf32> to vector<128x384xbf16>
    %c2_147 = arith.constant 2 : index
    %c0_148 = arith.constant 0 : index
    %c0_149 = arith.constant 0 : index
    %137 = vector.load %arg4[%c2_147, %c0_148, %c0_149] : memref<3x384x64xf32, #tpu.memory_space<vmem>>, vector<1x384x64xf32>
    %138 = vector.shape_cast %137 : vector<1x384x64xf32> to vector<384x64xf32>
    %139 = arith.truncf %138 : vector<384x64xf32> to vector<384x64xbf16>
    %cst_150 = arith.constant dense<0.000000e+00> : vector<128x64xf32>
    %140 = tpu.matmul %136, %139, %cst_150 {dimension_numbers = #tpu.dot_dimension_numbers<[1], [0], [0], [1], [0, 0, 1, 1], [], []>} : vector<128x384xbf16>, vector<384x64xbf16>, vector<128x64xf32> -> vector<128x64xf32>
    %141 = arith.addf %133, %140 : vector<128x64xf32>
    %c0_151 = arith.constant 0 : index
    %c0_152 = arith.constant 0 : index
    %142 = vector.load %arg5[%c0_151, %c0_152] : memref<1x64xf32, #tpu.memory_space<vmem>>, vector<1x64xf32>
    %143 = vector.broadcast %142 : vector<1x64xf32> to vector<128x64xf32>
    %144 = arith.addf %141, %143 : vector<128x64xf32>
    %cst_153 = arith.constant 0.000000e+00 : f32
    %145 = vector.broadcast %cst_153 : f32 to vector<128x64xf32>
    %146 = arith.maximumf %144, %145 : vector<128x64xf32>
    %147 = vector.shape_cast %146 : vector<128x64xf32> to vector<8x16x64xf32>
    %c9_154 = arith.constant 9 : index
    %c1_155 = arith.constant 1 : index
    %c0_156 = arith.constant 0 : index
    %148 = vector.load %arg15[%c9_154, %c1_155, %c0_156] : memref<18x18x64xf32, #tpu.memory_space<vmem>>, vector<8x16x64xf32>
    tpu.vector_store %arg15[%c9_154, %c1_155, %c0_156], %147 {strides = array<i32>} : memref<18x18x64xf32, #tpu.memory_space<vmem>>, vector<8x16x64xf32>,
    %c0_157 = arith.constant 0 : index
    %c0_158 = arith.constant 0 : index
    %c0_159 = arith.constant 0 : index
    %149 = vector.load %arg15[%c0_157, %c0_158, %c0_159] : memref<18x18x64xf32, #tpu.memory_space<vmem>>, vector<18x16x64xf32>
    %c0_160 = arith.constant 0 : index
    %c0_161 = arith.constant 0 : index
    %c0_162 = arith.constant 0 : index
    %150 = vector.load %arg16[%c0_160, %c0_161, %c0_162] : memref<18x16x192xf32, #tpu.memory_space<vmem>>, vector<18x16x64xf32>
    tpu.vector_store %arg16[%c0_160, %c0_161, %c0_162], %149 {strides = array<i32>} : memref<18x16x192xf32, #tpu.memory_space<vmem>>, vector<18x16x64xf32>,
    %c0_163 = arith.constant 0 : index
    %c1_164 = arith.constant 1 : index
    %c0_165 = arith.constant 0 : index
    %151 = vector.load %arg15[%c0_163, %c1_164, %c0_165] : memref<18x18x64xf32, #tpu.memory_space<vmem>>, vector<18x16x64xf32>
    %c0_166 = arith.constant 0 : index
    %c0_167 = arith.constant 0 : index
    %c64 = arith.constant 64 : index
    %152 = vector.load %arg16[%c0_166, %c0_167, %c64] : memref<18x16x192xf32, #tpu.memory_space<vmem>>, vector<18x16x64xf32>
    tpu.vector_store %arg16[%c0_166, %c0_167, %c64], %151 {strides = array<i32>} : memref<18x16x192xf32, #tpu.memory_space<vmem>>, vector<18x16x64xf32>,
    %c0_168 = arith.constant 0 : index
    %c2_169 = arith.constant 2 : index
    %c0_170 = arith.constant 0 : index
    %153 = vector.load %arg15[%c0_168, %c2_169, %c0_170] : memref<18x18x64xf32, #tpu.memory_space<vmem>>, vector<18x16x64xf32>
    %c0_171 = arith.constant 0 : index
    %c0_172 = arith.constant 0 : index
    %c128_173 = arith.constant 128 : index
    %154 = vector.load %arg16[%c0_171, %c0_172, %c128_173] : memref<18x16x192xf32, #tpu.memory_space<vmem>>, vector<18x16x64xf32>
    tpu.vector_store %arg16[%c0_171, %c0_172, %c128_173], %153 {strides = array<i32>} : memref<18x16x192xf32, #tpu.memory_space<vmem>>, vector<18x16x64xf32>,
    %cst_174 = arith.constant 0.000000e+00 : f32
    %155 = vector.broadcast %cst_174 : f32 to vector<18x18x16xf32>
    %c0_175 = arith.constant 0 : index
    %c0_176 = arith.constant 0 : index
    %c0_177 = arith.constant 0 : index
    %156 = vector.load %arg17[%c0_175, %c0_176, %c0_177] : memref<18x18x16xf32, #tpu.memory_space<vmem>>, vector<18x18x16xf32>
    tpu.vector_store %arg17[%c0_175, %c0_176, %c0_177], %155 {strides = array<i32>} : memref<18x18x16xf32, #tpu.memory_space<vmem>>, vector<18x18x16xf32>,
    %cst_178 = arith.constant 0.000000e+00 : f32
    %157 = vector.broadcast %cst_178 : f32 to vector<128x16xf32>
    %c0_179 = arith.constant 0 : index
    %c0_180 = arith.constant 0 : index
    %c0_181 = arith.constant 0 : index
    %158 = vector.load %arg16[%c0_179, %c0_180, %c0_181] : memref<18x16x192xf32, #tpu.memory_space<vmem>>, vector<8x16x192xf32>
    %159 = vector.shape_cast %158 : vector<8x16x192xf32> to vector<128x192xf32>
    %160 = arith.truncf %159 : vector<128x192xf32> to vector<128x192xbf16>
    %c0_182 = arith.constant 0 : index
    %c0_183 = arith.constant 0 : index
    %c0_184 = arith.constant 0 : index
    %161 = vector.load %arg6[%c0_182, %c0_183, %c0_184] : memref<3x192x16xf32, #tpu.memory_space<vmem>>, vector<1x192x16xf32>
    %162 = vector.shape_cast %161 : vector<1x192x16xf32> to vector<192x16xf32>
    %163 = arith.truncf %162 : vector<192x16xf32> to vector<192x16xbf16>
    %cst_185 = arith.constant dense<0.000000e+00> : vector<128x16xf32>
    %164 = tpu.matmul %160, %163, %cst_185 {dimension_numbers = #tpu.dot_dimension_numbers<[1], [0], [0], [1], [0, 0, 1, 1], [], []>} : vector<128x192xbf16>, vector<192x16xbf16>, vector<128x16xf32> -> vector<128x16xf32>
    %165 = arith.addf %157, %164 : vector<128x16xf32>
    %c1_186 = arith.constant 1 : index
    %c0_187 = arith.constant 0 : index
    %c0_188 = arith.constant 0 : index
    %166 = vector.load %arg16[%c1_186, %c0_187, %c0_188] : memref<18x16x192xf32, #tpu.memory_space<vmem>>, vector<8x16x192xf32>
    %167 = vector.shape_cast %166 : vector<8x16x192xf32> to vector<128x192xf32>
    %168 = arith.truncf %167 : vector<128x192xf32> to vector<128x192xbf16>
    %c1_189 = arith.constant 1 : index
    %c0_190 = arith.constant 0 : index
    %c0_191 = arith.constant 0 : index
    %169 = vector.load %arg6[%c1_189, %c0_190, %c0_191] : memref<3x192x16xf32, #tpu.memory_space<vmem>>, vector<1x192x16xf32>
    %170 = vector.shape_cast %169 : vector<1x192x16xf32> to vector<192x16xf32>
    %171 = arith.truncf %170 : vector<192x16xf32> to vector<192x16xbf16>
    %cst_192 = arith.constant dense<0.000000e+00> : vector<128x16xf32>
    %172 = tpu.matmul %168, %171, %cst_192 {dimension_numbers = #tpu.dot_dimension_numbers<[1], [0], [0], [1], [0, 0, 1, 1], [], []>} : vector<128x192xbf16>, vector<192x16xbf16>, vector<128x16xf32> -> vector<128x16xf32>
    %173 = arith.addf %165, %172 : vector<128x16xf32>
    %c2_193 = arith.constant 2 : index
    %c0_194 = arith.constant 0 : index
    %c0_195 = arith.constant 0 : index
    %174 = vector.load %arg16[%c2_193, %c0_194, %c0_195] : memref<18x16x192xf32, #tpu.memory_space<vmem>>, vector<8x16x192xf32>
    %175 = vector.shape_cast %174 : vector<8x16x192xf32> to vector<128x192xf32>
    %176 = arith.truncf %175 : vector<128x192xf32> to vector<128x192xbf16>
    %c2_196 = arith.constant 2 : index
    %c0_197 = arith.constant 0 : index
    %c0_198 = arith.constant 0 : index
    %177 = vector.load %arg6[%c2_196, %c0_197, %c0_198] : memref<3x192x16xf32, #tpu.memory_space<vmem>>, vector<1x192x16xf32>
    %178 = vector.shape_cast %177 : vector<1x192x16xf32> to vector<192x16xf32>
    %179 = arith.truncf %178 : vector<192x16xf32> to vector<192x16xbf16>
    %cst_199 = arith.constant dense<0.000000e+00> : vector<128x16xf32>
    %180 = tpu.matmul %176, %179, %cst_199 {dimension_numbers = #tpu.dot_dimension_numbers<[1], [0], [0], [1], [0, 0, 1, 1], [], []>} : vector<128x192xbf16>, vector<192x16xbf16>, vector<128x16xf32> -> vector<128x16xf32>
    %181 = arith.addf %173, %180 : vector<128x16xf32>
    %c0_200 = arith.constant 0 : index
    %c0_201 = arith.constant 0 : index
    %182 = vector.load %arg7[%c0_200, %c0_201] : memref<1x16xf32, #tpu.memory_space<vmem>>, vector<1x16xf32>
    %183 = vector.broadcast %182 : vector<1x16xf32> to vector<128x16xf32>
    %184 = arith.addf %181, %183 : vector<128x16xf32>
    %cst_202 = arith.constant 0.000000e+00 : f32
    %185 = vector.broadcast %cst_202 : f32 to vector<128x16xf32>
    %186 = arith.maximumf %184, %185 : vector<128x16xf32>
    %187 = vector.shape_cast %186 : vector<128x16xf32> to vector<8x16x16xf32>
    %c1_203 = arith.constant 1 : index
    %c1_204 = arith.constant 1 : index
    %c0_205 = arith.constant 0 : index
    %188 = vector.load %arg17[%c1_203, %c1_204, %c0_205] : memref<18x18x16xf32, #tpu.memory_space<vmem>>, vector<8x16x16xf32>
    tpu.vector_store %arg17[%c1_203, %c1_204, %c0_205], %187 {strides = array<i32>} : memref<18x18x16xf32, #tpu.memory_space<vmem>>, vector<8x16x16xf32>,
    %cst_206 = arith.constant 0.000000e+00 : f32
    %189 = vector.broadcast %cst_206 : f32 to vector<128x16xf32>
    %c8_207 = arith.constant 8 : index
    %c0_208 = arith.constant 0 : index
    %c0_209 = arith.constant 0 : index
    %190 = vector.load %arg16[%c8_207, %c0_208, %c0_209] : memref<18x16x192xf32, #tpu.memory_space<vmem>>, vector<8x16x192xf32>
    %191 = vector.shape_cast %190 : vector<8x16x192xf32> to vector<128x192xf32>
    %192 = arith.truncf %191 : vector<128x192xf32> to vector<128x192xbf16>
    %c0_210 = arith.constant 0 : index
    %c0_211 = arith.constant 0 : index
    %c0_212 = arith.constant 0 : index
    %193 = vector.load %arg6[%c0_210, %c0_211, %c0_212] : memref<3x192x16xf32, #tpu.memory_space<vmem>>, vector<1x192x16xf32>
    %194 = vector.shape_cast %193 : vector<1x192x16xf32> to vector<192x16xf32>
    %195 = arith.truncf %194 : vector<192x16xf32> to vector<192x16xbf16>
    %cst_213 = arith.constant dense<0.000000e+00> : vector<128x16xf32>
    %196 = tpu.matmul %192, %195, %cst_213 {dimension_numbers = #tpu.dot_dimension_numbers<[1], [0], [0], [1], [0, 0, 1, 1], [], []>} : vector<128x192xbf16>, vector<192x16xbf16>, vector<128x16xf32> -> vector<128x16xf32>
    %197 = arith.addf %189, %196 : vector<128x16xf32>
    %c9_214 = arith.constant 9 : index
    %c0_215 = arith.constant 0 : index
    %c0_216 = arith.constant 0 : index
    %198 = vector.load %arg16[%c9_214, %c0_215, %c0_216] : memref<18x16x192xf32, #tpu.memory_space<vmem>>, vector<8x16x192xf32>
    %199 = vector.shape_cast %198 : vector<8x16x192xf32> to vector<128x192xf32>
    %200 = arith.truncf %199 : vector<128x192xf32> to vector<128x192xbf16>
    %c1_217 = arith.constant 1 : index
    %c0_218 = arith.constant 0 : index
    %c0_219 = arith.constant 0 : index
    %201 = vector.load %arg6[%c1_217, %c0_218, %c0_219] : memref<3x192x16xf32, #tpu.memory_space<vmem>>, vector<1x192x16xf32>
    %202 = vector.shape_cast %201 : vector<1x192x16xf32> to vector<192x16xf32>
    %203 = arith.truncf %202 : vector<192x16xf32> to vector<192x16xbf16>
    %cst_220 = arith.constant dense<0.000000e+00> : vector<128x16xf32>
    %204 = tpu.matmul %200, %203, %cst_220 {dimension_numbers = #tpu.dot_dimension_numbers<[1], [0], [0], [1], [0, 0, 1, 1], [], []>} : vector<128x192xbf16>, vector<192x16xbf16>, vector<128x16xf32> -> vector<128x16xf32>
    %205 = arith.addf %197, %204 : vector<128x16xf32>
    %c10_221 = arith.constant 10 : index
    %c0_222 = arith.constant 0 : index
    %c0_223 = arith.constant 0 : index
    %206 = vector.load %arg16[%c10_221, %c0_222, %c0_223] : memref<18x16x192xf32, #tpu.memory_space<vmem>>, vector<8x16x192xf32>
    %207 = vector.shape_cast %206 : vector<8x16x192xf32> to vector<128x192xf32>
    %208 = arith.truncf %207 : vector<128x192xf32> to vector<128x192xbf16>
    %c2_224 = arith.constant 2 : index
    %c0_225 = arith.constant 0 : index
    %c0_226 = arith.constant 0 : index
    %209 = vector.load %arg6[%c2_224, %c0_225, %c0_226] : memref<3x192x16xf32, #tpu.memory_space<vmem>>, vector<1x192x16xf32>
    %210 = vector.shape_cast %209 : vector<1x192x16xf32> to vector<192x16xf32>
    %211 = arith.truncf %210 : vector<192x16xf32> to vector<192x16xbf16>
    %cst_227 = arith.constant dense<0.000000e+00> : vector<128x16xf32>
    %212 = tpu.matmul %208, %211, %cst_227 {dimension_numbers = #tpu.dot_dimension_numbers<[1], [0], [0], [1], [0, 0, 1, 1], [], []>} : vector<128x192xbf16>, vector<192x16xbf16>, vector<128x16xf32> -> vector<128x16xf32>
    %213 = arith.addf %205, %212 : vector<128x16xf32>
    %c0_228 = arith.constant 0 : index
    %c0_229 = arith.constant 0 : index
    %214 = vector.load %arg7[%c0_228, %c0_229] : memref<1x16xf32, #tpu.memory_space<vmem>>, vector<1x16xf32>
    %215 = vector.broadcast %214 : vector<1x16xf32> to vector<128x16xf32>
    %216 = arith.addf %213, %215 : vector<128x16xf32>
    %cst_230 = arith.constant 0.000000e+00 : f32
    %217 = vector.broadcast %cst_230 : f32 to vector<128x16xf32>
    %218 = arith.maximumf %216, %217 : vector<128x16xf32>
    %219 = vector.shape_cast %218 : vector<128x16xf32> to vector<8x16x16xf32>
    %c9_231 = arith.constant 9 : index
    %c1_232 = arith.constant 1 : index
    %c0_233 = arith.constant 0 : index
    %220 = vector.load %arg17[%c9_231, %c1_232, %c0_233] : memref<18x18x16xf32, #tpu.memory_space<vmem>>, vector<8x16x16xf32>
    tpu.vector_store %arg17[%c9_231, %c1_232, %c0_233], %219 {strides = array<i32>} : memref<18x18x16xf32, #tpu.memory_space<vmem>>, vector<8x16x16xf32>,
    %c0_234 = arith.constant 0 : index
    %c0_235 = arith.constant 0 : index
    %c0_236 = arith.constant 0 : index
    %221 = vector.load %arg17[%c0_234, %c0_235, %c0_236] : memref<18x18x16xf32, #tpu.memory_space<vmem>>, vector<18x16x16xf32>
    %c0_237 = arith.constant 0 : index
    %c0_238 = arith.constant 0 : index
    %c0_239 = arith.constant 0 : index
    %222 = vector.load %arg18[%c0_237, %c0_238, %c0_239] : memref<18x16x48xf32, #tpu.memory_space<vmem>>, vector<18x16x16xf32>
    tpu.vector_store %arg18[%c0_237, %c0_238, %c0_239], %221 {strides = array<i32>} : memref<18x16x48xf32, #tpu.memory_space<vmem>>, vector<18x16x16xf32>,
    %c0_240 = arith.constant 0 : index
    %c1_241 = arith.constant 1 : index
    %c0_242 = arith.constant 0 : index
    %223 = vector.load %arg17[%c0_240, %c1_241, %c0_242] : memref<18x18x16xf32, #tpu.memory_space<vmem>>, vector<18x16x16xf32>
    %c0_243 = arith.constant 0 : index
    %c0_244 = arith.constant 0 : index
    %c16 = arith.constant 16 : index
    %224 = vector.load %arg18[%c0_243, %c0_244, %c16] : memref<18x16x48xf32, #tpu.memory_space<vmem>>, vector<18x16x16xf32>
    tpu.vector_store %arg18[%c0_243, %c0_244, %c16], %223 {strides = array<i32>} : memref<18x16x48xf32, #tpu.memory_space<vmem>>, vector<18x16x16xf32>,
    %c0_245 = arith.constant 0 : index
    %c2_246 = arith.constant 2 : index
    %c0_247 = arith.constant 0 : index
    %225 = vector.load %arg17[%c0_245, %c2_246, %c0_247] : memref<18x18x16xf32, #tpu.memory_space<vmem>>, vector<18x16x16xf32>
    %c0_248 = arith.constant 0 : index
    %c0_249 = arith.constant 0 : index
    %c32 = arith.constant 32 : index
    %226 = vector.load %arg18[%c0_248, %c0_249, %c32] : memref<18x16x48xf32, #tpu.memory_space<vmem>>, vector<18x16x16xf32>
    tpu.vector_store %arg18[%c0_248, %c0_249, %c32], %225 {strides = array<i32>} : memref<18x16x48xf32, #tpu.memory_space<vmem>>, vector<18x16x16xf32>,
    %cst_250 = arith.constant 0.000000e+00 : f32
    %227 = vector.broadcast %cst_250 : f32 to vector<128x1xf32>
    %c0_251 = arith.constant 0 : index
    %c0_252 = arith.constant 0 : index
    %c0_253 = arith.constant 0 : index
    %228 = vector.load %arg18[%c0_251, %c0_252, %c0_253] : memref<18x16x48xf32, #tpu.memory_space<vmem>>, vector<8x16x48xf32>
    %229 = vector.shape_cast %228 : vector<8x16x48xf32> to vector<128x48xf32>
    %230 = arith.truncf %229 : vector<128x48xf32> to vector<128x48xbf16>
    %c0_254 = arith.constant 0 : index
    %c0_255 = arith.constant 0 : index
    %c0_256 = arith.constant 0 : index
    %231 = vector.load %arg8[%c0_254, %c0_255, %c0_256] : memref<3x48x1xf32, #tpu.memory_space<vmem>>, vector<1x48x1xf32>
    %232 = vector.shape_cast %231 : vector<1x48x1xf32> to vector<48x1xf32>
    %233 = arith.truncf %232 : vector<48x1xf32> to vector<48x1xbf16>
    %cst_257 = arith.constant dense<0.000000e+00> : vector<128x1xf32>
    %234 = tpu.matmul %230, %233, %cst_257 {dimension_numbers = #tpu.dot_dimension_numbers<[1], [0], [0], [1], [0, 0, 1, 1], [], []>} : vector<128x48xbf16>, vector<48x1xbf16>, vector<128x1xf32> -> vector<128x1xf32>
    %235 = arith.addf %227, %234 : vector<128x1xf32>
    %c1_258 = arith.constant 1 : index
    %c0_259 = arith.constant 0 : index
    %c0_260 = arith.constant 0 : index
    %236 = vector.load %arg18[%c1_258, %c0_259, %c0_260] : memref<18x16x48xf32, #tpu.memory_space<vmem>>, vector<8x16x48xf32>
    %237 = vector.shape_cast %236 : vector<8x16x48xf32> to vector<128x48xf32>
    %238 = arith.truncf %237 : vector<128x48xf32> to vector<128x48xbf16>
    %c1_261 = arith.constant 1 : index
    %c0_262 = arith.constant 0 : index
    %c0_263 = arith.constant 0 : index
    %239 = vector.load %arg8[%c1_261, %c0_262, %c0_263] : memref<3x48x1xf32, #tpu.memory_space<vmem>>, vector<1x48x1xf32>
    %240 = vector.shape_cast %239 : vector<1x48x1xf32> to vector<48x1xf32>
    %241 = arith.truncf %240 : vector<48x1xf32> to vector<48x1xbf16>
    %cst_264 = arith.constant dense<0.000000e+00> : vector<128x1xf32>
    %242 = tpu.matmul %238, %241, %cst_264 {dimension_numbers = #tpu.dot_dimension_numbers<[1], [0], [0], [1], [0, 0, 1, 1], [], []>} : vector<128x48xbf16>, vector<48x1xbf16>, vector<128x1xf32> -> vector<128x1xf32>
    %243 = arith.addf %235, %242 : vector<128x1xf32>
    %c2_265 = arith.constant 2 : index
    %c0_266 = arith.constant 0 : index
    %c0_267 = arith.constant 0 : index
    %244 = vector.load %arg18[%c2_265, %c0_266, %c0_267] : memref<18x16x48xf32, #tpu.memory_space<vmem>>, vector<8x16x48xf32>
    %245 = vector.shape_cast %244 : vector<8x16x48xf32> to vector<128x48xf32>
    %246 = arith.truncf %245 : vector<128x48xf32> to vector<128x48xbf16>
    %c2_268 = arith.constant 2 : index
    %c0_269 = arith.constant 0 : index
    %c0_270 = arith.constant 0 : index
    %247 = vector.load %arg8[%c2_268, %c0_269, %c0_270] : memref<3x48x1xf32, #tpu.memory_space<vmem>>, vector<1x48x1xf32>
    %248 = vector.shape_cast %247 : vector<1x48x1xf32> to vector<48x1xf32>
    %249 = arith.truncf %248 : vector<48x1xf32> to vector<48x1xbf16>
    %cst_271 = arith.constant dense<0.000000e+00> : vector<128x1xf32>
    %250 = tpu.matmul %246, %249, %cst_271 {dimension_numbers = #tpu.dot_dimension_numbers<[1], [0], [0], [1], [0, 0, 1, 1], [], []>} : vector<128x48xbf16>, vector<48x1xbf16>, vector<128x1xf32> -> vector<128x1xf32>
    %251 = arith.addf %243, %250 : vector<128x1xf32>
    %c0_272 = arith.constant 0 : index
    %c0_273 = arith.constant 0 : index
    %252 = vector.load %arg9[%c0_272, %c0_273] : memref<1x1xf32, #tpu.memory_space<vmem>>, vector<1x1xf32>
    %253 = vector.broadcast %252 : vector<1x1xf32> to vector<128x1xf32>
    %254 = arith.addf %251, %253 : vector<128x1xf32>
    %255 = vector.shape_cast %254 : vector<128x1xf32> to vector<1x8x16x1xf32>
    %c0_274 = arith.constant 0 : index
    %c0_275 = arith.constant 0 : index
    %c0_276 = arith.constant 0 : index
    %c0_277 = arith.constant 0 : index
    %256 = vector.load %arg10[%c0_274, %c0_275, %c0_276, %c0_277] : memref<1x16x16x1xf32, #tpu.memory_space<vmem>>, vector<1x8x16x1xf32>
    tpu.vector_store %arg10[%c0_274, %c0_275, %c0_276, %c0_277], %255 {strides = array<i32>} : memref<1x16x16x1xf32, #tpu.memory_space<vmem>>, vector<1x8x16x1xf32>,
    %cst_278 = arith.constant 0.000000e+00 : f32
    %257 = vector.broadcast %cst_278 : f32 to vector<128x1xf32>
    %c8_279 = arith.constant 8 : index
    %c0_280 = arith.constant 0 : index
    %c0_281 = arith.constant 0 : index
    %258 = vector.load %arg18[%c8_279, %c0_280, %c0_281] : memref<18x16x48xf32, #tpu.memory_space<vmem>>, vector<8x16x48xf32>
    %259 = vector.shape_cast %258 : vector<8x16x48xf32> to vector<128x48xf32>
    %260 = arith.truncf %259 : vector<128x48xf32> to vector<128x48xbf16>
    %c0_282 = arith.constant 0 : index
    %c0_283 = arith.constant 0 : index
    %c0_284 = arith.constant 0 : index
    %261 = vector.load %arg8[%c0_282, %c0_283, %c0_284] : memref<3x48x1xf32, #tpu.memory_space<vmem>>, vector<1x48x1xf32>
    %262 = vector.shape_cast %261 : vector<1x48x1xf32> to vector<48x1xf32>
    %263 = arith.truncf %262 : vector<48x1xf32> to vector<48x1xbf16>
    %cst_285 = arith.constant dense<0.000000e+00> : vector<128x1xf32>
    %264 = tpu.matmul %260, %263, %cst_285 {dimension_numbers = #tpu.dot_dimension_numbers<[1], [0], [0], [1], [0, 0, 1, 1], [], []>} : vector<128x48xbf16>, vector<48x1xbf16>, vector<128x1xf32> -> vector<128x1xf32>
    %265 = arith.addf %257, %264 : vector<128x1xf32>
    %c9_286 = arith.constant 9 : index
    %c0_287 = arith.constant 0 : index
    %c0_288 = arith.constant 0 : index
    %266 = vector.load %arg18[%c9_286, %c0_287, %c0_288] : memref<18x16x48xf32, #tpu.memory_space<vmem>>, vector<8x16x48xf32>
    %267 = vector.shape_cast %266 : vector<8x16x48xf32> to vector<128x48xf32>
    %268 = arith.truncf %267 : vector<128x48xf32> to vector<128x48xbf16>
    %c1_289 = arith.constant 1 : index
    %c0_290 = arith.constant 0 : index
    %c0_291 = arith.constant 0 : index
    %269 = vector.load %arg8[%c1_289, %c0_290, %c0_291] : memref<3x48x1xf32, #tpu.memory_space<vmem>>, vector<1x48x1xf32>
    %270 = vector.shape_cast %269 : vector<1x48x1xf32> to vector<48x1xf32>
    %271 = arith.truncf %270 : vector<48x1xf32> to vector<48x1xbf16>
    %cst_292 = arith.constant dense<0.000000e+00> : vector<128x1xf32>
    %272 = tpu.matmul %268, %271, %cst_292 {dimension_numbers = #tpu.dot_dimension_numbers<[1], [0], [0], [1], [0, 0, 1, 1], [], []>} : vector<128x48xbf16>, vector<48x1xbf16>, vector<128x1xf32> -> vector<128x1xf32>
    %273 = arith.addf %265, %272 : vector<128x1xf32>
    %c10_293 = arith.constant 10 : index
    %c0_294 = arith.constant 0 : index
    %c0_295 = arith.constant 0 : index
    %274 = vector.load %arg18[%c10_293, %c0_294, %c0_295] : memref<18x16x48xf32, #tpu.memory_space<vmem>>, vector<8x16x48xf32>
    %275 = vector.shape_cast %274 : vector<8x16x48xf32> to vector<128x48xf32>
    %276 = arith.truncf %275 : vector<128x48xf32> to vector<128x48xbf16>
    %c2_296 = arith.constant 2 : index
    %c0_297 = arith.constant 0 : index
    %c0_298 = arith.constant 0 : index
    %277 = vector.load %arg8[%c2_296, %c0_297, %c0_298] : memref<3x48x1xf32, #tpu.memory_space<vmem>>, vector<1x48x1xf32>
    %278 = vector.shape_cast %277 : vector<1x48x1xf32> to vector<48x1xf32>
    %279 = arith.truncf %278 : vector<48x1xf32> to vector<48x1xbf16>
    %cst_299 = arith.constant dense<0.000000e+00> : vector<128x1xf32>
    %280 = tpu.matmul %276, %279, %cst_299 {dimension_numbers = #tpu.dot_dimension_numbers<[1], [0], [0], [1], [0, 0, 1, 1], [], []>} : vector<128x48xbf16>, vector<48x1xbf16>, vector<128x1xf32> -> vector<128x1xf32>
    %281 = arith.addf %273, %280 : vector<128x1xf32>
    %c0_300 = arith.constant 0 : index
    %c0_301 = arith.constant 0 : index
    %282 = vector.load %arg9[%c0_300, %c0_301] : memref<1x1xf32, #tpu.memory_space<vmem>>, vector<1x1xf32>
    %283 = vector.broadcast %282 : vector<1x1xf32> to vector<128x1xf32>
    %284 = arith.addf %281, %283 : vector<128x1xf32>
    %285 = vector.shape_cast %284 : vector<128x1xf32> to vector<1x8x16x1xf32>
    %c0_302 = arith.constant 0 : index
    %c8_303 = arith.constant 8 : index
    %c0_304 = arith.constant 0 : index
    %c0_305 = arith.constant 0 : index
    %286 = vector.load %arg10[%c0_302, %c8_303, %c0_304, %c0_305] : memref<1x16x16x1xf32, #tpu.memory_space<vmem>>, vector<1x8x16x1xf32>
    tpu.vector_store %arg10[%c0_302, %c8_303, %c0_304, %c0_305], %285 {strides = array<i32>} : memref<1x16x16x1xf32, #tpu.memory_space<vmem>>, vector<1x8x16x1xf32>,
    return
  }
  func.func @transform_0(%arg0: i32) -> (i32, i32, i32, i32) {
    %c0_i32 = arith.constant 0 : i32
    %c0_i32_0 = arith.constant 0 : i32
    %c0_i32_1 = arith.constant 0 : i32
    %c0_i32_2 = arith.constant 0 : i32
    return %arg0, %c0_i32, %c0_i32_0, %c0_i32_1 : i32, i32, i32, i32
  }
  func.func @transform_1(%arg0: i32) -> (i32, i32, i32) {
    %c0_i32 = arith.constant 0 : i32
    %c0_i32_0 = arith.constant 0 : i32
    %c0_i32_1 = arith.constant 0 : i32
    %c0_i32_2 = arith.constant 0 : i32
    return %c0_i32, %c0_i32_0, %c0_i32_1 : i32, i32, i32
  }
  func.func @transform_2(%arg0: i32) -> (i32, i32) {
    %c0_i32 = arith.constant 0 : i32
    %c0_i32_0 = arith.constant 0 : i32
    %c0_i32_1 = arith.constant 0 : i32
    return %c0_i32, %c0_i32_0 : i32, i32
  }
  func.func @transform_3(%arg0: i32) -> (i32, i32, i32) {
    %c0_i32 = arith.constant 0 : i32
    %c0_i32_0 = arith.constant 0 : i32
    %c0_i32_1 = arith.constant 0 : i32
    %c0_i32_2 = arith.constant 0 : i32
    return %c0_i32, %c0_i32_0, %c0_i32_1 : i32, i32, i32
  }
  func.func @transform_4(%arg0: i32) -> (i32, i32) {
    %c0_i32 = arith.constant 0 : i32
    %c0_i32_0 = arith.constant 0 : i32
    %c0_i32_1 = arith.constant 0 : i32
    return %c0_i32, %c0_i32_0 : i32, i32
  }
  func.func @transform_5(%arg0: i32) -> (i32, i32, i32) {
    %c0_i32 = arith.constant 0 : i32
    %c0_i32_0 = arith.constant 0 : i32
    %c0_i32_1 = arith.constant 0 : i32
    %c0_i32_2 = arith.constant 0 : i32
    return %c0_i32, %c0_i32_0, %c0_i32_1 : i32, i32, i32
  }
  func.func @transform_6(%arg0: i32) -> (i32, i32) {
    %c0_i32 = arith.constant 0 : i32
    %c0_i32_0 = arith.constant 0 : i32
    %c0_i32_1 = arith.constant 0 : i32
    return %c0_i32, %c0_i32_0 : i32, i32
  }
  func.func @transform_7(%arg0: i32) -> (i32, i32, i32) {
    %c0_i32 = arith.constant 0 : i32
    %c0_i32_0 = arith.constant 0 : i32
    %c0_i32_1 = arith.constant 0 : i32
    %c0_i32_2 = arith.constant 0 : i32
    return %c0_i32, %c0_i32_0, %c0_i32_1 : i32, i32, i32
  }
  func.func @transform_8(%arg0: i32) -> (i32, i32) {
    %c0_i32 = arith.constant 0 : i32
    %c0_i32_0 = arith.constant 0 : i32
    %c0_i32_1 = arith.constant 0 : i32
    return %c0_i32, %c0_i32_0 : i32, i32
  }
  func.func @transform_9(%arg0: i32) -> (i32, i32, i32, i32) {
    %c0_i32 = arith.constant 0 : i32
    %c0_i32_0 = arith.constant 0 : i32
    %c0_i32_1 = arith.constant 0 : i32
    %c0_i32_2 = arith.constant 0 : i32
    return %arg0, %c0_i32, %c0_i32_0, %c0_i32_1 : i32, i32, i32, i32
  }
}

</mosaic_0001>

<llo_original>
// kernel: a_get_forward.1
$region0: #{a_get_forward.1}
  #allocation0 [shape = 'u32[]', space=smem, size = 0x4, offset = 0x4, fixed_abs, tag = 'smem constant byte address 0x4 - core index']
  #allocation1 [shape = 'u32[144,128]{1,0:T(1,128)}', space=vmem, size = 0x12000, scoped, tag = 'internal scratch']
  #allocation2 [shape = 'f32[18,18,4]{2,1,0:T(8,128)}', space=vmem, size = 0x36000, scoped, tag = 'scratch operand']
  #allocation3 [shape = 'f32[18,16,12]{2,1,0:T(8,128)}', space=vmem, size = 0x24000, scoped, tag = 'scratch operand']
  #allocation4 [shape = 'f32[18,18,128]{2,1,0:T(8,128)}', space=vmem, size = 0x36000, scoped, tag = 'scratch operand']
  #allocation5 [shape = 'f32[18,16,384]{2,1,0:T(8,128)}', space=vmem, size = 0x6c000, scoped, tag = 'scratch operand']
  #allocation6 [shape = 'f32[18,18,64]{2,1,0:T(8,128)}', space=vmem, size = 0x36000, scoped, tag = 'scratch operand']
  #allocation7 [shape = 'f32[18,16,192]{2,1,0:T(8,128)}', space=vmem, size = 0x48000, scoped, tag = 'scratch operand']
  #allocation8 [shape = 'f32[18,18,16]{2,1,0:T(8,128)}', space=vmem, size = 0x36000, scoped, tag = 'scratch operand']
  #allocation9 [shape = 'f32[18,16,48]{2,1,0:T(8,128)}', space=vmem, size = 0x24000, scoped, tag = 'scratch operand']
  #allocation10 [shape = 'f32[1,1]{1,0:T(1,128)S(1)}', space=vmem, size = 0x200, scoped, tag = 'scoped memory for a_get_forward.1']
  %s0 = inlined_call_operand.vmem [shape: f32[2,16,16,4], index: 0, kind: input, shape index: {}]
  %s1 = inlined_call_operand.vmem [shape: f32[3,12,128], index: 1, kind: input, shape index: {}]
  %s2 = inlined_call_operand.vmem [shape: f32[1,128], index: 2, kind: input, shape index: {}]
  %s3 = inlined_call_operand.vmem [shape: f32[3,384,64], index: 3, kind: input, shape index: {}]
  %s4 = inlined_call_operand.vmem [shape: f32[1,64], index: 4, kind: input, shape index: {}]
  %s5 = inlined_call_operand.vmem [shape: f32[3,192,16], index: 5, kind: input, shape index: {}]
  %s6 = inlined_call_operand.vmem [shape: f32[1,16], index: 6, kind: input, shape index: {}]
  %s7 = inlined_call_operand.vmem [shape: f32[3,48,1], index: 7, kind: input, shape index: {}]
  %s8 = inlined_call_operand.<no memory space> [shape: f32[1,1], index: 8, kind: input, shape index: {}]
  %s9 = inlined_call_operand.vmem [shape: f32[2,16,16,1], index: 9, kind: output, shape index: {}]
  %s10 = sld [smem:[#allocation0]]
  $region69: #{a_get_forward.1} parent=0
    _
  %s12 = ssub.s32 1, %s10
  %s13 = scalar_select 0, %s12, %s10
  %v14 = vstv %s8
  %15 = vst [vmem:[#allocation10] sm:$0x1] %v14
  loop: start=0, step=1, limit=4
  $region2: #{a_get_forward.1} parent=0 // loop_pre_header
    _
  $region3: #{a_get_forward.1} parent=0 // loop_header
    %s17 = sphi 0, %s21
    %p18 = scmp.ge.s32.totalorder %s17, 4
    %s27 = sphi 0, %s29
    %s30 = sphi 0, %s27
    %s31 = sphi 0, %s30
    %s47 = sphi 0, %s31
    %s51 = sphi 0, %s51
    %s53 = sphi 0, %s51
    %s54 = sphi 0, %s53
    %s68 = sphi 0, %s54
    %s72 = sphi 0, %s72
    %s74 = sphi 0, %s72
    %s75 = sphi 0, %s74
    %s89 = sphi 0, %s75
    %s93 = sphi 0, %s93
    %s95 = sphi 0, %s93
    %s96 = sphi 0, %s95
    %s110 = sphi 0, %s96
    %s114 = sphi 0, %s114
    %s116 = sphi 0, %s114
    %s117 = sphi 0, %s116
    %s131 = sphi 0, %s117
    %s135 = sphi 0, %s135
    %s137 = sphi 0, %s135
    %s138 = sphi 0, %s137
    %s152 = sphi 0, %s138
    %s156 = sphi 0, %s156
    %s158 = sphi 0, %s156
    %s159 = sphi 0, %s158
    %s173 = sphi 0, %s159
    %s177 = sphi 0, %s177
    %s179 = sphi 0, %s177
    %s180 = sphi 0, %s179
    %s194 = sphi 0, %s180
    %s198 = sphi 0, %s198
    %s200 = sphi 0, %s198
    %s201 = sphi 0, %s200
    %s215 = sphi 0, %s201
    %s221 = sphi 0, %s223
    %s224 = sphi 0, %s221
    %s225 = sphi 0, %s224
    %s241 = sphi 0, %s225
  $region4: #{a_get_forward.1} parent=0 // loop_header_branch
    %20 = sbr.rel (%p18) target = $region8
  $region5: #{a_get_forward.1} parent=0 // loop_body
    %s22 = ssub.s32 %s17, 1
    %s23 = ssub.s32 %s17, 2
    %s24 = sadd.s32 %s17, 1
    %s25 = ssub.s32 %s17, %s24
    %p26 = scmp.eq.s32.totalorder %s25, 0
    %s28 = sadd.s32 %s27, 1
    %s29 = scalar_select %p26, %s27, %s28
    %p32 = pneg %p26
    %p33 = scmp.eq.s32.totalorder %s17, 1
    %p34 = por %p32, %p33
    %p35 = scmp.ne.s32.totalorder %s27, %s30
    %p36 = scmp.eq.s32.totalorder %s17, 0
    %p37 = por %p35, %p36
    %p38 = scmp.ne.s32.totalorder %s27, %s30
    %p39 = scmp.eq.s32.totalorder %s22, 1
    %p40 = por %p38, %p39
    %p41 = scmp.ne.s32.totalorder %s30, %s31
    %p42 = scmp.eq.s32.totalorder %s22, 0
    %p43 = por %p41, %p42
    %p44 = scmp.ne.s32.totalorder %s30, %s31
    %p45 = scmp.eq.s32.totalorder %s23, 1
    %p46 = por %p44, %p45
    %p48 = scmp.ne.s32.totalorder %s31, %s47
    %p49 = scmp.eq.s32.totalorder %s23, 0
    %p50 = por %p48, %p49
    %s52 = sadd.s32 %s51, 1
    %p55 = scmp.eq.s32.totalorder %s17, 1
    %p56 = scmp.ne.s32.totalorder %s51, %s53
    %p57 = scmp.eq.s32.totalorder %s17, 0
    %p58 = por %p56, %p57
    %p59 = scmp.ne.s32.totalorder %s51, %s53
    %p60 = scmp.eq.s32.totalorder %s22, 1
    %p61 = por %p59, %p60
    %p62 = scmp.ne.s32.totalorder %s53, %s54
    %p63 = scmp.eq.s32.totalorder %s22, 0
    %p64 = por %p62, %p63
    %p65 = scmp.ne.s32.totalorder %s53, %s54
    %p66 = scmp.eq.s32.totalorder %s23, 1
    %p67 = por %p65, %p66
    %p69 = scmp.ne.s32.totalorder %s54, %s68
    %p70 = scmp.eq.s32.totalorder %s23, 0
    %p71 = por %p69, %p70
    %s73 = sadd.s32 %s72, 1
    %p76 = scmp.eq.s32.totalorder %s17, 1
    %p77 = scmp.ne.s32.totalorder %s72, %s74
    %p78 = scmp.eq.s32.totalorder %s17, 0
    %p79 = por %p77, %p78
    %p80 = scmp.ne.s32.totalorder %s72, %s74
    %p81 = scmp.eq.s32.totalorder %s22, 1
    %p82 = por %p80, %p81
    %p83 = scmp.ne.s32.totalorder %s74, %s75
    %p84 = scmp.eq.s32.totalorder %s22, 0
    %p85 = por %p83, %p84
    %p86 = scmp.ne.s32.totalorder %s74, %s75
    %p87 = scmp.eq.s32.totalorder %s23, 1
    %p88 = por %p86, %p87
    %p90 = scmp.ne.s32.totalorder %s75, %s89
    %p91 = scmp.eq.s32.totalorder %s23, 0
    %p92 = por %p90, %p91
    %s94 = sadd.s32 %s93, 1
    %p97 = scmp.eq.s32.totalorder %s17, 1
    %p98 = scmp.ne.s32.totalorder %s93, %s95
    %p99 = scmp.eq.s32.totalorder %s17, 0
    %p100 = por %p98, %p99
    %p101 = scmp.ne.s32.totalorder %s93, %s95
    %p102 = scmp.eq.s32.totalorder %s22, 1
    %p103 = por %p101, %p102
    %p104 = scmp.ne.s32.totalorder %s95, %s96
    %p105 = scmp.eq.s32.totalorder %s22, 0
    %p106 = por %p104, %p105
    %p107 = scmp.ne.s32.totalorder %s95, %s96
    %p108 = scmp.eq.s32.totalorder %s23, 1
    %p109 = por %p107, %p108
    %p111 = scmp.ne.s32.totalorder %s96, %s110
    %p112 = scmp.eq.s32.totalorder %s23, 0
    %p113 = por %p111, %p112
    %s115 = sadd.s32 %s114, 1
    %p118 = scmp.eq.s32.totalorder %s17, 1
    %p119 = scmp.ne.s32.totalorder %s114, %s116
    %p120 = scmp.eq.s32.totalorder %s17, 0
    %p121 = por %p119, %p120
    %p122 = scmp.ne.s32.totalorder %s114, %s116
    %p123 = scmp.eq.s32.totalorder %s22, 1
    %p124 = por %p122, %p123
    %p125 = scmp.ne.s32.totalorder %s116, %s117
    %p126 = scmp.eq.s32.totalorder %s22, 0
    %p127 = por %p125, %p126
    %p128 = scmp.ne.s32.totalorder %s116, %s117
    %p129 = scmp.eq.s32.totalorder %s23, 1
    %p130 = por %p128, %p129
    %p132 = scmp.ne.s32.totalorder %s117, %s131
    %p133 = scmp.eq.s32.totalorder %s23, 0
    %p134 = por %p132, %p133
    %s136 = sadd.s32 %s135, 1
    %p139 = scmp.eq.s32.totalorder %s17, 1
    %p140 = scmp.ne.s32.totalorder %s135, %s137
    %p141 = scmp.eq.s32.totalorder %s17, 0
    %p142 = por %p140, %p141
    %p143 = scmp.ne.s32.totalorder %s135, %s137
    %p144 = scmp.eq.s32.totalorder %s22, 1
    %p145 = por %p143, %p144
    %p146 = scmp.ne.s32.totalorder %s137, %s138
    %p147 = scmp.eq.s32.totalorder %s22, 0
    %p148 = por %p146, %p147
    %p149 = scmp.ne.s32.totalorder %s137, %s138
    %p150 = scmp.eq.s32.totalorder %s23, 1
    %p151 = por %p149, %p150
    %p153 = scmp.ne.s32.totalorder %s138, %s152
    %p154 = scmp.eq.s32.totalorder %s23, 0
    %p155 = por %p153, %p154
    %s157 = sadd.s32 %s156, 1
    %p160 = scmp.eq.s32.totalorder %s17, 1
    %p161 = scmp.ne.s32.totalorder %s156, %s158
    %p162 = scmp.eq.s32.totalorder %s17, 0
    %p163 = por %p161, %p162
    %p164 = scmp.ne.s32.totalorder %s156, %s158
    %p165 = scmp.eq.s32.totalorder %s22, 1
    %p166 = por %p164, %p165
    %p167 = scmp.ne.s32.totalorder %s158, %s159
    %p168 = scmp.eq.s32.totalorder %s22, 0
    %p169 = por %p167, %p168
    %p170 = scmp.ne.s32.totalorder %s158, %s159
    %p171 = scmp.eq.s32.totalorder %s23, 1
    %p172 = por %p170, %p171
    %p174 = scmp.ne.s32.totalorder %s159, %s173
    %p175 = scmp.eq.s32.totalorder %s23, 0
    %p176 = por %p174, %p175
    %s178 = sadd.s32 %s177, 1
    %p181 = scmp.eq.s32.totalorder %s17, 1
    %p182 = scmp.ne.s32.totalorder %s177, %s179
    %p183 = scmp.eq.s32.totalorder %s17, 0
    %p184 = por %p182, %p183
    %p185 = scmp.ne.s32.totalorder %s177, %s179
    %p186 = scmp.eq.s32.totalorder %s22, 1
    %p187 = por %p185, %p186
    %p188 = scmp.ne.s32.totalorder %s179, %s180
    %p189 = scmp.eq.s32.totalorder %s22, 0
    %p190 = por %p188, %p189
    %p191 = scmp.ne.s32.totalorder %s179, %s180
    %p192 = scmp.eq.s32.totalorder %s23, 1
    %p193 = por %p191, %p192
    %p195 = scmp.ne.s32.totalorder %s180, %s194
    %p196 = scmp.eq.s32.totalorder %s23, 0
    %p197 = por %p195, %p196
    %s199 = sadd.s32 %s198, 1
    %p202 = scmp.eq.s32.totalorder %s17, 1
    %p203 = scmp.ne.s32.totalorder %s198, %s200
    %p204 = scmp.eq.s32.totalorder %s17, 0
    %p205 = por %p203, %p204
    %p206 = scmp.ne.s32.totalorder %s198, %s200
    %p207 = scmp.eq.s32.totalorder %s22, 1
    %p208 = por %p206, %p207
    %p209 = scmp.ne.s32.totalorder %s200, %s201
    %p210 = scmp.eq.s32.totalorder %s22, 0
    %p211 = por %p209, %p210
    %p212 = scmp.ne.s32.totalorder %s200, %s201
    %p213 = scmp.eq.s32.totalorder %s23, 1
    %p214 = por %p212, %p213
    %p216 = scmp.ne.s32.totalorder %s201, %s215
    %p217 = scmp.eq.s32.totalorder %s23, 0
    %p218 = por %p216, %p217
    %s219 = ssub.s32 %s17, %s24
    %p220 = scmp.eq.s32.totalorder %s219, 0
    %s222 = sadd.s32 %s221, 1
    %s223 = scalar_select %p220, %s221, %s222
    %p226 = pneg %p220
    %p227 = scmp.eq.s32.totalorder %s17, 1
    %p228 = por %p226, %p227
    %p229 = scmp.ne.s32.totalorder %s221, %s224
    %p230 = scmp.eq.s32.totalorder %s17, 0
    %p231 = por %p229, %p230
    %p232 = scmp.ne.s32.totalorder %s221, %s224
    %p233 = scmp.eq.s32.totalorder %s22, 1
    %p234 = por %p232, %p233
    %p235 = scmp.ne.s32.totalorder %s224, %s225
    %p236 = scmp.eq.s32.totalorder %s22, 0
    %p237 = por %p235, %p236
    %p238 = scmp.ne.s32.totalorder %s224, %s225
    %p239 = scmp.eq.s32.totalorder %s23, 1
    %p240 = por %p238, %p239
    %p242 = scmp.ne.s32.totalorder %s225, %s241
    %p243 = scmp.eq.s32.totalorder %s23, 0
    %p244 = por %p242, %p243
    %p245 = scmp.le.s32.totalorder 1, %s17
    %p246 = scmp.lt.s32.totalorder %s17, 3
    %p247 = pnand %p245, %p246
    %p248 = pneg %p247
    // Predicated region
    $region9: #{a_get_forward.1} parent=5 // pred_check
      _
    $region10: #{a_get_forward.1} parent=5 // pred_check_branch
      %250 = sbr.rel (%p247) target = $region12
    $region11: #{a_get_forward.1} parent=5 // pred_region
      %s251 = ssub.s32 %s17, 1
      // Predicated region
      $region13: #{a_get_forward.1} parent=11 // pred_check
        %p252 = pneg %p64
      $region14: #{a_get_forward.1} parent=11 // pred_check_branch
        %254 = sbr.rel (%p252) target = $region16
      $region15: #{a_get_forward.1} parent=11 // pred_region
        _
      $region16: #{a_get_forward.1} parent=11 // pred_fallthru
        _
      // Predicated region
      $region17: #{a_get_forward.1} parent=11 // pred_check
        %p255 = pneg %p85
      $region18: #{a_get_forward.1} parent=11 // pred_check_branch
        %257 = sbr.rel (%p255) target = $region20
      $region19: #{a_get_forward.1} parent=11 // pred_region
        _
      $region20: #{a_get_forward.1} parent=11 // pred_fallthru
        _
      // Predicated region
      $region21: #{a_get_forward.1} parent=11 // pred_check
        %p258 = pneg %p106
      $region22: #{a_get_forward.1} parent=11 // pred_check_branch
        %260 = sbr.rel (%p258) target = $region24
      $region23: #{a_get_forward.1} parent=11 // pred_region
        _
      $region24: #{a_get_forward.1} parent=11 // pred_fallthru
        _
      // Predicated region
      $region25: #{a_get_forward.1} parent=11 // pred_check
        %p261 = pneg %p127
      $region26: #{a_get_forward.1} parent=11 // pred_check_branch
        %263 = sbr.rel (%p261) target = $region28
      $region27: #{a_get_forward.1} parent=11 // pred_region
        _
      $region28: #{a_get_forward.1} parent=11 // pred_fallthru
        _
      // Predicated region
      $region29: #{a_get_forward.1} parent=11 // pred_check
        %p264 = pneg %p148
      $region30: #{a_get_forward.1} parent=11 // pred_check_branch
        %266 = sbr.rel (%p264) target = $region32
      $region31: #{a_get_forward.1} parent=11 // pred_region
        _
      $region32: #{a_get_forward.1} parent=11 // pred_fallthru
        _
      // Predicated region
      $region33: #{a_get_forward.1} parent=11 // pred_check
        %p267 = pneg %p169
      $region34: #{a_get_forward.1} parent=11 // pred_check_branch
        %269 = sbr.rel (%p267) target = $region36
      $region35: #{a_get_forward.1} parent=11 // pred_region
        _
      $region36: #{a_get_forward.1} parent=11 // pred_fallthru
        _
      // Predicated region
      $region37: #{a_get_forward.1} parent=11 // pred_check
        %p270 = pneg %p190
      $region38: #{a_get_forward.1} parent=11 // pred_check_branch
        %272 = sbr.rel (%p270) target = $region40
      $region39: #{a_get_forward.1} parent=11 // pred_region
        _
      $region40: #{a_get_forward.1} parent=11 // pred_fallthru
        _
      // Predicated region
      $region41: #{a_get_forward.1} parent=11 // pred_check
        %p273 = pneg %p211
      $region42: #{a_get_forward.1} parent=11 // pred_check_branch
        %275 = sbr.rel (%p273) target = $region44
      $region43: #{a_get_forward.1} parent=11 // pred_region
        _
      $region44: #{a_get_forward.1} parent=11 // pred_fallthru
        _
    $region12: #{a_get_forward.1} parent=5 // pred_fallthru
      _
    %p276 = scmp.lt.s32.totalorder %s17, 2
    // Predicated region
    $region45: #{a_get_forward.1} parent=5 // pred_check
      %p277 = pneg %p276
    $region46: #{a_get_forward.1} parent=5 // pred_check_branch
      %279 = sbr.rel (%p277) target = $region48
    $region47: #{a_get_forward.1} parent=5 // pred_region
      // Predicated region
      $region49: #{a_get_forward.1} parent=47 // pred_check
        %p280 = pneg %p37
      $region50: #{a_get_forward.1} parent=47 // pred_check_branch
        %282 = sbr.rel (%p280) target = $region52
      $region51: #{a_get_forward.1} parent=47 // pred_region
        %p283 = scmp.lt.s32.totalorder %s17, 1
        %s284 = scalar_select %p283, %s17, 1
        %s285 = smul.addr %s284, 32
        %s286 = smul.addr %s285, 8
        %s287 = scalar_lea.vmem %s0, %s286
      $region52: #{a_get_forward.1} parent=47 // pred_fallthru
        _
    $region48: #{a_get_forward.1} parent=5 // pred_fallthru
      _
    %p288 = scmp.le.s32.totalorder 1, %s17
    %p289 = scmp.lt.s32.totalorder %s17, 3
    %p290 = pnand %p288, %p289
    %p291 = pneg %p290
    // Predicated region
    $region53: #{a_get_forward.1} parent=5 // pred_check
      _
    $region54: #{a_get_forward.1} parent=5 // pred_check_branch
      %293 = sbr.rel (%p290) target = $region56
    $region55: #{a_get_forward.1} parent=5 // pred_region
      %s294 = ssub.s32 %s17, 1
      %p295 = scmp.lt.s32.totalorder %s22, 1
      %s296 = scalar_select %p295, %s22, 1
      %s297 = smul.addr %s296, 32
      %s298 = smul.addr %s297, 8
      %s299 = scalar_lea.vmem %s0, %s298
      %p300 = pneg %p43
      %p301 = pneg %p40
      %p302 = pneg %p64
      %p303 = pneg %p61
      %p304 = pneg %p85
      %p305 = pneg %p82
      %p306 = pneg %p106
      %p307 = pneg %p103
      %p308 = pneg %p127
      %p309 = pneg %p124
      %p310 = pneg %p148
      %p311 = pneg %p145
      %p312 = pneg %p169
      %p313 = pneg %p166
      %p314 = pneg %p190
      %p315 = pneg %p187
      %p316 = pneg %p211
      %p317 = pneg %p208
      %p318 = pneg %p237
      %p319 = pneg %p234
      %p320 = scmp.lt.s32.totalorder %s22, 1
      %s321 = scalar_select %p320, %s22, 1
      %s322 = smul.addr %s321, 32
      %s323 = smul.addr %s322, 8
      %s324 = scalar_lea.vmem %s9, %s323
      %p325 = scmp.lt.s32.totalorder %s22, 1
      %s326 = scalar_select %p325, %s22, 1
      %s327 = smul.addr %s326, 32
      %s328 = smul.addr %s327, 8
      %s329 = scalar_lea.vmem %s0, %s328
      %p330 = scmp.lt.s32.totalorder %s22, 1
      %s331 = scalar_select %p330, %s22, 1
      %s332 = smul.addr %s331, 32
      %s333 = smul.addr %s332, 8
      %s334 = scalar_lea.vmem %s9, %s333
      %vm336 = vcmask 31744
      %337 = vst.msk [vmem:[#allocation2] sm:$0xff] %vm336, 0.0
      %338 = vst.msk [vmem:[#allocation2 + $0x8] sm:$0xff] %vm336, 0.0
      %vm339 = vcmask 25600
      %340 = vst.msk [vmem:[#allocation2 + $0x10] sm:$0x3] %vm339, 0.0
      %341 = vst.msk [vmem:[#allocation2 + $0x18] sm:$0xff] %vm336, 0.0
      %342 = vst.msk [vmem:[#allocation2 + $0x20] sm:$0xff] %vm336, 0.0
      %343 = vst.msk [vmem:[#allocation2 + $0x28] sm:$0x3] %vm339, 0.0
      %344 = vst.msk [vmem:[#allocation2 + $0x30] sm:$0xff] %vm336, 0.0
      %345 = vst.msk [vmem:[#allocation2 + $0x38] sm:$0xff] %vm336, 0.0
      %346 = vst.msk [vmem:[#allocation2 + $0x40] sm:$0x3] %vm339, 0.0
      %347 = vst.msk [vmem:[#allocation2 + $0x48] sm:$0xff] %vm336, 0.0
      %348 = vst.msk [vmem:[#allocation2 + $0x50] sm:$0xff] %vm336, 0.0
      %349 = vst.msk [vmem:[#allocation2 + $0x58] sm:$0x3] %vm339, 0.0
      %350 = vst.msk [vmem:[#allocation2 + $0x60] sm:$0xff] %vm336, 0.0
      %351 = vst.msk [vmem:[#allocation2 + $0x68] sm:$0xff] %vm336, 0.0
      %352 = vst.msk [vmem:[#allocation2 + $0x70] sm:$0x3] %vm339, 0.0
      %353 = vst.msk [vmem:[#allocation2 + $0x78] sm:$0xff] %vm336, 0.0
      %354 = vst.msk [vmem:[#allocation2 + $0x80] sm:$0xff] %vm336, 0.0
      %355 = vst.msk [vmem:[#allocation2 + $0x88] sm:$0x3] %vm339, 0.0
      %356 = vst.msk [vmem:[#allocation2 + $0x90] sm:$0xff] %vm336, 0.0
      %357 = vst.msk [vmem:[#allocation2 + $0x98] sm:$0xff] %vm336, 0.0
      %358 = vst.msk [vmem:[#allocation2 + $0xa0] sm:$0x3] %vm339, 0.0
      %359 = vst.msk [vmem:[#allocation2 + $0xa8] sm:$0xff] %vm336, 0.0
      %360 = vst.msk [vmem:[#allocation2 + $0xb0] sm:$0xff] %vm336, 0.0
      %361 = vst.msk [vmem:[#allocation2 + $0xb8] sm:$0x3] %vm339, 0.0
      %362 = vst.msk [vmem:[#allocation2 + $0xc0] sm:$0xff] %vm336, 0.0
      %363 = vst.msk [vmem:[#allocation2 + $0xc8] sm:$0xff] %vm336, 0.0
      %364 = vst.msk [vmem:[#allocation2 + $0xd0] sm:$0x3] %vm339, 0.0
      %365 = vst.msk [vmem:[#allocation2 + $0xd8] sm:$0xff] %vm336, 0.0
      %366 = vst.msk [vmem:[#allocation2 + $0xe0] sm:$0xff] %vm336, 0.0
      %367 = vst.msk [vmem:[#allocation2 + $0xe8] sm:$0x3] %vm339, 0.0
      %368 = vst.msk [vmem:[#allocation2 + $0xf0] sm:$0xff] %vm336, 0.0
      %369 = vst.msk [vmem:[#allocation2 + $0xf8] sm:$0xff] %vm336, 0.0
      %370 = vst.msk [vmem:[#allocation2 + $0x100] sm:$0x3] %vm339, 0.0
      %371 = vst.msk [vmem:[#allocation2 + $0x108] sm:$0xff] %vm336, 0.0
      %372 = vst.msk [vmem:[#allocation2 + $0x110] sm:$0xff] %vm336, 0.0
      %373 = vst.msk [vmem:[#allocation2 + $0x118] sm:$0x3] %vm339, 0.0
      %374 = vst.msk [vmem:[#allocation2 + $0x120] sm:$0xff] %vm336, 0.0
      %375 = vst.msk [vmem:[#allocation2 + $0x128] sm:$0xff] %vm336, 0.0
      %376 = vst.msk [vmem:[#allocation2 + $0x130] sm:$0x3] %vm339, 0.0
      %377 = vst.msk [vmem:[#allocation2 + $0x138] sm:$0xff] %vm336, 0.0
      %378 = vst.msk [vmem:[#allocation2 + $0x140] sm:$0xff] %vm336, 0.0
      %379 = vst.msk [vmem:[#allocation2 + $0x148] sm:$0x3] %vm339, 0.0
      %380 = vst.msk [vmem:[#allocation2 + $0x150] sm:$0xff] %vm336, 0.0
      %381 = vst.msk [vmem:[#allocation2 + $0x158] sm:$0xff] %vm336, 0.0
      %382 = vst.msk [vmem:[#allocation2 + $0x160] sm:$0x3] %vm339, 0.0
      %383 = vst.msk [vmem:[#allocation2 + $0x168] sm:$0xff] %vm336, 0.0
      %384 = vst.msk [vmem:[#allocation2 + $0x170] sm:$0xff] %vm336, 0.0
      %385 = vst.msk [vmem:[#allocation2 + $0x178] sm:$0x3] %vm339, 0.0
      %386 = vst.msk [vmem:[#allocation2 + $0x180] sm:$0xff] %vm336, 0.0
      %387 = vst.msk [vmem:[#allocation2 + $0x188] sm:$0xff] %vm336, 0.0
      %388 = vst.msk [vmem:[#allocation2 + $0x190] sm:$0x3] %vm339, 0.0
      %389 = vst.msk [vmem:[#allocation2 + $0x198] sm:$0xff] %vm336, 0.0
      %390 = vst.msk [vmem:[#allocation2 + $0x1a0] sm:$0xff] %vm336, 0.0
      %391 = vst.msk [vmem:[#allocation2 + $0x1a8] sm:$0x3] %vm339, 0.0
      %v392 = vld [vmem:[%s329] sm:$0xff]
      %v393 = vld [vmem:[%s329 + $0x8] sm:$0xff]
      %v394 = vld [vmem:[%s329 + $0x10] sm:$0xff]
      %v395 = vld [vmem:[%s329 + $0x18] sm:$0xff]
      %v396 = vld [vmem:[%s329 + $0x20] sm:$0xff]
      %v397 = vld [vmem:[%s329 + $0x28] sm:$0xff]
      %v398 = vld [vmem:[%s329 + $0x30] sm:$0xff]
      %v399 = vld [vmem:[%s329 + $0x38] sm:$0xff]
      %v400 = vld [vmem:[%s329 + $0x40] sm:$0xff]
      %v401 = vld [vmem:[%s329 + $0x48] sm:$0xff]
      %v402 = vld [vmem:[%s329 + $0x50] sm:$0xff]
      %v403 = vld [vmem:[%s329 + $0x58] sm:$0xff]
      %v404 = vld [vmem:[%s329 + $0x60] sm:$0xff]
      %v405 = vld [vmem:[%s329 + $0x68] sm:$0xff]
      %v406 = vld [vmem:[%s329 + $0x70] sm:$0xff]
      %v407 = vld [vmem:[%s329 + $0x78] sm:$0xff]
      %v408 = vld [vmem:[%s329 + $0x80] sm:$0xff]
      %v409 = vld [vmem:[%s329 + $0x88] sm:$0xff]
      %v410 = vld [vmem:[%s329 + $0x90] sm:$0xff]
      %v411 = vld [vmem:[%s329 + $0x98] sm:$0xff]
      %v412 = vld [vmem:[%s329 + $0xa0] sm:$0xff]
      %v413 = vld [vmem:[%s329 + $0xa8] sm:$0xff]
      %v414 = vld [vmem:[%s329 + $0xb0] sm:$0xff]
      %v415 = vld [vmem:[%s329 + $0xb8] sm:$0xff]
      %v416 = vld [vmem:[%s329 + $0xc0] sm:$0xff]
      %v417 = vld [vmem:[%s329 + $0xc8] sm:$0xff]
      %v418 = vld [vmem:[%s329 + $0xd0] sm:$0xff]
      %v419 = vld [vmem:[%s329 + $0xd8] sm:$0xff]
      %v420 = vld [vmem:[%s329 + $0xe0] sm:$0xff]
      %v421 = vld [vmem:[%s329 + $0xe8] sm:$0xff]
      %v422 = vld [vmem:[%s329 + $0xf0] sm:$0xff]
      %v423 = vld [vmem:[%s329 + $0xf8] sm:$0xff]
      %s424 = scalar_lea.vmem [#allocation2], 24
      %425 = vst.msk [vmem:[%s424 + $0x1] sm:$0xff] %vm336, %v392
      %426 = vst.msk [vmem:[%s424 + $0x9] sm:$0xff] %vm336, %v393
      %427 = vst.msk [vmem:[%s424 + $0x19] sm:$0xff] %vm336, %v394
      %428 = vst.msk [vmem:[%s424 + $0x21] sm:$0xff] %vm336, %v395
      %429 = vst.msk [vmem:[%s424 + $0x31] sm:$0xff] %vm336, %v396
      %430 = vst.msk [vmem:[%s424 + $0x39] sm:$0xff] %vm336, %v397
      %431 = vst.msk [vmem:[%s424 + $0x49] sm:$0xff] %vm336, %v398
      %432 = vst.msk [vmem:[%s424 + $0x51] sm:$0xff] %vm336, %v399
      %433 = vst.msk [vmem:[%s424 + $0x61] sm:$0xff] %vm336, %v400
      %434 = vst.msk [vmem:[%s424 + $0x69] sm:$0xff] %vm336, %v401
      %435 = vst.msk [vmem:[%s424 + $0x79] sm:$0xff] %vm336, %v402
      %436 = vst.msk [vmem:[%s424 + $0x81] sm:$0xff] %vm336, %v403
      %437 = vst.msk [vmem:[%s424 + $0x91] sm:$0xff] %vm336, %v404
      %438 = vst.msk [vmem:[%s424 + $0x99] sm:$0xff] %vm336, %v405
      %439 = vst.msk [vmem:[%s424 + $0xa9] sm:$0xff] %vm336, %v406
      %440 = vst.msk [vmem:[%s424 + $0xb1] sm:$0xff] %vm336, %v407
      %441 = vst.msk [vmem:[%s424 + $0xc1] sm:$0xff] %vm336, %v408
      %442 = vst.msk [vmem:[%s424 + $0xc9] sm:$0xff] %vm336, %v409
      %443 = vst.msk [vmem:[%s424 + $0xd9] sm:$0xff] %vm336, %v410
      %444 = vst.msk [vmem:[%s424 + $0xe1] sm:$0xff] %vm336, %v411
      %445 = vst.msk [vmem:[%s424 + $0xf1] sm:$0xff] %vm336, %v412
      %446 = vst.msk [vmem:[%s424 + $0xf9] sm:$0xff] %vm336, %v413
      %447 = vst.msk [vmem:[%s424 + $0x109] sm:$0xff] %vm336, %v414
      %448 = vst.msk [vmem:[%s424 + $0x111] sm:$0xff] %vm336, %v415
      %449 = vst.msk [vmem:[%s424 + $0x121] sm:$0xff] %vm336, %v416
      %450 = vst.msk [vmem:[%s424 + $0x129] sm:$0xff] %vm336, %v417
      %451 = vst.msk [vmem:[%s424 + $0x139] sm:$0xff] %vm336, %v418
      %452 = vst.msk [vmem:[%s424 + $0x141] sm:$0xff] %vm336, %v419
      %453 = vst.msk [vmem:[%s424 + $0x151] sm:$0xff] %vm336, %v420
      %454 = vst.msk [vmem:[%s424 + $0x159] sm:$0xff] %vm336, %v421
      %455 = vst.msk [vmem:[%s424 + $0x169] sm:$0xff] %vm336, %v422
      %456 = vst.msk [vmem:[%s424 + $0x171] sm:$0xff] %vm336, %v423
      %v457 = vld [vmem:[#allocation2] sm:$0xff]
      %v458 = vld [vmem:[#allocation2 + $0x8] sm:$0xff]
      %v459 = vld [vmem:[#allocation2 + $0x18] sm:$0xff]
      %v460 = vld [vmem:[#allocation2 + $0x20] sm:$0xff]
      %v461 = vld [vmem:[#allocation2 + $0x30] sm:$0xff]
      %v462 = vld [vmem:[#allocation2 + $0x38] sm:$0xff]
      %v463 = vld [vmem:[#allocation2 + $0x48] sm:$0xff]
      %v464 = vld [vmem:[#allocation2 + $0x50] sm:$0xff]
      %v465 = vld [vmem:[#allocation2 + $0x60] sm:$0xff]
      %v466 = vld [vmem:[#allocation2 + $0x68] sm:$0xff]
      %v467 = vld [vmem:[#allocation2 + $0x78] sm:$0xff]
      %v468 = vld [vmem:[#allocation2 + $0x80] sm:$0xff]
      %v469 = vld [vmem:[#allocation2 + $0x90] sm:$0xff]
      %v470 = vld [vmem:[#allocation2 + $0x98] sm:$0xff]
      %v471 = vld [vmem:[#allocation2 + $0xa8] sm:$0xff]
      %v472 = vld [vmem:[#allocation2 + $0xb0] sm:$0xff]
      %v473 = vld [vmem:[#allocation2 + $0xc0] sm:$0xff]
      %v474 = vld [vmem:[#allocation2 + $0xc8] sm:$0xff]
      %v475 = vld [vmem:[#allocation2 + $0xd8] sm:$0xff]
      %v476 = vld [vmem:[#allocation2 + $0xe0] sm:$0xff]
      %v477 = vld [vmem:[#allocation2 + $0xf0] sm:$0xff]
      %v478 = vld [vmem:[#allocation2 + $0xf8] sm:$0xff]
      %v479 = vld [vmem:[#allocation2 + $0x108] sm:$0xff]
      %v480 = vld [vmem:[#allocation2 + $0x110] sm:$0xff]
      %v481 = vld [vmem:[#allocation2 + $0x120] sm:$0xff]
      %v482 = vld [vmem:[#allocation2 + $0x128] sm:$0xff]
      %v483 = vld [vmem:[#allocation2 + $0x138] sm:$0xff]
      %v484 = vld [vmem:[#allocation2 + $0x140] sm:$0xff]
      %v485 = vld [vmem:[#allocation2 + $0x150] sm:$0xff]
      %v486 = vld [vmem:[#allocation2 + $0x158] sm:$0xff]
      %v487 = vld [vmem:[#allocation2 + $0x168] sm:$0xff]
      %v488 = vld [vmem:[#allocation2 + $0x170] sm:$0xff]
      %v489 = vld [vmem:[#allocation2 + $0x180] sm:$0xff]
      %v490 = vld [vmem:[#allocation2 + $0x188] sm:$0xff]
      %v491 = vld [vmem:[#allocation2 + $0x198] sm:$0xff]
      %v492 = vld [vmem:[#allocation2 + $0x1a0] sm:$0xff]
      %493 = vst.msk [vmem:[#allocation3] sm:$0xff] %vm336, %v457
      %494 = vst.msk [vmem:[#allocation3 + $0x8] sm:$0xff] %vm336, %v458
      %495 = vst.msk [vmem:[#allocation3 + $0x10] sm:$0xff] %vm336, %v459
      %496 = vst.msk [vmem:[#allocation3 + $0x18] sm:$0xff] %vm336, %v460
      %497 = vst.msk [vmem:[#allocation3 + $0x20] sm:$0xff] %vm336, %v461
      %498 = vst.msk [vmem:[#allocation3 + $0x28] sm:$0xff] %vm336, %v462
      %499 = vst.msk [vmem:[#allocation3 + $0x30] sm:$0xff] %vm336, %v463
      %500 = vst.msk [vmem:[#allocation3 + $0x38] sm:$0xff] %vm336, %v464
      %501 = vst.msk [vmem:[#allocation3 + $0x40] sm:$0xff] %vm336, %v465
      %502 = vst.msk [vmem:[#allocation3 + $0x48] sm:$0xff] %vm336, %v466
      %503 = vst.msk [vmem:[#allocation3 + $0x50] sm:$0xff] %vm336, %v467
      %504 = vst.msk [vmem:[#allocation3 + $0x58] sm:$0xff] %vm336, %v468
      %505 = vst.msk [vmem:[#allocation3 + $0x60] sm:$0xff] %vm336, %v469
      %506 = vst.msk [vmem:[#allocation3 + $0x68] sm:$0xff] %vm336, %v470
      %507 = vst.msk [vmem:[#allocation3 + $0x70] sm:$0xff] %vm336, %v471
      %508 = vst.msk [vmem:[#allocation3 + $0x78] sm:$0xff] %vm336, %v472
      %509 = vst.msk [vmem:[#allocation3 + $0x80] sm:$0xff] %vm336, %v473
      %510 = vst.msk [vmem:[#allocation3 + $0x88] sm:$0xff] %vm336, %v474
      %511 = vst.msk [vmem:[#allocation3 + $0x90] sm:$0xff] %vm336, %v475
      %512 = vst.msk [vmem:[#allocation3 + $0x98] sm:$0xff] %vm336, %v476
      %513 = vst.msk [vmem:[#allocation3 + $0xa0] sm:$0xff] %vm336, %v477
      %514 = vst.msk [vmem:[#allocation3 + $0xa8] sm:$0xff] %vm336, %v478
      %515 = vst.msk [vmem:[#allocation3 + $0xb0] sm:$0xff] %vm336, %v479
      %516 = vst.msk [vmem:[#allocation3 + $0xb8] sm:$0xff] %vm336, %v480
      %517 = vst.msk [vmem:[#allocation3 + $0xc0] sm:$0xff] %vm336, %v481
      %518 = vst.msk [vmem:[#allocation3 + $0xc8] sm:$0xff] %vm336, %v482
      %519 = vst.msk [vmem:[#allocation3 + $0xd0] sm:$0xff] %vm336, %v483
      %520 = vst.msk [vmem:[#allocation3 + $0xd8] sm:$0xff] %vm336, %v484
      %521 = vst.msk [vmem:[#allocation3 + $0xe0] sm:$0xff] %vm336, %v485
      %522 = vst.msk [vmem:[#allocation3 + $0xe8] sm:$0xff] %vm336, %v486
      %523 = vst.msk [vmem:[#allocation3 + $0xf0] sm:$0xff] %vm336, %v487
      %524 = vst.msk [vmem:[#allocation3 + $0xf8] sm:$0xff] %vm336, %v488
      %525 = vst.msk [vmem:[#allocation3 + $0x100] sm:$0xff] %vm336, %v489
      %526 = vst.msk [vmem:[#allocation3 + $0x108] sm:$0xff] %vm336, %v490
      %527 = vst.msk [vmem:[#allocation3 + $0x110] sm:$0xff] %vm336, %v491
      %528 = vst.msk [vmem:[#allocation3 + $0x118] sm:$0xff] %vm336, %v492
      %v529 = vld [vmem:[#allocation2 + $0x1] sm:$0xff]
      %v530 = vld [vmem:[#allocation2 + $0x9] sm:$0xff]
      %v531 = vld [vmem:[#allocation2 + $0x19] sm:$0xff]
      %v532 = vld [vmem:[#allocation2 + $0x21] sm:$0xff]
      %v533 = vld [vmem:[#allocation2 + $0x31] sm:$0xff]
      %v534 = vld [vmem:[#allocation2 + $0x39] sm:$0xff]
      %v535 = vld [vmem:[#allocation2 + $0x49] sm:$0xff]
      %v536 = vld [vmem:[#allocation2 + $0x51] sm:$0xff]
      %v537 = vld [vmem:[#allocation2 + $0x61] sm:$0xff]
      %v538 = vld [vmem:[#allocation2 + $0x69] sm:$0xff]
      %v539 = vld [vmem:[#allocation2 + $0x79] sm:$0xff]
      %v540 = vld [vmem:[#allocation2 + $0x81] sm:$0xff]
      %v541 = vld [vmem:[#allocation2 + $0x91] sm:$0xff]
      %v542 = vld [vmem:[#allocation2 + $0x99] sm:$0xff]
      %v543 = vld [vmem:[#allocation2 + $0xa9] sm:$0xff]
      %v544 = vld [vmem:[#allocation2 + $0xb1] sm:$0xff]
      %v545 = vld [vmem:[#allocation2 + $0xc1] sm:$0xff]
      %v546 = vld [vmem:[#allocation2 + $0xc9] sm:$0xff]
      %v547 = vld [vmem:[#allocation2 + $0xd9] sm:$0xff]
      %v548 = vld [vmem:[#allocation2 + $0xe1] sm:$0xff]
      %v549 = vld [vmem:[#allocation2 + $0xf1] sm:$0xff]
      %v550 = vld [vmem:[#allocation2 + $0xf9] sm:$0xff]
      %v551 = vld [vmem:[#allocation2 + $0x109] sm:$0xff]
      %v552 = vld [vmem:[#allocation2 + $0x111] sm:$0xff]
      %v553 = vld [vmem:[#allocation2 + $0x121] sm:$0xff]
      %v554 = vld [vmem:[#allocation2 + $0x129] sm:$0xff]
      %v555 = vld [vmem:[#allocation2 + $0x139] sm:$0xff]
      %v556 = vld [vmem:[#allocation2 + $0x141] sm:$0xff]
      %v557 = vld [vmem:[#allocation2 + $0x151] sm:$0xff]
      %v558 = vld [vmem:[#allocation2 + $0x159] sm:$0xff]
      %v559 = vld [vmem:[#allocation2 + $0x169] sm:$0xff]
      %v560 = vld [vmem:[#allocation2 + $0x171] sm:$0xff]
      %v561 = vld [vmem:[#allocation2 + $0x181] sm:$0xff]
      %v562 = vld [vmem:[#allocation2 + $0x189] sm:$0xff]
      %v563 = vld [vmem:[#allocation2 + $0x199] sm:$0xff]
      %v564 = vld [vmem:[#allocation2 + $0x1a1] sm:$0xff]
      %601 = vrot.lane.b32.xlu0 %v529, 4
      %v602 = vpop.permute.xlu0 %601
      %603 = vrot.lane.b32.xlu0 %v530, 4
      %v604 = vpop.permute.xlu0 %603
      %605 = vrot.lane.b32.xlu0 %v531, 4
      %v606 = vpop.permute.xlu0 %605
      %607 = vrot.lane.b32.xlu0 %v532, 4
      %v608 = vpop.permute.xlu0 %607
      %609 = vrot.lane.b32.xlu0 %v533, 4
      %v610 = vpop.permute.xlu0 %609
      %611 = vrot.lane.b32.xlu0 %v534, 4
      %v612 = vpop.permute.xlu0 %611
      %613 = vrot.lane.b32.xlu0 %v535, 4
      %v614 = vpop.permute.xlu0 %613
      %615 = vrot.lane.b32.xlu0 %v536, 4
      %v616 = vpop.permute.xlu0 %615
      %617 = vrot.lane.b32.xlu0 %v537, 4
      %v618 = vpop.permute.xlu0 %617
      %619 = vrot.lane.b32.xlu0 %v538, 4
      %v620 = vpop.permute.xlu0 %619
      %621 = vrot.lane.b32.xlu0 %v539, 4
      %v622 = vpop.permute.xlu0 %621
      %623 = vrot.lane.b32.xlu0 %v540, 4
      %v624 = vpop.permute.xlu0 %623
      %625 = vrot.lane.b32.xlu0 %v541, 4
      %v626 = vpop.permute.xlu0 %625
      %627 = vrot.lane.b32.xlu0 %v542, 4
      %v628 = vpop.permute.xlu0 %627
      %629 = vrot.lane.b32.xlu0 %v543, 4
      %v630 = vpop.permute.xlu0 %629
      %631 = vrot.lane.b32.xlu0 %v544, 4
      %v632 = vpop.permute.xlu0 %631
      %633 = vrot.lane.b32.xlu0 %v545, 4
      %v634 = vpop.permute.xlu0 %633
      %635 = vrot.lane.b32.xlu0 %v546, 4
      %v636 = vpop.permute.xlu0 %635
      %637 = vrot.lane.b32.xlu0 %v547, 4
      %v638 = vpop.permute.xlu0 %637
      %639 = vrot.lane.b32.xlu0 %v548, 4
      %v640 = vpop.permute.xlu0 %639
      %641 = vrot.lane.b32.xlu0 %v549, 4
      %v642 = vpop.permute.xlu0 %641
      %643 = vrot.lane.b32.xlu0 %v550, 4
      %v644 = vpop.permute.xlu0 %643
      %645 = vrot.lane.b32.xlu0 %v551, 4
      %v646 = vpop.permute.xlu0 %645
      %647 = vrot.lane.b32.xlu0 %v552, 4
      %v648 = vpop.permute.xlu0 %647
      %649 = vrot.lane.b32.xlu0 %v553, 4
      %v650 = vpop.permute.xlu0 %649
      %651 = vrot.lane.b32.xlu0 %v554, 4
      %v652 = vpop.permute.xlu0 %651
      %653 = vrot.lane.b32.xlu0 %v555, 4
      %v654 = vpop.permute.xlu0 %653
      %655 = vrot.lane.b32.xlu0 %v556, 4
      %v656 = vpop.permute.xlu0 %655
      %657 = vrot.lane.b32.xlu0 %v557, 4
      %v658 = vpop.permute.xlu0 %657
      %659 = vrot.lane.b32.xlu0 %v558, 4
      %v660 = vpop.permute.xlu0 %659
      %661 = vrot.lane.b32.xlu0 %v559, 4
      %v662 = vpop.permute.xlu0 %661
      %663 = vrot.lane.b32.xlu0 %v560, 4
      %v664 = vpop.permute.xlu0 %663
      %665 = vrot.lane.b32.xlu0 %v561, 4
      %v666 = vpop.permute.xlu0 %665
      %667 = vrot.lane.b32.xlu0 %v562, 4
      %v668 = vpop.permute.xlu0 %667
      %669 = vrot.lane.b32.xlu0 %v563, 4
      %v670 = vpop.permute.xlu0 %669
      %671 = vrot.lane.b32.xlu0 %v564, 4
      %v672 = vpop.permute.xlu0 %671
      %vm709 = vcmask 64544
      %710 = vst.msk [vmem:[#allocation3] sm:$0xff] %vm709, %v602
      %711 = vst.msk [vmem:[#allocation3 + $0x8] sm:$0xff] %vm709, %v604
      %712 = vst.msk [vmem:[#allocation3 + $0x10] sm:$0xff] %vm709, %v606
      %713 = vst.msk [vmem:[#allocation3 + $0x18] sm:$0xff] %vm709, %v608
      %714 = vst.msk [vmem:[#allocation3 + $0x20] sm:$0xff] %vm709, %v610
      %715 = vst.msk [vmem:[#allocation3 + $0x28] sm:$0xff] %vm709, %v612
      %716 = vst.msk [vmem:[#allocation3 + $0x30] sm:$0xff] %vm709, %v614
      %717 = vst.msk [vmem:[#allocation3 + $0x38] sm:$0xff] %vm709, %v616
      %718 = vst.msk [vmem:[#allocation3 + $0x40] sm:$0xff] %vm709, %v618
      %719 = vst.msk [vmem:[#allocation3 + $0x48] sm:$0xff] %vm709, %v620
      %720 = vst.msk [vmem:[#allocation3 + $0x50] sm:$0xff] %vm709, %v622
      %721 = vst.msk [vmem:[#allocation3 + $0x58] sm:$0xff] %vm709, %v624
      %722 = vst.msk [vmem:[#allocation3 + $0x60] sm:$0xff] %vm709, %v626
      %723 = vst.msk [vmem:[#allocation3 + $0x68] sm:$0xff] %vm709, %v628
      %724 = vst.msk [vmem:[#allocation3 + $0x70] sm:$0xff] %vm709, %v630
      %725 = vst.msk [vmem:[#allocation3 + $0x78] sm:$0xff] %vm709, %v632
      %726 = vst.msk [vmem:[#allocation3 + $0x80] sm:$0xff] %vm709, %v634
      %727 = vst.msk [vmem:[#allocation3 + $0x88] sm:$0xff] %vm709, %v636
      %728 = vst.msk [vmem:[#allocation3 + $0x90] sm:$0xff] %vm709, %v638
      %729 = vst.msk [vmem:[#allocation3 + $0x98] sm:$0xff] %vm709, %v640
      %730 = vst.msk [vmem:[#allocation3 + $0xa0] sm:$0xff] %vm709, %v642
      %731 = vst.msk [vmem:[#allocation3 + $0xa8] sm:$0xff] %vm709, %v644
      %732 = vst.msk [vmem:[#allocation3 + $0xb0] sm:$0xff] %vm709, %v646
      %733 = vst.msk [vmem:[#allocation3 + $0xb8] sm:$0xff] %vm709, %v648
      %734 = vst.msk [vmem:[#allocation3 + $0xc0] sm:$0xff] %vm709, %v650
      %735 = vst.msk [vmem:[#allocation3 + $0xc8] sm:$0xff] %vm709, %v652
      %736 = vst.msk [vmem:[#allocation3 + $0xd0] sm:$0xff] %vm709, %v654
      %737 = vst.msk [vmem:[#allocation3 + $0xd8] sm:$0xff] %vm709, %v656
      %738 = vst.msk [vmem:[#allocation3 + $0xe0] sm:$0xff] %vm709, %v658
      %739 = vst.msk [vmem:[#allocation3 + $0xe8] sm:$0xff] %vm709, %v660
      %740 = vst.msk [vmem:[#allocation3 + $0xf0] sm:$0xff] %vm709, %v662
      %741 = vst.msk [vmem:[#allocation3 + $0xf8] sm:$0xff] %vm709, %v664
      %742 = vst.msk [vmem:[#allocation3 + $0x100] sm:$0xff] %vm709, %v666
      %743 = vst.msk [vmem:[#allocation3 + $0x108] sm:$0xff] %vm709, %v668
      %744 = vst.msk [vmem:[#allocation3 + $0x110] sm:$0xff] %vm709, %v670
      %745 = vst.msk [vmem:[#allocation3 + $0x118] sm:$0xff] %vm709, %v672
      %v746 = vld [vmem:[#allocation2 + $0x2] sm:$0xff]
      %v747 = vld [vmem:[#allocation2 + $0xa] sm:$0xff]
      %v748 = vld [vmem:[#allocation2 + $0x1a] sm:$0xff]
      %v749 = vld [vmem:[#allocation2 + $0x22] sm:$0xff]
      %v750 = vld [vmem:[#allocation2 + $0x32] sm:$0xff]
      %v751 = vld [vmem:[#allocation2 + $0x3a] sm:$0xff]
      %v752 = vld [vmem:[#allocation2 + $0x4a] sm:$0xff]
      %v753 = vld [vmem:[#allocation2 + $0x52] sm:$0xff]
      %v754 = vld [vmem:[#allocation2 + $0x62] sm:$0xff]
      %v755 = vld [vmem:[#allocation2 + $0x6a] sm:$0xff]
      %v756 = vld [vmem:[#allocation2 + $0x7a] sm:$0xff]
      %v757 = vld [vmem:[#allocation2 + $0x82] sm:$0xff]
      %v758 = vld [vmem:[#allocation2 + $0x92] sm:$0xff]
      %v759 = vld [vmem:[#allocation2 + $0x9a] sm:$0xff]
      %v760 = vld [vmem:[#allocation2 + $0xaa] sm:$0xff]
      %v761 = vld [vmem:[#allocation2 + $0xb2] sm:$0xff]
      %v762 = vld [vmem:[#allocation2 + $0xc2] sm:$0xff]
      %v763 = vld [vmem:[#allocation2 + $0xca] sm:$0xff]
      %v764 = vld [vmem:[#allocation2 + $0xda] sm:$0xff]
      %v765 = vld [vmem:[#allocation2 + $0xe2] sm:$0xff]
      %v766 = vld [vmem:[#allocation2 + $0xf2] sm:$0xff]
      %v767 = vld [vmem:[#allocation2 + $0xfa] sm:$0xff]
      %v768 = vld [vmem:[#allocation2 + $0x10a] sm:$0xff]
      %v769 = vld [vmem:[#allocation2 + $0x112] sm:$0xff]
      %v770 = vld [vmem:[#allocation2 + $0x122] sm:$0xff]
      %v771 = vld [vmem:[#allocation2 + $0x12a] sm:$0xff]
      %v772 = vld [vmem:[#allocation2 + $0x13a] sm:$0xff]
      %v773 = vld [vmem:[#allocation2 + $0x142] sm:$0xff]
      %v774 = vld [vmem:[#allocation2 + $0x152] sm:$0xff]
      %v775 = vld [vmem:[#allocation2 + $0x15a] sm:$0xff]
      %v776 = vld [vmem:[#allocation2 + $0x16a] sm:$0xff]
      %v777 = vld [vmem:[#allocation2 + $0x172] sm:$0xff]
      %v778 = vld [vmem:[#allocation2 + $0x182] sm:$0xff]
      %v779 = vld [vmem:[#allocation2 + $0x18a] sm:$0xff]
      %v780 = vld [vmem:[#allocation2 + $0x19a] sm:$0xff]
      %v781 = vld [vmem:[#allocation2 + $0x1a2] sm:$0xff]
      %818 = vrot.lane.b32.xlu0 %v746, 8
      %v819 = vpop.permute.xlu0 %818
      %820 = vrot.lane.b32.xlu0 %v747, 8
      %v821 = vpop.permute.xlu0 %820
      %822 = vrot.lane.b32.xlu0 %v748, 8
      %v823 = vpop.permute.xlu0 %822
      %824 = vrot.lane.b32.xlu0 %v749, 8
      %v825 = vpop.permute.xlu0 %824
      %826 = vrot.lane.b32.xlu0 %v750, 8
      %v827 = vpop.permute.xlu0 %826
      %828 = vrot.lane.b32.xlu0 %v751, 8
      %v829 = vpop.permute.xlu0 %828
      %830 = vrot.lane.b32.xlu0 %v752, 8
      %v831 = vpop.permute.xlu0 %830
      %832 = vrot.lane.b32.xlu0 %v753, 8
      %v833 = vpop.permute.xlu0 %832
      %834 = vrot.lane.b32.xlu0 %v754, 8
      %v835 = vpop.permute.xlu0 %834
      %836 = vrot.lane.b32.xlu0 %v755, 8
      %v837 = vpop.permute.xlu0 %836
      %838 = vrot.lane.b32.xlu0 %v756, 8
      %v839 = vpop.permute.xlu0 %838
      %840 = vrot.lane.b32.xlu0 %v757, 8
      %v841 = vpop.permute.xlu0 %840
      %842 = vrot.lane.b32.xlu0 %v758, 8
      %v843 = vpop.permute.xlu0 %842
      %844 = vrot.lane.b32.xlu0 %v759, 8
      %v845 = vpop.permute.xlu0 %844
      %846 = vrot.lane.b32.xlu0 %v760, 8
      %v847 = vpop.permute.xlu0 %846
      %848 = vrot.lane.b32.xlu0 %v761, 8
      %v849 = vpop.permute.xlu0 %848
      %850 = vrot.lane.b32.xlu0 %v762, 8
      %v851 = vpop.permute.xlu0 %850
      %852 = vrot.lane.b32.xlu0 %v763, 8
      %v853 = vpop.permute.xlu0 %852
      %854 = vrot.lane.b32.xlu0 %v764, 8
      %v855 = vpop.permute.xlu0 %854
      %856 = vrot.lane.b32.xlu0 %v765, 8
      %v857 = vpop.permute.xlu0 %856
      %858 = vrot.lane.b32.xlu0 %v766, 8
      %v859 = vpop.permute.xlu0 %858
      %860 = vrot.lane.b32.xlu0 %v767, 8
      %v861 = vpop.permute.xlu0 %860
      %862 = vrot.lane.b32.xlu0 %v768, 8
      %v863 = vpop.permute.xlu0 %862
      %864 = vrot.lane.b32.xlu0 %v769, 8
      %v865 = vpop.permute.xlu0 %864
      %866 = vrot.lane.b32.xlu0 %v770, 8
      %v867 = vpop.permute.xlu0 %866
      %868 = vrot.lane.b32.xlu0 %v771, 8
      %v869 = vpop.permute.xlu0 %868
      %870 = vrot.lane.b32.xlu0 %v772, 8
      %v871 = vpop.permute.xlu0 %870
      %872 = vrot.lane.b32.xlu0 %v773, 8
      %v873 = vpop.permute.xlu0 %872
      %874 = vrot.lane.b32.xlu0 %v774, 8
      %v875 = vpop.permute.xlu0 %874
      %876 = vrot.lane.b32.xlu0 %v775, 8
      %v877 = vpop.permute.xlu0 %876
      %878 = vrot.lane.b32.xlu0 %v776, 8
      %v879 = vpop.permute.xlu0 %878
      %880 = vrot.lane.b32.xlu0 %v777, 8
      %v881 = vpop.permute.xlu0 %880
      %882 = vrot.lane.b32.xlu0 %v778, 8
      %v883 = vpop.permute.xlu0 %882
      %884 = vrot.lane.b32.xlu0 %v779, 8
      %v885 = vpop.permute.xlu0 %884
      %886 = vrot.lane.b32.xlu0 %v780, 8
      %v887 = vpop.permute.xlu0 %886
      %888 = vrot.lane.b32.xlu0 %v781, 8
      %v889 = vpop.permute.xlu0 %888
      %vm926 = vcmask 97344
      %927 = vst.msk [vmem:[#allocation3] sm:$0xff] %vm926, %v819
      %928 = vst.msk [vmem:[#allocation3 + $0x8] sm:$0xff] %vm926, %v821
      %929 = vst.msk [vmem:[#allocation3 + $0x10] sm:$0xff] %vm926, %v823
      %930 = vst.msk [vmem:[#allocation3 + $0x18] sm:$0xff] %vm926, %v825
      %931 = vst.msk [vmem:[#allocation3 + $0x20] sm:$0xff] %vm926, %v827
      %932 = vst.msk [vmem:[#allocation3 + $0x28] sm:$0xff] %vm926, %v829
      %933 = vst.msk [vmem:[#allocation3 + $0x30] sm:$0xff] %vm926, %v831
      %934 = vst.msk [vmem:[#allocation3 + $0x38] sm:$0xff] %vm926, %v833
      %935 = vst.msk [vmem:[#allocation3 + $0x40] sm:$0xff] %vm926, %v835
      %936 = vst.msk [vmem:[#allocation3 + $0x48] sm:$0xff] %vm926, %v837
      %937 = vst.msk [vmem:[#allocation3 + $0x50] sm:$0xff] %vm926, %v839
      %938 = vst.msk [vmem:[#allocation3 + $0x58] sm:$0xff] %vm926, %v841
      %939 = vst.msk [vmem:[#allocation3 + $0x60] sm:$0xff] %vm926, %v843
      %940 = vst.msk [vmem:[#allocation3 + $0x68] sm:$0xff] %vm926, %v845
      %941 = vst.msk [vmem:[#allocation3 + $0x70] sm:$0xff] %vm926, %v847
      %942 = vst.msk [vmem:[#allocation3 + $0x78] sm:$0xff] %vm926, %v849
      %943 = vst.msk [vmem:[#allocation3 + $0x80] sm:$0xff] %vm926, %v851
      %944 = vst.msk [vmem:[#allocation3 + $0x88] sm:$0xff] %vm926, %v853
      %945 = vst.msk [vmem:[#allocation3 + $0x90] sm:$0xff] %vm926, %v855
      %946 = vst.msk [vmem:[#allocation3 + $0x98] sm:$0xff] %vm926, %v857
      %947 = vst.msk [vmem:[#allocation3 + $0xa0] sm:$0xff] %vm926, %v859
      %948 = vst.msk [vmem:[#allocation3 + $0xa8] sm:$0xff] %vm926, %v861
      %949 = vst.msk [vmem:[#allocation3 + $0xb0] sm:$0xff] %vm926, %v863
      %950 = vst.msk [vmem:[#allocation3 + $0xb8] sm:$0xff] %vm926, %v865
      %951 = vst.msk [vmem:[#allocation3 + $0xc0] sm:$0xff] %vm926, %v867
      %952 = vst.msk [vmem:[#allocation3 + $0xc8] sm:$0xff] %vm926, %v869
      %953 = vst.msk [vmem:[#allocation3 + $0xd0] sm:$0xff] %vm926, %v871
      %954 = vst.msk [vmem:[#allocation3 + $0xd8] sm:$0xff] %vm926, %v873
      %955 = vst.msk [vmem:[#allocation3 + $0xe0] sm:$0xff] %vm926, %v875
      %956 = vst.msk [vmem:[#allocation3 + $0xe8] sm:$0xff] %vm926, %v877
      %957 = vst.msk [vmem:[#allocation3 + $0xf0] sm:$0xff] %vm926, %v879
      %958 = vst.msk [vmem:[#allocation3 + $0xf8] sm:$0xff] %vm926, %v881
      %959 = vst.msk [vmem:[#allocation3 + $0x100] sm:$0xff] %vm926, %v883
      %960 = vst.msk [vmem:[#allocation3 + $0x108] sm:$0xff] %vm926, %v885
      %961 = vst.msk [vmem:[#allocation3 + $0x110] sm:$0xff] %vm926, %v887
      %962 = vst.msk [vmem:[#allocation3 + $0x118] sm:$0xff] %vm926, %v889
      %963 = vst [vmem:[#allocation4] sm:$0xff] 0.0
      %964 = vst [vmem:[#allocation4 + $0x8] sm:$0xff] 0.0
      %965 = vst [vmem:[#allocation4 + $0x10] sm:$0x3] 0.0
      %966 = vst [vmem:[#allocation4 + $0x18] sm:$0xff] 0.0
      %967 = vst [vmem:[#allocation4 + $0x20] sm:$0xff] 0.0
      %968 = vst [vmem:[#allocation4 + $0x28] sm:$0x3] 0.0
      %969 = vst [vmem:[#allocation4 + $0x30] sm:$0xff] 0.0
      %970 = vst [vmem:[#allocation4 + $0x38] sm:$0xff] 0.0
      %971 = vst [vmem:[#allocation4 + $0x40] sm:$0x3] 0.0
      %972 = vst [vmem:[#allocation4 + $0x48] sm:$0xff] 0.0
      %973 = vst [vmem:[#allocation4 + $0x50] sm:$0xff] 0.0
      %974 = vst [vmem:[#allocation4 + $0x58] sm:$0x3] 0.0
      %975 = vst [vmem:[#allocation4 + $0x60] sm:$0xff] 0.0
      %976 = vst [vmem:[#allocation4 + $0x68] sm:$0xff] 0.0
      %977 = vst [vmem:[#allocation4 + $0x70] sm:$0x3] 0.0
      %978 = vst [vmem:[#allocation4 + $0x78] sm:$0xff] 0.0
      %979 = vst [vmem:[#allocation4 + $0x80] sm:$0xff] 0.0
      %980 = vst [vmem:[#allocation4 + $0x88] sm:$0x3] 0.0
      %981 = vst [vmem:[#allocation4 + $0x90] sm:$0xff] 0.0
      %982 = vst [vmem:[#allocation4 + $0x98] sm:$0xff] 0.0
      %983 = vst [vmem:[#allocation4 + $0xa0] sm:$0x3] 0.0
      %984 = vst [vmem:[#allocation4 + $0xa8] sm:$0xff] 0.0
      %985 = vst [vmem:[#allocation4 + $0xb0] sm:$0xff] 0.0
      %986 = vst [vmem:[#allocation4 + $0xb8] sm:$0x3] 0.0
      %987 = vst [vmem:[#allocation4 + $0xc0] sm:$0xff] 0.0
      %988 = vst [vmem:[#allocation4 + $0xc8] sm:$0xff] 0.0
      %989 = vst [vmem:[#allocation4 + $0xd0] sm:$0x3] 0.0
      %990 = vst [vmem:[#allocation4 + $0xd8] sm:$0xff] 0.0
      %991 = vst [vmem:[#allocation4 + $0xe0] sm:$0xff] 0.0
      %992 = vst [vmem:[#allocation4 + $0xe8] sm:$0x3] 0.0
      %993 = vst [vmem:[#allocation4 + $0xf0] sm:$0xff] 0.0
      %994 = vst [vmem:[#allocation4 + $0xf8] sm:$0xff] 0.0
      %995 = vst [vmem:[#allocation4 + $0x100] sm:$0x3] 0.0
      %996 = vst [vmem:[#allocation4 + $0x108] sm:$0xff] 0.0
      %997 = vst [vmem:[#allocation4 + $0x110] sm:$0xff] 0.0
      %998 = vst [vmem:[#allocation4 + $0x118] sm:$0x3] 0.0
      %999 = vst [vmem:[#allocation4 + $0x120] sm:$0xff] 0.0
      %1000 = vst [vmem:[#allocation4 + $0x128] sm:$0xff] 0.0
      %1001 = vst [vmem:[#allocation4 + $0x130] sm:$0x3] 0.0
      %1002 = vst [vmem:[#allocation4 + $0x138] sm:$0xff] 0.0
      %1003 = vst [vmem:[#allocation4 + $0x140] sm:$0xff] 0.0
      %1004 = vst [vmem:[#allocation4 + $0x148] sm:$0x3] 0.0
      %1005 = vst [vmem:[#allocation4 + $0x150] sm:$0xff] 0.0
      %1006 = vst [vmem:[#allocation4 + $0x158] sm:$0xff] 0.0
      %1007 = vst [vmem:[#allocation4 + $0x160] sm:$0x3] 0.0
      %1008 = vst [vmem:[#allocation4 + $0x168] sm:$0xff] 0.0
      %1009 = vst [vmem:[#allocation4 + $0x170] sm:$0xff] 0.0
      %1010 = vst [vmem:[#allocation4 + $0x178] sm:$0x3] 0.0
      %1011 = vst [vmem:[#allocation4 + $0x180] sm:$0xff] 0.0
      %1012 = vst [vmem:[#allocation4 + $0x188] sm:$0xff] 0.0
      %1013 = vst [vmem:[#allocation4 + $0x190] sm:$0x3] 0.0
      %1014 = vst [vmem:[#allocation4 + $0x198] sm:$0xff] 0.0
      %1015 = vst [vmem:[#allocation4 + $0x1a0] sm:$0xff] 0.0
      %1016 = vst [vmem:[#allocation4 + $0x1a8] sm:$0x3] 0.0
      %v1017 = vld [vmem:[#allocation3] sm:$0xff]
      %v1018 = vld [vmem:[#allocation3 + $0x8] sm:$0xff]
      %v1019 = vld [vmem:[#allocation3 + $0x10] sm:$0xff]
      %v1020 = vld [vmem:[#allocation3 + $0x18] sm:$0xff]
      %v1021 = vld [vmem:[#allocation3 + $0x20] sm:$0xff]
      %v1022 = vld [vmem:[#allocation3 + $0x28] sm:$0xff]
      %v1023 = vld [vmem:[#allocation3 + $0x30] sm:$0xff]
      %v1024 = vld [vmem:[#allocation3 + $0x38] sm:$0xff]
      %v1025 = vld [vmem:[#allocation3 + $0x40] sm:$0xff]
      %v1026 = vld [vmem:[#allocation3 + $0x48] sm:$0xff]
      %v1027 = vld [vmem:[#allocation3 + $0x50] sm:$0xff]
      %v1028 = vld [vmem:[#allocation3 + $0x58] sm:$0xff]
      %v1029 = vld [vmem:[#allocation3 + $0x60] sm:$0xff]
      %v1030 = vld [vmem:[#allocation3 + $0x68] sm:$0xff]
      %v1031 = vld [vmem:[#allocation3 + $0x70] sm:$0xff]
      %v1032 = vld [vmem:[#allocation3 + $0x78] sm:$0xff]
      %v1033 = vpack.c.bf16 %v1018, %v1017
      %v1034 = vpack.c.bf16 %v1020, %v1019
      %v1035 = vpack.c.bf16 %v1022, %v1021
      %v1036 = vpack.c.bf16 %v1024, %v1023
      %v1037 = vpack.c.bf16 %v1026, %v1025
      %v1038 = vpack.c.bf16 %v1028, %v1027
      %v1039 = vpack.c.bf16 %v1030, %v1029
      %v1040 = vpack.c.bf16 %v1032, %v1031
      %v1041 = vld [vmem:[%s1] sm:$0xff]
      %v1042 = vld [vmem:[%s1 + $0x8] sm:$0xf]
      %v1043 = vpack.c.bf16 %v1042, %v1041
      %s1044 = scalar_lea.vmem [#allocation3], 16
      %v1045 = vld [vmem:[%s1044] sm:$0xff]
      %v1046 = vld [vmem:[%s1044 + $0x8] sm:$0xff]
      %v1047 = vld [vmem:[%s1044 + $0x10] sm:$0xff]
      %v1048 = vld [vmem:[%s1044 + $0x18] sm:$0xff]
      %v1049 = vld [vmem:[%s1044 + $0x20] sm:$0xff]
      %v1050 = vld [vmem:[%s1044 + $0x28] sm:$0xff]
      %v1051 = vld [vmem:[%s1044 + $0x30] sm:$0xff]
      %v1052 = vld [vmem:[%s1044 + $0x38] sm:$0xff]
      %v1053 = vld [vmem:[%s1044 + $0x40] sm:$0xff]
      %v1054 = vld [vmem:[%s1044 + $0x48] sm:$0xff]
      %v1055 = vld [vmem:[%s1044 + $0x50] sm:$0xff]
      %v1056 = vld [vmem:[%s1044 + $0x58] sm:$0xff]
      %v1057 = vld [vmem:[%s1044 + $0x60] sm:$0xff]
      %v1058 = vld [vmem:[%s1044 + $0x68] sm:$0xff]
      %v1059 = vld [vmem:[%s1044 + $0x70] sm:$0xff]
      %v1060 = vld [vmem:[%s1044 + $0x78] sm:$0xff]
      %v1061 = vpack.c.bf16 %v1046, %v1045
      %v1062 = vpack.c.bf16 %v1048, %v1047
      %v1063 = vpack.c.bf16 %v1050, %v1049
      %v1064 = vpack.c.bf16 %v1052, %v1051
      %v1065 = vpack.c.bf16 %v1054, %v1053
      %v1066 = vpack.c.bf16 %v1056, %v1055
      %v1067 = vpack.c.bf16 %v1058, %v1057
      %v1068 = vpack.c.bf16 %v1060, %v1059
      %s1069 = scalar_lea.vmem %s1, 16
      %v1070 = vld [vmem:[%s1069] sm:$0xff]
      %v1071 = vld [vmem:[%s1069 + $0x8] sm:$0xf]
      %v1072 = vpack.c.bf16 %v1071, %v1070
      %vm1073 = vcmask 97280
      %v1075 = vsel %vm1073, %v1061, 0
      %v1078 = vsel %vm1073, %v1062, 0
      %v1081 = vsel %vm1073, %v1063, 0
      %v1084 = vsel %vm1073, %v1064, 0
      %v1087 = vsel %vm1073, %v1065, 0
      %v1090 = vsel %vm1073, %v1066, 0
      %v1093 = vsel %vm1073, %v1067, 0
      %v1096 = vsel %vm1073, %v1068, 0
      %vm1098 = vcmask 1045504
      %v1100 = vsel %vm1098, %v1072, 0
      %1102 = vmatprep.subr.bf16.mxu0 0
      %1103 = vmatpush1.bf16.msra.mxu0 %v1100
      %1104 = vmatprep.subr.bf16.mxu0 0
      %1105 = vmatpush1.bf16.msra.mxu0 0
      %1106 = vmatprep.subr.bf16.mxu0 0
      %1107 = vmatpush1.bf16.msra.mxu0 0
      %1108 = vmatprep.subr.bf16.mxu0 0
      %1109 = vmatpush1.bf16.msra.mxu0 0
      %1110 = vmatprep.subr.bf16.mxu0 0
      %1111 = vmatpush1.bf16.msra.mxu0 0
      %1112 = vmatprep.subr.bf16.mxu0 0
      %1113 = vmatpush1.bf16.msra.mxu0 0
      %1114 = vmatprep.subr.bf16.mxu0 0
      %1115 = vmatpush1.bf16.msra.mxu0 0
      %1116 = vmatprep.subr.bf16.mxu0 0
      %1117 = vmatpush1.bf16.msra.mxu0 0
      %1118 = vmatprep.subr.bf16.mxu0 0
      %1119 = vmatpush1.bf16.msra.mxu0 0
      %1120 = vmatprep.subr.bf16.mxu0 0
      %1121 = vmatpush1.bf16.msra.mxu0 0
      %1122 = vmatprep.subr.bf16.mxu0 0
      %1123 = vmatpush1.bf16.msra.mxu0 0
      %1124 = vmatprep.subr.bf16.mxu0 0
      %1125 = vmatpush1.bf16.msra.mxu0 0
      %1126 = vmatprep.subr.bf16.mxu0 0
      %1127 = vmatpush1.bf16.msra.mxu0 0
      %1128 = vmatprep.subr.bf16.mxu0 0
      %1129 = vmatpush1.bf16.msra.mxu0 0
      %1130 = vmatprep.subr.bf16.mxu0 0
      %1131 = vmatpush1.bf16.msra.mxu0 0
      %1132 = vmatprep.subr.bf16.mxu0 0
      %1133 = vmatpush1.bf16.msra.mxu0 0
      %1134 = vmatprep.mubr.bf16.mxu0 0
      %1135 = vmatmul.mubr.bf16.gmra.mrb[0].mxu0 %v1075
      %v1136 = vpop.f32.mrb[0].mxu0
      %v1137 = vadd.f32 0.0, %v1136
      %v1138 = vpop.f32.mrb[0].mxu0
      %v1139 = vpop.f32.mrb[0].mxu0
      %v1140 = vadd.f32 0.0, %v1139
      %v1141 = vpop.f32.mrb[0].mxu0
      %1142 = vmatprep.mubr.bf16.mxu0 0
      %1143 = vmatmul.mubr.bf16.gmra.mrb[0].mxu0 %v1078
      %v1144 = vpop.f32.mrb[0].mxu0
      %v1145 = vadd.f32 0.0, %v1144
      %v1146 = vpop.f32.mrb[0].mxu0
      %v1147 = vpop.f32.mrb[0].mxu0
      %v1148 = vadd.f32 0.0, %v1147
      %v1149 = vpop.f32.mrb[0].mxu0
      %1150 = vmatprep.mubr.bf16.mxu0 0
      %1151 = vmatmul.mubr.bf16.gmra.mrb[0].mxu0 %v1081
      %v1152 = vpop.f32.mrb[0].mxu0
      %v1153 = vadd.f32 0.0, %v1152
      %v1154 = vpop.f32.mrb[0].mxu0
      %v1155 = vpop.f32.mrb[0].mxu0
      %v1156 = vadd.f32 0.0, %v1155
      %v1157 = vpop.f32.mrb[0].mxu0
      %1158 = vmatprep.mubr.bf16.mxu0 0
      %1159 = vmatmul.mubr.bf16.gmra.mrb[0].mxu0 %v1084
      %v1160 = vpop.f32.mrb[0].mxu0
      %v1161 = vadd.f32 0.0, %v1160
      %v1162 = vpop.f32.mrb[0].mxu0
      %v1163 = vpop.f32.mrb[0].mxu0
      %v1164 = vadd.f32 0.0, %v1163
      %v1165 = vpop.f32.mrb[0].mxu0
      %1166 = vmatprep.mubr.bf16.mxu0 0
      %1167 = vmatmul.mubr.bf16.gmra.mrb[0].mxu0 %v1087
      %v1168 = vpop.f32.mrb[0].mxu0
      %v1169 = vadd.f32 0.0, %v1168
      %v1170 = vpop.f32.mrb[0].mxu0
      %v1171 = vpop.f32.mrb[0].mxu0
      %v1172 = vadd.f32 0.0, %v1171
      %v1173 = vpop.f32.mrb[0].mxu0
      %1174 = vmatprep.mubr.bf16.mxu0 0
      %1175 = vmatmul.mubr.bf16.gmra.mrb[0].mxu0 %v1090
      %v1176 = vpop.f32.mrb[0].mxu0
      %v1177 = vadd.f32 0.0, %v1176
      %v1178 = vpop.f32.mrb[0].mxu0
      %v1179 = vpop.f32.mrb[0].mxu0
      %v1180 = vadd.f32 0.0, %v1179
      %v1181 = vpop.f32.mrb[0].mxu0
      %1182 = vmatprep.mubr.bf16.mxu0 0
      %1183 = vmatmul.mubr.bf16.gmra.mrb[0].mxu0 %v1093
      %v1184 = vpop.f32.mrb[0].mxu0
      %v1185 = vadd.f32 0.0, %v1184
      %v1186 = vpop.f32.mrb[0].mxu0
      %v1187 = vpop.f32.mrb[0].mxu0
      %v1188 = vadd.f32 0.0, %v1187
      %v1189 = vpop.f32.mrb[0].mxu0
      %1190 = vmatprep.mubr.bf16.mxu0 0
      %1191 = vmatmul.mubr.bf16.gmra.mrb[0].mxu0 %v1096
      %v1192 = vpop.f32.mrb[0].mxu0
      %v1193 = vadd.f32 0.0, %v1192
      %v1194 = vpop.f32.mrb[0].mxu0
      %v1195 = vpop.f32.mrb[0].mxu0
      %v1196 = vadd.f32 0.0, %v1195
      %v1197 = vpop.f32.mrb[0].mxu0
      %1198 = vdwg.mxu0
      %v1200 = vsel %vm1073, %v1033, 0
      %v1203 = vsel %vm1073, %v1034, 0
      %v1206 = vsel %vm1073, %v1035, 0
      %v1209 = vsel %vm1073, %v1036, 0
      %v1212 = vsel %vm1073, %v1037, 0
      %v1215 = vsel %vm1073, %v1038, 0
      %v1218 = vsel %vm1073, %v1039, 0
      %v1221 = vsel %vm1073, %v1040, 0
      %v1224 = vsel %vm1098, %v1043, 0
      %1226 = vmatprep.subr.bf16.mxu0 0
      %1227 = vmatpush1.bf16.msra.mxu0 %v1224
      %1228 = vmatprep.subr.bf16.mxu0 0
      %1229 = vmatpush1.bf16.msra.mxu0 0
      %1230 = vmatprep.subr.bf16.mxu0 0
      %1231 = vmatpush1.bf16.msra.mxu0 0
      %1232 = vmatprep.subr.bf16.mxu0 0
      %1233 = vmatpush1.bf16.msra.mxu0 0
      %1234 = vmatprep.subr.bf16.mxu0 0
      %1235 = vmatpush1.bf16.msra.mxu0 0
      %1236 = vmatprep.subr.bf16.mxu0 0
      %1237 = vmatpush1.bf16.msra.mxu0 0
      %1238 = vmatprep.subr.bf16.mxu0 0
      %1239 = vmatpush1.bf16.msra.mxu0 0
      %1240 = vmatprep.subr.bf16.mxu0 0
      %1241 = vmatpush1.bf16.msra.mxu0 0
      %1242 = vmatprep.subr.bf16.mxu0 0
      %1243 = vmatpush1.bf16.msra.mxu0 0
      %1244 = vmatprep.subr.bf16.mxu0 0
      %1245 = vmatpush1.bf16.msra.mxu0 0
      %1246 = vmatprep.subr.bf16.mxu0 0
      %1247 = vmatpush1.bf16.msra.mxu0 0
      %1248 = vmatprep.subr.bf16.mxu0 0
      %1249 = vmatpush1.bf16.msra.mxu0 0
      %1250 = vmatprep.subr.bf16.mxu0 0
      %1251 = vmatpush1.bf16.msra.mxu0 0
      %1252 = vmatprep.subr.bf16.mxu0 0
      %1253 = vmatpush1.bf16.msra.mxu0 0
      %1254 = vmatprep.subr.bf16.mxu0 0
      %1255 = vmatpush1.bf16.msra.mxu0 0
      %1256 = vmatprep.subr.bf16.mxu0 0
      %1257 = vmatpush1.bf16.msra.mxu0 0
      %1258 = vmatprep.mubr.bf16.mxu0 0
      %1259 = vmatmul.mubr.bf16.gmra.mrb[0].mxu0 %v1200
      %v1260 = vpop.f32.mrb[0].mxu0
      %v1261 = vadd.f32 %v1137, %v1260
      %v1262 = vpop.f32.mrb[0].mxu0
      %v1263 = vpop.f32.mrb[0].mxu0
      %v1264 = vadd.f32 %v1140, %v1263
      %v1265 = vpop.f32.mrb[0].mxu0
      %1266 = vmatprep.mubr.bf16.mxu0 0
      %1267 = vmatmul.mubr.bf16.gmra.mrb[0].mxu0 %v1203
      %v1268 = vpop.f32.mrb[0].mxu0
      %v1269 = vadd.f32 %v1145, %v1268
      %v1270 = vpop.f32.mrb[0].mxu0
      %v1271 = vpop.f32.mrb[0].mxu0
      %v1272 = vadd.f32 %v1148, %v1271
      %v1273 = vpop.f32.mrb[0].mxu0
      %1274 = vmatprep.mubr.bf16.mxu0 0
      %1275 = vmatmul.mubr.bf16.gmra.mrb[0].mxu0 %v1206
      %v1276 = vpop.f32.mrb[0].mxu0
      %v1277 = vadd.f32 %v1153, %v1276
      %v1278 = vpop.f32.mrb[0].mxu0
      %v1279 = vpop.f32.mrb[0].mxu0
      %v1280 = vadd.f32 %v1156, %v1279
      %v1281 = vpop.f32.mrb[0].mxu0
      %1282 = vmatprep.mubr.bf16.mxu0 0
      %1283 = vmatmul.mubr.bf16.gmra.mrb[0].mxu0 %v1209
      %v1284 = vpop.f32.mrb[0].mxu0
      %v1285 = vadd.f32 %v1161, %v1284
      %v1286 = vpop.f32.mrb[0].mxu0
      %v1287 = vpop.f32.mrb[0].mxu0
      %v1288 = vadd.f32 %v1164, %v1287
      %v1289 = vpop.f32.mrb[0].mxu0
      %1290 = vmatprep.mubr.bf16.mxu0 0
      %1291 = vmatmul.mubr.bf16.gmra.mrb[0].mxu0 %v1212
      %v1292 = vpop.f32.mrb[0].mxu0
      %v1293 = vadd.f32 %v1169, %v1292
      %v1294 = vpop.f32.mrb[0].mxu0
      %v1295 = vpop.f32.mrb[0].mxu0
      %v1296 = vadd.f32 %v1172, %v1295
      %v1297 = vpop.f32.mrb[0].mxu0
      %1298 = vmatprep.mubr.bf16.mxu0 0
      %1299 = vmatmul.mubr.bf16.gmra.mrb[0].mxu0 %v1215
      %v1300 = vpop.f32.mrb[0].mxu0
      %v1301 = vadd.f32 %v1177, %v1300
      %v1302 = vpop.f32.mrb[0].mxu0
      %v1303 = vpop.f32.mrb[0].mxu0
      %v1304 = vadd.f32 %v1180, %v1303
      %v1305 = vpop.f32.mrb[0].mxu0
      %1306 = vmatprep.mubr.bf16.mxu0 0
      %1307 = vmatmul.mubr.bf16.gmra.mrb[0].mxu0 %v1218
      %v1308 = vpop.f32.mrb[0].mxu0
      %v1309 = vadd.f32 %v1185, %v1308
      %v1310 = vpop.f32.mrb[0].mxu0
      %v1311 = vpop.f32.mrb[0].mxu0
      %v1312 = vadd.f32 %v1188, %v1311
      %v1313 = vpop.f32.mrb[0].mxu0
      %1314 = vmatprep.mubr.bf16.mxu0 0
      %1315 = vmatmul.mubr.bf16.gmra.mrb[0].mxu0 %v1221
      %v1316 = vpop.f32.mrb[0].mxu0
      %v1317 = vadd.f32 %v1193, %v1316
      %v1318 = vpop.f32.mrb[0].mxu0
      %v1319 = vpop.f32.mrb[0].mxu0
      %v1320 = vadd.f32 %v1196, %v1319
      %v1321 = vpop.f32.mrb[0].mxu0
      %1322 = vdwg.mxu0
      %s1323 = scalar_lea.vmem [#allocation3], 32
      %v1324 = vld [vmem:[%s1323] sm:$0xff]
      %v1325 = vld [vmem:[%s1323 + $0x8] sm:$0xff]
      %v1326 = vld [vmem:[%s1323 + $0x10] sm:$0xff]
      %v1327 = vld [vmem:[%s1323 + $0x18] sm:$0xff]
      %v1328 = vld [vmem:[%s1323 + $0x20] sm:$0xff]
      %v1329 = vld [vmem:[%s1323 + $0x28] sm:$0xff]
      %v1330 = vld [vmem:[%s1323 + $0x30] sm:$0xff]
      %v1331 = vld [vmem:[%s1323 + $0x38] sm:$0xff]
      %v1332 = vld [vmem:[%s1323 + $0x40] sm:$0xff]
      %v1333 = vld [vmem:[%s1323 + $0x48] sm:$0xff]
      %v1334 = vld [vmem:[%s1323 + $0x50] sm:$0xff]
      %v1335 = vld [vmem:[%s1323 + $0x58] sm:$0xff]
      %v1336 = vld [vmem:[%s1323 + $0x60] sm:$0xff]
      %v1337 = vld [vmem:[%s1323 + $0x68] sm:$0xff]
      %v1338 = vld [vmem:[%s1323 + $0x70] sm:$0xff]
      %v1339 = vld [vmem:[%s1323 + $0x78] sm:$0xff]
      %v1340 = vpack.c.bf16 %v1325, %v1324
      %v1341 = vpack.c.bf16 %v1327, %v1326
      %v1342 = vpack.c.bf16 %v1329, %v1328
      %v1343 = vpack.c.bf16 %v1331, %v1330
      %v1344 = vpack.c.bf16 %v1333, %v1332
      %v1345 = vpack.c.bf16 %v1335, %v1334
      %v1346 = vpack.c.bf16 %v1337, %v1336
      %v1347 = vpack.c.bf16 %v1339, %v1338
      %s1348 = scalar_lea.vmem %s1, 32
      %v1349 = vld [vmem:[%s1348] sm:$0xff]
      %v1350 = vld [vmem:[%s1348 + $0x8] sm:$0xf]
      %v1351 = vpack.c.bf16 %v1350, %v1349
      %v1353 = vsel %vm1073, %v1340, 0
      %v1356 = vsel %vm1073, %v1341, 0
      %v1359 = vsel %vm1073, %v1342, 0
      %v1362 = vsel %vm1073, %v1343, 0
      %v1365 = vsel %vm1073, %v1344, 0
      %v1368 = vsel %vm1073, %v1345, 0
      %v1371 = vsel %vm1073, %v1346, 0
      %v1374 = vsel %vm1073, %v1347, 0
      %v1377 = vsel %vm1098, %v1351, 0
      %1379 = vmatprep.subr.bf16.mxu0 0
      %1380 = vmatpush1.bf16.msra.mxu0 %v1377
      %1381 = vmatprep.subr.bf16.mxu0 0
      %1382 = vmatpush1.bf16.msra.mxu0 0
      %1383 = vmatprep.subr.bf16.mxu0 0
      %1384 = vmatpush1.bf16.msra.mxu0 0
      %1385 = vmatprep.subr.bf16.mxu0 0
      %1386 = vmatpush1.bf16.msra.mxu0 0
      %1387 = vmatprep.subr.bf16.mxu0 0
      %1388 = vmatpush1.bf16.msra.mxu0 0
      %1389 = vmatprep.subr.bf16.mxu0 0
      %1390 = vmatpush1.bf16.msra.mxu0 0
      %1391 = vmatprep.subr.bf16.mxu0 0
      %1392 = vmatpush1.bf16.msra.mxu0 0
      %1393 = vmatprep.subr.bf16.mxu0 0
      %1394 = vmatpush1.bf16.msra.mxu0 0
      %1395 = vmatprep.subr.bf16.mxu0 0
      %1396 = vmatpush1.bf16.msra.mxu0 0
      %1397 = vmatprep.subr.bf16.mxu0 0
      %1398 = vmatpush1.bf16.msra.mxu0 0
      %1399 = vmatprep.subr.bf16.mxu0 0
      %1400 = vmatpush1.bf16.msra.mxu0 0
      %1401 = vmatprep.subr.bf16.mxu0 0
      %1402 = vmatpush1.bf16.msra.mxu0 0
      %1403 = vmatprep.subr.bf16.mxu0 0
      %1404 = vmatpush1.bf16.msra.mxu0 0
      %1405 = vmatprep.subr.bf16.mxu0 0
      %1406 = vmatpush1.bf16.msra.mxu0 0
      %1407 = vmatprep.subr.bf16.mxu0 0
      %1408 = vmatpush1.bf16.msra.mxu0 0
      %1409 = vmatprep.subr.bf16.mxu0 0
      %1410 = vmatpush1.bf16.msra.mxu0 0
      %1411 = vmatprep.mubr.bf16.mxu0 0
      %1412 = vmatmul.mubr.bf16.gmra.mrb[0].mxu0 %v1353
      %v1413 = vpop.f32.mrb[0].mxu0
      %v1414 = vadd.f32 0.0, %v1413
      %v1415 = vpop.f32.mrb[0].mxu0
      %v1416 = vpop.f32.mrb[0].mxu0
      %v1417 = vadd.f32 0.0, %v1416
      %v1418 = vpop.f32.mrb[0].mxu0
      %1419 = vmatprep.mubr.bf16.mxu0 0
      %1420 = vmatmul.mubr.bf16.gmra.mrb[0].mxu0 %v1356
      %v1421 = vpop.f32.mrb[0].mxu0
      %v1422 = vadd.f32 0.0, %v1421
      %v1423 = vpop.f32.mrb[0].mxu0
      %v1424 = vpop.f32.mrb[0].mxu0
      %v1425 = vadd.f32 0.0, %v1424
      %v1426 = vpop.f32.mrb[0].mxu0
      %1427 = vmatprep.mubr.bf16.mxu0 0
      %1428 = vmatmul.mubr.bf16.gmra.mrb[0].mxu0 %v1359
      %v1429 = vpop.f32.mrb[0].mxu0
      %v1430 = vadd.f32 0.0, %v1429
      %v1431 = vpop.f32.mrb[0].mxu0
      %v1432 = vpop.f32.mrb[0].mxu0
      %v1433 = vadd.f32 0.0, %v1432
      %v1434 = vpop.f32.mrb[0].mxu0
      %1435 = vmatprep.mubr.bf16.mxu0 0
      %1436 = vmatmul.mubr.bf16.gmra.mrb[0].mxu0 %v1362
      %v1437 = vpop.f32.mrb[0].mxu0
      %v1438 = vadd.f32 0.0, %v1437
      %v1439 = vpop.f32.mrb[0].mxu0
      %v1440 = vpop.f32.mrb[0].mxu0
      %v1441 = vadd.f32 0.0, %v1440
      %v1442 = vpop.f32.mrb[0].mxu0
      %1443 = vmatprep.mubr.bf16.mxu0 0
      %1444 = vmatmul.mubr.bf16.gmra.mrb[0].mxu0 %v1365
      %v1445 = vpop.f32.mrb[0].mxu0
      %v1446 = vadd.f32 0.0, %v1445
      %v1447 = vpop.f32.mrb[0].mxu0
      %v1448 = vpop.f32.mrb[0].mxu0
      %v1449 = vadd.f32 0.0, %v1448
      %v1450 = vpop.f32.mrb[0].mxu0
      %1451 = vmatprep.mubr.bf16.mxu0 0
      %1452 = vmatmul.mubr.bf16.gmra.mrb[0].mxu0 %v1368
      %v1453 = vpop.f32.mrb[0].mxu0
      %v1454 = vadd.f32 0.0, %v1453
      %v1455 = vpop.f32.mrb[0].mxu0
      %v1456 = vpop.f32.mrb[0].mxu0
      %v1457 = vadd.f32 0.0, %v1456
      %v1458 = vpop.f32.mrb[0].mxu0
      %1459 = vmatprep.mubr.bf16.mxu0 0
      %1460 = vmatmul.mubr.bf16.gmra.mrb[0].mxu0 %v1371
      %v1461 = vpop.f32.mrb[0].mxu0
      %v1462 = vadd.f32 0.0, %v1461
      %v1463 = vpop.f32.mrb[0].mxu0
      %v1464 = vpop.f32.mrb[0].mxu0
      %v1465 = vadd.f32 0.0, %v1464
      %v1466 = vpop.f32.mrb[0].mxu0
      %1467 = vmatprep.mubr.bf16.mxu0 0
      %1468 = vmatmul.mubr.bf16.gmra.mrb[0].mxu0 %v1374
      %v1469 = vpop.f32.mrb[0].mxu0
      %v1470 = vadd.f32 0.0, %v1469
      %v1471 = vpop.f32.mrb[0].mxu0
      %v1472 = vpop.f32.mrb[0].mxu0
      %v1473 = vadd.f32 0.0, %v1472
      %v1474 = vpop.f32.mrb[0].mxu0
      %1475 = vdwg.mxu0
      %v1476 = vadd.f32 %v1261, %v1414
      %v1477 = vadd.f32 %v1264, %v1417
      %v1478 = vadd.f32 %v1269, %v1422
      %v1479 = vadd.f32 %v1272, %v1425
      %v1480 = vadd.f32 %v1277, %v1430
      %v1481 = vadd.f32 %v1280, %v1433
      %v1482 = vadd.f32 %v1285, %v1438
      %v1483 = vadd.f32 %v1288, %v1441
      %v1484 = vadd.f32 %v1293, %v1446
      %v1485 = vadd.f32 %v1296, %v1449
      %v1486 = vadd.f32 %v1301, %v1454
      %v1487 = vadd.f32 %v1304, %v1457
      %v1488 = vadd.f32 %v1309, %v1462
      %v1489 = vadd.f32 %v1312, %v1465
      %v1490 = vadd.f32 %v1317, %v1470
      %v1491 = vadd.f32 %v1320, %v1473
      %v1492 = vld [vmem:[%s2] sm:$0x1]
      %v1494 = vlaneseq
      %v1495 = vshrl.u32 %v1494, 7
      %v1496 = vsub.s32 0, %v1495
      %v1497 = vrot.slane %v1492, %v1496
      %v1499 = vadd.f32 %v1476, %v1497
      %v1500 = vadd.f32 %v1477, %v1497
      %v1501 = vadd.f32 %v1478, %v1497
      %v1502 = vadd.f32 %v1479, %v1497
      %v1503 = vadd.f32 %v1480, %v1497
      %v1504 = vadd.f32 %v1481, %v1497
      %v1505 = vadd.f32 %v1482, %v1497
      %v1506 = vadd.f32 %v1483, %v1497
      %v1507 = vadd.f32 %v1484, %v1497
      %v1508 = vadd.f32 %v1485, %v1497
      %v1509 = vadd.f32 %v1486, %v1497
      %v1510 = vadd.f32 %v1487, %v1497
      %v1511 = vadd.f32 %v1488, %v1497
      %v1512 = vadd.f32 %v1489, %v1497
      %v1513 = vadd.f32 %v1490, %v1497
      %v1514 = vadd.f32 %v1491, %v1497
      %v1515 = vmax.f32 %v1499, 0.0
      %v1516 = vmax.f32 %v1500, 0.0
      %v1517 = vmax.f32 %v1501, 0.0
      %v1518 = vmax.f32 %v1502, 0.0
      %v1519 = vmax.f32 %v1503, 0.0
      %v1520 = vmax.f32 %v1504, 0.0
      %v1521 = vmax.f32 %v1505, 0.0
      %v1522 = vmax.f32 %v1506, 0.0
      %v1523 = vmax.f32 %v1507, 0.0
      %v1524 = vmax.f32 %v1508, 0.0
      %v1525 = vmax.f32 %v1509, 0.0
      %v1526 = vmax.f32 %v1510, 0.0
      %v1527 = vmax.f32 %v1511, 0.0
      %v1528 = vmax.f32 %v1512, 0.0
      %v1529 = vmax.f32 %v1513, 0.0
      %v1530 = vmax.f32 %v1514, 0.0
      %s1531 = scalar_lea.vmem [#allocation4], 24
      %1532 = vst [vmem:[%s1531 + $0x1] sm:$0xff] %v1515
      %1533 = vst [vmem:[%s1531 + $0x9] sm:$0xff] %v1516
      %1534 = vst [vmem:[%s1531 + $0x19] sm:$0xff] %v1517
      %1535 = vst [vmem:[%s1531 + $0x21] sm:$0xff] %v1518
      %1536 = vst [vmem:[%s1531 + $0x31] sm:$0xff] %v1519
      %1537 = vst [vmem:[%s1531 + $0x39] sm:$0xff] %v1520
      %1538 = vst [vmem:[%s1531 + $0x49] sm:$0xff] %v1521
      %1539 = vst [vmem:[%s1531 + $0x51] sm:$0xff] %v1522
      %1540 = vst [vmem:[%s1531 + $0x61] sm:$0xff] %v1523
      %1541 = vst [vmem:[%s1531 + $0x69] sm:$0xff] %v1524
      %1542 = vst [vmem:[%s1531 + $0x79] sm:$0xff] %v1525
      %1543 = vst [vmem:[%s1531 + $0x81] sm:$0xff] %v1526
      %1544 = vst [vmem:[%s1531 + $0x91] sm:$0xff] %v1527
      %1545 = vst [vmem:[%s1531 + $0x99] sm:$0xff] %v1528
      %1546 = vst [vmem:[%s1531 + $0xa9] sm:$0xff] %v1529
      %1547 = vst [vmem:[%s1531 + $0xb1] sm:$0xff] %v1530
      %s1548 = scalar_lea.vmem [#allocation3], 128
      %v1549 = vld [vmem:[%s1548] sm:$0xff]
      %v1550 = vld [vmem:[%s1548 + $0x8] sm:$0xff]
      %v1551 = vld [vmem:[%s1548 + $0x10] sm:$0xff]
      %v1552 = vld [vmem:[%s1548 + $0x18] sm:$0xff]
      %v1553 = vld [vmem:[%s1548 + $0x20] sm:$0xff]
      %v1554 = vld [vmem:[%s1548 + $0x28] sm:$0xff]
      %v1555 = vld [vmem:[%s1548 + $0x30] sm:$0xff]
      %v1556 = vld [vmem:[%s1548 + $0x38] sm:$0xff]
      %v1557 = vld [vmem:[%s1548 + $0x40] sm:$0xff]
      %v1558 = vld [vmem:[%s1548 + $0x48] sm:$0xff]
      %v1559 = vld [vmem:[%s1548 + $0x50] sm:$0xff]
      %v1560 = vld [vmem:[%s1548 + $0x58] sm:$0xff]
      %v1561 = vld [vmem:[%s1548 + $0x60] sm:$0xff]
      %v1562 = vld [vmem:[%s1548 + $0x68] sm:$0xff]
      %v1563 = vld [vmem:[%s1548 + $0x70] sm:$0xff]
      %v1564 = vld [vmem:[%s1548 + $0x78] sm:$0xff]
      %v1565 = vpack.c.bf16 %v1550, %v1549
      %v1566 = vpack.c.bf16 %v1552, %v1551
      %v1567 = vpack.c.bf16 %v1554, %v1553
      %v1568 = vpack.c.bf16 %v1556, %v1555
      %v1569 = vpack.c.bf16 %v1558, %v1557
      %v1570 = vpack.c.bf16 %v1560, %v1559
      %v1571 = vpack.c.bf16 %v1562, %v1561
      %v1572 = vpack.c.bf16 %v1564, %v1563
      %v1573 = vld [vmem:[%s1] sm:$0xff]
      %v1574 = vld [vmem:[%s1 + $0x8] sm:$0xf]
      %v1575 = vpack.c.bf16 %v1574, %v1573
      %s1576 = scalar_lea.vmem [#allocation3], 144
      %v1577 = vld [vmem:[%s1576] sm:$0xff]
      %v1578 = vld [vmem:[%s1576 + $0x8] sm:$0xff]
      %v1579 = vld [vmem:[%s1576 + $0x10] sm:$0xff]
      %v1580 = vld [vmem:[%s1576 + $0x18] sm:$0xff]
      %v1581 = vld [vmem:[%s1576 + $0x20] sm:$0xff]
      %v1582 = vld [vmem:[%s1576 + $0x28] sm:$0xff]
      %v1583 = vld [vmem:[%s1576 + $0x30] sm:$0xff]
      %v1584 = vld [vmem:[%s1576 + $0x38] sm:$0xff]
      %v1585 = vld [vmem:[%s1576 + $0x40] sm:$0xff]
      %v1586 = vld [vmem:[%s1576 + $0x48] sm:$0xff]
      %v1587 = vld [vmem:[%s1576 + $0x50] sm:$0xff]
      %v1588 = vld [vmem:[%s1576 + $0x58] sm:$0xff]
      %v1589 = vld [vmem:[%s1576 + $0x60] sm:$0xff]
      %v1590 = vld [vmem:[%s1576 + $0x68] sm:$0xff]
      %v1591 = vld [vmem:[%s1576 + $0x70] sm:$0xff]
      %v1592 = vld [vmem:[%s1576 + $0x78] sm:$0xff]
      %v1593 = vpack.c.bf16 %v1578, %v1577
      %v1594 = vpack.c.bf16 %v1580, %v1579
      %v1595 = vpack.c.bf16 %v1582, %v1581
      %v1596 = vpack.c.bf16 %v1584, %v1583
      %v1597 = vpack.c.bf16 %v1586, %v1585
      %v1598 = vpack.c.bf16 %v1588, %v1587
      %v1599 = vpack.c.bf16 %v1590, %v1589
      %v1600 = vpack.c.bf16 %v1592, %v1591
      %v1601 = vld [vmem:[%s1069] sm:$0xff]
      %v1602 = vld [vmem:[%s1069 + $0x8] sm:$0xf]
      %v1603 = vpack.c.bf16 %v1602, %v1601
      %v1605 = vsel %vm1073, %v1593, 0
      %v1608 = vsel %vm1073, %v1594, 0
      %v1611 = vsel %vm1073, %v1595, 0
      %v1614 = vsel %vm1073, %v1596, 0
      %v1617 = vsel %vm1073, %v1597, 0
      %v1620 = vsel %vm1073, %v1598, 0
      %v1623 = vsel %vm1073, %v1599, 0
      %v1626 = vsel %vm1073, %v1600, 0
      %v1629 = vsel %vm1098, %v1603, 0
      %1631 = vmatprep.subr.bf16.mxu0 0
      %1632 = vmatpush1.bf16.msra.mxu0 %v1629
      %1633 = vmatprep.subr.bf16.mxu0 0
      %1634 = vmatpush1.bf16.msra.mxu0 0
      %1635 = vmatprep.subr.bf16.mxu0 0
      %1636 = vmatpush1.bf16.msra.mxu0 0
      %1637 = vmatprep.subr.bf16.mxu0 0
      %1638 = vmatpush1.bf16.msra.mxu0 0
      %1639 = vmatprep.subr.bf16.mxu0 0
      %1640 = vmatpush1.bf16.msra.mxu0 0
      %1641 = vmatprep.subr.bf16.mxu0 0
      %1642 = vmatpush1.bf16.msra.mxu0 0
      %1643 = vmatprep.subr.bf16.mxu0 0
      %1644 = vmatpush1.bf16.msra.mxu0 0
      %1645 = vmatprep.subr.bf16.mxu0 0
      %1646 = vmatpush1.bf16.msra.mxu0 0
      %1647 = vmatprep.subr.bf16.mxu0 0
      %1648 = vmatpush1.bf16.msra.mxu0 0
      %1649 = vmatprep.subr.bf16.mxu0 0
      %1650 = vmatpush1.bf16.msra.mxu0 0
      %1651 = vmatprep.subr.bf16.mxu0 0
      %1652 = vmatpush1.bf16.msra.mxu0 0
      %1653 = vmatprep.subr.bf16.mxu0 0
      %1654 = vmatpush1.bf16.msra.mxu0 0
      %1655 = vmatprep.subr.bf16.mxu0 0
      %1656 = vmatpush1.bf16.msra.mxu0 0
      %1657 = vmatprep.subr.bf16.mxu0 0
      %1658 = vmatpush1.bf16.msra.mxu0 0
      %1659 = vmatprep.subr.bf16.mxu0 0
      %1660 = vmatpush1.bf16.msra.mxu0 0
      %1661 = vmatprep.subr.bf16.mxu0 0
      %1662 = vmatpush1.bf16.msra.mxu0 0
      %1663 = vmatprep.mubr.bf16.mxu0 0
      %1664 = vmatmul.mubr.bf16.gmra.mrb[0].mxu0 %v1605
      %v1665 = vpop.f32.mrb[0].mxu0
      %v1666 = vadd.f32 0.0, %v1665
      %v1667 = vpop.f32.mrb[0].mxu0
      %v1668 = vpop.f32.mrb[0].mxu0
      %v1669 = vadd.f32 0.0, %v1668
      %v1670 = vpop.f32.mrb[0].mxu0
      %1671 = vmatprep.mubr.bf16.mxu0 0
      %1672 = vmatmul.mubr.bf16.gmra.mrb[0].mxu0 %v1608
      %v1673 = vpop.f32.mrb[0].mxu0
      %v1674 = vadd.f32 0.0, %v1673
      %v1675 = vpop.f32.mrb[0].mxu0
      %v1676 = vpop.f32.mrb[0].mxu0
      %v1677 = vadd.f32 0.0, %v1676
      %v1678 = vpop.f32.mrb[0].mxu0
      %1679 = vmatprep.mubr.bf16.mxu0 0
      %1680 = vmatmul.mubr.bf16.gmra.mrb[0].mxu0 %v1611
      %v1681 = vpop.f32.mrb[0].mxu0
      %v1682 = vadd.f32 0.0, %v1681
      %v1683 = vpop.f32.mrb[0].mxu0
      %v1684 = vpop.f32.mrb[0].mxu0
      %v1685 = vadd.f32 0.0, %v1684
      %v1686 = vpop.f32.mrb[0].mxu0
      %1687 = vmatprep.mubr.bf16.mxu0 0
      %1688 = vmatmul.mubr.bf16.gmra.mrb[0].mxu0 %v1614
      %v1689 = vpop.f32.mrb[0].mxu0
      %v1690 = vadd.f32 0.0, %v1689
      %v1691 = vpop.f32.mrb[0].mxu0
      %v1692 = vpop.f32.mrb[0].mxu0
      %v1693 = vadd.f32 0.0, %v1692
      %v1694 = vpop.f32.mrb[0].mxu0
      %1695 = vmatprep.mubr.bf16.mxu0 0
      %1696 = vmatmul.mubr.bf16.gmra.mrb[0].mxu0 %v1617
      %v1697 = vpop.f32.mrb[0].mxu0
      %v1698 = vadd.f32 0.0, %v1697
      %v1699 = vpop.f32.mrb[0].mxu0
      %v1700 = vpop.f32.mrb[0].mxu0
      %v1701 = vadd.f32 0.0, %v1700
      %v1702 = vpop.f32.mrb[0].mxu0
      %1703 = vmatprep.mubr.bf16.mxu0 0
      %1704 = vmatmul.mubr.bf16.gmra.mrb[0].mxu0 %v1620
      %v1705 = vpop.f32.mrb[0].mxu0
      %v1706 = vadd.f32 0.0, %v1705
      %v1707 = vpop.f32.mrb[0].mxu0
      %v1708 = vpop.f32.mrb[0].mxu0
      %v1709 = vadd.f32 0.0, %v1708
      %v1710 = vpop.f32.mrb[0].mxu0
      %1711 = vmatprep.mubr.bf16.mxu0 0
      %1712 = vmatmul.mubr.bf16.gmra.mrb[0].mxu0 %v1623
      %v1713 = vpop.f32.mrb[0].mxu0
      %v1714 = vadd.f32 0.0, %v1713
      %v1715 = vpop.f32.mrb[0].mxu0
      %v1716 = vpop.f32.mrb[0].mxu0
      %v1717 = vadd.f32 0.0, %v1716
      %v1718 = vpop.f32.mrb[0].mxu0
      %1719 = vmatprep.mubr.bf16.mxu0 0
      %1720 = vmatmul.mubr.bf16.gmra.mrb[0].mxu0 %v1626
      %v1721 = vpop.f32.mrb[0].mxu0
      %v1722 = vadd.f32 0.0, %v1721
      %v1723 = vpop.f32.mrb[0].mxu0
      %v1724 = vpop.f32.mrb[0].mxu0
      %v1725 = vadd.f32 0.0, %v1724
      %v1726 = vpop.f32.mrb[0].mxu0
      %1727 = vdwg.mxu0
      %v1729 = vsel %vm1073, %v1565, 0
      %v1732 = vsel %vm1073, %v1566, 0
      %v1735 = vsel %vm1073, %v1567, 0
      %v1738 = vsel %vm1073, %v1568, 0
      %v1741 = vsel %vm1073, %v1569, 0
      %v1744 = vsel %vm1073, %v1570, 0
      %v1747 = vsel %vm1073, %v1571, 0
      %v1750 = vsel %vm1073, %v1572, 0
      %v1753 = vsel %vm1098, %v1575, 0
      %1755 = vmatprep.subr.bf16.mxu0 0
      %1756 = vmatpush1.bf16.msra.mxu0 %v1753
      %1757 = vmatprep.subr.bf16.mxu0 0
      %1758 = vmatpush1.bf16.msra.mxu0 0
      %1759 = vmatprep.subr.bf16.mxu0 0
      %1760 = vmatpush1.bf16.msra.mxu0 0
      %1761 = vmatprep.subr.bf16.mxu0 0
      %1762 = vmatpush1.bf16.msra.mxu0 0
      %1763 = vmatprep.subr.bf16.mxu0 0
      %1764 = vmatpush1.bf16.msra.mxu0 0
      %1765 = vmatprep.subr.bf16.mxu0 0
      %1766 = vmatpush1.bf16.msra.mxu0 0
      %1767 = vmatprep.subr.bf16.mxu0 0
      %1768 = vmatpush1.bf16.msra.mxu0 0
      %1769 = vmatprep.subr.bf16.mxu0 0
      %1770 = vmatpush1.bf16.msra.mxu0 0
      %1771 = vmatprep.subr.bf16.mxu0 0
      %1772 = vmatpush1.bf16.msra.mxu0 0
      %1773 = vmatprep.subr.bf16.mxu0 0
      %1774 = vmatpush1.bf16.msra.mxu0 0
      %1775 = vmatprep.subr.bf16.mxu0 0
      %1776 = vmatpush1.bf16.msra.mxu0 0
      %1777 = vmatprep.subr.bf16.mxu0 0
      %1778 = vmatpush1.bf16.msra.mxu0 0
      %1779 = vmatprep.subr.bf16.mxu0 0
      %1780 = vmatpush1.bf16.msra.mxu0 0
      %1781 = vmatprep.subr.bf16.mxu0 0
      %1782 = vmatpush1.bf16.msra.mxu0 0
      %1783 = vmatprep.subr.bf16.mxu0 0
      %1784 = vmatpush1.bf16.msra.mxu0 0
      %1785 = vmatprep.subr.bf16.mxu0 0
      %1786 = vmatpush1.bf16.msra.mxu0 0
      %1787 = vmatprep.mubr.bf16.mxu0 0
      %1788 = vmatmul.mubr.bf16.gmra.mrb[0].mxu0 %v1729
      %v1789 = vpop.f32.mrb[0].mxu0
      %v1790 = vadd.f32 %v1666, %v1789
      %v1791 = vpop.f32.mrb[0].mxu0
      %v1792 = vpop.f32.mrb[0].mxu0
      %v1793 = vadd.f32 %v1669, %v1792
      %v1794 = vpop.f32.mrb[0].mxu0
      %1795 = vmatprep.mubr.bf16.mxu0 0
      %1796 = vmatmul.mubr.bf16.gmra.mrb[0].mxu0 %v1732
      %v1797 = vpop.f32.mrb[0].mxu0
      %v1798 = vadd.f32 %v1674, %v1797
      %v1799 = vpop.f32.mrb[0].mxu0
      %v1800 = vpop.f32.mrb[0].mxu0
      %v1801 = vadd.f32 %v1677, %v1800
      %v1802 = vpop.f32.mrb[0].mxu0
      %1803 = vmatprep.mubr.bf16.mxu0 0
      %1804 = vmatmul.mubr.bf16.gmra.mrb[0].mxu0 %v1735
      %v1805 = vpop.f32.mrb[0].mxu0
      %v1806 = vadd.f32 %v1682, %v1805
      %v1807 = vpop.f32.mrb[0].mxu0
      %v1808 = vpop.f32.mrb[0].mxu0
      %v1809 = vadd.f32 %v1685, %v1808
      %v1810 = vpop.f32.mrb[0].mxu0
      %1811 = vmatprep.mubr.bf16.mxu0 0
      %1812 = vmatmul.mubr.bf16.gmra.mrb[0].mxu0 %v1738
      %v1813 = vpop.f32.mrb[0].mxu0
      %v1814 = vadd.f32 %v1690, %v1813
      %v1815 = vpop.f32.mrb[0].mxu0
      %v1816 = vpop.f32.mrb[0].mxu0
      %v1817 = vadd.f32 %v1693, %v1816
      %v1818 = vpop.f32.mrb[0].mxu0
      %1819 = vmatprep.mubr.bf16.mxu0 0
      %1820 = vmatmul.mubr.bf16.gmra.mrb[0].mxu0 %v1741
      %v1821 = vpop.f32.mrb[0].mxu0
      %v1822 = vadd.f32 %v1698, %v1821
      %v1823 = vpop.f32.mrb[0].mxu0
      %v1824 = vpop.f32.mrb[0].mxu0
      %v1825 = vadd.f32 %v1701, %v1824
      %v1826 = vpop.f32.mrb[0].mxu0
      %1827 = vmatprep.mubr.bf16.mxu0 0
      %1828 = vmatmul.mubr.bf16.gmra.mrb[0].mxu0 %v1744
      %v1829 = vpop.f32.mrb[0].mxu0
      %v1830 = vadd.f32 %v1706, %v1829
      %v1831 = vpop.f32.mrb[0].mxu0
      %v1832 = vpop.f32.mrb[0].mxu0
      %v1833 = vadd.f32 %v1709, %v1832
      %v1834 = vpop.f32.mrb[0].mxu0
      %1835 = vmatprep.mubr.bf16.mxu0 0
      %1836 = vmatmul.mubr.bf16.gmra.mrb[0].mxu0 %v1747
      %v1837 = vpop.f32.mrb[0].mxu0
      %v1838 = vadd.f32 %v1714, %v1837
      %v1839 = vpop.f32.mrb[0].mxu0
      %v1840 = vpop.f32.mrb[0].mxu0
      %v1841 = vadd.f32 %v1717, %v1840
      %v1842 = vpop.f32.mrb[0].mxu0
      %1843 = vmatprep.mubr.bf16.mxu0 0
      %1844 = vmatmul.mubr.bf16.gmra.mrb[0].mxu0 %v1750
      %v1845 = vpop.f32.mrb[0].mxu0
      %v1846 = vadd.f32 %v1722, %v1845
      %v1847 = vpop.f32.mrb[0].mxu0
      %v1848 = vpop.f32.mrb[0].mxu0
      %v1849 = vadd.f32 %v1725, %v1848
      %v1850 = vpop.f32.mrb[0].mxu0
      %1851 = vdwg.mxu0
      %s1852 = scalar_lea.vmem [#allocation3], 160
      %v1853 = vld [vmem:[%s1852] sm:$0xff]
      %v1854 = vld [vmem:[%s1852 + $0x8] sm:$0xff]
      %v1855 = vld [vmem:[%s1852 + $0x10] sm:$0xff]
      %v1856 = vld [vmem:[%s1852 + $0x18] sm:$0xff]
      %v1857 = vld [vmem:[%s1852 + $0x20] sm:$0xff]
      %v1858 = vld [vmem:[%s1852 + $0x28] sm:$0xff]
      %v1859 = vld [vmem:[%s1852 + $0x30] sm:$0xff]
      %v1860 = vld [vmem:[%s1852 + $0x38] sm:$0xff]
      %v1861 = vld [vmem:[%s1852 + $0x40] sm:$0xff]
      %v1862 = vld [vmem:[%s1852 + $0x48] sm:$0xff]
      %v1863 = vld [vmem:[%s1852 + $0x50] sm:$0xff]
      %v1864 = vld [vmem:[%s1852 + $0x58] sm:$0xff]
      %v1865 = vld [vmem:[%s1852 + $0x60] sm:$0xff]
      %v1866 = vld [vmem:[%s1852 + $0x68] sm:$0xff]
      %v1867 = vld [vmem:[%s1852 + $0x70] sm:$0xff]
      %v1868 = vld [vmem:[%s1852 + $0x78] sm:$0xff]
      %v1869 = vpack.c.bf16 %v1854, %v1853
      %v1870 = vpack.c.bf16 %v1856, %v1855
      %v1871 = vpack.c.bf16 %v1858, %v1857
      %v1872 = vpack.c.bf16 %v1860, %v1859
      %v1873 = vpack.c.bf16 %v1862, %v1861
      %v1874 = vpack.c.bf16 %v1864, %v1863
      %v1875 = vpack.c.bf16 %v1866, %v1865
      %v1876 = vpack.c.bf16 %v1868, %v1867
      %v1877 = vld [vmem:[%s1348] sm:$0xff]
      %v1878 = vld [vmem:[%s1348 + $0x8] sm:$0xf]
      %v1879 = vpack.c.bf16 %v1878, %v1877
      %v1881 = vsel %vm1073, %v1869, 0
      %v1884 = vsel %vm1073, %v1870, 0
      %v1887 = vsel %vm1073, %v1871, 0
      %v1890 = vsel %vm1073, %v1872, 0
      %v1893 = vsel %vm1073, %v1873, 0
      %v1896 = vsel %vm1073, %v1874, 0
      %v1899 = vsel %vm1073, %v1875, 0
      %v1902 = vsel %vm1073, %v1876, 0
      %v1905 = vsel %vm1098, %v1879, 0
      %1907 = vmatprep.subr.bf16.mxu0 0
      %1908 = vmatpush1.bf16.msra.mxu0 %v1905
      %1909 = vmatprep.subr.bf16.mxu0 0
      %1910 = vmatpush1.bf16.msra.mxu0 0
      %1911 = vmatprep.subr.bf16.mxu0 0
      %1912 = vmatpush1.bf16.msra.mxu0 0
      %1913 = vmatprep.subr.bf16.mxu0 0
      %1914 = vmatpush1.bf16.msra.mxu0 0
      %1915 = vmatprep.subr.bf16.mxu0 0
      %1916 = vmatpush1.bf16.msra.mxu0 0
      %1917 = vmatprep.subr.bf16.mxu0 0
      %1918 = vmatpush1.bf16.msra.mxu0 0
      %1919 = vmatprep.subr.bf16.mxu0 0
      %1920 = vmatpush1.bf16.msra.mxu0 0
      %1921 = vmatprep.subr.bf16.mxu0 0
      %1922 = vmatpush1.bf16.msra.mxu0 0
      %1923 = vmatprep.subr.bf16.mxu0 0
      %1924 = vmatpush1.bf16.msra.mxu0 0
      %1925 = vmatprep.subr.bf16.mxu0 0
      %1926 = vmatpush1.bf16.msra.mxu0 0
      %1927 = vmatprep.subr.bf16.mxu0 0
      %1928 = vmatpush1.bf16.msra.mxu0 0
      %1929 = vmatprep.subr.bf16.mxu0 0
      %1930 = vmatpush1.bf16.msra.mxu0 0
      %1931 = vmatprep.subr.bf16.mxu0 0
      %1932 = vmatpush1.bf16.msra.mxu0 0
      %1933 = vmatprep.subr.bf16.mxu0 0
      %1934 = vmatpush1.bf16.msra.mxu0 0
      %1935 = vmatprep.subr.bf16.mxu0 0
      %1936 = vmatpush1.bf16.msra.mxu0 0
      %1937 = vmatprep.subr.bf16.mxu0 0
      %1938 = vmatpush1.bf16.msra.mxu0 0
      %1939 = vmatprep.mubr.bf16.mxu0 0
      %1940 = vmatmul.mubr.bf16.gmra.mrb[0].mxu0 %v1881
      %v1941 = vpop.f32.mrb[0].mxu0
      %v1942 = vadd.f32 0.0, %v1941
      %v1943 = vpop.f32.mrb[0].mxu0
      %v1944 = vpop.f32.mrb[0].mxu0
      %v1945 = vadd.f32 0.0, %v1944
      %v1946 = vpop.f32.mrb[0].mxu0
      %1947 = vmatprep.mubr.bf16.mxu0 0
      %1948 = vmatmul.mubr.bf16.gmra.mrb[0].mxu0 %v1884
      %v1949 = vpop.f32.mrb[0].mxu0
      %v1950 = vadd.f32 0.0, %v1949
      %v1951 = vpop.f32.mrb[0].mxu0
      %v1952 = vpop.f32.mrb[0].mxu0
      %v1953 = vadd.f32 0.0, %v1952
      %v1954 = vpop.f32.mrb[0].mxu0
      %1955 = vmatprep.mubr.bf16.mxu0 0
      %1956 = vmatmul.mubr.bf16.gmra.mrb[0].mxu0 %v1887
      %v1957 = vpop.f32.mrb[0].mxu0
      %v1958 = vadd.f32 0.0, %v1957
      %v1959 = vpop.f32.mrb[0].mxu0
      %v1960 = vpop.f32.mrb[0].mxu0
      %v1961 = vadd.f32 0.0, %v1960
      %v1962 = vpop.f32.mrb[0].mxu0
      %1963 = vmatprep.mubr.bf16.mxu0 0
      %1964 = vmatmul.mubr.bf16.gmra.mrb[0].mxu0 %v1890
      %v1965 = vpop.f32.mrb[0].mxu0
      %v1966 = vadd.f32 0.0, %v1965
      %v1967 = vpop.f32.mrb[0].mxu0
      %v1968 = vpop.f32.mrb[0].mxu0
      %v1969 = vadd.f32 0.0, %v1968
      %v1970 = vpop.f32.mrb[0].mxu0
      %1971 = vmatprep.mubr.bf16.mxu0 0
      %1972 = vmatmul.mubr.bf16.gmra.mrb[0].mxu0 %v1893
      %v1973 = vpop.f32.mrb[0].mxu0
      %v1974 = vadd.f32 0.0, %v1973
      %v1975 = vpop.f32.mrb[0].mxu0
      %v1976 = vpop.f32.mrb[0].mxu0
      %v1977 = vadd.f32 0.0, %v1976
      %v1978 = vpop.f32.mrb[0].mxu0
      %1979 = vmatprep.mubr.bf16.mxu0 0
      %1980 = vmatmul.mubr.bf16.gmra.mrb[0].mxu0 %v1896
      %v1981 = vpop.f32.mrb[0].mxu0
      %v1982 = vadd.f32 0.0, %v1981
      %v1983 = vpop.f32.mrb[0].mxu0
      %v1984 = vpop.f32.mrb[0].mxu0
      %v1985 = vadd.f32 0.0, %v1984
      %v1986 = vpop.f32.mrb[0].mxu0
      %1987 = vmatprep.mubr.bf16.mxu0 0
      %1988 = vmatmul.mubr.bf16.gmra.mrb[0].mxu0 %v1899
      %v1989 = vpop.f32.mrb[0].mxu0
      %v1990 = vadd.f32 0.0, %v1989
      %v1991 = vpop.f32.mrb[0].mxu0
      %v1992 = vpop.f32.mrb[0].mxu0
      %v1993 = vadd.f32 0.0, %v1992
      %v1994 = vpop.f32.mrb[0].mxu0
      %1995 = vmatprep.mubr.bf16.mxu0 0
      %1996 = vmatmul.mubr.bf16.gmra.mrb[0].mxu0 %v1902
      %v1997 = vpop.f32.mrb[0].mxu0
      %v1998 = vadd.f32 0.0, %v1997
      %v1999 = vpop.f32.mrb[0].mxu0
      %v2000 = vpop.f32.mrb[0].mxu0
      %v2001 = vadd.f32 0.0, %v2000
      %v2002 = vpop.f32.mrb[0].mxu0
      %2003 = vdwg.mxu0
      %v2004 = vadd.f32 %v1790, %v1942
      %v2005 = vadd.f32 %v1793, %v1945
      %v2006 = vadd.f32 %v1798, %v1950
      %v2007 = vadd.f32 %v1801, %v1953
      %v2008 = vadd.f32 %v1806, %v1958
      %v2009 = vadd.f32 %v1809, %v1961
      %v2010 = vadd.f32 %v1814, %v1966
      %v2011 = vadd.f32 %v1817, %v1969
      %v2012 = vadd.f32 %v1822, %v1974
      %v2013 = vadd.f32 %v1825, %v1977
      %v2014 = vadd.f32 %v1830, %v1982
      %v2015 = vadd.f32 %v1833, %v1985
      %v2016 = vadd.f32 %v1838, %v1990
      %v2017 = vadd.f32 %v1841, %v1993
      %v2018 = vadd.f32 %v1846, %v1998
      %v2019 = vadd.f32 %v1849, %v2001
      %v2020 = vld [vmem:[%s2] sm:$0x1]
      %v2022 = vlaneseq
      %v2023 = vshrl.u32 %v2022, 7
      %v2024 = vsub.s32 0, %v2023
      %v2025 = vrot.slane %v2020, %v2024
      %v2027 = vadd.f32 %v2004, %v2025
      %v2028 = vadd.f32 %v2005, %v2025
      %v2029 = vadd.f32 %v2006, %v2025
      %v2030 = vadd.f32 %v2007, %v2025
      %v2031 = vadd.f32 %v2008, %v2025
      %v2032 = vadd.f32 %v2009, %v2025
      %v2033 = vadd.f32 %v2010, %v2025
      %v2034 = vadd.f32 %v2011, %v2025
      %v2035 = vadd.f32 %v2012, %v2025
      %v2036 = vadd.f32 %v2013, %v2025
      %v2037 = vadd.f32 %v2014, %v2025
      %v2038 = vadd.f32 %v2015, %v2025
      %v2039 = vadd.f32 %v2016, %v2025
      %v2040 = vadd.f32 %v2017, %v2025
      %v2041 = vadd.f32 %v2018, %v2025
      %v2042 = vadd.f32 %v2019, %v2025
      %v2043 = vmax.f32 %v2027, 0.0
      %v2044 = vmax.f32 %v2028, 0.0
      %v2045 = vmax.f32 %v2029, 0.0
      %v2046 = vmax.f32 %v2030, 0.0
      %v2047 = vmax.f32 %v2031, 0.0
      %v2048 = vmax.f32 %v2032, 0.0
      %v2049 = vmax.f32 %v2033, 0.0
      %v2050 = vmax.f32 %v2034, 0.0
      %v2051 = vmax.f32 %v2035, 0.0
      %v2052 = vmax.f32 %v2036, 0.0
      %v2053 = vmax.f32 %v2037, 0.0
      %v2054 = vmax.f32 %v2038, 0.0
      %v2055 = vmax.f32 %v2039, 0.0
      %v2056 = vmax.f32 %v2040, 0.0
      %v2057 = vmax.f32 %v2041, 0.0
      %v2058 = vmax.f32 %v2042, 0.0
      %s2059 = scalar_lea.vmem [#allocation4], 216
      %2060 = vst [vmem:[%s2059 + $0x1] sm:$0xff] %v2043
      %2061 = vst [vmem:[%s2059 + $0x9] sm:$0xff] %v2044
      %2062 = vst [vmem:[%s2059 + $0x19] sm:$0xff] %v2045
      %2063 = vst [vmem:[%s2059 + $0x21] sm:$0xff] %v2046
      %2064 = vst [vmem:[%s2059 + $0x31] sm:$0xff] %v2047
      %2065 = vst [vmem:[%s2059 + $0x39] sm:$0xff] %v2048
      %2066 = vst [vmem:[%s2059 + $0x49] sm:$0xff] %v2049
      %2067 = vst [vmem:[%s2059 + $0x51] sm:$0xff] %v2050
      %2068 = vst [vmem:[%s2059 + $0x61] sm:$0xff] %v2051
      %2069 = vst [vmem:[%s2059 + $0x69] sm:$0xff] %v2052
      %2070 = vst [vmem:[%s2059 + $0x79] sm:$0xff] %v2053
      %2071 = vst [vmem:[%s2059 + $0x81] sm:$0xff] %v2054
      %2072 = vst [vmem:[%s2059 + $0x91] sm:$0xff] %v2055
      %2073 = vst [vmem:[%s2059 + $0x99] sm:$0xff] %v2056
      %2074 = vst [vmem:[%s2059 + $0xa9] sm:$0xff] %v2057
      %2075 = vst [vmem:[%s2059 + $0xb1] sm:$0xff] %v2058
      %v2076 = vld [vmem:[#allocation4] sm:$0xff]
      %v2077 = vld [vmem:[#allocation4 + $0x8] sm:$0xff]
      %v2078 = vld [vmem:[#allocation4 + $0x18] sm:$0xff]
      %v2079 = vld [vmem:[#allocation4 + $0x20] sm:$0xff]
      %v2080 = vld [vmem:[#allocation4 + $0x30] sm:$0xff]
      %v2081 = vld [vmem:[#allocation4 + $0x38] sm:$0xff]
      %v2082 = vld [vmem:[#allocation4 + $0x48] sm:$0xff]
      %v2083 = vld [vmem:[#allocation4 + $0x50] sm:$0xff]
      %v2084 = vld [vmem:[#allocation4 + $0x60] sm:$0xff]
      %v2085 = vld [vmem:[#allocation4 + $0x68] sm:$0xff]
      %v2086 = vld [vmem:[#allocation4 + $0x78] sm:$0xff]
      %v2087 = vld [vmem:[#allocation4 + $0x80] sm:$0xff]
      %v2088 = vld [vmem:[#allocation4 + $0x90] sm:$0xff]
      %v2089 = vld [vmem:[#allocation4 + $0x98] sm:$0xff]
      %v2090 = vld [vmem:[#allocation4 + $0xa8] sm:$0xff]
      %v2091 = vld [vmem:[#allocation4 + $0xb0] sm:$0xff]
      %v2092 = vld [vmem:[#allocation4 + $0xc0] sm:$0xff]
      %v2093 = vld [vmem:[#allocation4 + $0xc8] sm:$0xff]
      %v2094 = vld [vmem:[#allocation4 + $0xd8] sm:$0xff]
      %v2095 = vld [vmem:[#allocation4 + $0xe0] sm:$0xff]
      %v2096 = vld [vmem:[#allocation4 + $0xf0] sm:$0xff]
      %v2097 = vld [vmem:[#allocation4 + $0xf8] sm:$0xff]
      %v2098 = vld [vmem:[#allocation4 + $0x108] sm:$0xff]
      %v2099 = vld [vmem:[#allocation4 + $0x110] sm:$0xff]
      %v2100 = vld [vmem:[#allocation4 + $0x120] sm:$0xff]
      %v2101 = vld [vmem:[#allocation4 + $0x128] sm:$0xff]
      %v2102 = vld [vmem:[#allocation4 + $0x138] sm:$0xff]
      %v2103 = vld [vmem:[#allocation4 + $0x140] sm:$0xff]
      %v2104 = vld [vmem:[#allocation4 + $0x150] sm:$0xff]
      %v2105 = vld [vmem:[#allocation4 + $0x158] sm:$0xff]
      %v2106 = vld [vmem:[#allocation4 + $0x168] sm:$0xff]
      %v2107 = vld [vmem:[#allocation4 + $0x170] sm:$0xff]
      %v2108 = vld [vmem:[#allocation4 + $0x180] sm:$0xff]
      %v2109 = vld [vmem:[#allocation4 + $0x188] sm:$0xff]
      %v2110 = vld [vmem:[#allocation4 + $0x198] sm:$0xff]
      %v2111 = vld [vmem:[#allocation4 + $0x1a0] sm:$0xff]
      %2112 = vst [vmem:[#allocation5] sm:$0xff] %v2076
      %2113 = vst [vmem:[#allocation5 + $0x18] sm:$0xff] %v2077
      %2114 = vst [vmem:[#allocation5 + $0x30] sm:$0xff] %v2078
      %2115 = vst [vmem:[#allocation5 + $0x48] sm:$0xff] %v2079
      %2116 = vst [vmem:[#allocation5 + $0x60] sm:$0xff] %v2080
      %2117 = vst [vmem:[#allocation5 + $0x78] sm:$0xff] %v2081
      %2118 = vst [vmem:[#allocation5 + $0x90] sm:$0xff] %v2082
      %2119 = vst [vmem:[#allocation5 + $0xa8] sm:$0xff] %v2083
      %2120 = vst [vmem:[#allocation5 + $0xc0] sm:$0xff] %v2084
      %2121 = vst [vmem:[#allocation5 + $0xd8] sm:$0xff] %v2085
      %2122 = vst [vmem:[#allocation5 + $0xf0] sm:$0xff] %v2086
      %2123 = vst [vmem:[#allocation5 + $0x108] sm:$0xff] %v2087
      %2124 = vst [vmem:[#allocation5 + $0x120] sm:$0xff] %v2088
      %2125 = vst [vmem:[#allocation5 + $0x138] sm:$0xff] %v2089
      %2126 = vst [vmem:[#allocation5 + $0x150] sm:$0xff] %v2090
      %2127 = vst [vmem:[#allocation5 + $0x168] sm:$0xff] %v2091
      %2128 = vst [vmem:[#allocation5 + $0x180] sm:$0xff] %v2092
      %2129 = vst [vmem:[#allocation5 + $0x198] sm:$0xff] %v2093
      %2130 = vst [vmem:[#allocation5 + $0x1b0] sm:$0xff] %v2094
      %2131 = vst [vmem:[#allocation5 + $0x1c8] sm:$0xff] %v2095
      %2132 = vst [vmem:[#allocation5 + $0x1e0] sm:$0xff] %v2096
      %2133 = vst [vmem:[#allocation5 + $0x1f8] sm:$0xff] %v2097
      %2134 = vst [vmem:[#allocation5 + $0x210] sm:$0xff] %v2098
      %2135 = vst [vmem:[#allocation5 + $0x228] sm:$0xff] %v2099
      %2136 = vst [vmem:[#allocation5 + $0x240] sm:$0xff] %v2100
      %2137 = vst [vmem:[#allocation5 + $0x258] sm:$0xff] %v2101
      %2138 = vst [vmem:[#allocation5 + $0x270] sm:$0xff] %v2102
      %2139 = vst [vmem:[#allocation5 + $0x288] sm:$0xff] %v2103
      %2140 = vst [vmem:[#allocation5 + $0x2a0] sm:$0xff] %v2104
      %2141 = vst [vmem:[#allocation5 + $0x2b8] sm:$0xff] %v2105
      %2142 = vst [vmem:[#allocation5 + $0x2d0] sm:$0xff] %v2106
      %2143 = vst [vmem:[#allocation5 + $0x2e8] sm:$0xff] %v2107
      %2144 = vst [vmem:[#allocation5 + $0x300] sm:$0xff] %v2108
      %2145 = vst [vmem:[#allocation5 + $0x318] sm:$0xff] %v2109
      %2146 = vst [vmem:[#allocation5 + $0x330] sm:$0xff] %v2110
      %2147 = vst [vmem:[#allocation5 + $0x348] sm:$0xff] %v2111
      %v2148 = vld [vmem:[#allocation4 + $0x1] sm:$0xff]
      %v2149 = vld [vmem:[#allocation4 + $0x9] sm:$0xff]
      %v2150 = vld [vmem:[#allocation4 + $0x19] sm:$0xff]
      %v2151 = vld [vmem:[#allocation4 + $0x21] sm:$0xff]
      %v2152 = vld [vmem:[#allocation4 + $0x31] sm:$0xff]
      %v2153 = vld [vmem:[#allocation4 + $0x39] sm:$0xff]
      %v2154 = vld [vmem:[#allocation4 + $0x49] sm:$0xff]
      %v2155 = vld [vmem:[#allocation4 + $0x51] sm:$0xff]
      %v2156 = vld [vmem:[#allocation4 + $0x61] sm:$0xff]
      %v2157 = vld [vmem:[#allocation4 + $0x69] sm:$0xff]
      %v2158 = vld [vmem:[#allocation4 + $0x79] sm:$0xff]
      %v2159 = vld [vmem:[#allocation4 + $0x81] sm:$0xff]
      %v2160 = vld [vmem:[#allocation4 + $0x91] sm:$0xff]
      %v2161 = vld [vmem:[#allocation4 + $0x99] sm:$0xff]
      %v2162 = vld [vmem:[#allocation4 + $0xa9] sm:$0xff]
      %v2163 = vld [vmem:[#allocation4 + $0xb1] sm:$0xff]
      %v2164 = vld [vmem:[#allocation4 + $0xc1] sm:$0xff]
      %v2165 = vld [vmem:[#allocation4 + $0xc9] sm:$0xff]
      %v2166 = vld [vmem:[#allocation4 + $0xd9] sm:$0xff]
      %v2167 = vld [vmem:[#allocation4 + $0xe1] sm:$0xff]
      %v2168 = vld [vmem:[#allocation4 + $0xf1] sm:$0xff]
      %v2169 = vld [vmem:[#allocation4 + $0xf9] sm:$0xff]
      %v2170 = vld [vmem:[#allocation4 + $0x109] sm:$0xff]
      %v2171 = vld [vmem:[#allocation4 + $0x111] sm:$0xff]
      %v2172 = vld [vmem:[#allocation4 + $0x121] sm:$0xff]
      %v2173 = vld [vmem:[#allocation4 + $0x129] sm:$0xff]
      %v2174 = vld [vmem:[#allocation4 + $0x139] sm:$0xff]
      %v2175 = vld [vmem:[#allocation4 + $0x141] sm:$0xff]
      %v2176 = vld [vmem:[#allocation4 + $0x151] sm:$0xff]
      %v2177 = vld [vmem:[#allocation4 + $0x159] sm:$0xff]
      %v2178 = vld [vmem:[#allocation4 + $0x169] sm:$0xff]
      %v2179 = vld [vmem:[#allocation4 + $0x171] sm:$0xff]
      %v2180 = vld [vmem:[#allocation4 + $0x181] sm:$0xff]
      %v2181 = vld [vmem:[#allocation4 + $0x189] sm:$0xff]
      %v2182 = vld [vmem:[#allocation4 + $0x199] sm:$0xff]
      %v2183 = vld [vmem:[#allocation4 + $0x1a1] sm:$0xff]
      %2184 = vst [vmem:[#allocation5 + $0x8] sm:$0xff] %v2148
      %2185 = vst [vmem:[#allocation5 + $0x20] sm:$0xff] %v2149
      %2186 = vst [vmem:[#allocation5 + $0x38] sm:$0xff] %v2150
      %2187 = vst [vmem:[#allocation5 + $0x50] sm:$0xff] %v2151
      %2188 = vst [vmem:[#allocation5 + $0x68] sm:$0xff] %v2152
      %2189 = vst [vmem:[#allocation5 + $0x80] sm:$0xff] %v2153
      %2190 = vst [vmem:[#allocation5 + $0x98] sm:$0xff] %v2154
      %2191 = vst [vmem:[#allocation5 + $0xb0] sm:$0xff] %v2155
      %2192 = vst [vmem:[#allocation5 + $0xc8] sm:$0xff] %v2156
      %2193 = vst [vmem:[#allocation5 + $0xe0] sm:$0xff] %v2157
      %2194 = vst [vmem:[#allocation5 + $0xf8] sm:$0xff] %v2158
      %2195 = vst [vmem:[#allocation5 + $0x110] sm:$0xff] %v2159
      %2196 = vst [vmem:[#allocation5 + $0x128] sm:$0xff] %v2160
      %2197 = vst [vmem:[#allocation5 + $0x140] sm:$0xff] %v2161
      %2198 = vst [vmem:[#allocation5 + $0x158] sm:$0xff] %v2162
      %2199 = vst [vmem:[#allocation5 + $0x170] sm:$0xff] %v2163
      %2200 = vst [vmem:[#allocation5 + $0x188] sm:$0xff] %v2164
      %2201 = vst [vmem:[#allocation5 + $0x1a0] sm:$0xff] %v2165
      %2202 = vst [vmem:[#allocation5 + $0x1b8] sm:$0xff] %v2166
      %2203 = vst [vmem:[#allocation5 + $0x1d0] sm:$0xff] %v2167
      %2204 = vst [vmem:[#allocation5 + $0x1e8] sm:$0xff] %v2168
      %2205 = vst [vmem:[#allocation5 + $0x200] sm:$0xff] %v2169
      %2206 = vst [vmem:[#allocation5 + $0x218] sm:$0xff] %v2170
      %2207 = vst [vmem:[#allocation5 + $0x230] sm:$0xff] %v2171
      %2208 = vst [vmem:[#allocation5 + $0x248] sm:$0xff] %v2172
      %2209 = vst [vmem:[#allocation5 + $0x260] sm:$0xff] %v2173
      %2210 = vst [vmem:[#allocation5 + $0x278] sm:$0xff] %v2174
      %2211 = vst [vmem:[#allocation5 + $0x290] sm:$0xff] %v2175
      %2212 = vst [vmem:[#allocation5 + $0x2a8] sm:$0xff] %v2176
      %2213 = vst [vmem:[#allocation5 + $0x2c0] sm:$0xff] %v2177
      %2214 = vst [vmem:[#allocation5 + $0x2d8] sm:$0xff] %v2178
      %2215 = vst [vmem:[#allocation5 + $0x2f0] sm:$0xff] %v2179
      %2216 = vst [vmem:[#allocation5 + $0x308] sm:$0xff] %v2180
      %2217 = vst [vmem:[#allocation5 + $0x320] sm:$0xff] %v2181
      %2218 = vst [vmem:[#allocation5 + $0x338] sm:$0xff] %v2182
      %2219 = vst [vmem:[#allocation5 + $0x350] sm:$0xff] %v2183
      %v2220 = vld [vmem:[#allocation4 + $0x2] sm:$0xff]
      %v2221 = vld [vmem:[#allocation4 + $0xa] sm:$0xff]
      %v2222 = vld [vmem:[#allocation4 + $0x1a] sm:$0xff]
      %v2223 = vld [vmem:[#allocation4 + $0x22] sm:$0xff]
      %v2224 = vld [vmem:[#allocation4 + $0x32] sm:$0xff]
      %v2225 = vld [vmem:[#allocation4 + $0x3a] sm:$0xff]
      %v2226 = vld [vmem:[#allocation4 + $0x4a] sm:$0xff]
      %v2227 = vld [vmem:[#allocation4 + $0x52] sm:$0xff]
      %v2228 = vld [vmem:[#allocation4 + $0x62] sm:$0xff]
      %v2229 = vld [vmem:[#allocation4 + $0x6a] sm:$0xff]
      %v2230 = vld [vmem:[#allocation4 + $0x7a] sm:$0xff]
      %v2231 = vld [vmem:[#allocation4 + $0x82] sm:$0xff]
      %v2232 = vld [vmem:[#allocation4 + $0x92] sm:$0xff]
      %v2233 = vld [vmem:[#allocation4 + $0x9a] sm:$0xff]
      %v2234 = vld [vmem:[#allocation4 + $0xaa] sm:$0xff]
      %v2235 = vld [vmem:[#allocation4 + $0xb2] sm:$0xff]
      %v2236 = vld [vmem:[#allocation4 + $0xc2] sm:$0xff]
      %v2237 = vld [vmem:[#allocation4 + $0xca] sm:$0xff]
      %v2238 = vld [vmem:[#allocation4 + $0xda] sm:$0xff]
      %v2239 = vld [vmem:[#allocation4 + $0xe2] sm:$0xff]
      %v2240 = vld [vmem:[#allocation4 + $0xf2] sm:$0xff]
      %v2241 = vld [vmem:[#allocation4 + $0xfa] sm:$0xff]
      %v2242 = vld [vmem:[#allocation4 + $0x10a] sm:$0xff]
      %v2243 = vld [vmem:[#allocation4 + $0x112] sm:$0xff]
      %v2244 = vld [vmem:[#allocation4 + $0x122] sm:$0xff]
      %v2245 = vld [vmem:[#allocation4 + $0x12a] sm:$0xff]
      %v2246 = vld [vmem:[#allocation4 + $0x13a] sm:$0xff]
      %v2247 = vld [vmem:[#allocation4 + $0x142] sm:$0xff]
      %v2248 = vld [vmem:[#allocation4 + $0x152] sm:$0xff]
      %v2249 = vld [vmem:[#allocation4 + $0x15a] sm:$0xff]
      %v2250 = vld [vmem:[#allocation4 + $0x16a] sm:$0xff]
      %v2251 = vld [vmem:[#allocation4 + $0x172] sm:$0xff]
      %v2252 = vld [vmem:[#allocation4 + $0x182] sm:$0xff]
      %v2253 = vld [vmem:[#allocation4 + $0x18a] sm:$0xff]
      %v2254 = vld [vmem:[#allocation4 + $0x19a] sm:$0xff]
      %v2255 = vld [vmem:[#allocation4 + $0x1a2] sm:$0xff]
      %2256 = vst [vmem:[#allocation5 + $0x10] sm:$0xff] %v2220
      %2257 = vst [vmem:[#allocation5 + $0x28] sm:$0xff] %v2221
      %2258 = vst [vmem:[#allocation5 + $0x40] sm:$0xff] %v2222
      %2259 = vst [vmem:[#allocation5 + $0x58] sm:$0xff] %v2223
      %2260 = vst [vmem:[#allocation5 + $0x70] sm:$0xff] %v2224
      %2261 = vst [vmem:[#allocation5 + $0x88] sm:$0xff] %v2225
      %2262 = vst [vmem:[#allocation5 + $0xa0] sm:$0xff] %v2226
      %2263 = vst [vmem:[#allocation5 + $0xb8] sm:$0xff] %v2227
      %2264 = vst [vmem:[#allocation5 + $0xd0] sm:$0xff] %v2228
      %2265 = vst [vmem:[#allocation5 + $0xe8] sm:$0xff] %v2229
      %2266 = vst [vmem:[#allocation5 + $0x100] sm:$0xff] %v2230
      %2267 = vst [vmem:[#allocation5 + $0x118] sm:$0xff] %v2231
      %2268 = vst [vmem:[#allocation5 + $0x130] sm:$0xff] %v2232
      %2269 = vst [vmem:[#allocation5 + $0x148] sm:$0xff] %v2233
      %2270 = vst [vmem:[#allocation5 + $0x160] sm:$0xff] %v2234
      %2271 = vst [vmem:[#allocation5 + $0x178] sm:$0xff] %v2235
      %2272 = vst [vmem:[#allocation5 + $0x190] sm:$0xff] %v2236
      %2273 = vst [vmem:[#allocation5 + $0x1a8] sm:$0xff] %v2237
      %2274 = vst [vmem:[#allocation5 + $0x1c0] sm:$0xff] %v2238
      %2275 = vst [vmem:[#allocation5 + $0x1d8] sm:$0xff] %v2239
      %2276 = vst [vmem:[#allocation5 + $0x1f0] sm:$0xff] %v2240
      %2277 = vst [vmem:[#allocation5 + $0x208] sm:$0xff] %v2241
      %2278 = vst [vmem:[#allocation5 + $0x220] sm:$0xff] %v2242
      %2279 = vst [vmem:[#allocation5 + $0x238] sm:$0xff] %v2243
      %2280 = vst [vmem:[#allocation5 + $0x250] sm:$0xff] %v2244
      %2281 = vst [vmem:[#allocation5 + $0x268] sm:$0xff] %v2245
      %2282 = vst [vmem:[#allocation5 + $0x280] sm:$0xff] %v2246
      %2283 = vst [vmem:[#allocation5 + $0x298] sm:$0xff] %v2247
      %2284 = vst [vmem:[#allocation5 + $0x2b0] sm:$0xff] %v2248
      %2285 = vst [vmem:[#allocation5 + $0x2c8] sm:$0xff] %v2249
      %2286 = vst [vmem:[#allocation5 + $0x2e0] sm:$0xff] %v2250
      %2287 = vst [vmem:[#allocation5 + $0x2f8] sm:$0xff] %v2251
      %2288 = vst [vmem:[#allocation5 + $0x310] sm:$0xff] %v2252
      %2289 = vst [vmem:[#allocation5 + $0x328] sm:$0xff] %v2253
      %2290 = vst [vmem:[#allocation5 + $0x340] sm:$0xff] %v2254
      %2291 = vst [vmem:[#allocation5 + $0x358] sm:$0xff] %v2255
      %vm2292 = vcmask 523264
      %2293 = vst.msk [vmem:[#allocation6] sm:$0xff] %vm2292, 0.0
      %2294 = vst.msk [vmem:[#allocation6 + $0x8] sm:$0xff] %vm2292, 0.0
      %vm2295 = vcmask 517120
      %2296 = vst.msk [vmem:[#allocation6 + $0x10] sm:$0x3] %vm2295, 0.0
      %2297 = vst.msk [vmem:[#allocation6 + $0x18] sm:$0xff] %vm2292, 0.0
      %2298 = vst.msk [vmem:[#allocation6 + $0x20] sm:$0xff] %vm2292, 0.0
      %2299 = vst.msk [vmem:[#allocation6 + $0x28] sm:$0x3] %vm2295, 0.0
      %2300 = vst.msk [vmem:[#allocation6 + $0x30] sm:$0xff] %vm2292, 0.0
      %2301 = vst.msk [vmem:[#allocation6 + $0x38] sm:$0xff] %vm2292, 0.0
      %2302 = vst.msk [vmem:[#allocation6 + $0x40] sm:$0x3] %vm2295, 0.0
      %2303 = vst.msk [vmem:[#allocation6 + $0x48] sm:$0xff] %vm2292, 0.0
      %2304 = vst.msk [vmem:[#allocation6 + $0x50] sm:$0xff] %vm2292, 0.0
      %2305 = vst.msk [vmem:[#allocation6 + $0x58] sm:$0x3] %vm2295, 0.0
      %2306 = vst.msk [vmem:[#allocation6 + $0x60] sm:$0xff] %vm2292, 0.0
      %2307 = vst.msk [vmem:[#allocation6 + $0x68] sm:$0xff] %vm2292, 0.0
      %2308 = vst.msk [vmem:[#allocation6 + $0x70] sm:$0x3] %vm2295, 0.0
      %2309 = vst.msk [vmem:[#allocation6 + $0x78] sm:$0xff] %vm2292, 0.0
      %2310 = vst.msk [vmem:[#allocation6 + $0x80] sm:$0xff] %vm2292, 0.0
      %2311 = vst.msk [vmem:[#allocation6 + $0x88] sm:$0x3] %vm2295, 0.0
      %2312 = vst.msk [vmem:[#allocation6 + $0x90] sm:$0xff] %vm2292, 0.0
      %2313 = vst.msk [vmem:[#allocation6 + $0x98] sm:$0xff] %vm2292, 0.0
      %2314 = vst.msk [vmem:[#allocation6 + $0xa0] sm:$0x3] %vm2295, 0.0
      %2315 = vst.msk [vmem:[#allocation6 + $0xa8] sm:$0xff] %vm2292, 0.0
      %2316 = vst.msk [vmem:[#allocation6 + $0xb0] sm:$0xff] %vm2292, 0.0
      %2317 = vst.msk [vmem:[#allocation6 + $0xb8] sm:$0x3] %vm2295, 0.0
      %2318 = vst.msk [vmem:[#allocation6 + $0xc0] sm:$0xff] %vm2292, 0.0
      %2319 = vst.msk [vmem:[#allocation6 + $0xc8] sm:$0xff] %vm2292, 0.0
      %2320 = vst.msk [vmem:[#allocation6 + $0xd0] sm:$0x3] %vm2295, 0.0
      %2321 = vst.msk [vmem:[#allocation6 + $0xd8] sm:$0xff] %vm2292, 0.0
      %2322 = vst.msk [vmem:[#allocation6 + $0xe0] sm:$0xff] %vm2292, 0.0
      %2323 = vst.msk [vmem:[#allocation6 + $0xe8] sm:$0x3] %vm2295, 0.0
      %2324 = vst.msk [vmem:[#allocation6 + $0xf0] sm:$0xff] %vm2292, 0.0
      %2325 = vst.msk [vmem:[#allocation6 + $0xf8] sm:$0xff] %vm2292, 0.0
      %2326 = vst.msk [vmem:[#allocation6 + $0x100] sm:$0x3] %vm2295, 0.0
      %2327 = vst.msk [vmem:[#allocation6 + $0x108] sm:$0xff] %vm2292, 0.0
      %2328 = vst.msk [vmem:[#allocation6 + $0x110] sm:$0xff] %vm2292, 0.0
      %2329 = vst.msk [vmem:[#allocation6 + $0x118] sm:$0x3] %vm2295, 0.0
      %2330 = vst.msk [vmem:[#allocation6 + $0x120] sm:$0xff] %vm2292, 0.0
      %2331 = vst.msk [vmem:[#allocation6 + $0x128] sm:$0xff] %vm2292, 0.0
      %2332 = vst.msk [vmem:[#allocation6 + $0x130] sm:$0x3] %vm2295, 0.0
      %2333 = vst.msk [vmem:[#allocation6 + $0x138] sm:$0xff] %vm2292, 0.0
      %2334 = vst.msk [vmem:[#allocation6 + $0x140] sm:$0xff] %vm2292, 0.0
      %2335 = vst.msk [vmem:[#allocation6 + $0x148] sm:$0x3] %vm2295, 0.0
      %2336 = vst.msk [vmem:[#allocation6 + $0x150] sm:$0xff] %vm2292, 0.0
      %2337 = vst.msk [vmem:[#allocation6 + $0x158] sm:$0xff] %vm2292, 0.0
      %2338 = vst.msk [vmem:[#allocation6 + $0x160] sm:$0x3] %vm2295, 0.0
      %2339 = vst.msk [vmem:[#allocation6 + $0x168] sm:$0xff] %vm2292, 0.0
      %2340 = vst.msk [vmem:[#allocation6 + $0x170] sm:$0xff] %vm2292, 0.0
      %2341 = vst.msk [vmem:[#allocation6 + $0x178] sm:$0x3] %vm2295, 0.0
      %2342 = vst.msk [vmem:[#allocation6 + $0x180] sm:$0xff] %vm2292, 0.0
      %2343 = vst.msk [vmem:[#allocation6 + $0x188] sm:$0xff] %vm2292, 0.0
      %2344 = vst.msk [vmem:[#allocation6 + $0x190] sm:$0x3] %vm2295, 0.0
      %2345 = vst.msk [vmem:[#allocation6 + $0x198] sm:$0xff] %vm2292, 0.0
      %2346 = vst.msk [vmem:[#allocation6 + $0x1a0] sm:$0xff] %vm2292, 0.0
      %2347 = vst.msk [vmem:[#allocation6 + $0x1a8] sm:$0x3] %vm2295, 0.0
      %v2348 = vld [vmem:[#allocation5] sm:$0xff]
      %v2349 = vld [vmem:[#allocation5 + $0x8] sm:$0xff]
      %v2350 = vld [vmem:[#allocation5 + $0x10] sm:$0xff]
      %v2351 = vld [vmem:[#allocation5 + $0x18] sm:$0xff]
      %v2352 = vld [vmem:[#allocation5 + $0x20] sm:$0xff]
      %v2353 = vld [vmem:[#allocation5 + $0x28] sm:$0xff]
      %v2354 = vld [vmem:[#allocation5 + $0x30] sm:$0xff]
      %v2355 = vld [vmem:[#allocation5 + $0x38] sm:$0xff]
      %v2356 = vld [vmem:[#allocation5 + $0x40] sm:$0xff]
      %v2357 = vld [vmem:[#allocation5 + $0x48] sm:$0xff]
      %v2358 = vld [vmem:[#allocation5 + $0x50] sm:$0xff]
      %v2359 = vld [vmem:[#allocation5 + $0x58] sm:$0xff]
      %v2360 = vld [vmem:[#allocation5 + $0x60] sm:$0xff]
      %v2361 = vld [vmem:[#allocation5 + $0x68] sm:$0xff]
      %v2362 = vld [vmem:[#allocation5 + $0x70] sm:$0xff]
      %v2363 = vld [vmem:[#allocation5 + $0x78] sm:$0xff]
      %v2364 = vld [vmem:[#allocation5 + $0x80] sm:$0xff]
      %v2365 = vld [vmem:[#allocation5 + $0x88] sm:$0xff]
      %v2366 = vld [vmem:[#allocation5 + $0x90] sm:$0xff]
      %v2367 = vld [vmem:[#allocation5 + $0x98] sm:$0xff]
      %v2368 = vld [vmem:[#allocation5 + $0xa0] sm:$0xff]
      %v2369 = vld [vmem:[#allocation5 + $0xa8] sm:$0xff]
      %v2370 = vld [vmem:[#allocation5 + $0xb0] sm:$0xff]
      %v2371 = vld [vmem:[#allocation5 + $0xb8] sm:$0xff]
      %v2372 = vld [vmem:[#allocation5 + $0xc0] sm:$0xff]
      %v2373 = vld [vmem:[#allocation5 + $0xc8] sm:$0xff]
      %v2374 = vld [vmem:[#allocation5 + $0xd0] sm:$0xff]
      %v2375 = vld [vmem:[#allocation5 + $0xd8] sm:$0xff]
      %v2376 = vld [vmem:[#allocation5 + $0xe0] sm:$0xff]
      %v2377 = vld [vmem:[#allocation5 + $0xe8] sm:$0xff]
      %v2378 = vld [vmem:[#allocation5 + $0xf0] sm:$0xff]
      %v2379 = vld [vmem:[#allocation5 + $0xf8] sm:$0xff]
      %v2380 = vld [vmem:[#allocation5 + $0x100] sm:$0xff]
      %v2381 = vld [vmem:[#allocation5 + $0x108] sm:$0xff]
      %v2382 = vld [vmem:[#allocation5 + $0x110] sm:$0xff]
      %v2383 = vld [vmem:[#allocation5 + $0x118] sm:$0xff]
      %v2384 = vld [vmem:[#allocation5 + $0x120] sm:$0xff]
      %v2385 = vld [vmem:[#allocation5 + $0x128] sm:$0xff]
      %v2386 = vld [vmem:[#allocation5 + $0x130] sm:$0xff]
      %v2387 = vld [vmem:[#allocation5 + $0x138] sm:$0xff]
      %v2388 = vld [vmem:[#allocation5 + $0x140] sm:$0xff]
      %v2389 = vld [vmem:[#allocation5 + $0x148] sm:$0xff]
      %v2390 = vld [vmem:[#allocation5 + $0x150] sm:$0xff]
      %v2391 = vld [vmem:[#allocation5 + $0x158] sm:$0xff]
      %v2392 = vld [vmem:[#allocation5 + $0x160] sm:$0xff]
      %v2393 = vld [vmem:[#allocation5 + $0x168] sm:$0xff]
      %v2394 = vld [vmem:[#allocation5 + $0x170] sm:$0xff]
      %v2395 = vld [vmem:[#allocation5 + $0x178] sm:$0xff]
      %v2396 = vpack.c.bf16 %v2351, %v2348
      %v2397 = vpack.c.bf16 %v2352, %v2349
      %v2398 = vpack.c.bf16 %v2353, %v2350
      %v2399 = vpack.c.bf16 %v2357, %v2354
      %v2400 = vpack.c.bf16 %v2358, %v2355
      %v2401 = vpack.c.bf16 %v2359, %v2356
      %v2402 = vpack.c.bf16 %v2363, %v2360
      %v2403 = vpack.c.bf16 %v2364, %v2361
      %v2404 = vpack.c.bf16 %v2365, %v2362
      %v2405 = vpack.c.bf16 %v2369, %v2366
      %v2406 = vpack.c.bf16 %v2370, %v2367
      %v2407 = vpack.c.bf16 %v2371, %v2368
      %v2408 = vpack.c.bf16 %v2375, %v2372
      %v2409 = vpack.c.bf16 %v2376, %v2373
      %v2410 = vpack.c.bf16 %v2377, %v2374
      %v2411 = vpack.c.bf16 %v2381, %v2378
      %v2412 = vpack.c.bf16 %v2382, %v2379
      %v2413 = vpack.c.bf16 %v2383, %v2380
      %v2414 = vpack.c.bf16 %v2387, %v2384
      %v2415 = vpack.c.bf16 %v2388, %v2385
      %v2416 = vpack.c.bf16 %v2389, %v2386
      %v2417 = vpack.c.bf16 %v2393, %v2390
      %v2418 = vpack.c.bf16 %v2394, %v2391
      %v2419 = vpack.c.bf16 %v2395, %v2392
      %v2420 = vld [vmem:[%s3] sm:$0xff]
      %v2421 = vld [vmem:[%s3 + $0x8] sm:$0xff]
      %v2422 = vld [vmem:[%s3 + $0x10] sm:$0xff]
      %v2423 = vld [vmem:[%s3 + $0x18] sm:$0xff]
      %v2424 = vld [vmem:[%s3 + $0x20] sm:$0xff]
      %v2425 = vld [vmem:[%s3 + $0x28] sm:$0xff]
      %v2426 = vld [vmem:[%s3 + $0x30] sm:$0xff]
      %v2427 = vld [vmem:[%s3 + $0x38] sm:$0xff]
      %v2428 = vld [vmem:[%s3 + $0x40] sm:$0xff]
      %v2429 = vld [vmem:[%s3 + $0x48] sm:$0xff]
      %v2430 = vld [vmem:[%s3 + $0x50] sm:$0xff]
      %v2431 = vld [vmem:[%s3 + $0x58] sm:$0xff]
      %v2432 = vld [vmem:[%s3 + $0x60] sm:$0xff]
      %v2433 = vld [vmem:[%s3 + $0x68] sm:$0xff]
      %v2434 = vld [vmem:[%s3 + $0x70] sm:$0xff]
      %v2435 = vld [vmem:[%s3 + $0x78] sm:$0xff]
      %v2436 = vld [vmem:[%s3 + $0x80] sm:$0xff]
      %v2437 = vld [vmem:[%s3 + $0x88] sm:$0xff]
      %v2438 = vld [vmem:[%s3 + $0x90] sm:$0xff]
      %v2439 = vld [vmem:[%s3 + $0x98] sm:$0xff]
      %v2440 = vld [vmem:[%s3 + $0xa0] sm:$0xff]
      %v2441 = vld [vmem:[%s3 + $0xa8] sm:$0xff]
      %v2442 = vld [vmem:[%s3 + $0xb0] sm:$0xff]
      %v2443 = vld [vmem:[%s3 + $0xb8] sm:$0xff]
      %v2444 = vld [vmem:[%s3 + $0xc0] sm:$0xff]
      %v2445 = vld [vmem:[%s3 + $0xc8] sm:$0xff]
      %v2446 = vld [vmem:[%s3 + $0xd0] sm:$0xff]
      %v2447 = vld [vmem:[%s3 + $0xd8] sm:$0xff]
      %v2448 = vld [vmem:[%s3 + $0xe0] sm:$0xff]
      %v2449 = vld [vmem:[%s3 + $0xe8] sm:$0xff]
      %v2450 = vld [vmem:[%s3 + $0xf0] sm:$0xff]
      %v2451 = vld [vmem:[%s3 + $0xf8] sm:$0xff]
      %v2452 = vld [vmem:[%s3 + $0x100] sm:$0xff]
      %v2453 = vld [vmem:[%s3 + $0x108] sm:$0xff]
      %v2454 = vld [vmem:[%s3 + $0x110] sm:$0xff]
      %v2455 = vld [vmem:[%s3 + $0x118] sm:$0xff]
      %v2456 = vld [vmem:[%s3 + $0x120] sm:$0xff]
      %v2457 = vld [vmem:[%s3 + $0x128] sm:$0xff]
      %v2458 = vld [vmem:[%s3 + $0x130] sm:$0xff]
      %v2459 = vld [vmem:[%s3 + $0x138] sm:$0xff]
      %v2460 = vld [vmem:[%s3 + $0x140] sm:$0xff]
      %v2461 = vld [vmem:[%s3 + $0x148] sm:$0xff]
      %v2462 = vld [vmem:[%s3 + $0x150] sm:$0xff]
      %v2463 = vld [vmem:[%s3 + $0x158] sm:$0xff]
      %v2464 = vld [vmem:[%s3 + $0x160] sm:$0xff]
      %v2465 = vld [vmem:[%s3 + $0x168] sm:$0xff]
      %v2466 = vld [vmem:[%s3 + $0x170] sm:$0xff]
      %v2467 = vld [vmem:[%s3 + $0x178] sm:$0xff]
      %v2468 = vpack.c.bf16 %v2421, %v2420
      %v2469 = vpack.c.bf16 %v2423, %v2422
      %v2470 = vpack.c.bf16 %v2425, %v2424
      %v2471 = vpack.c.bf16 %v2427, %v2426
      %v2472 = vpack.c.bf16 %v2429, %v2428
      %v2473 = vpack.c.bf16 %v2431, %v2430
      %v2474 = vpack.c.bf16 %v2433, %v2432
      %v2475 = vpack.c.bf16 %v2435, %v2434
      %v2476 = vpack.c.bf16 %v2437, %v2436
      %v2477 = vpack.c.bf16 %v2439, %v2438
      %v2478 = vpack.c.bf16 %v2441, %v2440
      %v2479 = vpack.c.bf16 %v2443, %v2442
      %v2480 = vpack.c.bf16 %v2445, %v2444
      %v2481 = vpack.c.bf16 %v2447, %v2446
      %v2482 = vpack.c.bf16 %v2449, %v2448
      %v2483 = vpack.c.bf16 %v2451, %v2450
      %v2484 = vpack.c.bf16 %v2453, %v2452
      %v2485 = vpack.c.bf16 %v2455, %v2454
      %v2486 = vpack.c.bf16 %v2457, %v2456
      %v2487 = vpack.c.bf16 %v2459, %v2458
      %v2488 = vpack.c.bf16 %v2461, %v2460
      %v2489 = vpack.c.bf16 %v2463, %v2462
      %v2490 = vpack.c.bf16 %v2465, %v2464
      %v2491 = vpack.c.bf16 %v2467, %v2466
      %s2492 = scalar_lea.vmem [#allocation5], 48
      %v2493 = vld [vmem:[%s2492] sm:$0xff]
      %v2494 = vld [vmem:[%s2492 + $0x8] sm:$0xff]
      %v2495 = vld [vmem:[%s2492 + $0x10] sm:$0xff]
      %v2496 = vld [vmem:[%s2492 + $0x18] sm:$0xff]
      %v2497 = vld [vmem:[%s2492 + $0x20] sm:$0xff]
      %v2498 = vld [vmem:[%s2492 + $0x28] sm:$0xff]
      %v2499 = vld [vmem:[%s2492 + $0x30] sm:$0xff]
      %v2500 = vld [vmem:[%s2492 + $0x38] sm:$0xff]
      %v2501 = vld [vmem:[%s2492 + $0x40] sm:$0xff]
      %v2502 = vld [vmem:[%s2492 + $0x48] sm:$0xff]
      %v2503 = vld [vmem:[%s2492 + $0x50] sm:$0xff]
      %v2504 = vld [vmem:[%s2492 + $0x58] sm:$0xff]
      %v2505 = vld [vmem:[%s2492 + $0x60] sm:$0xff]
      %v2506 = vld [vmem:[%s2492 + $0x68] sm:$0xff]
      %v2507 = vld [vmem:[%s2492 + $0x70] sm:$0xff]
      %v2508 = vld [vmem:[%s2492 + $0x78] sm:$0xff]
      %v2509 = vld [vmem:[%s2492 + $0x80] sm:$0xff]
      %v2510 = vld [vmem:[%s2492 + $0x88] sm:$0xff]
      %v2511 = vld [vmem:[%s2492 + $0x90] sm:$0xff]
      %v2512 = vld [vmem:[%s2492 + $0x98] sm:$0xff]
      %v2513 = vld [vmem:[%s2492 + $0xa0] sm:$0xff]
      %v2514 = vld [vmem:[%s2492 + $0xa8] sm:$0xff]
      %v2515 = vld [vmem:[%s2492 + $0xb0] sm:$0xff]
      %v2516 = vld [vmem:[%s2492 + $0xb8] sm:$0xff]
      %v2517 = vld [vmem:[%s2492 + $0xc0] sm:$0xff]
      %v2518 = vld [vmem:[%s2492 + $0xc8] sm:$0xff]
      %v2519 = vld [vmem:[%s2492 + $0xd0] sm:$0xff]
      %v2520 = vld [vmem:[%s2492 + $0xd8] sm:$0xff]
      %v2521 = vld [vmem:[%s2492 + $0xe0] sm:$0xff]
      %v2522 = vld [vmem:[%s2492 + $0xe8] sm:$0xff]
      %v2523 = vld [vmem:[%s2492 + $0xf0] sm:$0xff]
      %v2524 = vld [vmem:[%s2492 + $0xf8] sm:$0xff]
      %v2525 = vld [vmem:[%s2492 + $0x100] sm:$0xff]
      %v2526 = vld [vmem:[%s2492 + $0x108] sm:$0xff]
      %v2527 = vld [vmem:[%s2492 + $0x110] sm:$0xff]
      %v2528 = vld [vmem:[%s2492 + $0x118] sm:$0xff]
      %v2529 = vld [vmem:[%s2492 + $0x120] sm:$0xff]
      %v2530 = vld [vmem:[%s2492 + $0x128] sm:$0xff]
      %v2531 = vld [vmem:[%s2492 + $0x130] sm:$0xff]
      %v2532 = vld [vmem:[%s2492 + $0x138] sm:$0xff]
      %v2533 = vld [vmem:[%s2492 + $0x140] sm:$0xff]
      %v2534 = vld [vmem:[%s2492 + $0x148] sm:$0xff]
      %v2535 = vld [vmem:[%s2492 + $0x150] sm:$0xff]
      %v2536 = vld [vmem:[%s2492 + $0x158] sm:$0xff]
      %v2537 = vld [vmem:[%s2492 + $0x160] sm:$0xff]
      %v2538 = vld [vmem:[%s2492 + $0x168] sm:$0xff]
      %v2539 = vld [vmem:[%s2492 + $0x170] sm:$0xff]
      %v2540 = vld [vmem:[%s2492 + $0x178] sm:$0xff]
      %v2541 = vpack.c.bf16 %v2496, %v2493
      %v2542 = vpack.c.bf16 %v2497, %v2494
      %v2543 = vpack.c.bf16 %v2498, %v2495
      %v2544 = vpack.c.bf16 %v2502, %v2499
      %v2545 = vpack.c.bf16 %v2503, %v2500
      %v2546 = vpack.c.bf16 %v2504, %v2501
      %v2547 = vpack.c.bf16 %v2508, %v2505
      %v2548 = vpack.c.bf16 %v2509, %v2506
      %v2549 = vpack.c.bf16 %v2510, %v2507
      %v2550 = vpack.c.bf16 %v2514, %v2511
      %v2551 = vpack.c.bf16 %v2515, %v2512
      %v2552 = vpack.c.bf16 %v2516, %v2513
      %v2553 = vpack.c.bf16 %v2520, %v2517
      %v2554 = vpack.c.bf16 %v2521, %v2518
      %v2555 = vpack.c.bf16 %v2522, %v2519
      %v2556 = vpack.c.bf16 %v2526, %v2523
      %v2557 = vpack.c.bf16 %v2527, %v2524
      %v2558 = vpack.c.bf16 %v2528, %v2525
      %v2559 = vpack.c.bf16 %v2532, %v2529
      %v2560 = vpack.c.bf16 %v2533, %v2530
      %v2561 = vpack.c.bf16 %v2534, %v2531
      %v2562 = vpack.c.bf16 %v2538, %v2535
      %v2563 = vpack.c.bf16 %v2539, %v2536
      %v2564 = vpack.c.bf16 %v2540, %v2537
      %s2565 = scalar_lea.vmem %s3, 384
      %v2566 = vld [vmem:[%s2565] sm:$0xff]
      %v2567 = vld [vmem:[%s2565 + $0x8] sm:$0xff]
      %v2568 = vld [vmem:[%s2565 + $0x10] sm:$0xff]
      %v2569 = vld [vmem:[%s2565 + $0x18] sm:$0xff]
      %v2570 = vld [vmem:[%s2565 + $0x20] sm:$0xff]
      %v2571 = vld [vmem:[%s2565 + $0x28] sm:$0xff]
      %v2572 = vld [vmem:[%s2565 + $0x30] sm:$0xff]
      %v2573 = vld [vmem:[%s2565 + $0x38] sm:$0xff]
      %v2574 = vld [vmem:[%s2565 + $0x40] sm:$0xff]
      %v2575 = vld [vmem:[%s2565 + $0x48] sm:$0xff]
      %v2576 = vld [vmem:[%s2565 + $0x50] sm:$0xff]
      %v2577 = vld [vmem:[%s2565 + $0x58] sm:$0xff]
      %v2578 = vld [vmem:[%s2565 + $0x60] sm:$0xff]
      %v2579 = vld [vmem:[%s2565 + $0x68] sm:$0xff]
      %v2580 = vld [vmem:[%s2565 + $0x70] sm:$0xff]
      %v2581 = vld [vmem:[%s2565 + $0x78] sm:$0xff]
      %v2582 = vld [vmem:[%s2565 + $0x80] sm:$0xff]
      %v2583 = vld [vmem:[%s2565 + $0x88] sm:$0xff]
      %v2584 = vld [vmem:[%s2565 + $0x90] sm:$0xff]
      %v2585 = vld [vmem:[%s2565 + $0x98] sm:$0xff]
      %v2586 = vld [vmem:[%s2565 + $0xa0] sm:$0xff]
      %v2587 = vld [vmem:[%s2565 + $0xa8] sm:$0xff]
      %v2588 = vld [vmem:[%s2565 + $0xb0] sm:$0xff]
      %v2589 = vld [vmem:[%s2565 + $0xb8] sm:$0xff]
      %v2590 = vld [vmem:[%s2565 + $0xc0] sm:$0xff]
      %v2591 = vld [vmem:[%s2565 + $0xc8] sm:$0xff]
      %v2592 = vld [vmem:[%s2565 + $0xd0] sm:$0xff]
      %v2593 = vld [vmem:[%s2565 + $0xd8] sm:$0xff]
      %v2594 = vld [vmem:[%s2565 + $0xe0] sm:$0xff]
      %v2595 = vld [vmem:[%s2565 + $0xe8] sm:$0xff]
      %v2596 = vld [vmem:[%s2565 + $0xf0] sm:$0xff]
      %v2597 = vld [vmem:[%s2565 + $0xf8] sm:$0xff]
      %v2598 = vld [vmem:[%s2565 + $0x100] sm:$0xff]
      %v2599 = vld [vmem:[%s2565 + $0x108] sm:$0xff]
      %v2600 = vld [vmem:[%s2565 + $0x110] sm:$0xff]
      %v2601 = vld [vmem:[%s2565 + $0x118] sm:$0xff]
      %v2602 = vld [vmem:[%s2565 + $0x120] sm:$0xff]
      %v2603 = vld [vmem:[%s2565 + $0x128] sm:$0xff]
      %v2604 = vld [vmem:[%s2565 + $0x130] sm:$0xff]
      %v2605 = vld [vmem:[%s2565 + $0x138] sm:$0xff]
      %v2606 = vld [vmem:[%s2565 + $0x140] sm:$0xff]
      %v2607 = vld [vmem:[%s2565 + $0x148] sm:$0xff]
      %v2608 = vld [vmem:[%s2565 + $0x150] sm:$0xff]
      %v2609 = vld [vmem:[%s2565 + $0x158] sm:$0xff]
      %v2610 = vld [vmem:[%s2565 + $0x160] sm:$0xff]
      %v2611 = vld [vmem:[%s2565 + $0x168] sm:$0xff]
      %v2612 = vld [vmem:[%s2565 + $0x170] sm:$0xff]
      %v2613 = vld [vmem:[%s2565 + $0x178] sm:$0xff]
      %v2614 = vpack.c.bf16 %v2567, %v2566
      %v2615 = vpack.c.bf16 %v2569, %v2568
      %v2616 = vpack.c.bf16 %v2571, %v2570
      %v2617 = vpack.c.bf16 %v2573, %v2572
      %v2618 = vpack.c.bf16 %v2575, %v2574
      %v2619 = vpack.c.bf16 %v2577, %v2576
      %v2620 = vpack.c.bf16 %v2579, %v2578
      %v2621 = vpack.c.bf16 %v2581, %v2580
      %v2622 = vpack.c.bf16 %v2583, %v2582
      %v2623 = vpack.c.bf16 %v2585, %v2584
      %v2624 = vpack.c.bf16 %v2587, %v2586
      %v2625 = vpack.c.bf16 %v2589, %v2588
      %v2626 = vpack.c.bf16 %v2591, %v2590
      %v2627 = vpack.c.bf16 %v2593, %v2592
      %v2628 = vpack.c.bf16 %v2595, %v2594
      %v2629 = vpack.c.bf16 %v2597, %v2596
      %v2630 = vpack.c.bf16 %v2599, %v2598
      %v2631 = vpack.c.bf16 %v2601, %v2600
      %v2632 = vpack.c.bf16 %v2603, %v2602
      %v2633 = vpack.c.bf16 %v2605, %v2604
      %v2634 = vpack.c.bf16 %v2607, %v2606
      %v2635 = vpack.c.bf16 %v2609, %v2608
      %v2636 = vpack.c.bf16 %v2611, %v2610
      %v2637 = vpack.c.bf16 %v2613, %v2612
      %2638 = vmatprep.subr.bf16.mxu0 0
      %2639 = vmatpush1.bf16.msra.mxu0 %v2614
      %2640 = vmatprep.subr.bf16.mxu0 0
      %2641 = vmatpush1.bf16.msra.mxu0 %v2615
      %2642 = vmatprep.subr.bf16.mxu0 0
      %2643 = vmatpush1.bf16.msra.mxu0 %v2616
      %2644 = vmatprep.subr.bf16.mxu0 0
      %2645 = vmatpush1.bf16.msra.mxu0 %v2617
      %2646 = vmatprep.subr.bf16.mxu0 0
      %2647 = vmatpush1.bf16.msra.mxu0 %v2618
      %2648 = vmatprep.subr.bf16.mxu0 0
      %2649 = vmatpush1.bf16.msra.mxu0 %v2619
      %2650 = vmatprep.subr.bf16.mxu0 0
      %2651 = vmatpush1.bf16.msra.mxu0 %v2620
      %2652 = vmatprep.subr.bf16.mxu0 0
      %2653 = vmatpush1.bf16.msra.mxu0 %v2621
      %2654 = vmatprep.subr.bf16.mxu0 0
      %2655 = vmatpush1.bf16.msra.mxu0 %v2622
      %2656 = vmatprep.subr.bf16.mxu0 0
      %2657 = vmatpush1.bf16.msra.mxu0 %v2623
      %2658 = vmatprep.subr.bf16.mxu0 0
      %2659 = vmatpush1.bf16.msra.mxu0 %v2624
      %2660 = vmatprep.subr.bf16.mxu0 0
      %2661 = vmatpush1.bf16.msra.mxu0 %v2625
      %2662 = vmatprep.subr.bf16.mxu0 0
      %2663 = vmatpush1.bf16.msra.mxu0 %v2626
      %2664 = vmatprep.subr.bf16.mxu0 0
      %2665 = vmatpush1.bf16.msra.mxu0 %v2627
      %2666 = vmatprep.subr.bf16.mxu0 0
      %2667 = vmatpush1.bf16.msra.mxu0 %v2628
      %2668 = vmatprep.subr.bf16.mxu0 0
      %2669 = vmatpush1.bf16.msra.mxu0 %v2629
      %2670 = vmatprep.mubr.bf16.mxu0 %v2542
      %2671 = vmatmul.mubr.bf16.gmra.mrb[0].mxu0 %v2541
      %v2672 = vpop.f32.mrb[0].mxu0
      %v2673 = vadd.f32 0.0, %v2672
      %v2674 = vpop.f32.mrb[0].mxu0
      %v2675 = vpop.f32.mrb[0].mxu0
      %v2676 = vadd.f32 0.0, %v2675
      %v2677 = vpop.f32.mrb[0].mxu0
      %2678 = vmatprep.mubr.bf16.mxu0 %v2545
      %2679 = vmatmul.mubr.bf16.gmra.mrb[0].mxu0 %v2544
      %v2680 = vpop.f32.mrb[0].mxu0
      %v2681 = vadd.f32 0.0, %v2680
      %v2682 = vpop.f32.mrb[0].mxu0
      %v2683 = vpop.f32.mrb[0].mxu0
      %v2684 = vadd.f32 0.0, %v2683
      %v2685 = vpop.f32.mrb[0].mxu0
      %2686 = vmatprep.mubr.bf16.mxu0 %v2548
      %2687 = vmatmul.mubr.bf16.gmra.mrb[0].mxu0 %v2547
      %v2688 = vpop.f32.mrb[0].mxu0
      %v2689 = vadd.f32 0.0, %v2688
      %v2690 = vpop.f32.mrb[0].mxu0
      %v2691 = vpop.f32.mrb[0].mxu0
      %v2692 = vadd.f32 0.0, %v2691
      %v2693 = vpop.f32.mrb[0].mxu0
      %2694 = vmatprep.mubr.bf16.mxu0 %v2551
      %2695 = vmatmul.mubr.bf16.gmra.mrb[0].mxu0 %v2550
      %v2696 = vpop.f32.mrb[0].mxu0
      %v2697 = vadd.f32 0.0, %v2696
      %v2698 = vpop.f32.mrb[0].mxu0
      %v2699 = vpop.f32.mrb[0].mxu0
      %v2700 = vadd.f32 0.0, %v2699
      %v2701 = vpop.f32.mrb[0].mxu0
      %2702 = vmatprep.mubr.bf16.mxu0 %v2554
      %2703 = vmatmul.mubr.bf16.gmra.mrb[0].mxu0 %v2553
      %v2704 = vpop.f32.mrb[0].mxu0
      %v2705 = vadd.f32 0.0, %v2704
      %v2706 = vpop.f32.mrb[0].mxu0
      %v2707 = vpop.f32.mrb[0].mxu0
      %v2708 = vadd.f32 0.0, %v2707
      %v2709 = vpop.f32.mrb[0].mxu0
      %2710 = vmatprep.mubr.bf16.mxu0 %v2557
      %2711 = vmatmul.mubr.bf16.gmra.mrb[0].mxu0 %v2556
      %v2712 = vpop.f32.mrb[0].mxu0
      %v2713 = vadd.f32 0.0, %v2712
      %v2714 = vpop.f32.mrb[0].mxu0
      %v2715 = vpop.f32.mrb[0].mxu0
      %v2716 = vadd.f32 0.0, %v2715
      %v2717 = vpop.f32.mrb[0].mxu0
      %2718 = vmatprep.mubr.bf16.mxu0 %v2560
      %2719 = vmatmul.mubr.bf16.gmra.mrb[0].mxu0 %v2559
      %v2720 = vpop.f32.mrb[0].mxu0
      %v2721 = vadd.f32 0.0, %v2720
      %v2722 = vpop.f32.mrb[0].mxu0
      %v2723 = vpop.f32.mrb[0].mxu0
      %v2724 = vadd.f32 0.0, %v2723
      %v2725 = vpop.f32.mrb[0].mxu0
      %2726 = vmatprep.mubr.bf16.mxu0 %v2563
      %2727 = vmatmul.mubr.bf16.gmra.mrb[0].mxu0 %v2562
      %v2728 = vpop.f32.mrb[0].mxu0
      %v2729 = vadd.f32 0.0, %v2728
      %v2730 = vpop.f32.mrb[0].mxu0
      %v2731 = vpop.f32.mrb[0].mxu0
      %v2732 = vadd.f32 0.0, %v2731
      %v2733 = vpop.f32.mrb[0].mxu0
      %2734 = vdwg.mxu0
      %2735 = vmatprep.subr.bf16.mxu0 0
      %2736 = vmatpush1.bf16.msra.mxu0 %v2630
      %2737 = vmatprep.subr.bf16.mxu0 0
      %2738 = vmatpush1.bf16.msra.mxu0 %v2631
      %2739 = vmatprep.subr.bf16.mxu0 0
      %2740 = vmatpush1.bf16.msra.mxu0 %v2632
      %2741 = vmatprep.subr.bf16.mxu0 0
      %2742 = vmatpush1.bf16.msra.mxu0 %v2633
      %2743 = vmatprep.subr.bf16.mxu0 0
      %2744 = vmatpush1.bf16.msra.mxu0 %v2634
      %2745 = vmatprep.subr.bf16.mxu0 0
      %2746 = vmatpush1.bf16.msra.mxu0 %v2635
      %2747 = vmatprep.subr.bf16.mxu0 0
      %2748 = vmatpush1.bf16.msra.mxu0 %v2636
      %2749 = vmatprep.subr.bf16.mxu0 0
      %2750 = vmatpush1.bf16.msra.mxu0 %v2637
      %2751 = vmatprep.subr.bf16.mxu0 0
      %2752 = vmatpush1.bf16.msra.mxu0 0
      %2753 = vmatprep.subr.bf16.mxu0 0
      %2754 = vmatpush1.bf16.msra.mxu0 0
      %2755 = vmatprep.subr.bf16.mxu0 0
      %2756 = vmatpush1.bf16.msra.mxu0 0
      %2757 = vmatprep.subr.bf16.mxu0 0
      %2758 = vmatpush1.bf16.msra.mxu0 0
      %2759 = vmatprep.subr.bf16.mxu0 0
      %2760 = vmatpush1.bf16.msra.mxu0 0
      %2761 = vmatprep.subr.bf16.mxu0 0
      %2762 = vmatpush1.bf16.msra.mxu0 0
      %2763 = vmatprep.subr.bf16.mxu0 0
      %2764 = vmatpush1.bf16.msra.mxu0 0
      %2765 = vmatprep.subr.bf16.mxu0 0
      %2766 = vmatpush1.bf16.msra.mxu0 0
      %2767 = vmatprep.mubr.bf16.mxu0 0
      %2768 = vmatmul.mubr.bf16.gmra.mrb[0].mxu0 %v2543
      %v2769 = vpop.f32.mrb[0].mxu0
      %v2770 = vadd.f32 %v2673, %v2769
      %v2771 = vpop.f32.mrb[0].mxu0
      %v2772 = vpop.f32.mrb[0].mxu0
      %v2773 = vadd.f32 %v2676, %v2772
      %v2774 = vpop.f32.mrb[0].mxu0
      %2775 = vmatprep.mubr.bf16.mxu0 0
      %2776 = vmatmul.mubr.bf16.gmra.mrb[0].mxu0 %v2546
      %v2777 = vpop.f32.mrb[0].mxu0
      %v2778 = vadd.f32 %v2681, %v2777
      %v2779 = vpop.f32.mrb[0].mxu0
      %v2780 = vpop.f32.mrb[0].mxu0
      %v2781 = vadd.f32 %v2684, %v2780
      %v2782 = vpop.f32.mrb[0].mxu0
      %2783 = vmatprep.mubr.bf16.mxu0 0
      %2784 = vmatmul.mubr.bf16.gmra.mrb[0].mxu0 %v2549
      %v2785 = vpop.f32.mrb[0].mxu0
      %v2786 = vadd.f32 %v2689, %v2785
      %v2787 = vpop.f32.mrb[0].mxu0
      %v2788 = vpop.f32.mrb[0].mxu0
      %v2789 = vadd.f32 %v2692, %v2788
      %v2790 = vpop.f32.mrb[0].mxu0
      %2791 = vmatprep.mubr.bf16.mxu0 0
      %2792 = vmatmul.mubr.bf16.gmra.mrb[0].mxu0 %v2552
      %v2793 = vpop.f32.mrb[0].mxu0
      %v2794 = vadd.f32 %v2697, %v2793
      %v2795 = vpop.f32.mrb[0].mxu0
      %v2796 = vpop.f32.mrb[0].mxu0
      %v2797 = vadd.f32 %v2700, %v2796
      %v2798 = vpop.f32.mrb[0].mxu0
      %2799 = vmatprep.mubr.bf16.mxu0 0
      %2800 = vmatmul.mubr.bf16.gmra.mrb[0].mxu0 %v2555
      %v2801 = vpop.f32.mrb[0].mxu0
      %v2802 = vadd.f32 %v2705, %v2801
      %v2803 = vpop.f32.mrb[0].mxu0
      %v2804 = vpop.f32.mrb[0].mxu0
      %v2805 = vadd.f32 %v2708, %v2804
      %v2806 = vpop.f32.mrb[0].mxu0
      %2807 = vmatprep.mubr.bf16.mxu0 0
      %2808 = vmatmul.mubr.bf16.gmra.mrb[0].mxu0 %v2558
      %v2809 = vpop.f32.mrb[0].mxu0
      %v2810 = vadd.f32 %v2713, %v2809
      %v2811 = vpop.f32.mrb[0].mxu0
      %v2812 = vpop.f32.mrb[0].mxu0
      %v2813 = vadd.f32 %v2716, %v2812
      %v2814 = vpop.f32.mrb[0].mxu0
      %2815 = vmatprep.mubr.bf16.mxu0 0
      %2816 = vmatmul.mubr.bf16.gmra.mrb[0].mxu0 %v2561
      %v2817 = vpop.f32.mrb[0].mxu0
      %v2818 = vadd.f32 %v2721, %v2817
      %v2819 = vpop.f32.mrb[0].mxu0
      %v2820 = vpop.f32.mrb[0].mxu0
      %v2821 = vadd.f32 %v2724, %v2820
      %v2822 = vpop.f32.mrb[0].mxu0
      %2823 = vmatprep.mubr.bf16.mxu0 0
      %2824 = vmatmul.mubr.bf16.gmra.mrb[0].mxu0 %v2564
      %v2825 = vpop.f32.mrb[0].mxu0
      %v2826 = vadd.f32 %v2729, %v2825
      %v2827 = vpop.f32.mrb[0].mxu0
      %v2828 = vpop.f32.mrb[0].mxu0
      %v2829 = vadd.f32 %v2732, %v2828
      %v2830 = vpop.f32.mrb[0].mxu0
      %2831 = vdwg.mxu0
      %2832 = vmatprep.subr.bf16.mxu0 0
      %2833 = vmatpush1.bf16.msra.mxu0 %v2468
      %2834 = vmatprep.subr.bf16.mxu0 0
      %2835 = vmatpush1.bf16.msra.mxu0 %v2469
      %2836 = vmatprep.subr.bf16.mxu0 0
      %2837 = vmatpush1.bf16.msra.mxu0 %v2470
      %2838 = vmatprep.subr.bf16.mxu0 0
      %2839 = vmatpush1.bf16.msra.mxu0 %v2471
      %2840 = vmatprep.subr.bf16.mxu0 0
      %2841 = vmatpush1.bf16.msra.mxu0 %v2472
      %2842 = vmatprep.subr.bf16.mxu0 0
      %2843 = vmatpush1.bf16.msra.mxu0 %v2473
      %2844 = vmatprep.subr.bf16.mxu0 0
      %2845 = vmatpush1.bf16.msra.mxu0 %v2474
      %2846 = vmatprep.subr.bf16.mxu0 0
      %2847 = vmatpush1.bf16.msra.mxu0 %v2475
      %2848 = vmatprep.subr.bf16.mxu0 0
      %2849 = vmatpush1.bf16.msra.mxu0 %v2476
      %2850 = vmatprep.subr.bf16.mxu0 0
      %2851 = vmatpush1.bf16.msra.mxu0 %v2477
      %2852 = vmatprep.subr.bf16.mxu0 0
      %2853 = vmatpush1.bf16.msra.mxu0 %v2478
      %2854 = vmatprep.subr.bf16.mxu0 0
      %2855 = vmatpush1.bf16.msra.mxu0 %v2479
      %2856 = vmatprep.subr.bf16.mxu0 0
      %2857 = vmatpush1.bf16.msra.mxu0 %v2480
      %2858 = vmatprep.subr.bf16.mxu0 0
      %2859 = vmatpush1.bf16.msra.mxu0 %v2481
      %2860 = vmatprep.subr.bf16.mxu0 0
      %2861 = vmatpush1.bf16.msra.mxu0 %v2482
      %2862 = vmatprep.subr.bf16.mxu0 0
      %2863 = vmatpush1.bf16.msra.mxu0 %v2483
      %2864 = vmatprep.mubr.bf16.mxu0 %v2397
      %2865 = vmatmul.mubr.bf16.gmra.mrb[0].mxu0 %v2396
      %v2866 = vpop.f32.mrb[0].mxu0
      %v2867 = vadd.f32 %v2770, %v2866
      %v2868 = vpop.f32.mrb[0].mxu0
      %v2869 = vpop.f32.mrb[0].mxu0
      %v2870 = vadd.f32 %v2773, %v2869
      %v2871 = vpop.f32.mrb[0].mxu0
      %2872 = vmatprep.mubr.bf16.mxu0 %v2400
      %2873 = vmatmul.mubr.bf16.gmra.mrb[0].mxu0 %v2399
      %v2874 = vpop.f32.mrb[0].mxu0
      %v2875 = vadd.f32 %v2778, %v2874
      %v2876 = vpop.f32.mrb[0].mxu0
      %v2877 = vpop.f32.mrb[0].mxu0
      %v2878 = vadd.f32 %v2781, %v2877
      %v2879 = vpop.f32.mrb[0].mxu0
      %2880 = vmatprep.mubr.bf16.mxu0 %v2403
      %2881 = vmatmul.mubr.bf16.gmra.mrb[0].mxu0 %v2402
      %v2882 = vpop.f32.mrb[0].mxu0
      %v2883 = vadd.f32 %v2786, %v2882
      %v2884 = vpop.f32.mrb[0].mxu0
      %v2885 = vpop.f32.mrb[0].mxu0
      %v2886 = vadd.f32 %v2789, %v2885
      %v2887 = vpop.f32.mrb[0].mxu0
      %2888 = vmatprep.mubr.bf16.mxu0 %v2406
      %2889 = vmatmul.mubr.bf16.gmra.mrb[0].mxu0 %v2405
      %v2890 = vpop.f32.mrb[0].mxu0
      %v2891 = vadd.f32 %v2794, %v2890
      %v2892 = vpop.f32.mrb[0].mxu0
      %v2893 = vpop.f32.mrb[0].mxu0
      %v2894 = vadd.f32 %v2797, %v2893
      %v2895 = vpop.f32.mrb[0].mxu0
      %2896 = vmatprep.mubr.bf16.mxu0 %v2409
      %2897 = vmatmul.mubr.bf16.gmra.mrb[0].mxu0 %v2408
      %v2898 = vpop.f32.mrb[0].mxu0
      %v2899 = vadd.f32 %v2802, %v2898
      %v2900 = vpop.f32.mrb[0].mxu0
      %v2901 = vpop.f32.mrb[0].mxu0
      %v2902 = vadd.f32 %v2805, %v2901
      %v2903 = vpop.f32.mrb[0].mxu0
      %2904 = vmatprep.mubr.bf16.mxu0 %v2412
      %2905 = vmatmul.mubr.bf16.gmra.mrb[0].mxu0 %v2411
      %v2906 = vpop.f32.mrb[0].mxu0
      %v2907 = vadd.f32 %v2810, %v2906
      %v2908 = vpop.f32.mrb[0].mxu0
      %v2909 = vpop.f32.mrb[0].mxu0
      %v2910 = vadd.f32 %v2813, %v2909
      %v2911 = vpop.f32.mrb[0].mxu0
      %2912 = vmatprep.mubr.bf16.mxu0 %v2415
      %2913 = vmatmul.mubr.bf16.gmra.mrb[0].mxu0 %v2414
      %v2914 = vpop.f32.mrb[0].mxu0
      %v2915 = vadd.f32 %v2818, %v2914
      %v2916 = vpop.f32.mrb[0].mxu0
      %v2917 = vpop.f32.mrb[0].mxu0
      %v2918 = vadd.f32 %v2821, %v2917
      %v2919 = vpop.f32.mrb[0].mxu0
      %2920 = vmatprep.mubr.bf16.mxu0 %v2418
      %2921 = vmatmul.mubr.bf16.gmra.mrb[0].mxu0 %v2417
      %v2922 = vpop.f32.mrb[0].mxu0
      %v2923 = vadd.f32 %v2826, %v2922
      %v2924 = vpop.f32.mrb[0].mxu0
      %v2925 = vpop.f32.mrb[0].mxu0
      %v2926 = vadd.f32 %v2829, %v2925
      %v2927 = vpop.f32.mrb[0].mxu0
      %2928 = vdwg.mxu0
      %2929 = vmatprep.subr.bf16.mxu0 0
      %2930 = vmatpush1.bf16.msra.mxu0 %v2484
      %2931 = vmatprep.subr.bf16.mxu0 0
      %2932 = vmatpush1.bf16.msra.mxu0 %v2485
      %2933 = vmatprep.subr.bf16.mxu0 0
      %2934 = vmatpush1.bf16.msra.mxu0 %v2486
      %2935 = vmatprep.subr.bf16.mxu0 0
      %2936 = vmatpush1.bf16.msra.mxu0 %v2487
      %2937 = vmatprep.subr.bf16.mxu0 0
      %2938 = vmatpush1.bf16.msra.mxu0 %v2488
      %2939 = vmatprep.subr.bf16.mxu0 0
      %2940 = vmatpush1.bf16.msra.mxu0 %v2489
      %2941 = vmatprep.subr.bf16.mxu0 0
      %2942 = vmatpush1.bf16.msra.mxu0 %v2490
      %2943 = vmatprep.subr.bf16.mxu0 0
      %2944 = vmatpush1.bf16.msra.mxu0 %v2491
      %2945 = vmatprep.subr.bf16.mxu0 0
      %2946 = vmatpush1.bf16.msra.mxu0 0
      %2947 = vmatprep.subr.bf16.mxu0 0
      %2948 = vmatpush1.bf16.msra.mxu0 0
      %2949 = vmatprep.subr.bf16.mxu0 0
      %2950 = vmatpush1.bf16.msra.mxu0 0
      %2951 = vmatprep.subr.bf16.mxu0 0
      %2952 = vmatpush1.bf16.msra.mxu0 0
      %2953 = vmatprep.subr.bf16.mxu0 0
      %2954 = vmatpush1.bf16.msra.mxu0 0
      %2955 = vmatprep.subr.bf16.mxu0 0
      %2956 = vmatpush1.bf16.msra.mxu0 0
      %2957 = vmatprep.subr.bf16.mxu0 0
      %2958 = vmatpush1.bf16.msra.mxu0 0
      %2959 = vmatprep.subr.bf16.mxu0 0
      %2960 = vmatpush1.bf16.msra.mxu0 0
      %2961 = vmatprep.mubr.bf16.mxu0 0
      %2962 = vmatmul.mubr.bf16.gmra.mrb[0].mxu0 %v2398
      %v2963 = vpop.f32.mrb[0].mxu0
      %v2964 = vadd.f32 %v2867, %v2963
      %v2965 = vpop.f32.mrb[0].mxu0
      %v2966 = vpop.f32.mrb[0].mxu0
      %v2967 = vadd.f32 %v2870, %v2966
      %v2968 = vpop.f32.mrb[0].mxu0
      %2969 = vmatprep.mubr.bf16.mxu0 0
      %2970 = vmatmul.mubr.bf16.gmra.mrb[0].mxu0 %v2401
      %v2971 = vpop.f32.mrb[0].mxu0
      %v2972 = vadd.f32 %v2875, %v2971
      %v2973 = vpop.f32.mrb[0].mxu0
      %v2974 = vpop.f32.mrb[0].mxu0
      %v2975 = vadd.f32 %v2878, %v2974
      %v2976 = vpop.f32.mrb[0].mxu0
      %2977 = vmatprep.mubr.bf16.mxu0 0
      %2978 = vmatmul.mubr.bf16.gmra.mrb[0].mxu0 %v2404
      %v2979 = vpop.f32.mrb[0].mxu0
      %v2980 = vadd.f32 %v2883, %v2979
      %v2981 = vpop.f32.mrb[0].mxu0
      %v2982 = vpop.f32.mrb[0].mxu0
      %v2983 = vadd.f32 %v2886, %v2982
      %v2984 = vpop.f32.mrb[0].mxu0
      %2985 = vmatprep.mubr.bf16.mxu0 0
      %2986 = vmatmul.mubr.bf16.gmra.mrb[0].mxu0 %v2407
      %v2987 = vpop.f32.mrb[0].mxu0
      %v2988 = vadd.f32 %v2891, %v2987
      %v2989 = vpop.f32.mrb[0].mxu0
      %v2990 = vpop.f32.mrb[0].mxu0
      %v2991 = vadd.f32 %v2894, %v2990
      %v2992 = vpop.f32.mrb[0].mxu0
      %2993 = vmatprep.mubr.bf16.mxu0 0
      %2994 = vmatmul.mubr.bf16.gmra.mrb[0].mxu0 %v2410
      %v2995 = vpop.f32.mrb[0].mxu0
      %v2996 = vadd.f32 %v2899, %v2995
      %v2997 = vpop.f32.mrb[0].mxu0
      %v2998 = vpop.f32.mrb[0].mxu0
      %v2999 = vadd.f32 %v2902, %v2998
      %v3000 = vpop.f32.mrb[0].mxu0
      %3001 = vmatprep.mubr.bf16.mxu0 0
      %3002 = vmatmul.mubr.bf16.gmra.mrb[0].mxu0 %v2413
      %v3003 = vpop.f32.mrb[0].mxu0
      %v3004 = vadd.f32 %v2907, %v3003
      %v3005 = vpop.f32.mrb[0].mxu0
      %v3006 = vpop.f32.mrb[0].mxu0
      %v3007 = vadd.f32 %v2910, %v3006
      %v3008 = vpop.f32.mrb[0].mxu0
      %3009 = vmatprep.mubr.bf16.mxu0 0
      %3010 = vmatmul.mubr.bf16.gmra.mrb[0].mxu0 %v2416
      %v3011 = vpop.f32.mrb[0].mxu0
      %v3012 = vadd.f32 %v2915, %v3011
      %v3013 = vpop.f32.mrb[0].mxu0
      %v3014 = vpop.f32.mrb[0].mxu0
      %v3015 = vadd.f32 %v2918, %v3014
      %v3016 = vpop.f32.mrb[0].mxu0
      %3017 = vmatprep.mubr.bf16.mxu0 0
      %3018 = vmatmul.mubr.bf16.gmra.mrb[0].mxu0 %v2419
      %v3019 = vpop.f32.mrb[0].mxu0
      %v3020 = vadd.f32 %v2923, %v3019
      %v3021 = vpop.f32.mrb[0].mxu0
      %v3022 = vpop.f32.mrb[0].mxu0
      %v3023 = vadd.f32 %v2926, %v3022
      %v3024 = vpop.f32.mrb[0].mxu0
      %3025 = vdwg.mxu0
      %s3026 = scalar_lea.vmem [#allocation5], 96
      %v3027 = vld [vmem:[%s3026] sm:$0xff]
      %v3028 = vld [vmem:[%s3026 + $0x8] sm:$0xff]
      %v3029 = vld [vmem:[%s3026 + $0x10] sm:$0xff]
      %v3030 = vld [vmem:[%s3026 + $0x18] sm:$0xff]
      %v3031 = vld [vmem:[%s3026 + $0x20] sm:$0xff]
      %v3032 = vld [vmem:[%s3026 + $0x28] sm:$0xff]
      %v3033 = vld [vmem:[%s3026 + $0x30] sm:$0xff]
      %v3034 = vld [vmem:[%s3026 + $0x38] sm:$0xff]
      %v3035 = vld [vmem:[%s3026 + $0x40] sm:$0xff]
      %v3036 = vld [vmem:[%s3026 + $0x48] sm:$0xff]
      %v3037 = vld [vmem:[%s3026 + $0x50] sm:$0xff]
      %v3038 = vld [vmem:[%s3026 + $0x58] sm:$0xff]
      %v3039 = vld [vmem:[%s3026 + $0x60] sm:$0xff]
      %v3040 = vld [vmem:[%s3026 + $0x68] sm:$0xff]
      %v3041 = vld [vmem:[%s3026 + $0x70] sm:$0xff]
      %v3042 = vld [vmem:[%s3026 + $0x78] sm:$0xff]
      %v3043 = vld [vmem:[%s3026 + $0x80] sm:$0xff]
      %v3044 = vld [vmem:[%s3026 + $0x88] sm:$0xff]
      %v3045 = vld [vmem:[%s3026 + $0x90] sm:$0xff]
      %v3046 = vld [vmem:[%s3026 + $0x98] sm:$0xff]
      %v3047 = vld [vmem:[%s3026 + $0xa0] sm:$0xff]
      %v3048 = vld [vmem:[%s3026 + $0xa8] sm:$0xff]
      %v3049 = vld [vmem:[%s3026 + $0xb0] sm:$0xff]
      %v3050 = vld [vmem:[%s3026 + $0xb8] sm:$0xff]
      %v3051 = vld [vmem:[%s3026 + $0xc0] sm:$0xff]
      %v3052 = vld [vmem:[%s3026 + $0xc8] sm:$0xff]
      %v3053 = vld [vmem:[%s3026 + $0xd0] sm:$0xff]
      %v3054 = vld [vmem:[%s3026 + $0xd8] sm:$0xff]
      %v3055 = vld [vmem:[%s3026 + $0xe0] sm:$0xff]
      %v3056 = vld [vmem:[%s3026 + $0xe8] sm:$0xff]
      %v3057 = vld [vmem:[%s3026 + $0xf0] sm:$0xff]
      %v3058 = vld [vmem:[%s3026 + $0xf8] sm:$0xff]
      %v3059 = vld [vmem:[%s3026 + $0x100] sm:$0xff]
      %v3060 = vld [vmem:[%s3026 + $0x108] sm:$0xff]
      %v3061 = vld [vmem:[%s3026 + $0x110] sm:$0xff]
      %v3062 = vld [vmem:[%s3026 + $0x118] sm:$0xff]
      %v3063 = vld [vmem:[%s3026 + $0x120] sm:$0xff]
      %v3064 = vld [vmem:[%s3026 + $0x128] sm:$0xff]
      %v3065 = vld [vmem:[%s3026 + $0x130] sm:$0xff]
      %v3066 = vld [vmem:[%s3026 + $0x138] sm:$0xff]
      %v3067 = vld [vmem:[%s3026 + $0x140] sm:$0xff]
      %v3068 = vld [vmem:[%s3026 + $0x148] sm:$0xff]
      %v3069 = vld [vmem:[%s3026 + $0x150] sm:$0xff]
      %v3070 = vld [vmem:[%s3026 + $0x158] sm:$0xff]
      %v3071 = vld [vmem:[%s3026 + $0x160] sm:$0xff]
      %v3072 = vld [vmem:[%s3026 + $0x168] sm:$0xff]
      %v3073 = vld [vmem:[%s3026 + $0x170] sm:$0xff]
      %v3074 = vld [vmem:[%s3026 + $0x178] sm:$0xff]
      %v3075 = vpack.c.bf16 %v3030, %v3027
      %v3076 = vpack.c.bf16 %v3031, %v3028
      %v3077 = vpack.c.bf16 %v3032, %v3029
      %v3078 = vpack.c.bf16 %v3036, %v3033
      %v3079 = vpack.c.bf16 %v3037, %v3034
      %v3080 = vpack.c.bf16 %v3038, %v3035
      %v3081 = vpack.c.bf16 %v3042, %v3039
      %v3082 = vpack.c.bf16 %v3043, %v3040
      %v3083 = vpack.c.bf16 %v3044, %v3041
      %v3084 = vpack.c.bf16 %v3048, %v3045
      %v3085 = vpack.c.bf16 %v3049, %v3046
      %v3086 = vpack.c.bf16 %v3050, %v3047
      %v3087 = vpack.c.bf16 %v3054, %v3051
      %v3088 = vpack.c.bf16 %v3055, %v3052
      %v3089 = vpack.c.bf16 %v3056, %v3053
      %v3090 = vpack.c.bf16 %v3060, %v3057
      %v3091 = vpack.c.bf16 %v3061, %v3058
      %v3092 = vpack.c.bf16 %v3062, %v3059
      %v3093 = vpack.c.bf16 %v3066, %v3063
      %v3094 = vpack.c.bf16 %v3067, %v3064
      %v3095 = vpack.c.bf16 %v3068, %v3065
      %v3096 = vpack.c.bf16 %v3072, %v3069
      %v3097 = vpack.c.bf16 %v3073, %v3070
      %v3098 = vpack.c.bf16 %v3074, %v3071
      %s3099 = scalar_lea.vmem %s3, 768
      %v3100 = vld [vmem:[%s3099] sm:$0xff]
      %v3101 = vld [vmem:[%s3099 + $0x8] sm:$0xff]
      %v3102 = vld [vmem:[%s3099 + $0x10] sm:$0xff]
      %v3103 = vld [vmem:[%s3099 + $0x18] sm:$0xff]
      %v3104 = vld [vmem:[%s3099 + $0x20] sm:$0xff]
      %v3105 = vld [vmem:[%s3099 + $0x28] sm:$0xff]
      %v3106 = vld [vmem:[%s3099 + $0x30] sm:$0xff]
      %v3107 = vld [vmem:[%s3099 + $0x38] sm:$0xff]
      %v3108 = vld [vmem:[%s3099 + $0x40] sm:$0xff]
      %v3109 = vld [vmem:[%s3099 + $0x48] sm:$0xff]
      %v3110 = vld [vmem:[%s3099 + $0x50] sm:$0xff]
      %v3111 = vld [vmem:[%s3099 + $0x58] sm:$0xff]
      %v3112 = vld [vmem:[%s3099 + $0x60] sm:$0xff]
      %v3113 = vld [vmem:[%s3099 + $0x68] sm:$0xff]
      %v3114 = vld [vmem:[%s3099 + $0x70] sm:$0xff]
      %v3115 = vld [vmem:[%s3099 + $0x78] sm:$0xff]
      %v3116 = vld [vmem:[%s3099 + $0x80] sm:$0xff]
      %v3117 = vld [vmem:[%s3099 + $0x88] sm:$0xff]
      %v3118 = vld [vmem:[%s3099 + $0x90] sm:$0xff]
      %v3119 = vld [vmem:[%s3099 + $0x98] sm:$0xff]
      %v3120 = vld [vmem:[%s3099 + $0xa0] sm:$0xff]
      %v3121 = vld [vmem:[%s3099 + $0xa8] sm:$0xff]
      %v3122 = vld [vmem:[%s3099 + $0xb0] sm:$0xff]
      %v3123 = vld [vmem:[%s3099 + $0xb8] sm:$0xff]
      %v3124 = vld [vmem:[%s3099 + $0xc0] sm:$0xff]
      %v3125 = vld [vmem:[%s3099 + $0xc8] sm:$0xff]
      %v3126 = vld [vmem:[%s3099 + $0xd0] sm:$0xff]
      %v3127 = vld [vmem:[%s3099 + $0xd8] sm:$0xff]
      %v3128 = vld [vmem:[%s3099 + $0xe0] sm:$0xff]
      %v3129 = vld [vmem:[%s3099 + $0xe8] sm:$0xff]
      %v3130 = vld [vmem:[%s3099 + $0xf0] sm:$0xff]
      %v3131 = vld [vmem:[%s3099 + $0xf8] sm:$0xff]
      %v3132 = vld [vmem:[%s3099 + $0x100] sm:$0xff]
      %v3133 = vld [vmem:[%s3099 + $0x108] sm:$0xff]
      %v3134 = vld [vmem:[%s3099 + $0x110] sm:$0xff]
      %v3135 = vld [vmem:[%s3099 + $0x118] sm:$0xff]
      %v3136 = vld [vmem:[%s3099 + $0x120] sm:$0xff]
      %v3137 = vld [vmem:[%s3099 + $0x128] sm:$0xff]
      %v3138 = vld [vmem:[%s3099 + $0x130] sm:$0xff]
      %v3139 = vld [vmem:[%s3099 + $0x138] sm:$0xff]
      %v3140 = vld [vmem:[%s3099 + $0x140] sm:$0xff]
      %v3141 = vld [vmem:[%s3099 + $0x148] sm:$0xff]
      %v3142 = vld [vmem:[%s3099 + $0x150] sm:$0xff]
      %v3143 = vld [vmem:[%s3099 + $0x158] sm:$0xff]
      %v3144 = vld [vmem:[%s3099 + $0x160] sm:$0xff]
      %v3145 = vld [vmem:[%s3099 + $0x168] sm:$0xff]
      %v3146 = vld [vmem:[%s3099 + $0x170] sm:$0xff]
      %v3147 = vld [vmem:[%s3099 + $0x178] sm:$0xff]
      %v3148 = vpack.c.bf16 %v3101, %v3100
      %v3149 = vpack.c.bf16 %v3103, %v3102
      %v3150 = vpack.c.bf16 %v3105, %v3104
      %v3151 = vpack.c.bf16 %v3107, %v3106
      %v3152 = vpack.c.bf16 %v3109, %v3108
      %v3153 = vpack.c.bf16 %v3111, %v3110
      %v3154 = vpack.c.bf16 %v3113, %v3112
      %v3155 = vpack.c.bf16 %v3115, %v3114
      %v3156 = vpack.c.bf16 %v3117, %v3116
      %v3157 = vpack.c.bf16 %v3119, %v3118
      %v3158 = vpack.c.bf16 %v3121, %v3120
      %v3159 = vpack.c.bf16 %v3123, %v3122
      %v3160 = vpack.c.bf16 %v3125, %v3124
      %v3161 = vpack.c.bf16 %v3127, %v3126
      %v3162 = vpack.c.bf16 %v3129, %v3128
      %v3163 = vpack.c.bf16 %v3131, %v3130
      %v3164 = vpack.c.bf16 %v3133, %v3132
      %v3165 = vpack.c.bf16 %v3135, %v3134
      %v3166 = vpack.c.bf16 %v3137, %v3136
      %v3167 = vpack.c.bf16 %v3139, %v3138
      %v3168 = vpack.c.bf16 %v3141, %v3140
      %v3169 = vpack.c.bf16 %v3143, %v3142
      %v3170 = vpack.c.bf16 %v3145, %v3144
      %v3171 = vpack.c.bf16 %v3147, %v3146
      %3172 = vmatprep.subr.bf16.mxu0 0
      %3173 = vmatpush1.bf16.msra.mxu0 %v3148
      %3174 = vmatprep.subr.bf16.mxu0 0
      %3175 = vmatpush1.bf16.msra.mxu0 %v3149
      %3176 = vmatprep.subr.bf16.mxu0 0
      %3177 = vmatpush1.bf16.msra.mxu0 %v3150
      %3178 = vmatprep.subr.bf16.mxu0 0
      %3179 = vmatpush1.bf16.msra.mxu0 %v3151
      %3180 = vmatprep.subr.bf16.mxu0 0
      %3181 = vmatpush1.bf16.msra.mxu0 %v3152
      %3182 = vmatprep.subr.bf16.mxu0 0
      %3183 = vmatpush1.bf16.msra.mxu0 %v3153
      %3184 = vmatprep.subr.bf16.mxu0 0
      %3185 = vmatpush1.bf16.msra.mxu0 %v3154
      %3186 = vmatprep.subr.bf16.mxu0 0
      %3187 = vmatpush1.bf16.msra.mxu0 %v3155
      %3188 = vmatprep.subr.bf16.mxu0 0
      %3189 = vmatpush1.bf16.msra.mxu0 %v3156
      %3190 = vmatprep.subr.bf16.mxu0 0
      %3191 = vmatpush1.bf16.msra.mxu0 %v3157
      %3192 = vmatprep.subr.bf16.mxu0 0
      %3193 = vmatpush1.bf16.msra.mxu0 %v3158
      %3194 = vmatprep.subr.bf16.mxu0 0
      %3195 = vmatpush1.bf16.msra.mxu0 %v3159
      %3196 = vmatprep.subr.bf16.mxu0 0
      %3197 = vmatpush1.bf16.msra.mxu0 %v3160
      %3198 = vmatprep.subr.bf16.mxu0 0
      %3199 = vmatpush1.bf16.msra.mxu0 %v3161
      %3200 = vmatprep.subr.bf16.mxu0 0
      %3201 = vmatpush1.bf16.msra.mxu0 %v3162
      %3202 = vmatprep.subr.bf16.mxu0 0
      %3203 = vmatpush1.bf16.msra.mxu0 %v3163
      %3204 = vmatprep.mubr.bf16.mxu0 %v3076
      %3205 = vmatmul.mubr.bf16.gmra.mrb[0].mxu0 %v3075
      %v3206 = vpop.f32.mrb[0].mxu0
      %v3207 = vadd.f32 0.0, %v3206
      %v3208 = vpop.f32.mrb[0].mxu0
      %v3209 = vpop.f32.mrb[0].mxu0
      %v3210 = vadd.f32 0.0, %v3209
      %v3211 = vpop.f32.mrb[0].mxu0
      %3212 = vmatprep.mubr.bf16.mxu0 %v3079
      %3213 = vmatmul.mubr.bf16.gmra.mrb[0].mxu0 %v3078
      %v3214 = vpop.f32.mrb[0].mxu0
      %v3215 = vadd.f32 0.0, %v3214
      %v3216 = vpop.f32.mrb[0].mxu0
      %v3217 = vpop.f32.mrb[0].mxu0
      %v3218 = vadd.f32 0.0, %v3217
      %v3219 = vpop.f32.mrb[0].mxu0
      %3220 = vmatprep.mubr.bf16.mxu0 %v3082
      %3221 = vmatmul.mubr.bf16.gmra.mrb[0].mxu0 %v3081
      %v3222 = vpop.f32.mrb[0].mxu0
      %v3223 = vadd.f32 0.0, %v3222
      %v3224 = vpop.f32.mrb[0].mxu0
      %v3225 = vpop.f32.mrb[0].mxu0
      %v3226 = vadd.f32 0.0, %v3225
      %v3227 = vpop.f32.mrb[0].mxu0
      %3228 = vmatprep.mubr.bf16.mxu0 %v3085
      %3229 = vmatmul.mubr.bf16.gmra.mrb[0].mxu0 %v3084
      %v3230 = vpop.f32.mrb[0].mxu0
      %v3231 = vadd.f32 0.0, %v3230
      %v3232 = vpop.f32.mrb[0].mxu0
      %v3233 = vpop.f32.mrb[0].mxu0
      %v3234 = vadd.f32 0.0, %v3233
      %v3235 = vpop.f32.mrb[0].mxu0
      %3236 = vmatprep.mubr.bf16.mxu0 %v3088
      %3237 = vmatmul.mubr.bf16.gmra.mrb[0].mxu0 %v3087
      %v3238 = vpop.f32.mrb[0].mxu0
      %v3239 = vadd.f32 0.0, %v3238
      %v3240 = vpop.f32.mrb[0].mxu0
      %v3241 = vpop.f32.mrb[0].mxu0
      %v3242 = vadd.f32 0.0, %v3241
      %v3243 = vpop.f32.mrb[0].mxu0
      %3244 = vmatprep.mubr.bf16.mxu0 %v3091
      %3245 = vmatmul.mubr.bf16.gmra.mrb[0].mxu0 %v3090
      %v3246 = vpop.f32.mrb[0].mxu0
      %v3247 = vadd.f32 0.0, %v3246
      %v3248 = vpop.f32.mrb[0].mxu0
      %v3249 = vpop.f32.mrb[0].mxu0
      %v3250 = vadd.f32 0.0, %v3249
      %v3251 = vpop.f32.mrb[0].mxu0
      %3252 = vmatprep.mubr.bf16.mxu0 %v3094
      %3253 = vmatmul.mubr.bf16.gmra.mrb[0].mxu0 %v3093
      %v3254 = vpop.f32.mrb[0].mxu0
      %v3255 = vadd.f32 0.0, %v3254
      %v3256 = vpop.f32.mrb[0].mxu0
      %v3257 = vpop.f32.mrb[0].mxu0
      %v3258 = vadd.f32 0.0, %v3257
      %v3259 = vpop.f32.mrb[0].mxu0
      %3260 = vmatprep.mubr.bf16.mxu0 %v3097
      %3261 = vmatmul.mubr.bf16.gmra.mrb[0].mxu0 %v3096
      %v3262 = vpop.f32.mrb[0].mxu0
      %v3263 = vadd.f32 0.0, %v3262
      %v3264 = vpop.f32.mrb[0].mxu0
      %v3265 = vpop.f32.mrb[0].mxu0
      %v3266 = vadd.f32 0.0, %v3265
      %v3267 = vpop.f32.mrb[0].mxu0
      %3268 = vdwg.mxu0
      %3269 = vmatprep.subr.bf16.mxu0 0
      %3270 = vmatpush1.bf16.msra.mxu0 %v3164
      %3271 = vmatprep.subr.bf16.mxu0 0
      %3272 = vmatpush1.bf16.msra.mxu0 %v3165
      %3273 = vmatprep.subr.bf16.mxu0 0
      %3274 = vmatpush1.bf16.msra.mxu0 %v3166
      %3275 = vmatprep.subr.bf16.mxu0 0
      %3276 = vmatpush1.bf16.msra.mxu0 %v3167
      %3277 = vmatprep.subr.bf16.mxu0 0
      %3278 = vmatpush1.bf16.msra.mxu0 %v3168
      %3279 = vmatprep.subr.bf16.mxu0 0
      %3280 = vmatpush1.bf16.msra.mxu0 %v3169
      %3281 = vmatprep.subr.bf16.mxu0 0
      %3282 = vmatpush1.bf16.msra.mxu0 %v3170
      %3283 = vmatprep.subr.bf16.mxu0 0
      %3284 = vmatpush1.bf16.msra.mxu0 %v3171
      %3285 = vmatprep.subr.bf16.mxu0 0
      %3286 = vmatpush1.bf16.msra.mxu0 0
      %3287 = vmatprep.subr.bf16.mxu0 0
      %3288 = vmatpush1.bf16.msra.mxu0 0
      %3289 = vmatprep.subr.bf16.mxu0 0
      %3290 = vmatpush1.bf16.msra.mxu0 0
      %3291 = vmatprep.subr.bf16.mxu0 0
      %3292 = vmatpush1.bf16.msra.mxu0 0
      %3293 = vmatprep.subr.bf16.mxu0 0
      %3294 = vmatpush1.bf16.msra.mxu0 0
      %3295 = vmatprep.subr.bf16.mxu0 0
      %3296 = vmatpush1.bf16.msra.mxu0 0
      %3297 = vmatprep.subr.bf16.mxu0 0
      %3298 = vmatpush1.bf16.msra.mxu0 0
      %3299 = vmatprep.subr.bf16.mxu0 0
      %3300 = vmatpush1.bf16.msra.mxu0 0
      %3301 = vmatprep.mubr.bf16.mxu0 0
      %3302 = vmatmul.mubr.bf16.gmra.mrb[0].mxu0 %v3077
      %v3303 = vpop.f32.mrb[0].mxu0
      %v3304 = vadd.f32 %v3207, %v3303
      %v3305 = vpop.f32.mrb[0].mxu0
      %v3306 = vpop.f32.mrb[0].mxu0
      %v3307 = vadd.f32 %v3210, %v3306
      %v3308 = vpop.f32.mrb[0].mxu0
      %3309 = vmatprep.mubr.bf16.mxu0 0
      %3310 = vmatmul.mubr.bf16.gmra.mrb[0].mxu0 %v3080
      %v3311 = vpop.f32.mrb[0].mxu0
      %v3312 = vadd.f32 %v3215, %v3311
      %v3313 = vpop.f32.mrb[0].mxu0
      %v3314 = vpop.f32.mrb[0].mxu0
      %v3315 = vadd.f32 %v3218, %v3314
      %v3316 = vpop.f32.mrb[0].mxu0
      %3317 = vmatprep.mubr.bf16.mxu0 0
      %3318 = vmatmul.mubr.bf16.gmra.mrb[0].mxu0 %v3083
      %v3319 = vpop.f32.mrb[0].mxu0
      %v3320 = vadd.f32 %v3223, %v3319
      %v3321 = vpop.f32.mrb[0].mxu0
      %v3322 = vpop.f32.mrb[0].mxu0
      %v3323 = vadd.f32 %v3226, %v3322
      %v3324 = vpop.f32.mrb[0].mxu0
      %3325 = vmatprep.mubr.bf16.mxu0 0
      %3326 = vmatmul.mubr.bf16.gmra.mrb[0].mxu0 %v3086
      %v3327 = vpop.f32.mrb[0].mxu0
      %v3328 = vadd.f32 %v3231, %v3327
      %v3329 = vpop.f32.mrb[0].mxu0
      %v3330 = vpop.f32.mrb[0].mxu0
      %v3331 = vadd.f32 %v3234, %v3330
      %v3332 = vpop.f32.mrb[0].mxu0
      %3333 = vmatprep.mubr.bf16.mxu0 0
      %3334 = vmatmul.mubr.bf16.gmra.mrb[0].mxu0 %v3089
      %v3335 = vpop.f32.mrb[0].mxu0
      %v3336 = vadd.f32 %v3239, %v3335
      %v3337 = vpop.f32.mrb[0].mxu0
      %v3338 = vpop.f32.mrb[0].mxu0
      %v3339 = vadd.f32 %v3242, %v3338
      %v3340 = vpop.f32.mrb[0].mxu0
      %3341 = vmatprep.mubr.bf16.mxu0 0
      %3342 = vmatmul.mubr.bf16.gmra.mrb[0].mxu0 %v3092
      %v3343 = vpop.f32.mrb[0].mxu0
      %v3344 = vadd.f32 %v3247, %v3343
      %v3345 = vpop.f32.mrb[0].mxu0
      %v3346 = vpop.f32.mrb[0].mxu0
      %v3347 = vadd.f32 %v3250, %v3346
      %v3348 = vpop.f32.mrb[0].mxu0
      %3349 = vmatprep.mubr.bf16.mxu0 0
      %3350 = vmatmul.mubr.bf16.gmra.mrb[0].mxu0 %v3095
      %v3351 = vpop.f32.mrb[0].mxu0
      %v3352 = vadd.f32 %v3255, %v3351
      %v3353 = vpop.f32.mrb[0].mxu0
      %v3354 = vpop.f32.mrb[0].mxu0
      %v3355 = vadd.f32 %v3258, %v3354
      %v3356 = vpop.f32.mrb[0].mxu0
      %3357 = vmatprep.mubr.bf16.mxu0 0
      %3358 = vmatmul.mubr.bf16.gmra.mrb[0].mxu0 %v3098
      %v3359 = vpop.f32.mrb[0].mxu0
      %v3360 = vadd.f32 %v3263, %v3359
      %v3361 = vpop.f32.mrb[0].mxu0
      %v3362 = vpop.f32.mrb[0].mxu0
      %v3363 = vadd.f32 %v3266, %v3362
      %v3364 = vpop.f32.mrb[0].mxu0
      %3365 = vdwg.mxu0
      %v3366 = vadd.f32 %v2964, %v3304
      %v3367 = vadd.f32 %v2967, %v3307
      %v3368 = vadd.f32 %v2972, %v3312
      %v3369 = vadd.f32 %v2975, %v3315
      %v3370 = vadd.f32 %v2980, %v3320
      %v3371 = vadd.f32 %v2983, %v3323
      %v3372 = vadd.f32 %v2988, %v3328
      %v3373 = vadd.f32 %v2991, %v3331
      %v3374 = vadd.f32 %v2996, %v3336
      %v3375 = vadd.f32 %v2999, %v3339
      %v3376 = vadd.f32 %v3004, %v3344
      %v3377 = vadd.f32 %v3007, %v3347
      %v3378 = vadd.f32 %v3012, %v3352
      %v3379 = vadd.f32 %v3015, %v3355
      %v3380 = vadd.f32 %v3020, %v3360
      %v3381 = vadd.f32 %v3023, %v3363
      %v3382 = vld [vmem:[%s4] sm:$0x1]
      %v3384 = vlaneseq
      %v3385 = vshrl.u32 %v3384, 7
      %v3386 = vsub.s32 0, %v3385
      %v3387 = vrot.slane %v3382, %v3386
      %v3389 = vadd.f32 %v3366, %v3387
      %v3390 = vadd.f32 %v3367, %v3387
      %v3391 = vadd.f32 %v3368, %v3387
      %v3392 = vadd.f32 %v3369, %v3387
      %v3393 = vadd.f32 %v3370, %v3387
      %v3394 = vadd.f32 %v3371, %v3387
      %v3395 = vadd.f32 %v3372, %v3387
      %v3396 = vadd.f32 %v3373, %v3387
      %v3397 = vadd.f32 %v3374, %v3387
      %v3398 = vadd.f32 %v3375, %v3387
      %v3399 = vadd.f32 %v3376, %v3387
      %v3400 = vadd.f32 %v3377, %v3387
      %v3401 = vadd.f32 %v3378, %v3387
      %v3402 = vadd.f32 %v3379, %v3387
      %v3403 = vadd.f32 %v3380, %v3387
      %v3404 = vadd.f32 %v3381, %v3387
      %v3405 = vmax.f32 %v3389, 0.0
      %v3406 = vmax.f32 %v3390, 0.0
      %v3407 = vmax.f32 %v3391, 0.0
      %v3408 = vmax.f32 %v3392, 0.0
      %v3409 = vmax.f32 %v3393, 0.0
      %v3410 = vmax.f32 %v3394, 0.0
      %v3411 = vmax.f32 %v3395, 0.0
      %v3412 = vmax.f32 %v3396, 0.0
      %v3413 = vmax.f32 %v3397, 0.0
      %v3414 = vmax.f32 %v3398, 0.0
      %v3415 = vmax.f32 %v3399, 0.0
      %v3416 = vmax.f32 %v3400, 0.0
      %v3417 = vmax.f32 %v3401, 0.0
      %v3418 = vmax.f32 %v3402, 0.0
      %v3419 = vmax.f32 %v3403, 0.0
      %v3420 = vmax.f32 %v3404, 0.0
      %s3421 = scalar_lea.vmem [#allocation6], 24
      %3422 = vst.msk [vmem:[%s3421 + $0x1] sm:$0xff] %vm2292, %v3405
      %3423 = vst.msk [vmem:[%s3421 + $0x9] sm:$0xff] %vm2292, %v3406
      %3424 = vst.msk [vmem:[%s3421 + $0x19] sm:$0xff] %vm2292, %v3407
      %3425 = vst.msk [vmem:[%s3421 + $0x21] sm:$0xff] %vm2292, %v3408
      %3426 = vst.msk [vmem:[%s3421 + $0x31] sm:$0xff] %vm2292, %v3409
      %3427 = vst.msk [vmem:[%s3421 + $0x39] sm:$0xff] %vm2292, %v3410
      %3428 = vst.msk [vmem:[%s3421 + $0x49] sm:$0xff] %vm2292, %v3411
      %3429 = vst.msk [vmem:[%s3421 + $0x51] sm:$0xff] %vm2292, %v3412
      %3430 = vst.msk [vmem:[%s3421 + $0x61] sm:$0xff] %vm2292, %v3413
      %3431 = vst.msk [vmem:[%s3421 + $0x69] sm:$0xff] %vm2292, %v3414
      %3432 = vst.msk [vmem:[%s3421 + $0x79] sm:$0xff] %vm2292, %v3415
      %3433 = vst.msk [vmem:[%s3421 + $0x81] sm:$0xff] %vm2292, %v3416
      %3434 = vst.msk [vmem:[%s3421 + $0x91] sm:$0xff] %vm2292, %v3417
      %3435 = vst.msk [vmem:[%s3421 + $0x99] sm:$0xff] %vm2292, %v3418
      %3436 = vst.msk [vmem:[%s3421 + $0xa9] sm:$0xff] %vm2292, %v3419
      %3437 = vst.msk [vmem:[%s3421 + $0xb1] sm:$0xff] %vm2292, %v3420
      %s3438 = scalar_lea.vmem [#allocation5], 384
      %v3439 = vld [vmem:[%s3438] sm:$0xff]
      %v3440 = vld [vmem:[%s3438 + $0x8] sm:$0xff]
      %v3441 = vld [vmem:[%s3438 + $0x10] sm:$0xff]
      %v3442 = vld [vmem:[%s3438 + $0x18] sm:$0xff]
      %v3443 = vld [vmem:[%s3438 + $0x20] sm:$0xff]
      %v3444 = vld [vmem:[%s3438 + $0x28] sm:$0xff]
      %v3445 = vld [vmem:[%s3438 + $0x30] sm:$0xff]
      %v3446 = vld [vmem:[%s3438 + $0x38] sm:$0xff]
      %v3447 = vld [vmem:[%s3438 + $0x40] sm:$0xff]
      %v3448 = vld [vmem:[%s3438 + $0x48] sm:$0xff]
      %v3449 = vld [vmem:[%s3438 + $0x50] sm:$0xff]
      %v3450 = vld [vmem:[%s3438 + $0x58] sm:$0xff]
      %v3451 = vld [vmem:[%s3438 + $0x60] sm:$0xff]
      %v3452 = vld [vmem:[%s3438 + $0x68] sm:$0xff]
      %v3453 = vld [vmem:[%s3438 + $0x70] sm:$0xff]
      %v3454 = vld [vmem:[%s3438 + $0x78] sm:$0xff]
      %v3455 = vld [vmem:[%s3438 + $0x80] sm:$0xff]
      %v3456 = vld [vmem:[%s3438 + $0x88] sm:$0xff]
      %v3457 = vld [vmem:[%s3438 + $0x90] sm:$0xff]
      %v3458 = vld [vmem:[%s3438 + $0x98] sm:$0xff]
      %v3459 = vld [vmem:[%s3438 + $0xa0] sm:$0xff]
      %v3460 = vld [vmem:[%s3438 + $0xa8] sm:$0xff]
      %v3461 = vld [vmem:[%s3438 + $0xb0] sm:$0xff]
      %v3462 = vld [vmem:[%s3438 + $0xb8] sm:$0xff]
      %v3463 = vld [vmem:[%s3438 + $0xc0] sm:$0xff]
      %v3464 = vld [vmem:[%s3438 + $0xc8] sm:$0xff]
      %v3465 = vld [vmem:[%s3438 + $0xd0] sm:$0xff]
      %v3466 = vld [vmem:[%s3438 + $0xd8] sm:$0xff]
      %v3467 = vld [vmem:[%s3438 + $0xe0] sm:$0xff]
      %v3468 = vld [vmem:[%s3438 + $0xe8] sm:$0xff]
      %v3469 = vld [vmem:[%s3438 + $0xf0] sm:$0xff]
      %v3470 = vld [vmem:[%s3438 + $0xf8] sm:$0xff]
      %v3471 = vld [vmem:[%s3438 + $0x100] sm:$0xff]
      %v3472 = vld [vmem:[%s3438 + $0x108] sm:$0xff]
      %v3473 = vld [vmem:[%s3438 + $0x110] sm:$0xff]
      %v3474 = vld [vmem:[%s3438 + $0x118] sm:$0xff]
      %v3475 = vld [vmem:[%s3438 + $0x120] sm:$0xff]
      %v3476 = vld [vmem:[%s3438 + $0x128] sm:$0xff]
      %v3477 = vld [vmem:[%s3438 + $0x130] sm:$0xff]
      %v3478 = vld [vmem:[%s3438 + $0x138] sm:$0xff]
      %v3479 = vld [vmem:[%s3438 + $0x140] sm:$0xff]
      %v3480 = vld [vmem:[%s3438 + $0x148] sm:$0xff]
      %v3481 = vld [vmem:[%s3438 + $0x150] sm:$0xff]
      %v3482 = vld [vmem:[%s3438 + $0x158] sm:$0xff]
      %v3483 = vld [vmem:[%s3438 + $0x160] sm:$0xff]
      %v3484 = vld [vmem:[%s3438 + $0x168] sm:$0xff]
      %v3485 = vld [vmem:[%s3438 + $0x170] sm:$0xff]
      %v3486 = vld [vmem:[%s3438 + $0x178] sm:$0xff]
      %v3487 = vpack.c.bf16 %v3442, %v3439
      %v3488 = vpack.c.bf16 %v3443, %v3440
      %v3489 = vpack.c.bf16 %v3444, %v3441
      %v3490 = vpack.c.bf16 %v3448, %v3445
      %v3491 = vpack.c.bf16 %v3449, %v3446
      %v3492 = vpack.c.bf16 %v3450, %v3447
      %v3493 = vpack.c.bf16 %v3454, %v3451
      %v3494 = vpack.c.bf16 %v3455, %v3452
      %v3495 = vpack.c.bf16 %v3456, %v3453
      %v3496 = vpack.c.bf16 %v3460, %v3457
      %v3497 = vpack.c.bf16 %v3461, %v3458
      %v3498 = vpack.c.bf16 %v3462, %v3459
      %v3499 = vpack.c.bf16 %v3466, %v3463
      %v3500 = vpack.c.bf16 %v3467, %v3464
      %v3501 = vpack.c.bf16 %v3468, %v3465
      %v3502 = vpack.c.bf16 %v3472, %v3469
      %v3503 = vpack.c.bf16 %v3473, %v3470
      %v3504 = vpack.c.bf16 %v3474, %v3471
      %v3505 = vpack.c.bf16 %v3478, %v3475
      %v3506 = vpack.c.bf16 %v3479, %v3476
      %v3507 = vpack.c.bf16 %v3480, %v3477
      %v3508 = vpack.c.bf16 %v3484, %v3481
      %v3509 = vpack.c.bf16 %v3485, %v3482
      %v3510 = vpack.c.bf16 %v3486, %v3483
      %v3511 = vld [vmem:[%s3] sm:$0xff]
      %v3512 = vld [vmem:[%s3 + $0x8] sm:$0xff]
      %v3513 = vld [vmem:[%s3 + $0x10] sm:$0xff]
      %v3514 = vld [vmem:[%s3 + $0x18] sm:$0xff]
      %v3515 = vld [vmem:[%s3 + $0x20] sm:$0xff]
      %v3516 = vld [vmem:[%s3 + $0x28] sm:$0xff]
      %v3517 = vld [vmem:[%s3 + $0x30] sm:$0xff]
      %v3518 = vld [vmem:[%s3 + $0x38] sm:$0xff]
      %v3519 = vld [vmem:[%s3 + $0x40] sm:$0xff]
      %v3520 = vld [vmem:[%s3 + $0x48] sm:$0xff]
      %v3521 = vld [vmem:[%s3 + $0x50] sm:$0xff]
      %v3522 = vld [vmem:[%s3 + $0x58] sm:$0xff]
      %v3523 = vld [vmem:[%s3 + $0x60] sm:$0xff]
      %v3524 = vld [vmem:[%s3 + $0x68] sm:$0xff]
      %v3525 = vld [vmem:[%s3 + $0x70] sm:$0xff]
      %v3526 = vld [vmem:[%s3 + $0x78] sm:$0xff]
      %v3527 = vld [vmem:[%s3 + $0x80] sm:$0xff]
      %v3528 = vld [vmem:[%s3 + $0x88] sm:$0xff]
      %v3529 = vld [vmem:[%s3 + $0x90] sm:$0xff]
      %v3530 = vld [vmem:[%s3 + $0x98] sm:$0xff]
      %v3531 = vld [vmem:[%s3 + $0xa0] sm:$0xff]
      %v3532 = vld [vmem:[%s3 + $0xa8] sm:$0xff]
      %v3533 = vld [vmem:[%s3 + $0xb0] sm:$0xff]
      %v3534 = vld [vmem:[%s3 + $0xb8] sm:$0xff]
      %v3535 = vld [vmem:[%s3 + $0xc0] sm:$0xff]
      %v3536 = vld [vmem:[%s3 + $0xc8] sm:$0xff]
      %v3537 = vld [vmem:[%s3 + $0xd0] sm:$0xff]
      %v3538 = vld [vmem:[%s3 + $0xd8] sm:$0xff]
      %v3539 = vld [vmem:[%s3 + $0xe0] sm:$0xff]
      %v3540 = vld [vmem:[%s3 + $0xe8] sm:$0xff]
      %v3541 = vld [vmem:[%s3 + $0xf0] sm:$0xff]
      %v3542 = vld [vmem:[%s3 + $0xf8] sm:$0xff]
      %v3543 = vld [vmem:[%s3 + $0x100] sm:$0xff]
      %v3544 = vld [vmem:[%s3 + $0x108] sm:$0xff]
      %v3545 = vld [vmem:[%s3 + $0x110] sm:$0xff]
      %v3546 = vld [vmem:[%s3 + $0x118] sm:$0xff]
      %v3547 = vld [vmem:[%s3 + $0x120] sm:$0xff]
      %v3548 = vld [vmem:[%s3 + $0x128] sm:$0xff]
      %v3549 = vld [vmem:[%s3 + $0x130] sm:$0xff]
      %v3550 = vld [vmem:[%s3 + $0x138] sm:$0xff]
      %v3551 = vld [vmem:[%s3 + $0x140] sm:$0xff]
      %v3552 = vld [vmem:[%s3 + $0x148] sm:$0xff]
      %v3553 = vld [vmem:[%s3 + $0x150] sm:$0xff]
      %v3554 = vld [vmem:[%s3 + $0x158] sm:$0xff]
      %v3555 = vld [vmem:[%s3 + $0x160] sm:$0xff]
      %v3556 = vld [vmem:[%s3 + $0x168] sm:$0xff]
      %v3557 = vld [vmem:[%s3 + $0x170] sm:$0xff]
      %v3558 = vld [vmem:[%s3 + $0x178] sm:$0xff]
      %v3559 = vpack.c.bf16 %v3512, %v3511
      %v3560 = vpack.c.bf16 %v3514, %v3513
      %v3561 = vpack.c.bf16 %v3516, %v3515
      %v3562 = vpack.c.bf16 %v3518, %v3517
      %v3563 = vpack.c.bf16 %v3520, %v3519
      %v3564 = vpack.c.bf16 %v3522, %v3521
      %v3565 = vpack.c.bf16 %v3524, %v3523
      %v3566 = vpack.c.bf16 %v3526, %v3525
      %v3567 = vpack.c.bf16 %v3528, %v3527
      %v3568 = vpack.c.bf16 %v3530, %v3529
      %v3569 = vpack.c.bf16 %v3532, %v3531
      %v3570 = vpack.c.bf16 %v3534, %v3533
      %v3571 = vpack.c.bf16 %v3536, %v3535
      %v3572 = vpack.c.bf16 %v3538, %v3537
      %v3573 = vpack.c.bf16 %v3540, %v3539
      %v3574 = vpack.c.bf16 %v3542, %v3541
      %v3575 = vpack.c.bf16 %v3544, %v3543
      %v3576 = vpack.c.bf16 %v3546, %v3545
      %v3577 = vpack.c.bf16 %v3548, %v3547
      %v3578 = vpack.c.bf16 %v3550, %v3549
      %v3579 = vpack.c.bf16 %v3552, %v3551
      %v3580 = vpack.c.bf16 %v3554, %v3553
      %v3581 = vpack.c.bf16 %v3556, %v3555
      %v3582 = vpack.c.bf16 %v3558, %v3557
      %s3583 = scalar_lea.vmem [#allocation5], 432
      %v3584 = vld [vmem:[%s3583] sm:$0xff]
      %v3585 = vld [vmem:[%s3583 + $0x8] sm:$0xff]
      %v3586 = vld [vmem:[%s3583 + $0x10] sm:$0xff]
      %v3587 = vld [vmem:[%s3583 + $0x18] sm:$0xff]
      %v3588 = vld [vmem:[%s3583 + $0x20] sm:$0xff]
      %v3589 = vld [vmem:[%s3583 + $0x28] sm:$0xff]
      %v3590 = vld [vmem:[%s3583 + $0x30] sm:$0xff]
      %v3591 = vld [vmem:[%s3583 + $0x38] sm:$0xff]
      %v3592 = vld [vmem:[%s3583 + $0x40] sm:$0xff]
      %v3593 = vld [vmem:[%s3583 + $0x48] sm:$0xff]
      %v3594 = vld [vmem:[%s3583 + $0x50] sm:$0xff]
      %v3595 = vld [vmem:[%s3583 + $0x58] sm:$0xff]
      %v3596 = vld [vmem:[%s3583 + $0x60] sm:$0xff]
      %v3597 = vld [vmem:[%s3583 + $0x68] sm:$0xff]
      %v3598 = vld [vmem:[%s3583 + $0x70] sm:$0xff]
      %v3599 = vld [vmem:[%s3583 + $0x78] sm:$0xff]
      %v3600 = vld [vmem:[%s3583 + $0x80] sm:$0xff]
      %v3601 = vld [vmem:[%s3583 + $0x88] sm:$0xff]
      %v3602 = vld [vmem:[%s3583 + $0x90] sm:$0xff]
      %v3603 = vld [vmem:[%s3583 + $0x98] sm:$0xff]
      %v3604 = vld [vmem:[%s3583 + $0xa0] sm:$0xff]
      %v3605 = vld [vmem:[%s3583 + $0xa8] sm:$0xff]
      %v3606 = vld [vmem:[%s3583 + $0xb0] sm:$0xff]
      %v3607 = vld [vmem:[%s3583 + $0xb8] sm:$0xff]
      %v3608 = vld [vmem:[%s3583 + $0xc0] sm:$0xff]
      %v3609 = vld [vmem:[%s3583 + $0xc8] sm:$0xff]
      %v3610 = vld [vmem:[%s3583 + $0xd0] sm:$0xff]
      %v3611 = vld [vmem:[%s3583 + $0xd8] sm:$0xff]
      %v3612 = vld [vmem:[%s3583 + $0xe0] sm:$0xff]
      %v3613 = vld [vmem:[%s3583 + $0xe8] sm:$0xff]
      %v3614 = vld [vmem:[%s3583 + $0xf0] sm:$0xff]
      %v3615 = vld [vmem:[%s3583 + $0xf8] sm:$0xff]
      %v3616 = vld [vmem:[%s3583 + $0x100] sm:$0xff]
      %v3617 = vld [vmem:[%s3583 + $0x108] sm:$0xff]
      %v3618 = vld [vmem:[%s3583 + $0x110] sm:$0xff]
      %v3619 = vld [vmem:[%s3583 + $0x118] sm:$0xff]
      %v3620 = vld [vmem:[%s3583 + $0x120] sm:$0xff]
      %v3621 = vld [vmem:[%s3583 + $0x128] sm:$0xff]
      %v3622 = vld [vmem:[%s3583 + $0x130] sm:$0xff]
      %v3623 = vld [vmem:[%s3583 + $0x138] sm:$0xff]
      %v3624 = vld [vmem:[%s3583 + $0x140] sm:$0xff]
      %v3625 = vld [vmem:[%s3583 + $0x148] sm:$0xff]
      %v3626 = vld [vmem:[%s3583 + $0x150] sm:$0xff]
      %v3627 = vld [vmem:[%s3583 + $0x158] sm:$0xff]
      %v3628 = vld [vmem:[%s3583 + $0x160] sm:$0xff]
      %v3629 = vld [vmem:[%s3583 + $0x168] sm:$0xff]
      %v3630 = vld [vmem:[%s3583 + $0x170] sm:$0xff]
      %v3631 = vld [vmem:[%s3583 + $0x178] sm:$0xff]
      %v3632 = vpack.c.bf16 %v3587, %v3584
      %v3633 = vpack.c.bf16 %v3588, %v3585
      %v3634 = vpack.c.bf16 %v3589, %v3586
      %v3635 = vpack.c.bf16 %v3593, %v3590
      %v3636 = vpack.c.bf16 %v3594, %v3591
      %v3637 = vpack.c.bf16 %v3595, %v3592
      %v3638 = vpack.c.bf16 %v3599, %v3596
      %v3639 = vpack.c.bf16 %v3600, %v3597
      %v3640 = vpack.c.bf16 %v3601, %v3598
      %v3641 = vpack.c.bf16 %v3605, %v3602
      %v3642 = vpack.c.bf16 %v3606, %v3603
      %v3643 = vpack.c.bf16 %v3607, %v3604
      %v3644 = vpack.c.bf16 %v3611, %v3608
      %v3645 = vpack.c.bf16 %v3612, %v3609
      %v3646 = vpack.c.bf16 %v3613, %v3610
      %v3647 = vpack.c.bf16 %v3617, %v3614
      %v3648 = vpack.c.bf16 %v3618, %v3615
      %v3649 = vpack.c.bf16 %v3619, %v3616
      %v3650 = vpack.c.bf16 %v3623, %v3620
      %v3651 = vpack.c.bf16 %v3624, %v3621
      %v3652 = vpack.c.bf16 %v3625, %v3622
      %v3653 = vpack.c.bf16 %v3629, %v3626
      %v3654 = vpack.c.bf16 %v3630, %v3627
      %v3655 = vpack.c.bf16 %v3631, %v3628
      %v3656 = vld [vmem:[%s2565] sm:$0xff]
      %v3657 = vld [vmem:[%s2565 + $0x8] sm:$0xff]
      %v3658 = vld [vmem:[%s2565 + $0x10] sm:$0xff]
      %v3659 = vld [vmem:[%s2565 + $0x18] sm:$0xff]
      %v3660 = vld [vmem:[%s2565 + $0x20] sm:$0xff]
      %v3661 = vld [vmem:[%s2565 + $0x28] sm:$0xff]
      %v3662 = vld [vmem:[%s2565 + $0x30] sm:$0xff]
      %v3663 = vld [vmem:[%s2565 + $0x38] sm:$0xff]
      %v3664 = vld [vmem:[%s2565 + $0x40] sm:$0xff]
      %v3665 = vld [vmem:[%s2565 + $0x48] sm:$0xff]
      %v3666 = vld [vmem:[%s2565 + $0x50] sm:$0xff]
      %v3667 = vld [vmem:[%s2565 + $0x58] sm:$0xff]
      %v3668 = vld [vmem:[%s2565 + $0x60] sm:$0xff]
      %v3669 = vld [vmem:[%s2565 + $0x68] sm:$0xff]
      %v3670 = vld [vmem:[%s2565 + $0x70] sm:$0xff]
      %v3671 = vld [vmem:[%s2565 + $0x78] sm:$0xff]
      %v3672 = vld [vmem:[%s2565 + $0x80] sm:$0xff]
      %v3673 = vld [vmem:[%s2565 + $0x88] sm:$0xff]
      %v3674 = vld [vmem:[%s2565 + $0x90] sm:$0xff]
      %v3675 = vld [vmem:[%s2565 + $0x98] sm:$0xff]
      %v3676 = vld [vmem:[%s2565 + $0xa0] sm:$0xff]
      %v3677 = vld [vmem:[%s2565 + $0xa8] sm:$0xff]
      %v3678 = vld [vmem:[%s2565 + $0xb0] sm:$0xff]
      %v3679 = vld [vmem:[%s2565 + $0xb8] sm:$0xff]
      %v3680 = vld [vmem:[%s2565 + $0xc0] sm:$0xff]
      %v3681 = vld [vmem:[%s2565 + $0xc8] sm:$0xff]
      %v3682 = vld [vmem:[%s2565 + $0xd0] sm:$0xff]
      %v3683 = vld [vmem:[%s2565 + $0xd8] sm:$0xff]
      %v3684 = vld [vmem:[%s2565 + $0xe0] sm:$0xff]
      %v3685 = vld [vmem:[%s2565 + $0xe8] sm:$0xff]
      %v3686 = vld [vmem:[%s2565 + $0xf0] sm:$0xff]
      %v3687 = vld [vmem:[%s2565 + $0xf8] sm:$0xff]
      %v3688 = vld [vmem:[%s2565 + $0x100] sm:$0xff]
      %v3689 = vld [vmem:[%s2565 + $0x108] sm:$0xff]
      %v3690 = vld [vmem:[%s2565 + $0x110] sm:$0xff]
      %v3691 = vld [vmem:[%s2565 + $0x118] sm:$0xff]
      %v3692 = vld [vmem:[%s2565 + $0x120] sm:$0xff]
      %v3693 = vld [vmem:[%s2565 + $0x128] sm:$0xff]
      %v3694 = vld [vmem:[%s2565 + $0x130] sm:$0xff]
      %v3695 = vld [vmem:[%s2565 + $0x138] sm:$0xff]
      %v3696 = vld [vmem:[%s2565 + $0x140] sm:$0xff]
      %v3697 = vld [vmem:[%s2565 + $0x148] sm:$0xff]
      %v3698 = vld [vmem:[%s2565 + $0x150] sm:$0xff]
      %v3699 = vld [vmem:[%s2565 + $0x158] sm:$0xff]
      %v3700 = vld [vmem:[%s2565 + $0x160] sm:$0xff]
      %v3701 = vld [vmem:[%s2565 + $0x168] sm:$0xff]
      %v3702 = vld [vmem:[%s2565 + $0x170] sm:$0xff]
      %v3703 = vld [vmem:[%s2565 + $0x178] sm:$0xff]
      %v3704 = vpack.c.bf16 %v3657, %v3656
      %v3705 = vpack.c.bf16 %v3659, %v3658
      %v3706 = vpack.c.bf16 %v3661, %v3660
      %v3707 = vpack.c.bf16 %v3663, %v3662
      %v3708 = vpack.c.bf16 %v3665, %v3664
      %v3709 = vpack.c.bf16 %v3667, %v3666
      %v3710 = vpack.c.bf16 %v3669, %v3668
      %v3711 = vpack.c.bf16 %v3671, %v3670
      %v3712 = vpack.c.bf16 %v3673, %v3672
      %v3713 = vpack.c.bf16 %v3675, %v3674
      %v3714 = vpack.c.bf16 %v3677, %v3676
      %v3715 = vpack.c.bf16 %v3679, %v3678
      %v3716 = vpack.c.bf16 %v3681, %v3680
      %v3717 = vpack.c.bf16 %v3683, %v3682
      %v3718 = vpack.c.bf16 %v3685, %v3684
      %v3719 = vpack.c.bf16 %v3687, %v3686
      %v3720 = vpack.c.bf16 %v3689, %v3688
      %v3721 = vpack.c.bf16 %v3691, %v3690
      %v3722 = vpack.c.bf16 %v3693, %v3692
      %v3723 = vpack.c.bf16 %v3695, %v3694
      %v3724 = vpack.c.bf16 %v3697, %v3696
      %v3725 = vpack.c.bf16 %v3699, %v3698
      %v3726 = vpack.c.bf16 %v3701, %v3700
      %v3727 = vpack.c.bf16 %v3703, %v3702
      %3728 = vmatprep.subr.bf16.mxu0 0
      %3729 = vmatpush1.bf16.msra.mxu0 %v3704
      %3730 = vmatprep.subr.bf16.mxu0 0
      %3731 = vmatpush1.bf16.msra.mxu0 %v3705
      %3732 = vmatprep.subr.bf16.mxu0 0
      %3733 = vmatpush1.bf16.msra.mxu0 %v3706
      %3734 = vmatprep.subr.bf16.mxu0 0
      %3735 = vmatpush1.bf16.msra.mxu0 %v3707
      %3736 = vmatprep.subr.bf16.mxu0 0
      %3737 = vmatpush1.bf16.msra.mxu0 %v3708
      %3738 = vmatprep.subr.bf16.mxu0 0
      %3739 = vmatpush1.bf16.msra.mxu0 %v3709
      %3740 = vmatprep.subr.bf16.mxu0 0
      %3741 = vmatpush1.bf16.msra.mxu0 %v3710
      %3742 = vmatprep.subr.bf16.mxu0 0
      %3743 = vmatpush1.bf16.msra.mxu0 %v3711
      %3744 = vmatprep.subr.bf16.mxu0 0
      %3745 = vmatpush1.bf16.msra.mxu0 %v3712
      %3746 = vmatprep.subr.bf16.mxu0 0
      %3747 = vmatpush1.bf16.msra.mxu0 %v3713
      %3748 = vmatprep.subr.bf16.mxu0 0
      %3749 = vmatpush1.bf16.msra.mxu0 %v3714
      %3750 = vmatprep.subr.bf16.mxu0 0
      %3751 = vmatpush1.bf16.msra.mxu0 %v3715
      %3752 = vmatprep.subr.bf16.mxu0 0
      %3753 = vmatpush1.bf16.msra.mxu0 %v3716
      %3754 = vmatprep.subr.bf16.mxu0 0
      %3755 = vmatpush1.bf16.msra.mxu0 %v3717
      %3756 = vmatprep.subr.bf16.mxu0 0
      %3757 = vmatpush1.bf16.msra.mxu0 %v3718
      %3758 = vmatprep.subr.bf16.mxu0 0
      %3759 = vmatpush1.bf16.msra.mxu0 %v3719
      %3760 = vmatprep.mubr.bf16.mxu0 %v3633
      %3761 = vmatmul.mubr.bf16.gmra.mrb[0].mxu0 %v3632
      %v3762 = vpop.f32.mrb[0].mxu0
      %v3763 = vadd.f32 0.0, %v3762
      %v3764 = vpop.f32.mrb[0].mxu0
      %v3765 = vpop.f32.mrb[0].mxu0
      %v3766 = vadd.f32 0.0, %v3765
      %v3767 = vpop.f32.mrb[0].mxu0
      %3768 = vmatprep.mubr.bf16.mxu0 %v3636
      %3769 = vmatmul.mubr.bf16.gmra.mrb[0].mxu0 %v3635
      %v3770 = vpop.f32.mrb[0].mxu0
      %v3771 = vadd.f32 0.0, %v3770
      %v3772 = vpop.f32.mrb[0].mxu0
      %v3773 = vpop.f32.mrb[0].mxu0
      %v3774 = vadd.f32 0.0, %v3773
      %v3775 = vpop.f32.mrb[0].mxu0
      %3776 = vmatprep.mubr.bf16.mxu0 %v3639
      %3777 = vmatmul.mubr.bf16.gmra.mrb[0].mxu0 %v3638
      %v3778 = vpop.f32.mrb[0].mxu0
      %v3779 = vadd.f32 0.0, %v3778
      %v3780 = vpop.f32.mrb[0].mxu0
      %v3781 = vpop.f32.mrb[0].mxu0
      %v3782 = vadd.f32 0.0, %v3781
      %v3783 = vpop.f32.mrb[0].mxu0
      %3784 = vmatprep.mubr.bf16.mxu0 %v3642
      %3785 = vmatmul.mubr.bf16.gmra.mrb[0].mxu0 %v3641
      %v3786 = vpop.f32.mrb[0].mxu0
      %v3787 = vadd.f32 0.0, %v3786
      %v3788 = vpop.f32.mrb[0].mxu0
      %v3789 = vpop.f32.mrb[0].mxu0
      %v3790 = vadd.f32 0.0, %v3789
      %v3791 = vpop.f32.mrb[0].mxu0
      %3792 = vmatprep.mubr.bf16.mxu0 %v3645
      %3793 = vmatmul.mubr.bf16.gmra.mrb[0].mxu0 %v3644
      %v3794 = vpop.f32.mrb[0].mxu0
      %v3795 = vadd.f32 0.0, %v3794
      %v3796 = vpop.f32.mrb[0].mxu0
      %v3797 = vpop.f32.mrb[0].mxu0
      %v3798 = vadd.f32 0.0, %v3797
      %v3799 = vpop.f32.mrb[0].mxu0
      %3800 = vmatprep.mubr.bf16.mxu0 %v3648
      %3801 = vmatmul.mubr.bf16.gmra.mrb[0].mxu0 %v3647
      %v3802 = vpop.f32.mrb[0].mxu0
      %v3803 = vadd.f32 0.0, %v3802
      %v3804 = vpop.f32.mrb[0].mxu0
      %v3805 = vpop.f32.mrb[0].mxu0
      %v3806 = vadd.f32 0.0, %v3805
      %v3807 = vpop.f32.mrb[0].mxu0
      %3808 = vmatprep.mubr.bf16.mxu0 %v3651
      %3809 = vmatmul.mubr.bf16.gmra.mrb[0].mxu0 %v3650
      %v3810 = vpop.f32.mrb[0].mxu0
      %v3811 = vadd.f32 0.0, %v3810
      %v3812 = vpop.f32.mrb[0].mxu0
      %v3813 = vpop.f32.mrb[0].mxu0
      %v3814 = vadd.f32 0.0, %v3813
      %v3815 = vpop.f32.mrb[0].mxu0
      %3816 = vmatprep.mubr.bf16.mxu0 %v3654
      %3817 = vmatmul.mubr.bf16.gmra.mrb[0].mxu0 %v3653
      %v3818 = vpop.f32.mrb[0].mxu0
      %v3819 = vadd.f32 0.0, %v3818
      %v3820 = vpop.f32.mrb[0].mxu0
      %v3821 = vpop.f32.mrb[0].mxu0
      %v3822 = vadd.f32 0.0, %v3821
      %v3823 = vpop.f32.mrb[0].mxu0
      %3824 = vdwg.mxu0
      %3825 = vmatprep.subr.bf16.mxu0 0
      %3826 = vmatpush1.bf16.msra.mxu0 %v3720
      %3827 = vmatprep.subr.bf16.mxu0 0
      %3828 = vmatpush1.bf16.msra.mxu0 %v3721
      %3829 = vmatprep.subr.bf16.mxu0 0
      %3830 = vmatpush1.bf16.msra.mxu0 %v3722
      %3831 = vmatprep.subr.bf16.mxu0 0
      %3832 = vmatpush1.bf16.msra.mxu0 %v3723
      %3833 = vmatprep.subr.bf16.mxu0 0
      %3834 = vmatpush1.bf16.msra.mxu0 %v3724
      %3835 = vmatprep.subr.bf16.mxu0 0
      %3836 = vmatpush1.bf16.msra.mxu0 %v3725
      %3837 = vmatprep.subr.bf16.mxu0 0
      %3838 = vmatpush1.bf16.msra.mxu0 %v3726
      %3839 = vmatprep.subr.bf16.mxu0 0
      %3840 = vmatpush1.bf16.msra.mxu0 %v3727
      %3841 = vmatprep.subr.bf16.mxu0 0
      %3842 = vmatpush1.bf16.msra.mxu0 0
      %3843 = vmatprep.subr.bf16.mxu0 0
      %3844 = vmatpush1.bf16.msra.mxu0 0
      %3845 = vmatprep.subr.bf16.mxu0 0
      %3846 = vmatpush1.bf16.msra.mxu0 0
      %3847 = vmatprep.subr.bf16.mxu0 0
      %3848 = vmatpush1.bf16.msra.mxu0 0
      %3849 = vmatprep.subr.bf16.mxu0 0
      %3850 = vmatpush1.bf16.msra.mxu0 0
      %3851 = vmatprep.subr.bf16.mxu0 0
      %3852 = vmatpush1.bf16.msra.mxu0 0
      %3853 = vmatprep.subr.bf16.mxu0 0
      %3854 = vmatpush1.bf16.msra.mxu0 0
      %3855 = vmatprep.subr.bf16.mxu0 0
      %3856 = vmatpush1.bf16.msra.mxu0 0
      %3857 = vmatprep.mubr.bf16.mxu0 0
      %3858 = vmatmul.mubr.bf16.gmra.mrb[0].mxu0 %v3634
      %v3859 = vpop.f32.mrb[0].mxu0
      %v3860 = vadd.f32 %v3763, %v3859
      %v3861 = vpop.f32.mrb[0].mxu0
      %v3862 = vpop.f32.mrb[0].mxu0
      %v3863 = vadd.f32 %v3766, %v3862
      %v3864 = vpop.f32.mrb[0].mxu0
      %3865 = vmatprep.mubr.bf16.mxu0 0
      %3866 = vmatmul.mubr.bf16.gmra.mrb[0].mxu0 %v3637
      %v3867 = vpop.f32.mrb[0].mxu0
      %v3868 = vadd.f32 %v3771, %v3867
      %v3869 = vpop.f32.mrb[0].mxu0
      %v3870 = vpop.f32.mrb[0].mxu0
      %v3871 = vadd.f32 %v3774, %v3870
      %v3872 = vpop.f32.mrb[0].mxu0
      %3873 = vmatprep.mubr.bf16.mxu0 0
      %3874 = vmatmul.mubr.bf16.gmra.mrb[0].mxu0 %v3640
      %v3875 = vpop.f32.mrb[0].mxu0
      %v3876 = vadd.f32 %v3779, %v3875
      %v3877 = vpop.f32.mrb[0].mxu0
      %v3878 = vpop.f32.mrb[0].mxu0
      %v3879 = vadd.f32 %v3782, %v3878
      %v3880 = vpop.f32.mrb[0].mxu0
      %3881 = vmatprep.mubr.bf16.mxu0 0
      %3882 = vmatmul.mubr.bf16.gmra.mrb[0].mxu0 %v3643
      %v3883 = vpop.f32.mrb[0].mxu0
      %v3884 = vadd.f32 %v3787, %v3883
      %v3885 = vpop.f32.mrb[0].mxu0
      %v3886 = vpop.f32.mrb[0].mxu0
      %v3887 = vadd.f32 %v3790, %v3886
      %v3888 = vpop.f32.mrb[0].mxu0
      %3889 = vmatprep.mubr.bf16.mxu0 0
      %3890 = vmatmul.mubr.bf16.gmra.mrb[0].mxu0 %v3646
      %v3891 = vpop.f32.mrb[0].mxu0
      %v3892 = vadd.f32 %v3795, %v3891
      %v3893 = vpop.f32.mrb[0].mxu0
      %v3894 = vpop.f32.mrb[0].mxu0
      %v3895 = vadd.f32 %v3798, %v3894
      %v3896 = vpop.f32.mrb[0].mxu0
      %3897 = vmatprep.mubr.bf16.mxu0 0
      %3898 = vmatmul.mubr.bf16.gmra.mrb[0].mxu0 %v3649
      %v3899 = vpop.f32.mrb[0].mxu0
      %v3900 = vadd.f32 %v3803, %v3899
      %v3901 = vpop.f32.mrb[0].mxu0
      %v3902 = vpop.f32.mrb[0].mxu0
      %v3903 = vadd.f32 %v3806, %v3902
      %v3904 = vpop.f32.mrb[0].mxu0
      %3905 = vmatprep.mubr.bf16.mxu0 0
      %3906 = vmatmul.mubr.bf16.gmra.mrb[0].mxu0 %v3652
      %v3907 = vpop.f32.mrb[0].mxu0
      %v3908 = vadd.f32 %v3811, %v3907
      %v3909 = vpop.f32.mrb[0].mxu0
      %v3910 = vpop.f32.mrb[0].mxu0
      %v3911 = vadd.f32 %v3814, %v3910
      %v3912 = vpop.f32.mrb[0].mxu0
      %3913 = vmatprep.mubr.bf16.mxu0 0
      %3914 = vmatmul.mubr.bf16.gmra.mrb[0].mxu0 %v3655
      %v3915 = vpop.f32.mrb[0].mxu0
      %v3916 = vadd.f32 %v3819, %v3915
      %v3917 = vpop.f32.mrb[0].mxu0
      %v3918 = vpop.f32.mrb[0].mxu0
      %v3919 = vadd.f32 %v3822, %v3918
      %v3920 = vpop.f32.mrb[0].mxu0
      %3921 = vdwg.mxu0
      %3922 = vmatprep.subr.bf16.mxu0 0
      %3923 = vmatpush1.bf16.msra.mxu0 %v3559
      %3924 = vmatprep.subr.bf16.mxu0 0
      %3925 = vmatpush1.bf16.msra.mxu0 %v3560
      %3926 = vmatprep.subr.bf16.mxu0 0
      %3927 = vmatpush1.bf16.msra.mxu0 %v3561
      %3928 = vmatprep.subr.bf16.mxu0 0
      %3929 = vmatpush1.bf16.msra.mxu0 %v3562
      %3930 = vmatprep.subr.bf16.mxu0 0
      %3931 = vmatpush1.bf16.msra.mxu0 %v3563
      %3932 = vmatprep.subr.bf16.mxu0 0
      %3933 = vmatpush1.bf16.msra.mxu0 %v3564
      %3934 = vmatprep.subr.bf16.mxu0 0
      %3935 = vmatpush1.bf16.msra.mxu0 %v3565
      %3936 = vmatprep.subr.bf16.mxu0 0
      %3937 = vmatpush1.bf16.msra.mxu0 %v3566
      %3938 = vmatprep.subr.bf16.mxu0 0
      %3939 = vmatpush1.bf16.msra.mxu0 %v3567
      %3940 = vmatprep.subr.bf16.mxu0 0
      %3941 = vmatpush1.bf16.msra.mxu0 %v3568
      %3942 = vmatprep.subr.bf16.mxu0 0
      %3943 = vmatpush1.bf16.msra.mxu0 %v3569
      %3944 = vmatprep.subr.bf16.mxu0 0
      %3945 = vmatpush1.bf16.msra.mxu0 %v3570
      %3946 = vmatprep.subr.bf16.mxu0 0
      %3947 = vmatpush1.bf16.msra.mxu0 %v3571
      %3948 = vmatprep.subr.bf16.mxu0 0
      %3949 = vmatpush1.bf16.msra.mxu0 %v3572
      %3950 = vmatprep.subr.bf16.mxu0 0
      %3951 = vmatpush1.bf16.msra.mxu0 %v3573
      %3952 = vmatprep.subr.bf16.mxu0 0
      %3953 = vmatpush1.bf16.msra.mxu0 %v3574
      %3954 = vmatprep.mubr.bf16.mxu0 %v3488
      %3955 = vmatmul.mubr.bf16.gmra.mrb[0].mxu0 %v3487
      %v3956 = vpop.f32.mrb[0].mxu0
      %v3957 = vadd.f32 %v3860, %v3956
      %v3958 = vpop.f32.mrb[0].mxu0
      %v3959 = vpop.f32.mrb[0].mxu0
      %v3960 = vadd.f32 %v3863, %v3959
      %v3961 = vpop.f32.mrb[0].mxu0
      %3962 = vmatprep.mubr.bf16.mxu0 %v3491
      %3963 = vmatmul.mubr.bf16.gmra.mrb[0].mxu0 %v3490
      %v3964 = vpop.f32.mrb[0].mxu0
      %v3965 = vadd.f32 %v3868, %v3964
      %v3966 = vpop.f32.mrb[0].mxu0
      %v3967 = vpop.f32.mrb[0].mxu0
      %v3968 = vadd.f32 %v3871, %v3967
      %v3969 = vpop.f32.mrb[0].mxu0
      %3970 = vmatprep.mubr.bf16.mxu0 %v3494
      %3971 = vmatmul.mubr.bf16.gmra.mrb[0].mxu0 %v3493
      %v3972 = vpop.f32.mrb[0].mxu0
      %v3973 = vadd.f32 %v3876, %v3972
      %v3974 = vpop.f32.mrb[0].mxu0
      %v3975 = vpop.f32.mrb[0].mxu0
      %v3976 = vadd.f32 %v3879, %v3975
      %v3977 = vpop.f32.mrb[0].mxu0
      %3978 = vmatprep.mubr.bf16.mxu0 %v3497
      %3979 = vmatmul.mubr.bf16.gmra.mrb[0].mxu0 %v3496
      %v3980 = vpop.f32.mrb[0].mxu0
      %v3981 = vadd.f32 %v3884, %v3980
      %v3982 = vpop.f32.mrb[0].mxu0
      %v3983 = vpop.f32.mrb[0].mxu0
      %v3984 = vadd.f32 %v3887, %v3983
      %v3985 = vpop.f32.mrb[0].mxu0
      %3986 = vmatprep.mubr.bf16.mxu0 %v3500
      %3987 = vmatmul.mubr.bf16.gmra.mrb[0].mxu0 %v3499
      %v3988 = vpop.f32.mrb[0].mxu0
      %v3989 = vadd.f32 %v3892, %v3988
      %v3990 = vpop.f32.mrb[0].mxu0
      %v3991 = vpop.f32.mrb[0].mxu0
      %v3992 = vadd.f32 %v3895, %v3991
      %v3993 = vpop.f32.mrb[0].mxu0
      %3994 = vmatprep.mubr.bf16.mxu0 %v3503
      %3995 = vmatmul.mubr.bf16.gmra.mrb[0].mxu0 %v3502
      %v3996 = vpop.f32.mrb[0].mxu0
      %v3997 = vadd.f32 %v3900, %v3996
      %v3998 = vpop.f32.mrb[0].mxu0
      %v3999 = vpop.f32.mrb[0].mxu0
      %v4000 = vadd.f32 %v3903, %v3999
      %v4001 = vpop.f32.mrb[0].mxu0
      %4002 = vmatprep.mubr.bf16.mxu0 %v3506
      %4003 = vmatmul.mubr.bf16.gmra.mrb[0].mxu0 %v3505
      %v4004 = vpop.f32.mrb[0].mxu0
      %v4005 = vadd.f32 %v3908, %v4004
      %v4006 = vpop.f32.mrb[0].mxu0
      %v4007 = vpop.f32.mrb[0].mxu0
      %v4008 = vadd.f32 %v3911, %v4007
      %v4009 = vpop.f32.mrb[0].mxu0
      %4010 = vmatprep.mubr.bf16.mxu0 %v3509
      %4011 = vmatmul.mubr.bf16.gmra.mrb[0].mxu0 %v3508
      %v4012 = vpop.f32.mrb[0].mxu0
      %v4013 = vadd.f32 %v3916, %v4012
      %v4014 = vpop.f32.mrb[0].mxu0
      %v4015 = vpop.f32.mrb[0].mxu0
      %v4016 = vadd.f32 %v3919, %v4015
      %v4017 = vpop.f32.mrb[0].mxu0
      %4018 = vdwg.mxu0
      %4019 = vmatprep.subr.bf16.mxu0 0
      %4020 = vmatpush1.bf16.msra.mxu0 %v3575
      %4021 = vmatprep.subr.bf16.mxu0 0
      %4022 = vmatpush1.bf16.msra.mxu0 %v3576
      %4023 = vmatprep.subr.bf16.mxu0 0
      %4024 = vmatpush1.bf16.msra.mxu0 %v3577
      %4025 = vmatprep.subr.bf16.mxu0 0
      %4026 = vmatpush1.bf16.msra.mxu0 %v3578
      %4027 = vmatprep.subr.bf16.mxu0 0
      %4028 = vmatpush1.bf16.msra.mxu0 %v3579
      %4029 = vmatprep.subr.bf16.mxu0 0
      %4030 = vmatpush1.bf16.msra.mxu0 %v3580
      %4031 = vmatprep.subr.bf16.mxu0 0
      %4032 = vmatpush1.bf16.msra.mxu0 %v3581
      %4033 = vmatprep.subr.bf16.mxu0 0
      %4034 = vmatpush1.bf16.msra.mxu0 %v3582
      %4035 = vmatprep.subr.bf16.mxu0 0
      %4036 = vmatpush1.bf16.msra.mxu0 0
      %4037 = vmatprep.subr.bf16.mxu0 0
      %4038 = vmatpush1.bf16.msra.mxu0 0
      %4039 = vmatprep.subr.bf16.mxu0 0
      %4040 = vmatpush1.bf16.msra.mxu0 0
      %4041 = vmatprep.subr.bf16.mxu0 0
      %4042 = vmatpush1.bf16.msra.mxu0 0
      %4043 = vmatprep.subr.bf16.mxu0 0
      %4044 = vmatpush1.bf16.msra.mxu0 0
      %4045 = vmatprep.subr.bf16.mxu0 0
      %4046 = vmatpush1.bf16.msra.mxu0 0
      %4047 = vmatprep.subr.bf16.mxu0 0
      %4048 = vmatpush1.bf16.msra.mxu0 0
      %4049 = vmatprep.subr.bf16.mxu0 0
      %4050 = vmatpush1.bf16.msra.mxu0 0
      %4051 = vmatprep.mubr.bf16.mxu0 0
      %4052 = vmatmul.mubr.bf16.gmra.mrb[0].mxu0 %v3489
      %v4053 = vpop.f32.mrb[0].mxu0
      %v4054 = vadd.f32 %v3957, %v4053
      %v4055 = vpop.f32.mrb[0].mxu0
      %v4056 = vpop.f32.mrb[0].mxu0
      %v4057 = vadd.f32 %v3960, %v4056
      %v4058 = vpop.f32.mrb[0].mxu0
      %4059 = vmatprep.mubr.bf16.mxu0 0
      %4060 = vmatmul.mubr.bf16.gmra.mrb[0].mxu0 %v3492
      %v4061 = vpop.f32.mrb[0].mxu0
      %v4062 = vadd.f32 %v3965, %v4061
      %v4063 = vpop.f32.mrb[0].mxu0
      %v4064 = vpop.f32.mrb[0].mxu0
      %v4065 = vadd.f32 %v3968, %v4064
      %v4066 = vpop.f32.mrb[0].mxu0
      %4067 = vmatprep.mubr.bf16.mxu0 0
      %4068 = vmatmul.mubr.bf16.gmra.mrb[0].mxu0 %v3495
      %v4069 = vpop.f32.mrb[0].mxu0
      %v4070 = vadd.f32 %v3973, %v4069
      %v4071 = vpop.f32.mrb[0].mxu0
      %v4072 = vpop.f32.mrb[0].mxu0
      %v4073 = vadd.f32 %v3976, %v4072
      %v4074 = vpop.f32.mrb[0].mxu0
      %4075 = vmatprep.mubr.bf16.mxu0 0
      %4076 = vmatmul.mubr.bf16.gmra.mrb[0].mxu0 %v3498
      %v4077 = vpop.f32.mrb[0].mxu0
      %v4078 = vadd.f32 %v3981, %v4077
      %v4079 = vpop.f32.mrb[0].mxu0
      %v4080 = vpop.f32.mrb[0].mxu0
      %v4081 = vadd.f32 %v3984, %v4080
      %v4082 = vpop.f32.mrb[0].mxu0
      %4083 = vmatprep.mubr.bf16.mxu0 0
      %4084 = vmatmul.mubr.bf16.gmra.mrb[0].mxu0 %v3501
      %v4085 = vpop.f32.mrb[0].mxu0
      %v4086 = vadd.f32 %v3989, %v4085
      %v4087 = vpop.f32.mrb[0].mxu0
      %v4088 = vpop.f32.mrb[0].mxu0
      %v4089 = vadd.f32 %v3992, %v4088
      %v4090 = vpop.f32.mrb[0].mxu0
      %4091 = vmatprep.mubr.bf16.mxu0 0
      %4092 = vmatmul.mubr.bf16.gmra.mrb[0].mxu0 %v3504
      %v4093 = vpop.f32.mrb[0].mxu0
      %v4094 = vadd.f32 %v3997, %v4093
      %v4095 = vpop.f32.mrb[0].mxu0
      %v4096 = vpop.f32.mrb[0].mxu0
      %v4097 = vadd.f32 %v4000, %v4096
      %v4098 = vpop.f32.mrb[0].mxu0
      %4099 = vmatprep.mubr.bf16.mxu0 0
      %4100 = vmatmul.mubr.bf16.gmra.mrb[0].mxu0 %v3507
      %v4101 = vpop.f32.mrb[0].mxu0
      %v4102 = vadd.f32 %v4005, %v4101
      %v4103 = vpop.f32.mrb[0].mxu0
      %v4104 = vpop.f32.mrb[0].mxu0
      %v4105 = vadd.f32 %v4008, %v4104
      %v4106 = vpop.f32.mrb[0].mxu0
      %4107 = vmatprep.mubr.bf16.mxu0 0
      %4108 = vmatmul.mubr.bf16.gmra.mrb[0].mxu0 %v3510
      %v4109 = vpop.f32.mrb[0].mxu0
      %v4110 = vadd.f32 %v4013, %v4109
      %v4111 = vpop.f32.mrb[0].mxu0
      %v4112 = vpop.f32.mrb[0].mxu0
      %v4113 = vadd.f32 %v4016, %v4112
      %v4114 = vpop.f32.mrb[0].mxu0
      %4115 = vdwg.mxu0
      %s4116 = scalar_lea.vmem [#allocation5], 480
      %v4117 = vld [vmem:[%s4116] sm:$0xff]
      %v4118 = vld [vmem:[%s4116 + $0x8] sm:$0xff]
      %v4119 = vld [vmem:[%s4116 + $0x10] sm:$0xff]
      %v4120 = vld [vmem:[%s4116 + $0x18] sm:$0xff]
      %v4121 = vld [vmem:[%s4116 + $0x20] sm:$0xff]
      %v4122 = vld [vmem:[%s4116 + $0x28] sm:$0xff]
      %v4123 = vld [vmem:[%s4116 + $0x30] sm:$0xff]
      %v4124 = vld [vmem:[%s4116 + $0x38] sm:$0xff]
      %v4125 = vld [vmem:[%s4116 + $0x40] sm:$0xff]
      %v4126 = vld [vmem:[%s4116 + $0x48] sm:$0xff]
      %v4127 = vld [vmem:[%s4116 + $0x50] sm:$0xff]
      %v4128 = vld [vmem:[%s4116 + $0x58] sm:$0xff]
      %v4129 = vld [vmem:[%s4116 + $0x60] sm:$0xff]
      %v4130 = vld [vmem:[%s4116 + $0x68] sm:$0xff]
      %v4131 = vld [vmem:[%s4116 + $0x70] sm:$0xff]
      %v4132 = vld [vmem:[%s4116 + $0x78] sm:$0xff]
      %v4133 = vld [vmem:[%s4116 + $0x80] sm:$0xff]
      %v4134 = vld [vmem:[%s4116 + $0x88] sm:$0xff]
      %v4135 = vld [vmem:[%s4116 + $0x90] sm:$0xff]
      %v4136 = vld [vmem:[%s4116 + $0x98] sm:$0xff]
      %v4137 = vld [vmem:[%s4116 + $0xa0] sm:$0xff]
      %v4138 = vld [vmem:[%s4116 + $0xa8] sm:$0xff]
      %v4139 = vld [vmem:[%s4116 + $0xb0] sm:$0xff]
      %v4140 = vld [vmem:[%s4116 + $0xb8] sm:$0xff]
      %v4141 = vld [vmem:[%s4116 + $0xc0] sm:$0xff]
      %v4142 = vld [vmem:[%s4116 + $0xc8] sm:$0xff]
      %v4143 = vld [vmem:[%s4116 + $0xd0] sm:$0xff]
      %v4144 = vld [vmem:[%s4116 + $0xd8] sm:$0xff]
      %v4145 = vld [vmem:[%s4116 + $0xe0] sm:$0xff]
      %v4146 = vld [vmem:[%s4116 + $0xe8] sm:$0xff]
      %v4147 = vld [vmem:[%s4116 + $0xf0] sm:$0xff]
      %v4148 = vld [vmem:[%s4116 + $0xf8] sm:$0xff]
      %v4149 = vld [vmem:[%s4116 + $0x100] sm:$0xff]
      %v4150 = vld [vmem:[%s4116 + $0x108] sm:$0xff]
      %v4151 = vld [vmem:[%s4116 + $0x110] sm:$0xff]
      %v4152 = vld [vmem:[%s4116 + $0x118] sm:$0xff]
      %v4153 = vld [vmem:[%s4116 + $0x120] sm:$0xff]
      %v4154 = vld [vmem:[%s4116 + $0x128] sm:$0xff]
      %v4155 = vld [vmem:[%s4116 + $0x130] sm:$0xff]
      %v4156 = vld [vmem:[%s4116 + $0x138] sm:$0xff]
      %v4157 = vld [vmem:[%s4116 + $0x140] sm:$0xff]
      %v4158 = vld [vmem:[%s4116 + $0x148] sm:$0xff]
      %v4159 = vld [vmem:[%s4116 + $0x150] sm:$0xff]
      %v4160 = vld [vmem:[%s4116 + $0x158] sm:$0xff]
      %v4161 = vld [vmem:[%s4116 + $0x160] sm:$0xff]
      %v4162 = vld [vmem:[%s4116 + $0x168] sm:$0xff]
      %v4163 = vld [vmem:[%s4116 + $0x170] sm:$0xff]
      %v4164 = vld [vmem:[%s4116 + $0x178] sm:$0xff]
      %v4165 = vpack.c.bf16 %v4120, %v4117
      %v4166 = vpack.c.bf16 %v4121, %v4118
      %v4167 = vpack.c.bf16 %v4122, %v4119
      %v4168 = vpack.c.bf16 %v4126, %v4123
      %v4169 = vpack.c.bf16 %v4127, %v4124
      %v4170 = vpack.c.bf16 %v4128, %v4125
      %v4171 = vpack.c.bf16 %v4132, %v4129
      %v4172 = vpack.c.bf16 %v4133, %v4130
      %v4173 = vpack.c.bf16 %v4134, %v4131
      %v4174 = vpack.c.bf16 %v4138, %v4135
      %v4175 = vpack.c.bf16 %v4139, %v4136
      %v4176 = vpack.c.bf16 %v4140, %v4137
      %v4177 = vpack.c.bf16 %v4144, %v4141
      %v4178 = vpack.c.bf16 %v4145, %v4142
      %v4179 = vpack.c.bf16 %v4146, %v4143
      %v4180 = vpack.c.bf16 %v4150, %v4147
      %v4181 = vpack.c.bf16 %v4151, %v4148
      %v4182 = vpack.c.bf16 %v4152, %v4149
      %v4183 = vpack.c.bf16 %v4156, %v4153
      %v4184 = vpack.c.bf16 %v4157, %v4154
      %v4185 = vpack.c.bf16 %v4158, %v4155
      %v4186 = vpack.c.bf16 %v4162, %v4159
      %v4187 = vpack.c.bf16 %v4163, %v4160
      %v4188 = vpack.c.bf16 %v4164, %v4161
      %v4189 = vld [vmem:[%s3099] sm:$0xff]
      %v4190 = vld [vmem:[%s3099 + $0x8] sm:$0xff]
      %v4191 = vld [vmem:[%s3099 + $0x10] sm:$0xff]
      %v4192 = vld [vmem:[%s3099 + $0x18] sm:$0xff]
      %v4193 = vld [vmem:[%s3099 + $0x20] sm:$0xff]
      %v4194 = vld [vmem:[%s3099 + $0x28] sm:$0xff]
      %v4195 = vld [vmem:[%s3099 + $0x30] sm:$0xff]
      %v4196 = vld [vmem:[%s3099 + $0x38] sm:$0xff]
      %v4197 = vld [vmem:[%s3099 + $0x40] sm:$0xff]
      %v4198 = vld [vmem:[%s3099 + $0x48] sm:$0xff]
      %v4199 = vld [vmem:[%s3099 + $0x50] sm:$0xff]
      %v4200 = vld [vmem:[%s3099 + $0x58] sm:$0xff]
      %v4201 = vld [vmem:[%s3099 + $0x60] sm:$0xff]
      %v4202 = vld [vmem:[%s3099 + $0x68] sm:$0xff]
      %v4203 = vld [vmem:[%s3099 + $0x70] sm:$0xff]
      %v4204 = vld [vmem:[%s3099 + $0x78] sm:$0xff]
      %v4205 = vld [vmem:[%s3099 + $0x80] sm:$0xff]
      %v4206 = vld [vmem:[%s3099 + $0x88] sm:$0xff]
      %v4207 = vld [vmem:[%s3099 + $0x90] sm:$0xff]
      %v4208 = vld [vmem:[%s3099 + $0x98] sm:$0xff]
      %v4209 = vld [vmem:[%s3099 + $0xa0] sm:$0xff]
      %v4210 = vld [vmem:[%s3099 + $0xa8] sm:$0xff]
      %v4211 = vld [vmem:[%s3099 + $0xb0] sm:$0xff]
      %v4212 = vld [vmem:[%s3099 + $0xb8] sm:$0xff]
      %v4213 = vld [vmem:[%s3099 + $0xc0] sm:$0xff]
      %v4214 = vld [vmem:[%s3099 + $0xc8] sm:$0xff]
      %v4215 = vld [vmem:[%s3099 + $0xd0] sm:$0xff]
      %v4216 = vld [vmem:[%s3099 + $0xd8] sm:$0xff]
      %v4217 = vld [vmem:[%s3099 + $0xe0] sm:$0xff]
      %v4218 = vld [vmem:[%s3099 + $0xe8] sm:$0xff]
      %v4219 = vld [vmem:[%s3099 + $0xf0] sm:$0xff]
      %v4220 = vld [vmem:[%s3099 + $0xf8] sm:$0xff]
      %v4221 = vld [vmem:[%s3099 + $0x100] sm:$0xff]
      %v4222 = vld [vmem:[%s3099 + $0x108] sm:$0xff]
      %v4223 = vld [vmem:[%s3099 + $0x110] sm:$0xff]
      %v4224 = vld [vmem:[%s3099 + $0x118] sm:$0xff]
      %v4225 = vld [vmem:[%s3099 + $0x120] sm:$0xff]
      %v4226 = vld [vmem:[%s3099 + $0x128] sm:$0xff]
      %v4227 = vld [vmem:[%s3099 + $0x130] sm:$0xff]
      %v4228 = vld [vmem:[%s3099 + $0x138] sm:$0xff]
      %v4229 = vld [vmem:[%s3099 + $0x140] sm:$0xff]
      %v4230 = vld [vmem:[%s3099 + $0x148] sm:$0xff]
      %v4231 = vld [vmem:[%s3099 + $0x150] sm:$0xff]
      %v4232 = vld [vmem:[%s3099 + $0x158] sm:$0xff]
      %v4233 = vld [vmem:[%s3099 + $0x160] sm:$0xff]
      %v4234 = vld [vmem:[%s3099 + $0x168] sm:$0xff]
      %v4235 = vld [vmem:[%s3099 + $0x170] sm:$0xff]
      %v4236 = vld [vmem:[%s3099 + $0x178] sm:$0xff]
      %v4237 = vpack.c.bf16 %v4190, %v4189
      %v4238 = vpack.c.bf16 %v4192, %v4191
      %v4239 = vpack.c.bf16 %v4194, %v4193
      %v4240 = vpack.c.bf16 %v4196, %v4195
      %v4241 = vpack.c.bf16 %v4198, %v4197
      %v4242 = vpack.c.bf16 %v4200, %v4199
      %v4243 = vpack.c.bf16 %v4202, %v4201
      %v4244 = vpack.c.bf16 %v4204, %v4203
      %v4245 = vpack.c.bf16 %v4206, %v4205
      %v4246 = vpack.c.bf16 %v4208, %v4207
      %v4247 = vpack.c.bf16 %v4210, %v4209
      %v4248 = vpack.c.bf16 %v4212, %v4211
      %v4249 = vpack.c.bf16 %v4214, %v4213
      %v4250 = vpack.c.bf16 %v4216, %v4215
      %v4251 = vpack.c.bf16 %v4218, %v4217
      %v4252 = vpack.c.bf16 %v4220, %v4219
      %v4253 = vpack.c.bf16 %v4222, %v4221
      %v4254 = vpack.c.bf16 %v4224, %v4223
      %v4255 = vpack.c.bf16 %v4226, %v4225
      %v4256 = vpack.c.bf16 %v4228, %v4227
      %v4257 = vpack.c.bf16 %v4230, %v4229
      %v4258 = vpack.c.bf16 %v4232, %v4231
      %v4259 = vpack.c.bf16 %v4234, %v4233
      %v4260 = vpack.c.bf16 %v4236, %v4235
      %4261 = vmatprep.subr.bf16.mxu0 0
      %4262 = vmatpush1.bf16.msra.mxu0 %v4237
      %4263 = vmatprep.subr.bf16.mxu0 0
      %4264 = vmatpush1.bf16.msra.mxu0 %v4238
      %4265 = vmatprep.subr.bf16.mxu0 0
      %4266 = vmatpush1.bf16.msra.mxu0 %v4239
      %4267 = vmatprep.subr.bf16.mxu0 0
      %4268 = vmatpush1.bf16.msra.mxu0 %v4240
      %4269 = vmatprep.subr.bf16.mxu0 0
      %4270 = vmatpush1.bf16.msra.mxu0 %v4241
      %4271 = vmatprep.subr.bf16.mxu0 0
      %4272 = vmatpush1.bf16.msra.mxu0 %v4242
      %4273 = vmatprep.subr.bf16.mxu0 0
      %4274 = vmatpush1.bf16.msra.mxu0 %v4243
      %4275 = vmatprep.subr.bf16.mxu0 0
      %4276 = vmatpush1.bf16.msra.mxu0 %v4244
      %4277 = vmatprep.subr.bf16.mxu0 0
      %4278 = vmatpush1.bf16.msra.mxu0 %v4245
      %4279 = vmatprep.subr.bf16.mxu0 0
      %4280 = vmatpush1.bf16.msra.mxu0 %v4246
      %4281 = vmatprep.subr.bf16.mxu0 0
      %4282 = vmatpush1.bf16.msra.mxu0 %v4247
      %4283 = vmatprep.subr.bf16.mxu0 0
      %4284 = vmatpush1.bf16.msra.mxu0 %v4248
      %4285 = vmatprep.subr.bf16.mxu0 0
      %4286 = vmatpush1.bf16.msra.mxu0 %v4249
      %4287 = vmatprep.subr.bf16.mxu0 0
      %4288 = vmatpush1.bf16.msra.mxu0 %v4250
      %4289 = vmatprep.subr.bf16.mxu0 0
      %4290 = vmatpush1.bf16.msra.mxu0 %v4251
      %4291 = vmatprep.subr.bf16.mxu0 0
      %4292 = vmatpush1.bf16.msra.mxu0 %v4252
      %4293 = vmatprep.mubr.bf16.mxu0 %v4166
      %4294 = vmatmul.mubr.bf16.gmra.mrb[0].mxu0 %v4165
      %v4295 = vpop.f32.mrb[0].mxu0
      %v4296 = vadd.f32 0.0, %v4295
      %v4297 = vpop.f32.mrb[0].mxu0
      %v4298 = vpop.f32.mrb[0].mxu0
      %v4299 = vadd.f32 0.0, %v4298
      %v4300 = vpop.f32.mrb[0].mxu0
      %4301 = vmatprep.mubr.bf16.mxu0 %v4169
      %4302 = vmatmul.mubr.bf16.gmra.mrb[0].mxu0 %v4168
      %v4303 = vpop.f32.mrb[0].mxu0
      %v4304 = vadd.f32 0.0, %v4303
      %v4305 = vpop.f32.mrb[0].mxu0
      %v4306 = vpop.f32.mrb[0].mxu0
      %v4307 = vadd.f32 0.0, %v4306
      %v4308 = vpop.f32.mrb[0].mxu0
      %4309 = vmatprep.mubr.bf16.mxu0 %v4172
      %4310 = vmatmul.mubr.bf16.gmra.mrb[0].mxu0 %v4171
      %v4311 = vpop.f32.mrb[0].mxu0
      %v4312 = vadd.f32 0.0, %v4311
      %v4313 = vpop.f32.mrb[0].mxu0
      %v4314 = vpop.f32.mrb[0].mxu0
      %v4315 = vadd.f32 0.0, %v4314
      %v4316 = vpop.f32.mrb[0].mxu0
      %4317 = vmatprep.mubr.bf16.mxu0 %v4175
      %4318 = vmatmul.mubr.bf16.gmra.mrb[0].mxu0 %v4174
      %v4319 = vpop.f32.mrb[0].mxu0
      %v4320 = vadd.f32 0.0, %v4319
      %v4321 = vpop.f32.mrb[0].mxu0
      %v4322 = vpop.f32.mrb[0].mxu0
      %v4323 = vadd.f32 0.0, %v4322
      %v4324 = vpop.f32.mrb[0].mxu0
      %4325 = vmatprep.mubr.bf16.mxu0 %v4178
      %4326 = vmatmul.mubr.bf16.gmra.mrb[0].mxu0 %v4177
      %v4327 = vpop.f32.mrb[0].mxu0
      %v4328 = vadd.f32 0.0, %v4327
      %v4329 = vpop.f32.mrb[0].mxu0
      %v4330 = vpop.f32.mrb[0].mxu0
      %v4331 = vadd.f32 0.0, %v4330
      %v4332 = vpop.f32.mrb[0].mxu0
      %4333 = vmatprep.mubr.bf16.mxu0 %v4181
      %4334 = vmatmul.mubr.bf16.gmra.mrb[0].mxu0 %v4180
      %v4335 = vpop.f32.mrb[0].mxu0
      %v4336 = vadd.f32 0.0, %v4335
      %v4337 = vpop.f32.mrb[0].mxu0
      %v4338 = vpop.f32.mrb[0].mxu0
      %v4339 = vadd.f32 0.0, %v4338
      %v4340 = vpop.f32.mrb[0].mxu0
      %4341 = vmatprep.mubr.bf16.mxu0 %v4184
      %4342 = vmatmul.mubr.bf16.gmra.mrb[0].mxu0 %v4183
      %v4343 = vpop.f32.mrb[0].mxu0
      %v4344 = vadd.f32 0.0, %v4343
      %v4345 = vpop.f32.mrb[0].mxu0
      %v4346 = vpop.f32.mrb[0].mxu0
      %v4347 = vadd.f32 0.0, %v4346
      %v4348 = vpop.f32.mrb[0].mxu0
      %4349 = vmatprep.mubr.bf16.mxu0 %v4187
      %4350 = vmatmul.mubr.bf16.gmra.mrb[0].mxu0 %v4186
      %v4351 = vpop.f32.mrb[0].mxu0
      %v4352 = vadd.f32 0.0, %v4351
      %v4353 = vpop.f32.mrb[0].mxu0
      %v4354 = vpop.f32.mrb[0].mxu0
      %v4355 = vadd.f32 0.0, %v4354
      %v4356 = vpop.f32.mrb[0].mxu0
      %4357 = vdwg.mxu0
      %4358 = vmatprep.subr.bf16.mxu0 0
      %4359 = vmatpush1.bf16.msra.mxu0 %v4253
      %4360 = vmatprep.subr.bf16.mxu0 0
      %4361 = vmatpush1.bf16.msra.mxu0 %v4254
      %4362 = vmatprep.subr.bf16.mxu0 0
      %4363 = vmatpush1.bf16.msra.mxu0 %v4255
      %4364 = vmatprep.subr.bf16.mxu0 0
      %4365 = vmatpush1.bf16.msra.mxu0 %v4256
      %4366 = vmatprep.subr.bf16.mxu0 0
      %4367 = vmatpush1.bf16.msra.mxu0 %v4257
      %4368 = vmatprep.subr.bf16.mxu0 0
      %4369 = vmatpush1.bf16.msra.mxu0 %v4258
      %4370 = vmatprep.subr.bf16.mxu0 0
      %4371 = vmatpush1.bf16.msra.mxu0 %v4259
      %4372 = vmatprep.subr.bf16.mxu0 0
      %4373 = vmatpush1.bf16.msra.mxu0 %v4260
      %4374 = vmatprep.subr.bf16.mxu0 0
      %4375 = vmatpush1.bf16.msra.mxu0 0
      %4376 = vmatprep.subr.bf16.mxu0 0
      %4377 = vmatpush1.bf16.msra.mxu0 0
      %4378 = vmatprep.subr.bf16.mxu0 0
      %4379 = vmatpush1.bf16.msra.mxu0 0
      %4380 = vmatprep.subr.bf16.mxu0 0
      %4381 = vmatpush1.bf16.msra.mxu0 0
      %4382 = vmatprep.subr.bf16.mxu0 0
      %4383 = vmatpush1.bf16.msra.mxu0 0
      %4384 = vmatprep.subr.bf16.mxu0 0
      %4385 = vmatpush1.bf16.msra.mxu0 0
      %4386 = vmatprep.subr.bf16.mxu0 0
      %4387 = vmatpush1.bf16.msra.mxu0 0
      %4388 = vmatprep.subr.bf16.mxu0 0
      %4389 = vmatpush1.bf16.msra.mxu0 0
      %4390 = vmatprep.mubr.bf16.mxu0 0
      %4391 = vmatmul.mubr.bf16.gmra.mrb[0].mxu0 %v4167
      %v4392 = vpop.f32.mrb[0].mxu0
      %v4393 = vadd.f32 %v4296, %v4392
      %v4394 = vpop.f32.mrb[0].mxu0
      %v4395 = vpop.f32.mrb[0].mxu0
      %v4396 = vadd.f32 %v4299, %v4395
      %v4397 = vpop.f32.mrb[0].mxu0
      %4398 = vmatprep.mubr.bf16.mxu0 0
      %4399 = vmatmul.mubr.bf16.gmra.mrb[0].mxu0 %v4170
      %v4400 = vpop.f32.mrb[0].mxu0
      %v4401 = vadd.f32 %v4304, %v4400
      %v4402 = vpop.f32.mrb[0].mxu0
      %v4403 = vpop.f32.mrb[0].mxu0
      %v4404 = vadd.f32 %v4307, %v4403
      %v4405 = vpop.f32.mrb[0].mxu0
      %4406 = vmatprep.mubr.bf16.mxu0 0
      %4407 = vmatmul.mubr.bf16.gmra.mrb[0].mxu0 %v4173
      %v4408 = vpop.f32.mrb[0].mxu0
      %v4409 = vadd.f32 %v4312, %v4408
      %v4410 = vpop.f32.mrb[0].mxu0
      %v4411 = vpop.f32.mrb[0].mxu0
      %v4412 = vadd.f32 %v4315, %v4411
      %v4413 = vpop.f32.mrb[0].mxu0
      %4414 = vmatprep.mubr.bf16.mxu0 0
      %4415 = vmatmul.mubr.bf16.gmra.mrb[0].mxu0 %v4176
      %v4416 = vpop.f32.mrb[0].mxu0
      %v4417 = vadd.f32 %v4320, %v4416
      %v4418 = vpop.f32.mrb[0].mxu0
      %v4419 = vpop.f32.mrb[0].mxu0
      %v4420 = vadd.f32 %v4323, %v4419
      %v4421 = vpop.f32.mrb[0].mxu0
      %4422 = vmatprep.mubr.bf16.mxu0 0
      %4423 = vmatmul.mubr.bf16.gmra.mrb[0].mxu0 %v4179
      %v4424 = vpop.f32.mrb[0].mxu0
      %v4425 = vadd.f32 %v4328, %v4424
      %v4426 = vpop.f32.mrb[0].mxu0
      %v4427 = vpop.f32.mrb[0].mxu0
      %v4428 = vadd.f32 %v4331, %v4427
      %v4429 = vpop.f32.mrb[0].mxu0
      %4430 = vmatprep.mubr.bf16.mxu0 0
      %4431 = vmatmul.mubr.bf16.gmra.mrb[0].mxu0 %v4182
      %v4432 = vpop.f32.mrb[0].mxu0
      %v4433 = vadd.f32 %v4336, %v4432
      %v4434 = vpop.f32.mrb[0].mxu0
      %v4435 = vpop.f32.mrb[0].mxu0
      %v4436 = vadd.f32 %v4339, %v4435
      %v4437 = vpop.f32.mrb[0].mxu0
      %4438 = vmatprep.mubr.bf16.mxu0 0
      %4439 = vmatmul.mubr.bf16.gmra.mrb[0].mxu0 %v4185
      %v4440 = vpop.f32.mrb[0].mxu0
      %v4441 = vadd.f32 %v4344, %v4440
      %v4442 = vpop.f32.mrb[0].mxu0
      %v4443 = vpop.f32.mrb[0].mxu0
      %v4444 = vadd.f32 %v4347, %v4443
      %v4445 = vpop.f32.mrb[0].mxu0
      %4446 = vmatprep.mubr.bf16.mxu0 0
      %4447 = vmatmul.mubr.bf16.gmra.mrb[0].mxu0 %v4188
      %v4448 = vpop.f32.mrb[0].mxu0
      %v4449 = vadd.f32 %v4352, %v4448
      %v4450 = vpop.f32.mrb[0].mxu0
      %v4451 = vpop.f32.mrb[0].mxu0
      %v4452 = vadd.f32 %v4355, %v4451
      %v4453 = vpop.f32.mrb[0].mxu0
      %4454 = vdwg.mxu0
      %v4455 = vadd.f32 %v4054, %v4393
      %v4456 = vadd.f32 %v4057, %v4396
      %v4457 = vadd.f32 %v4062, %v4401
      %v4458 = vadd.f32 %v4065, %v4404
      %v4459 = vadd.f32 %v4070, %v4409
      %v4460 = vadd.f32 %v4073, %v4412
      %v4461 = vadd.f32 %v4078, %v4417
      %v4462 = vadd.f32 %v4081, %v4420
      %v4463 = vadd.f32 %v4086, %v4425
      %v4464 = vadd.f32 %v4089, %v4428
      %v4465 = vadd.f32 %v4094, %v4433
      %v4466 = vadd.f32 %v4097, %v4436
      %v4467 = vadd.f32 %v4102, %v4441
      %v4468 = vadd.f32 %v4105, %v4444
      %v4469 = vadd.f32 %v4110, %v4449
      %v4470 = vadd.f32 %v4113, %v4452
      %v4471 = vld [vmem:[%s4] sm:$0x1]
      %v4473 = vlaneseq
      %v4474 = vshrl.u32 %v4473, 7
      %v4475 = vsub.s32 0, %v4474
      %v4476 = vrot.slane %v4471, %v4475
      %v4478 = vadd.f32 %v4455, %v4476
      %v4479 = vadd.f32 %v4456, %v4476
      %v4480 = vadd.f32 %v4457, %v4476
      %v4481 = vadd.f32 %v4458, %v4476
      %v4482 = vadd.f32 %v4459, %v4476
      %v4483 = vadd.f32 %v4460, %v4476
      %v4484 = vadd.f32 %v4461, %v4476
      %v4485 = vadd.f32 %v4462, %v4476
      %v4486 = vadd.f32 %v4463, %v4476
      %v4487 = vadd.f32 %v4464, %v4476
      %v4488 = vadd.f32 %v4465, %v4476
      %v4489 = vadd.f32 %v4466, %v4476
      %v4490 = vadd.f32 %v4467, %v4476
      %v4491 = vadd.f32 %v4468, %v4476
      %v4492 = vadd.f32 %v4469, %v4476
      %v4493 = vadd.f32 %v4470, %v4476
      %v4494 = vmax.f32 %v4478, 0.0
      %v4495 = vmax.f32 %v4479, 0.0
      %v4496 = vmax.f32 %v4480, 0.0
      %v4497 = vmax.f32 %v4481, 0.0
      %v4498 = vmax.f32 %v4482, 0.0
      %v4499 = vmax.f32 %v4483, 0.0
      %v4500 = vmax.f32 %v4484, 0.0
      %v4501 = vmax.f32 %v4485, 0.0
      %v4502 = vmax.f32 %v4486, 0.0
      %v4503 = vmax.f32 %v4487, 0.0
      %v4504 = vmax.f32 %v4488, 0.0
      %v4505 = vmax.f32 %v4489, 0.0
      %v4506 = vmax.f32 %v4490, 0.0
      %v4507 = vmax.f32 %v4491, 0.0
      %v4508 = vmax.f32 %v4492, 0.0
      %v4509 = vmax.f32 %v4493, 0.0
      %s4510 = scalar_lea.vmem [#allocation6], 216
      %4511 = vst.msk [vmem:[%s4510 + $0x1] sm:$0xff] %vm2292, %v4494
      %4512 = vst.msk [vmem:[%s4510 + $0x9] sm:$0xff] %vm2292, %v4495
      %4513 = vst.msk [vmem:[%s4510 + $0x19] sm:$0xff] %vm2292, %v4496
      %4514 = vst.msk [vmem:[%s4510 + $0x21] sm:$0xff] %vm2292, %v4497
      %4515 = vst.msk [vmem:[%s4510 + $0x31] sm:$0xff] %vm2292, %v4498
      %4516 = vst.msk [vmem:[%s4510 + $0x39] sm:$0xff] %vm2292, %v4499
      %4517 = vst.msk [vmem:[%s4510 + $0x49] sm:$0xff] %vm2292, %v4500
      %4518 = vst.msk [vmem:[%s4510 + $0x51] sm:$0xff] %vm2292, %v4501
      %4519 = vst.msk [vmem:[%s4510 + $0x61] sm:$0xff] %vm2292, %v4502
      %4520 = vst.msk [vmem:[%s4510 + $0x69] sm:$0xff] %vm2292, %v4503
      %4521 = vst.msk [vmem:[%s4510 + $0x79] sm:$0xff] %vm2292, %v4504
      %4522 = vst.msk [vmem:[%s4510 + $0x81] sm:$0xff] %vm2292, %v4505
      %4523 = vst.msk [vmem:[%s4510 + $0x91] sm:$0xff] %vm2292, %v4506
      %4524 = vst.msk [vmem:[%s4510 + $0x99] sm:$0xff] %vm2292, %v4507
      %4525 = vst.msk [vmem:[%s4510 + $0xa9] sm:$0xff] %vm2292, %v4508
      %4526 = vst.msk [vmem:[%s4510 + $0xb1] sm:$0xff] %vm2292, %v4509
      %v4527 = vld [vmem:[#allocation6] sm:$0xff]
      %v4528 = vld [vmem:[#allocation6 + $0x8] sm:$0xff]
      %v4529 = vld [vmem:[#allocation6 + $0x18] sm:$0xff]
      %v4530 = vld [vmem:[#allocation6 + $0x20] sm:$0xff]
      %v4531 = vld [vmem:[#allocation6 + $0x30] sm:$0xff]
      %v4532 = vld [vmem:[#allocation6 + $0x38] sm:$0xff]
      %v4533 = vld [vmem:[#allocation6 + $0x48] sm:$0xff]
      %v4534 = vld [vmem:[#allocation6 + $0x50] sm:$0xff]
      %v4535 = vld [vmem:[#allocation6 + $0x60] sm:$0xff]
      %v4536 = vld [vmem:[#allocation6 + $0x68] sm:$0xff]
      %v4537 = vld [vmem:[#allocation6 + $0x78] sm:$0xff]
      %v4538 = vld [vmem:[#allocation6 + $0x80] sm:$0xff]
      %v4539 = vld [vmem:[#allocation6 + $0x90] sm:$0xff]
      %v4540 = vld [vmem:[#allocation6 + $0x98] sm:$0xff]
      %v4541 = vld [vmem:[#allocation6 + $0xa8] sm:$0xff]
      %v4542 = vld [vmem:[#allocation6 + $0xb0] sm:$0xff]
      %v4543 = vld [vmem:[#allocation6 + $0xc0] sm:$0xff]
      %v4544 = vld [vmem:[#allocation6 + $0xc8] sm:$0xff]
      %v4545 = vld [vmem:[#allocation6 + $0xd8] sm:$0xff]
      %v4546 = vld [vmem:[#allocation6 + $0xe0] sm:$0xff]
      %v4547 = vld [vmem:[#allocation6 + $0xf0] sm:$0xff]
      %v4548 = vld [vmem:[#allocation6 + $0xf8] sm:$0xff]
      %v4549 = vld [vmem:[#allocation6 + $0x108] sm:$0xff]
      %v4550 = vld [vmem:[#allocation6 + $0x110] sm:$0xff]
      %v4551 = vld [vmem:[#allocation6 + $0x120] sm:$0xff]
      %v4552 = vld [vmem:[#allocation6 + $0x128] sm:$0xff]
      %v4553 = vld [vmem:[#allocation6 + $0x138] sm:$0xff]
      %v4554 = vld [vmem:[#allocation6 + $0x140] sm:$0xff]
      %v4555 = vld [vmem:[#allocation6 + $0x150] sm:$0xff]
      %v4556 = vld [vmem:[#allocation6 + $0x158] sm:$0xff]
      %v4557 = vld [vmem:[#allocation6 + $0x168] sm:$0xff]
      %v4558 = vld [vmem:[#allocation6 + $0x170] sm:$0xff]
      %v4559 = vld [vmem:[#allocation6 + $0x180] sm:$0xff]
      %v4560 = vld [vmem:[#allocation6 + $0x188] sm:$0xff]
      %v4561 = vld [vmem:[#allocation6 + $0x198] sm:$0xff]
      %v4562 = vld [vmem:[#allocation6 + $0x1a0] sm:$0xff]
      %4563 = vst.msk [vmem:[#allocation7] sm:$0xff] %vm2292, %v4527
      %4564 = vst.msk [vmem:[#allocation7 + $0x10] sm:$0xff] %vm2292, %v4528
      %4565 = vst.msk [vmem:[#allocation7 + $0x20] sm:$0xff] %vm2292, %v4529
      %4566 = vst.msk [vmem:[#allocation7 + $0x30] sm:$0xff] %vm2292, %v4530
      %4567 = vst.msk [vmem:[#allocation7 + $0x40] sm:$0xff] %vm2292, %v4531
      %4568 = vst.msk [vmem:[#allocation7 + $0x50] sm:$0xff] %vm2292, %v4532
      %4569 = vst.msk [vmem:[#allocation7 + $0x60] sm:$0xff] %vm2292, %v4533
      %4570 = vst.msk [vmem:[#allocation7 + $0x70] sm:$0xff] %vm2292, %v4534
      %4571 = vst.msk [vmem:[#allocation7 + $0x80] sm:$0xff] %vm2292, %v4535
      %4572 = vst.msk [vmem:[#allocation7 + $0x90] sm:$0xff] %vm2292, %v4536
      %4573 = vst.msk [vmem:[#allocation7 + $0xa0] sm:$0xff] %vm2292, %v4537
      %4574 = vst.msk [vmem:[#allocation7 + $0xb0] sm:$0xff] %vm2292, %v4538
      %4575 = vst.msk [vmem:[#allocation7 + $0xc0] sm:$0xff] %vm2292, %v4539
      %4576 = vst.msk [vmem:[#allocation7 + $0xd0] sm:$0xff] %vm2292, %v4540
      %4577 = vst.msk [vmem:[#allocation7 + $0xe0] sm:$0xff] %vm2292, %v4541
      %4578 = vst.msk [vmem:[#allocation7 + $0xf0] sm:$0xff] %vm2292, %v4542
      %4579 = vst.msk [vmem:[#allocation7 + $0x100] sm:$0xff] %vm2292, %v4543
      %4580 = vst.msk [vmem:[#allocation7 + $0x110] sm:$0xff] %vm2292, %v4544
      %4581 = vst.msk [vmem:[#allocation7 + $0x120] sm:$0xff] %vm2292, %v4545
      %4582 = vst.msk [vmem:[#allocation7 + $0x130] sm:$0xff] %vm2292, %v4546
      %4583 = vst.msk [vmem:[#allocation7 + $0x140] sm:$0xff] %vm2292, %v4547
      %4584 = vst.msk [vmem:[#allocation7 + $0x150] sm:$0xff] %vm2292, %v4548
      %4585 = vst.msk [vmem:[#allocation7 + $0x160] sm:$0xff] %vm2292, %v4549
      %4586 = vst.msk [vmem:[#allocation7 + $0x170] sm:$0xff] %vm2292, %v4550
      %4587 = vst.msk [vmem:[#allocation7 + $0x180] sm:$0xff] %vm2292, %v4551
      %4588 = vst.msk [vmem:[#allocation7 + $0x190] sm:$0xff] %vm2292, %v4552
      %4589 = vst.msk [vmem:[#allocation7 + $0x1a0] sm:$0xff] %vm2292, %v4553
      %4590 = vst.msk [vmem:[#allocation7 + $0x1b0] sm:$0xff] %vm2292, %v4554
      %4591 = vst.msk [vmem:[#allocation7 + $0x1c0] sm:$0xff] %vm2292, %v4555
      %4592 = vst.msk [vmem:[#allocation7 + $0x1d0] sm:$0xff] %vm2292, %v4556
      %4593 = vst.msk [vmem:[#allocation7 + $0x1e0] sm:$0xff] %vm2292, %v4557
      %4594 = vst.msk [vmem:[#allocation7 + $0x1f0] sm:$0xff] %vm2292, %v4558
      %4595 = vst.msk [vmem:[#allocation7 + $0x200] sm:$0xff] %vm2292, %v4559
      %4596 = vst.msk [vmem:[#allocation7 + $0x210] sm:$0xff] %vm2292, %v4560
      %4597 = vst.msk [vmem:[#allocation7 + $0x220] sm:$0xff] %vm2292, %v4561
      %4598 = vst.msk [vmem:[#allocation7 + $0x230] sm:$0xff] %vm2292, %v4562
      %v4599 = vld [vmem:[#allocation6 + $0x1] sm:$0xff]
      %v4600 = vld [vmem:[#allocation6 + $0x9] sm:$0xff]
      %v4601 = vld [vmem:[#allocation6 + $0x19] sm:$0xff]
      %v4602 = vld [vmem:[#allocation6 + $0x21] sm:$0xff]
      %v4603 = vld [vmem:[#allocation6 + $0x31] sm:$0xff]
      %v4604 = vld [vmem:[#allocation6 + $0x39] sm:$0xff]
      %v4605 = vld [vmem:[#allocation6 + $0x49] sm:$0xff]
      %v4606 = vld [vmem:[#allocation6 + $0x51] sm:$0xff]
      %v4607 = vld [vmem:[#allocation6 + $0x61] sm:$0xff]
      %v4608 = vld [vmem:[#allocation6 + $0x69] sm:$0xff]
      %v4609 = vld [vmem:[#allocation6 + $0x79] sm:$0xff]
      %v4610 = vld [vmem:[#allocation6 + $0x81] sm:$0xff]
      %v4611 = vld [vmem:[#allocation6 + $0x91] sm:$0xff]
      %v4612 = vld [vmem:[#allocation6 + $0x99] sm:$0xff]
      %v4613 = vld [vmem:[#allocation6 + $0xa9] sm:$0xff]
      %v4614 = vld [vmem:[#allocation6 + $0xb1] sm:$0xff]
      %v4615 = vld [vmem:[#allocation6 + $0xc1] sm:$0xff]
      %v4616 = vld [vmem:[#allocation6 + $0xc9] sm:$0xff]
      %v4617 = vld [vmem:[#allocation6 + $0xd9] sm:$0xff]
      %v4618 = vld [vmem:[#allocation6 + $0xe1] sm:$0xff]
      %v4619 = vld [vmem:[#allocation6 + $0xf1] sm:$0xff]
      %v4620 = vld [vmem:[#allocation6 + $0xf9] sm:$0xff]
      %v4621 = vld [vmem:[#allocation6 + $0x109] sm:$0xff]
      %v4622 = vld [vmem:[#allocation6 + $0x111] sm:$0xff]
      %v4623 = vld [vmem:[#allocation6 + $0x121] sm:$0xff]
      %v4624 = vld [vmem:[#allocation6 + $0x129] sm:$0xff]
      %v4625 = vld [vmem:[#allocation6 + $0x139] sm:$0xff]
      %v4626 = vld [vmem:[#allocation6 + $0x141] sm:$0xff]
      %v4627 = vld [vmem:[#allocation6 + $0x151] sm:$0xff]
      %v4628 = vld [vmem:[#allocation6 + $0x159] sm:$0xff]
      %v4629 = vld [vmem:[#allocation6 + $0x169] sm:$0xff]
      %v4630 = vld [vmem:[#allocation6 + $0x171] sm:$0xff]
      %v4631 = vld [vmem:[#allocation6 + $0x181] sm:$0xff]
      %v4632 = vld [vmem:[#allocation6 + $0x189] sm:$0xff]
      %v4633 = vld [vmem:[#allocation6 + $0x199] sm:$0xff]
      %v4634 = vld [vmem:[#allocation6 + $0x1a1] sm:$0xff]
      %4671 = vrot.lane.b32.xlu0 %v4599, 64
      %v4672 = vpop.permute.xlu0 %4671
      %4673 = vrot.lane.b32.xlu0 %v4600, 64
      %v4674 = vpop.permute.xlu0 %4673
      %4675 = vrot.lane.b32.xlu0 %v4601, 64
      %v4676 = vpop.permute.xlu0 %4675
      %4677 = vrot.lane.b32.xlu0 %v4602, 64
      %v4678 = vpop.permute.xlu0 %4677
      %4679 = vrot.lane.b32.xlu0 %v4603, 64
      %v4680 = vpop.permute.xlu0 %4679
      %4681 = vrot.lane.b32.xlu0 %v4604, 64
      %v4682 = vpop.permute.xlu0 %4681
      %4683 = vrot.lane.b32.xlu0 %v4605, 64
      %v4684 = vpop.permute.xlu0 %4683
      %4685 = vrot.lane.b32.xlu0 %v4606, 64
      %v4686 = vpop.permute.xlu0 %4685
      %4687 = vrot.lane.b32.xlu0 %v4607, 64
      %v4688 = vpop.permute.xlu0 %4687
      %4689 = vrot.lane.b32.xlu0 %v4608, 64
      %v4690 = vpop.permute.xlu0 %4689
      %4691 = vrot.lane.b32.xlu0 %v4609, 64
      %v4692 = vpop.permute.xlu0 %4691
      %4693 = vrot.lane.b32.xlu0 %v4610, 64
      %v4694 = vpop.permute.xlu0 %4693
      %4695 = vrot.lane.b32.xlu0 %v4611, 64
      %v4696 = vpop.permute.xlu0 %4695
      %4697 = vrot.lane.b32.xlu0 %v4612, 64
      %v4698 = vpop.permute.xlu0 %4697
      %4699 = vrot.lane.b32.xlu0 %v4613, 64
      %v4700 = vpop.permute.xlu0 %4699
      %4701 = vrot.lane.b32.xlu0 %v4614, 64
      %v4702 = vpop.permute.xlu0 %4701
      %4703 = vrot.lane.b32.xlu0 %v4615, 64
      %v4704 = vpop.permute.xlu0 %4703
      %4705 = vrot.lane.b32.xlu0 %v4616, 64
      %v4706 = vpop.permute.xlu0 %4705
      %4707 = vrot.lane.b32.xlu0 %v4617, 64
      %v4708 = vpop.permute.xlu0 %4707
      %4709 = vrot.lane.b32.xlu0 %v4618, 64
      %v4710 = vpop.permute.xlu0 %4709
      %4711 = vrot.lane.b32.xlu0 %v4619, 64
      %v4712 = vpop.permute.xlu0 %4711
      %4713 = vrot.lane.b32.xlu0 %v4620, 64
      %v4714 = vpop.permute.xlu0 %4713
      %4715 = vrot.lane.b32.xlu0 %v4621, 64
      %v4716 = vpop.permute.xlu0 %4715
      %4717 = vrot.lane.b32.xlu0 %v4622, 64
      %v4718 = vpop.permute.xlu0 %4717
      %4719 = vrot.lane.b32.xlu0 %v4623, 64
      %v4720 = vpop.permute.xlu0 %4719
      %4721 = vrot.lane.b32.xlu0 %v4624, 64
      %v4722 = vpop.permute.xlu0 %4721
      %4723 = vrot.lane.b32.xlu0 %v4625, 64
      %v4724 = vpop.permute.xlu0 %4723
      %4725 = vrot.lane.b32.xlu0 %v4626, 64
      %v4726 = vpop.permute.xlu0 %4725
      %4727 = vrot.lane.b32.xlu0 %v4627, 64
      %v4728 = vpop.permute.xlu0 %4727
      %4729 = vrot.lane.b32.xlu0 %v4628, 64
      %v4730 = vpop.permute.xlu0 %4729
      %4731 = vrot.lane.b32.xlu0 %v4629, 64
      %v4732 = vpop.permute.xlu0 %4731
      %4733 = vrot.lane.b32.xlu0 %v4630, 64
      %v4734 = vpop.permute.xlu0 %4733
      %4735 = vrot.lane.b32.xlu0 %v4631, 64
      %v4736 = vpop.permute.xlu0 %4735
      %4737 = vrot.lane.b32.xlu0 %v4632, 64
      %v4738 = vpop.permute.xlu0 %4737
      %4739 = vrot.lane.b32.xlu0 %v4633, 64
      %v4740 = vpop.permute.xlu0 %4739
      %4741 = vrot.lane.b32.xlu0 %v4634, 64
      %v4742 = vpop.permute.xlu0 %4741
      %vm4779 = vcmask 1048064
      %4780 = vst.msk [vmem:[#allocation7] sm:$0xff] %vm4779, %v4672
      %4781 = vst.msk [vmem:[#allocation7 + $0x10] sm:$0xff] %vm4779, %v4674
      %4782 = vst.msk [vmem:[#allocation7 + $0x20] sm:$0xff] %vm4779, %v4676
      %4783 = vst.msk [vmem:[#allocation7 + $0x30] sm:$0xff] %vm4779, %v4678
      %4784 = vst.msk [vmem:[#allocation7 + $0x40] sm:$0xff] %vm4779, %v4680
      %4785 = vst.msk [vmem:[#allocation7 + $0x50] sm:$0xff] %vm4779, %v4682
      %4786 = vst.msk [vmem:[#allocation7 + $0x60] sm:$0xff] %vm4779, %v4684
      %4787 = vst.msk [vmem:[#allocation7 + $0x70] sm:$0xff] %vm4779, %v4686
      %4788 = vst.msk [vmem:[#allocation7 + $0x80] sm:$0xff] %vm4779, %v4688
      %4789 = vst.msk [vmem:[#allocation7 + $0x90] sm:$0xff] %vm4779, %v4690
      %4790 = vst.msk [vmem:[#allocation7 + $0xa0] sm:$0xff] %vm4779, %v4692
      %4791 = vst.msk [vmem:[#allocation7 + $0xb0] sm:$0xff] %vm4779, %v4694
      %4792 = vst.msk [vmem:[#allocation7 + $0xc0] sm:$0xff] %vm4779, %v4696
      %4793 = vst.msk [vmem:[#allocation7 + $0xd0] sm:$0xff] %vm4779, %v4698
      %4794 = vst.msk [vmem:[#allocation7 + $0xe0] sm:$0xff] %vm4779, %v4700
      %4795 = vst.msk [vmem:[#allocation7 + $0xf0] sm:$0xff] %vm4779, %v4702
      %4796 = vst.msk [vmem:[#allocation7 + $0x100] sm:$0xff] %vm4779, %v4704
      %4797 = vst.msk [vmem:[#allocation7 + $0x110] sm:$0xff] %vm4779, %v4706
      %4798 = vst.msk [vmem:[#allocation7 + $0x120] sm:$0xff] %vm4779, %v4708
      %4799 = vst.msk [vmem:[#allocation7 + $0x130] sm:$0xff] %vm4779, %v4710
      %4800 = vst.msk [vmem:[#allocation7 + $0x140] sm:$0xff] %vm4779, %v4712
      %4801 = vst.msk [vmem:[#allocation7 + $0x150] sm:$0xff] %vm4779, %v4714
      %4802 = vst.msk [vmem:[#allocation7 + $0x160] sm:$0xff] %vm4779, %v4716
      %4803 = vst.msk [vmem:[#allocation7 + $0x170] sm:$0xff] %vm4779, %v4718
      %4804 = vst.msk [vmem:[#allocation7 + $0x180] sm:$0xff] %vm4779, %v4720
      %4805 = vst.msk [vmem:[#allocation7 + $0x190] sm:$0xff] %vm4779, %v4722
      %4806 = vst.msk [vmem:[#allocation7 + $0x1a0] sm:$0xff] %vm4779, %v4724
      %4807 = vst.msk [vmem:[#allocation7 + $0x1b0] sm:$0xff] %vm4779, %v4726
      %4808 = vst.msk [vmem:[#allocation7 + $0x1c0] sm:$0xff] %vm4779, %v4728
      %4809 = vst.msk [vmem:[#allocation7 + $0x1d0] sm:$0xff] %vm4779, %v4730
      %4810 = vst.msk [vmem:[#allocation7 + $0x1e0] sm:$0xff] %vm4779, %v4732
      %4811 = vst.msk [vmem:[#allocation7 + $0x1f0] sm:$0xff] %vm4779, %v4734
      %4812 = vst.msk [vmem:[#allocation7 + $0x200] sm:$0xff] %vm4779, %v4736
      %4813 = vst.msk [vmem:[#allocation7 + $0x210] sm:$0xff] %vm4779, %v4738
      %4814 = vst.msk [vmem:[#allocation7 + $0x220] sm:$0xff] %vm4779, %v4740
      %4815 = vst.msk [vmem:[#allocation7 + $0x230] sm:$0xff] %vm4779, %v4742
      %v4816 = vld [vmem:[#allocation6 + $0x2] sm:$0xff]
      %v4817 = vld [vmem:[#allocation6 + $0xa] sm:$0xff]
      %v4818 = vld [vmem:[#allocation6 + $0x1a] sm:$0xff]
      %v4819 = vld [vmem:[#allocation6 + $0x22] sm:$0xff]
      %v4820 = vld [vmem:[#allocation6 + $0x32] sm:$0xff]
      %v4821 = vld [vmem:[#allocation6 + $0x3a] sm:$0xff]
      %v4822 = vld [vmem:[#allocation6 + $0x4a] sm:$0xff]
      %v4823 = vld [vmem:[#allocation6 + $0x52] sm:$0xff]
      %v4824 = vld [vmem:[#allocation6 + $0x62] sm:$0xff]
      %v4825 = vld [vmem:[#allocation6 + $0x6a] sm:$0xff]
      %v4826 = vld [vmem:[#allocation6 + $0x7a] sm:$0xff]
      %v4827 = vld [vmem:[#allocation6 + $0x82] sm:$0xff]
      %v4828 = vld [vmem:[#allocation6 + $0x92] sm:$0xff]
      %v4829 = vld [vmem:[#allocation6 + $0x9a] sm:$0xff]
      %v4830 = vld [vmem:[#allocation6 + $0xaa] sm:$0xff]
      %v4831 = vld [vmem:[#allocation6 + $0xb2] sm:$0xff]
      %v4832 = vld [vmem:[#allocation6 + $0xc2] sm:$0xff]
      %v4833 = vld [vmem:[#allocation6 + $0xca] sm:$0xff]
      %v4834 = vld [vmem:[#allocation6 + $0xda] sm:$0xff]
      %v4835 = vld [vmem:[#allocation6 + $0xe2] sm:$0xff]
      %v4836 = vld [vmem:[#allocation6 + $0xf2] sm:$0xff]
      %v4837 = vld [vmem:[#allocation6 + $0xfa] sm:$0xff]
      %v4838 = vld [vmem:[#allocation6 + $0x10a] sm:$0xff]
      %v4839 = vld [vmem:[#allocation6 + $0x112] sm:$0xff]
      %v4840 = vld [vmem:[#allocation6 + $0x122] sm:$0xff]
      %v4841 = vld [vmem:[#allocation6 + $0x12a] sm:$0xff]
      %v4842 = vld [vmem:[#allocation6 + $0x13a] sm:$0xff]
      %v4843 = vld [vmem:[#allocation6 + $0x142] sm:$0xff]
      %v4844 = vld [vmem:[#allocation6 + $0x152] sm:$0xff]
      %v4845 = vld [vmem:[#allocation6 + $0x15a] sm:$0xff]
      %v4846 = vld [vmem:[#allocation6 + $0x16a] sm:$0xff]
      %v4847 = vld [vmem:[#allocation6 + $0x172] sm:$0xff]
      %v4848 = vld [vmem:[#allocation6 + $0x182] sm:$0xff]
      %v4849 = vld [vmem:[#allocation6 + $0x18a] sm:$0xff]
      %v4850 = vld [vmem:[#allocation6 + $0x19a] sm:$0xff]
      %v4851 = vld [vmem:[#allocation6 + $0x1a2] sm:$0xff]
      %4852 = vst.msk [vmem:[#allocation7 + $0x8] sm:$0xff] %vm2292, %v4816
      %4853 = vst.msk [vmem:[#allocation7 + $0x18] sm:$0xff] %vm2292, %v4817
      %4854 = vst.msk [vmem:[#allocation7 + $0x28] sm:$0xff] %vm2292, %v4818
      %4855 = vst.msk [vmem:[#allocation7 + $0x38] sm:$0xff] %vm2292, %v4819
      %4856 = vst.msk [vmem:[#allocation7 + $0x48] sm:$0xff] %vm2292, %v4820
      %4857 = vst.msk [vmem:[#allocation7 + $0x58] sm:$0xff] %vm2292, %v4821
      %4858 = vst.msk [vmem:[#allocation7 + $0x68] sm:$0xff] %vm2292, %v4822
      %4859 = vst.msk [vmem:[#allocation7 + $0x78] sm:$0xff] %vm2292, %v4823
      %4860 = vst.msk [vmem:[#allocation7 + $0x88] sm:$0xff] %vm2292, %v4824
      %4861 = vst.msk [vmem:[#allocation7 + $0x98] sm:$0xff] %vm2292, %v4825
      %4862 = vst.msk [vmem:[#allocation7 + $0xa8] sm:$0xff] %vm2292, %v4826
      %4863 = vst.msk [vmem:[#allocation7 + $0xb8] sm:$0xff] %vm2292, %v4827
      %4864 = vst.msk [vmem:[#allocation7 + $0xc8] sm:$0xff] %vm2292, %v4828
      %4865 = vst.msk [vmem:[#allocation7 + $0xd8] sm:$0xff] %vm2292, %v4829
      %4866 = vst.msk [vmem:[#allocation7 + $0xe8] sm:$0xff] %vm2292, %v4830
      %4867 = vst.msk [vmem:[#allocation7 + $0xf8] sm:$0xff] %vm2292, %v4831
      %4868 = vst.msk [vmem:[#allocation7 + $0x108] sm:$0xff] %vm2292, %v4832
      %4869 = vst.msk [vmem:[#allocation7 + $0x118] sm:$0xff] %vm2292, %v4833
      %4870 = vst.msk [vmem:[#allocation7 + $0x128] sm:$0xff] %vm2292, %v4834
      %4871 = vst.msk [vmem:[#allocation7 + $0x138] sm:$0xff] %vm2292, %v4835
      %4872 = vst.msk [vmem:[#allocation7 + $0x148] sm:$0xff] %vm2292, %v4836
      %4873 = vst.msk [vmem:[#allocation7 + $0x158] sm:$0xff] %vm2292, %v4837
      %4874 = vst.msk [vmem:[#allocation7 + $0x168] sm:$0xff] %vm2292, %v4838
      %4875 = vst.msk [vmem:[#allocation7 + $0x178] sm:$0xff] %vm2292, %v4839
      %4876 = vst.msk [vmem:[#allocation7 + $0x188] sm:$0xff] %vm2292, %v4840
      %4877 = vst.msk [vmem:[#allocation7 + $0x198] sm:$0xff] %vm2292, %v4841
      %4878 = vst.msk [vmem:[#allocation7 + $0x1a8] sm:$0xff] %vm2292, %v4842
      %4879 = vst.msk [vmem:[#allocation7 + $0x1b8] sm:$0xff] %vm2292, %v4843
      %4880 = vst.msk [vmem:[#allocation7 + $0x1c8] sm:$0xff] %vm2292, %v4844
      %4881 = vst.msk [vmem:[#allocation7 + $0x1d8] sm:$0xff] %vm2292, %v4845
      %4882 = vst.msk [vmem:[#allocation7 + $0x1e8] sm:$0xff] %vm2292, %v4846
      %4883 = vst.msk [vmem:[#allocation7 + $0x1f8] sm:$0xff] %vm2292, %v4847
      %4884 = vst.msk [vmem:[#allocation7 + $0x208] sm:$0xff] %vm2292, %v4848
      %4885 = vst.msk [vmem:[#allocation7 + $0x218] sm:$0xff] %vm2292, %v4849
      %4886 = vst.msk [vmem:[#allocation7 + $0x228] sm:$0xff] %vm2292, %v4850
      %4887 = vst.msk [vmem:[#allocation7 + $0x238] sm:$0xff] %vm2292, %v4851
      %vm4888 = vcmask 130048
      %4889 = vst.msk [vmem:[#allocation8] sm:$0xff] %vm4888, 0.0
      %4890 = vst.msk [vmem:[#allocation8 + $0x8] sm:$0xff] %vm4888, 0.0
      %vm4891 = vcmask 123904
      %4892 = vst.msk [vmem:[#allocation8 + $0x10] sm:$0x3] %vm4891, 0.0
      %4893 = vst.msk [vmem:[#allocation8 + $0x18] sm:$0xff] %vm4888, 0.0
      %4894 = vst.msk [vmem:[#allocation8 + $0x20] sm:$0xff] %vm4888, 0.0
      %4895 = vst.msk [vmem:[#allocation8 + $0x28] sm:$0x3] %vm4891, 0.0
      %4896 = vst.msk [vmem:[#allocation8 + $0x30] sm:$0xff] %vm4888, 0.0
      %4897 = vst.msk [vmem:[#allocation8 + $0x38] sm:$0xff] %vm4888, 0.0
      %4898 = vst.msk [vmem:[#allocation8 + $0x40] sm:$0x3] %vm4891, 0.0
      %4899 = vst.msk [vmem:[#allocation8 + $0x48] sm:$0xff] %vm4888, 0.0
      %4900 = vst.msk [vmem:[#allocation8 + $0x50] sm:$0xff] %vm4888, 0.0
      %4901 = vst.msk [vmem:[#allocation8 + $0x58] sm:$0x3] %vm4891, 0.0
      %4902 = vst.msk [vmem:[#allocation8 + $0x60] sm:$0xff] %vm4888, 0.0
      %4903 = vst.msk [vmem:[#allocation8 + $0x68] sm:$0xff] %vm4888, 0.0
      %4904 = vst.msk [vmem:[#allocation8 + $0x70] sm:$0x3] %vm4891, 0.0
      %4905 = vst.msk [vmem:[#allocation8 + $0x78] sm:$0xff] %vm4888, 0.0
      %4906 = vst.msk [vmem:[#allocation8 + $0x80] sm:$0xff] %vm4888, 0.0
      %4907 = vst.msk [vmem:[#allocation8 + $0x88] sm:$0x3] %vm4891, 0.0
      %4908 = vst.msk [vmem:[#allocation8 + $0x90] sm:$0xff] %vm4888, 0.0
      %4909 = vst.msk [vmem:[#allocation8 + $0x98] sm:$0xff] %vm4888, 0.0
      %4910 = vst.msk [vmem:[#allocation8 + $0xa0] sm:$0x3] %vm4891, 0.0
      %4911 = vst.msk [vmem:[#allocation8 + $0xa8] sm:$0xff] %vm4888, 0.0
      %4912 = vst.msk [vmem:[#allocation8 + $0xb0] sm:$0xff] %vm4888, 0.0
      %4913 = vst.msk [vmem:[#allocation8 + $0xb8] sm:$0x3] %vm4891, 0.0
      %4914 = vst.msk [vmem:[#allocation8 + $0xc0] sm:$0xff] %vm4888, 0.0
      %4915 = vst.msk [vmem:[#allocation8 + $0xc8] sm:$0xff] %vm4888, 0.0
      %4916 = vst.msk [vmem:[#allocation8 + $0xd0] sm:$0x3] %vm4891, 0.0
      %4917 = vst.msk [vmem:[#allocation8 + $0xd8] sm:$0xff] %vm4888, 0.0
      %4918 = vst.msk [vmem:[#allocation8 + $0xe0] sm:$0xff] %vm4888, 0.0
      %4919 = vst.msk [vmem:[#allocation8 + $0xe8] sm:$0x3] %vm4891, 0.0
      %4920 = vst.msk [vmem:[#allocation8 + $0xf0] sm:$0xff] %vm4888, 0.0
      %4921 = vst.msk [vmem:[#allocation8 + $0xf8] sm:$0xff] %vm4888, 0.0
      %4922 = vst.msk [vmem:[#allocation8 + $0x100] sm:$0x3] %vm4891, 0.0
      %4923 = vst.msk [vmem:[#allocation8 + $0x108] sm:$0xff] %vm4888, 0.0
      %4924 = vst.msk [vmem:[#allocation8 + $0x110] sm:$0xff] %vm4888, 0.0
      %4925 = vst.msk [vmem:[#allocation8 + $0x118] sm:$0x3] %vm4891, 0.0
      %4926 = vst.msk [vmem:[#allocation8 + $0x120] sm:$0xff] %vm4888, 0.0
      %4927 = vst.msk [vmem:[#allocation8 + $0x128] sm:$0xff] %vm4888, 0.0
      %4928 = vst.msk [vmem:[#allocation8 + $0x130] sm:$0x3] %vm4891, 0.0
      %4929 = vst.msk [vmem:[#allocation8 + $0x138] sm:$0xff] %vm4888, 0.0
      %4930 = vst.msk [vmem:[#allocation8 + $0x140] sm:$0xff] %vm4888, 0.0
      %4931 = vst.msk [vmem:[#allocation8 + $0x148] sm:$0x3] %vm4891, 0.0
      %4932 = vst.msk [vmem:[#allocation8 + $0x150] sm:$0xff] %vm4888, 0.0
      %4933 = vst.msk [vmem:[#allocation8 + $0x158] sm:$0xff] %vm4888, 0.0
      %4934 = vst.msk [vmem:[#allocation8 + $0x160] sm:$0x3] %vm4891, 0.0
      %4935 = vst.msk [vmem:[#allocation8 + $0x168] sm:$0xff] %vm4888, 0.0
      %4936 = vst.msk [vmem:[#allocation8 + $0x170] sm:$0xff] %vm4888, 0.0
      %4937 = vst.msk [vmem:[#allocation8 + $0x178] sm:$0x3] %vm4891, 0.0
      %4938 = vst.msk [vmem:[#allocation8 + $0x180] sm:$0xff] %vm4888, 0.0
      %4939 = vst.msk [vmem:[#allocation8 + $0x188] sm:$0xff] %vm4888, 0.0
      %4940 = vst.msk [vmem:[#allocation8 + $0x190] sm:$0x3] %vm4891, 0.0
      %4941 = vst.msk [vmem:[#allocation8 + $0x198] sm:$0xff] %vm4888, 0.0
      %4942 = vst.msk [vmem:[#allocation8 + $0x1a0] sm:$0xff] %vm4888, 0.0
      %4943 = vst.msk [vmem:[#allocation8 + $0x1a8] sm:$0x3] %vm4891, 0.0
      %v4944 = vld [vmem:[#allocation7] sm:$0xff]
      %v4945 = vld [vmem:[#allocation7 + $0x8] sm:$0xff]
      %v4946 = vld [vmem:[#allocation7 + $0x10] sm:$0xff]
      %v4947 = vld [vmem:[#allocation7 + $0x18] sm:$0xff]
      %v4948 = vld [vmem:[#allocation7 + $0x20] sm:$0xff]
      %v4949 = vld [vmem:[#allocation7 + $0x28] sm:$0xff]
      %v4950 = vld [vmem:[#allocation7 + $0x30] sm:$0xff]
      %v4951 = vld [vmem:[#allocation7 + $0x38] sm:$0xff]
      %v4952 = vld [vmem:[#allocation7 + $0x40] sm:$0xff]
      %v4953 = vld [vmem:[#allocation7 + $0x48] sm:$0xff]
      %v4954 = vld [vmem:[#allocation7 + $0x50] sm:$0xff]
      %v4955 = vld [vmem:[#allocation7 + $0x58] sm:$0xff]
      %v4956 = vld [vmem:[#allocation7 + $0x60] sm:$0xff]
      %v4957 = vld [vmem:[#allocation7 + $0x68] sm:$0xff]
      %v4958 = vld [vmem:[#allocation7 + $0x70] sm:$0xff]
      %v4959 = vld [vmem:[#allocation7 + $0x78] sm:$0xff]
      %v4960 = vld [vmem:[#allocation7 + $0x80] sm:$0xff]
      %v4961 = vld [vmem:[#allocation7 + $0x88] sm:$0xff]
      %v4962 = vld [vmem:[#allocation7 + $0x90] sm:$0xff]
      %v4963 = vld [vmem:[#allocation7 + $0x98] sm:$0xff]
      %v4964 = vld [vmem:[#allocation7 + $0xa0] sm:$0xff]
      %v4965 = vld [vmem:[#allocation7 + $0xa8] sm:$0xff]
      %v4966 = vld [vmem:[#allocation7 + $0xb0] sm:$0xff]
      %v4967 = vld [vmem:[#allocation7 + $0xb8] sm:$0xff]
      %v4968 = vld [vmem:[#allocation7 + $0xc0] sm:$0xff]
      %v4969 = vld [vmem:[#allocation7 + $0xc8] sm:$0xff]
      %v4970 = vld [vmem:[#allocation7 + $0xd0] sm:$0xff]
      %v4971 = vld [vmem:[#allocation7 + $0xd8] sm:$0xff]
      %v4972 = vld [vmem:[#allocation7 + $0xe0] sm:$0xff]
      %v4973 = vld [vmem:[#allocation7 + $0xe8] sm:$0xff]
      %v4974 = vld [vmem:[#allocation7 + $0xf0] sm:$0xff]
      %v4975 = vld [vmem:[#allocation7 + $0xf8] sm:$0xff]
      %v4976 = vpack.c.bf16 %v4946, %v4944
      %v4977 = vpack.c.bf16 %v4947, %v4945
      %v4978 = vpack.c.bf16 %v4950, %v4948
      %v4979 = vpack.c.bf16 %v4951, %v4949
      %v4980 = vpack.c.bf16 %v4954, %v4952
      %v4981 = vpack.c.bf16 %v4955, %v4953
      %v4982 = vpack.c.bf16 %v4958, %v4956
      %v4983 = vpack.c.bf16 %v4959, %v4957
      %v4984 = vpack.c.bf16 %v4962, %v4960
      %v4985 = vpack.c.bf16 %v4963, %v4961
      %v4986 = vpack.c.bf16 %v4966, %v4964
      %v4987 = vpack.c.bf16 %v4967, %v4965
      %v4988 = vpack.c.bf16 %v4970, %v4968
      %v4989 = vpack.c.bf16 %v4971, %v4969
      %v4990 = vpack.c.bf16 %v4974, %v4972
      %v4991 = vpack.c.bf16 %v4975, %v4973
      %v4992 = vld [vmem:[%s5] sm:$0xff]
      %v4993 = vld [vmem:[%s5 + $0x8] sm:$0xff]
      %v4994 = vld [vmem:[%s5 + $0x10] sm:$0xff]
      %v4995 = vld [vmem:[%s5 + $0x18] sm:$0xff]
      %v4996 = vld [vmem:[%s5 + $0x20] sm:$0xff]
      %v4997 = vld [vmem:[%s5 + $0x28] sm:$0xff]
      %v4998 = vld [vmem:[%s5 + $0x30] sm:$0xff]
      %v4999 = vld [vmem:[%s5 + $0x38] sm:$0xff]
      %v5000 = vld [vmem:[%s5 + $0x40] sm:$0xff]
      %v5001 = vld [vmem:[%s5 + $0x48] sm:$0xff]
      %v5002 = vld [vmem:[%s5 + $0x50] sm:$0xff]
      %v5003 = vld [vmem:[%s5 + $0x58] sm:$0xff]
      %v5004 = vld [vmem:[%s5 + $0x60] sm:$0xff]
      %v5005 = vld [vmem:[%s5 + $0x68] sm:$0xff]
      %v5006 = vld [vmem:[%s5 + $0x70] sm:$0xff]
      %v5007 = vld [vmem:[%s5 + $0x78] sm:$0xff]
      %v5008 = vld [vmem:[%s5 + $0x80] sm:$0xff]
      %v5009 = vld [vmem:[%s5 + $0x88] sm:$0xff]
      %v5010 = vld [vmem:[%s5 + $0x90] sm:$0xff]
      %v5011 = vld [vmem:[%s5 + $0x98] sm:$0xff]
      %v5012 = vld [vmem:[%s5 + $0xa0] sm:$0xff]
      %v5013 = vld [vmem:[%s5 + $0xa8] sm:$0xff]
      %v5014 = vld [vmem:[%s5 + $0xb0] sm:$0xff]
      %v5015 = vld [vmem:[%s5 + $0xb8] sm:$0xff]
      %v5016 = vpack.c.bf16 %v4993, %v4992
      %v5017 = vpack.c.bf16 %v4995, %v4994
      %v5018 = vpack.c.bf16 %v4997, %v4996
      %v5019 = vpack.c.bf16 %v4999, %v4998
      %v5020 = vpack.c.bf16 %v5001, %v5000
      %v5021 = vpack.c.bf16 %v5003, %v5002
      %v5022 = vpack.c.bf16 %v5005, %v5004
      %v5023 = vpack.c.bf16 %v5007, %v5006
      %v5024 = vpack.c.bf16 %v5009, %v5008
      %v5025 = vpack.c.bf16 %v5011, %v5010
      %v5026 = vpack.c.bf16 %v5013, %v5012
      %v5027 = vpack.c.bf16 %v5015, %v5014
      %s5028 = scalar_lea.vmem [#allocation7], 32
      %v5029 = vld [vmem:[%s5028] sm:$0xff]
      %v5030 = vld [vmem:[%s5028 + $0x8] sm:$0xff]
      %v5031 = vld [vmem:[%s5028 + $0x10] sm:$0xff]
      %v5032 = vld [vmem:[%s5028 + $0x18] sm:$0xff]
      %v5033 = vld [vmem:[%s5028 + $0x20] sm:$0xff]
      %v5034 = vld [vmem:[%s5028 + $0x28] sm:$0xff]
      %v5035 = vld [vmem:[%s5028 + $0x30] sm:$0xff]
      %v5036 = vld [vmem:[%s5028 + $0x38] sm:$0xff]
      %v5037 = vld [vmem:[%s5028 + $0x40] sm:$0xff]
      %v5038 = vld [vmem:[%s5028 + $0x48] sm:$0xff]
      %v5039 = vld [vmem:[%s5028 + $0x50] sm:$0xff]
      %v5040 = vld [vmem:[%s5028 + $0x58] sm:$0xff]
      %v5041 = vld [vmem:[%s5028 + $0x60] sm:$0xff]
      %v5042 = vld [vmem:[%s5028 + $0x68] sm:$0xff]
      %v5043 = vld [vmem:[%s5028 + $0x70] sm:$0xff]
      %v5044 = vld [vmem:[%s5028 + $0x78] sm:$0xff]
      %v5045 = vld [vmem:[%s5028 + $0x80] sm:$0xff]
      %v5046 = vld [vmem:[%s5028 + $0x88] sm:$0xff]
      %v5047 = vld [vmem:[%s5028 + $0x90] sm:$0xff]
      %v5048 = vld [vmem:[%s5028 + $0x98] sm:$0xff]
      %v5049 = vld [vmem:[%s5028 + $0xa0] sm:$0xff]
      %v5050 = vld [vmem:[%s5028 + $0xa8] sm:$0xff]
      %v5051 = vld [vmem:[%s5028 + $0xb0] sm:$0xff]
      %v5052 = vld [vmem:[%s5028 + $0xb8] sm:$0xff]
      %v5053 = vld [vmem:[%s5028 + $0xc0] sm:$0xff]
      %v5054 = vld [vmem:[%s5028 + $0xc8] sm:$0xff]
      %v5055 = vld [vmem:[%s5028 + $0xd0] sm:$0xff]
      %v5056 = vld [vmem:[%s5028 + $0xd8] sm:$0xff]
      %v5057 = vld [vmem:[%s5028 + $0xe0] sm:$0xff]
      %v5058 = vld [vmem:[%s5028 + $0xe8] sm:$0xff]
      %v5059 = vld [vmem:[%s5028 + $0xf0] sm:$0xff]
      %v5060 = vld [vmem:[%s5028 + $0xf8] sm:$0xff]
      %v5061 = vpack.c.bf16 %v5031, %v5029
      %v5062 = vpack.c.bf16 %v5032, %v5030
      %v5063 = vpack.c.bf16 %v5035, %v5033
      %v5064 = vpack.c.bf16 %v5036, %v5034
      %v5065 = vpack.c.bf16 %v5039, %v5037
      %v5066 = vpack.c.bf16 %v5040, %v5038
      %v5067 = vpack.c.bf16 %v5043, %v5041
      %v5068 = vpack.c.bf16 %v5044, %v5042
      %v5069 = vpack.c.bf16 %v5047, %v5045
      %v5070 = vpack.c.bf16 %v5048, %v5046
      %v5071 = vpack.c.bf16 %v5051, %v5049
      %v5072 = vpack.c.bf16 %v5052, %v5050
      %v5073 = vpack.c.bf16 %v5055, %v5053
      %v5074 = vpack.c.bf16 %v5056, %v5054
      %v5075 = vpack.c.bf16 %v5059, %v5057
      %v5076 = vpack.c.bf16 %v5060, %v5058
      %s5077 = scalar_lea.vmem %s5, 192
      %v5078 = vld [vmem:[%s5077] sm:$0xff]
      %v5079 = vld [vmem:[%s5077 + $0x8] sm:$0xff]
      %v5080 = vld [vmem:[%s5077 + $0x10] sm:$0xff]
      %v5081 = vld [vmem:[%s5077 + $0x18] sm:$0xff]
      %v5082 = vld [vmem:[%s5077 + $0x20] sm:$0xff]
      %v5083 = vld [vmem:[%s5077 + $0x28] sm:$0xff]
      %v5084 = vld [vmem:[%s5077 + $0x30] sm:$0xff]
      %v5085 = vld [vmem:[%s5077 + $0x38] sm:$0xff]
      %v5086 = vld [vmem:[%s5077 + $0x40] sm:$0xff]
      %v5087 = vld [vmem:[%s5077 + $0x48] sm:$0xff]
      %v5088 = vld [vmem:[%s5077 + $0x50] sm:$0xff]
      %v5089 = vld [vmem:[%s5077 + $0x58] sm:$0xff]
      %v5090 = vld [vmem:[%s5077 + $0x60] sm:$0xff]
      %v5091 = vld [vmem:[%s5077 + $0x68] sm:$0xff]
      %v5092 = vld [vmem:[%s5077 + $0x70] sm:$0xff]
      %v5093 = vld [vmem:[%s5077 + $0x78] sm:$0xff]
      %v5094 = vld [vmem:[%s5077 + $0x80] sm:$0xff]
      %v5095 = vld [vmem:[%s5077 + $0x88] sm:$0xff]
      %v5096 = vld [vmem:[%s5077 + $0x90] sm:$0xff]
      %v5097 = vld [vmem:[%s5077 + $0x98] sm:$0xff]
      %v5098 = vld [vmem:[%s5077 + $0xa0] sm:$0xff]
      %v5099 = vld [vmem:[%s5077 + $0xa8] sm:$0xff]
      %v5100 = vld [vmem:[%s5077 + $0xb0] sm:$0xff]
      %v5101 = vld [vmem:[%s5077 + $0xb8] sm:$0xff]
      %v5102 = vpack.c.bf16 %v5079, %v5078
      %v5103 = vpack.c.bf16 %v5081, %v5080
      %v5104 = vpack.c.bf16 %v5083, %v5082
      %v5105 = vpack.c.bf16 %v5085, %v5084
      %v5106 = vpack.c.bf16 %v5087, %v5086
      %v5107 = vpack.c.bf16 %v5089, %v5088
      %v5108 = vpack.c.bf16 %v5091, %v5090
      %v5109 = vpack.c.bf16 %v5093, %v5092
      %v5110 = vpack.c.bf16 %v5095, %v5094
      %v5111 = vpack.c.bf16 %v5097, %v5096
      %v5112 = vpack.c.bf16 %v5099, %v5098
      %v5113 = vpack.c.bf16 %v5101, %v5100
      %v5115 = vsel %vm2292, %v5062, 0
      %v5118 = vsel %vm2292, %v5064, 0
      %v5121 = vsel %vm2292, %v5066, 0
      %v5124 = vsel %vm2292, %v5068, 0
      %v5127 = vsel %vm2292, %v5070, 0
      %v5130 = vsel %vm2292, %v5072, 0
      %v5133 = vsel %vm2292, %v5074, 0
      %v5136 = vsel %vm2292, %v5076, 0
      %5138 = vmatprep.subr.bf16.mxu0 0
      %5139 = vmatpush1.bf16.msra.mxu0 %v5102
      %5140 = vmatprep.subr.bf16.mxu0 0
      %5141 = vmatpush1.bf16.msra.mxu0 %v5103
      %5142 = vmatprep.subr.bf16.mxu0 0
      %5143 = vmatpush1.bf16.msra.mxu0 %v5104
      %5144 = vmatprep.subr.bf16.mxu0 0
      %5145 = vmatpush1.bf16.msra.mxu0 %v5105
      %5146 = vmatprep.subr.bf16.mxu0 0
      %5147 = vmatpush1.bf16.msra.mxu0 %v5106
      %5148 = vmatprep.subr.bf16.mxu0 0
      %5149 = vmatpush1.bf16.msra.mxu0 %v5107
      %5150 = vmatprep.subr.bf16.mxu0 0
      %5151 = vmatpush1.bf16.msra.mxu0 %v5108
      %5152 = vmatprep.subr.bf16.mxu0 0
      %5153 = vmatpush1.bf16.msra.mxu0 %v5109
      %5154 = vmatprep.subr.bf16.mxu0 0
      %5155 = vmatpush1.bf16.msra.mxu0 %v5110
      %5156 = vmatprep.subr.bf16.mxu0 0
      %5157 = vmatpush1.bf16.msra.mxu0 %v5111
      %5158 = vmatprep.subr.bf16.mxu0 0
      %5159 = vmatpush1.bf16.msra.mxu0 %v5112
      %5160 = vmatprep.subr.bf16.mxu0 0
      %5161 = vmatpush1.bf16.msra.mxu0 %v5113
      %5162 = vmatprep.subr.bf16.mxu0 0
      %5163 = vmatpush1.bf16.msra.mxu0 0
      %5164 = vmatprep.subr.bf16.mxu0 0
      %5165 = vmatpush1.bf16.msra.mxu0 0
      %5166 = vmatprep.subr.bf16.mxu0 0
      %5167 = vmatpush1.bf16.msra.mxu0 0
      %5168 = vmatprep.subr.bf16.mxu0 0
      %5169 = vmatpush1.bf16.msra.mxu0 0
      %5170 = vmatprep.mubr.bf16.mxu0 %v5115
      %5171 = vmatmul.mubr.bf16.gmra.mrb[0].mxu0 %v5061
      %v5172 = vpop.f32.mrb[0].mxu0
      %v5173 = vadd.f32 0.0, %v5172
      %v5174 = vpop.f32.mrb[0].mxu0
      %v5175 = vpop.f32.mrb[0].mxu0
      %v5176 = vadd.f32 0.0, %v5175
      %v5177 = vpop.f32.mrb[0].mxu0
      %5178 = vmatprep.mubr.bf16.mxu0 %v5118
      %5179 = vmatmul.mubr.bf16.gmra.mrb[0].mxu0 %v5063
      %v5180 = vpop.f32.mrb[0].mxu0
      %v5181 = vadd.f32 0.0, %v5180
      %v5182 = vpop.f32.mrb[0].mxu0
      %v5183 = vpop.f32.mrb[0].mxu0
      %v5184 = vadd.f32 0.0, %v5183
      %v5185 = vpop.f32.mrb[0].mxu0
      %5186 = vmatprep.mubr.bf16.mxu0 %v5121
      %5187 = vmatmul.mubr.bf16.gmra.mrb[0].mxu0 %v5065
      %v5188 = vpop.f32.mrb[0].mxu0
      %v5189 = vadd.f32 0.0, %v5188
      %v5190 = vpop.f32.mrb[0].mxu0
      %v5191 = vpop.f32.mrb[0].mxu0
      %v5192 = vadd.f32 0.0, %v5191
      %v5193 = vpop.f32.mrb[0].mxu0
      %5194 = vmatprep.mubr.bf16.mxu0 %v5124
      %5195 = vmatmul.mubr.bf16.gmra.mrb[0].mxu0 %v5067
      %v5196 = vpop.f32.mrb[0].mxu0
      %v5197 = vadd.f32 0.0, %v5196
      %v5198 = vpop.f32.mrb[0].mxu0
      %v5199 = vpop.f32.mrb[0].mxu0
      %v5200 = vadd.f32 0.0, %v5199
      %v5201 = vpop.f32.mrb[0].mxu0
      %5202 = vmatprep.mubr.bf16.mxu0 %v5127
      %5203 = vmatmul.mubr.bf16.gmra.mrb[0].mxu0 %v5069
      %v5204 = vpop.f32.mrb[0].mxu0
      %v5205 = vadd.f32 0.0, %v5204
      %v5206 = vpop.f32.mrb[0].mxu0
      %v5207 = vpop.f32.mrb[0].mxu0
      %v5208 = vadd.f32 0.0, %v5207
      %v5209 = vpop.f32.mrb[0].mxu0
      %5210 = vmatprep.mubr.bf16.mxu0 %v5130
      %5211 = vmatmul.mubr.bf16.gmra.mrb[0].mxu0 %v5071
      %v5212 = vpop.f32.mrb[0].mxu0
      %v5213 = vadd.f32 0.0, %v5212
      %v5214 = vpop.f32.mrb[0].mxu0
      %v5215 = vpop.f32.mrb[0].mxu0
      %v5216 = vadd.f32 0.0, %v5215
      %v5217 = vpop.f32.mrb[0].mxu0
      %5218 = vmatprep.mubr.bf16.mxu0 %v5133
      %5219 = vmatmul.mubr.bf16.gmra.mrb[0].mxu0 %v5073
      %v5220 = vpop.f32.mrb[0].mxu0
      %v5221 = vadd.f32 0.0, %v5220
      %v5222 = vpop.f32.mrb[0].mxu0
      %v5223 = vpop.f32.mrb[0].mxu0
      %v5224 = vadd.f32 0.0, %v5223
      %v5225 = vpop.f32.mrb[0].mxu0
      %5226 = vmatprep.mubr.bf16.mxu0 %v5136
      %5227 = vmatmul.mubr.bf16.gmra.mrb[0].mxu0 %v5075
      %v5228 = vpop.f32.mrb[0].mxu0
      %v5229 = vadd.f32 0.0, %v5228
      %v5230 = vpop.f32.mrb[0].mxu0
      %v5231 = vpop.f32.mrb[0].mxu0
      %v5232 = vadd.f32 0.0, %v5231
      %v5233 = vpop.f32.mrb[0].mxu0
      %5234 = vdwg.mxu0
      %v5236 = vsel %vm2292, %v4977, 0
      %v5239 = vsel %vm2292, %v4979, 0
      %v5242 = vsel %vm2292, %v4981, 0
      %v5245 = vsel %vm2292, %v4983, 0
      %v5248 = vsel %vm2292, %v4985, 0
      %v5251 = vsel %vm2292, %v4987, 0
      %v5254 = vsel %vm2292, %v4989, 0
      %v5257 = vsel %vm2292, %v4991, 0
      %5259 = vmatprep.subr.bf16.mxu0 0
      %5260 = vmatpush1.bf16.msra.mxu0 %v5016
      %5261 = vmatprep.subr.bf16.mxu0 0
      %5262 = vmatpush1.bf16.msra.mxu0 %v5017
      %5263 = vmatprep.subr.bf16.mxu0 0
      %5264 = vmatpush1.bf16.msra.mxu0 %v5018
      %5265 = vmatprep.subr.bf16.mxu0 0
      %5266 = vmatpush1.bf16.msra.mxu0 %v5019
      %5267 = vmatprep.subr.bf16.mxu0 0
      %5268 = vmatpush1.bf16.msra.mxu0 %v5020
      %5269 = vmatprep.subr.bf16.mxu0 0
      %5270 = vmatpush1.bf16.msra.mxu0 %v5021
      %5271 = vmatprep.subr.bf16.mxu0 0
      %5272 = vmatpush1.bf16.msra.mxu0 %v5022
      %5273 = vmatprep.subr.bf16.mxu0 0
      %5274 = vmatpush1.bf16.msra.mxu0 %v5023
      %5275 = vmatprep.subr.bf16.mxu0 0
      %5276 = vmatpush1.bf16.msra.mxu0 %v5024
      %5277 = vmatprep.subr.bf16.mxu0 0
      %5278 = vmatpush1.bf16.msra.mxu0 %v5025
      %5279 = vmatprep.subr.bf16.mxu0 0
      %5280 = vmatpush1.bf16.msra.mxu0 %v5026
      %5281 = vmatprep.subr.bf16.mxu0 0
      %5282 = vmatpush1.bf16.msra.mxu0 %v5027
      %5283 = vmatprep.subr.bf16.mxu0 0
      %5284 = vmatpush1.bf16.msra.mxu0 0
      %5285 = vmatprep.subr.bf16.mxu0 0
      %5286 = vmatpush1.bf16.msra.mxu0 0
      %5287 = vmatprep.subr.bf16.mxu0 0
      %5288 = vmatpush1.bf16.msra.mxu0 0
      %5289 = vmatprep.subr.bf16.mxu0 0
      %5290 = vmatpush1.bf16.msra.mxu0 0
      %5291 = vmatprep.mubr.bf16.mxu0 %v5236
      %5292 = vmatmul.mubr.bf16.gmra.mrb[0].mxu0 %v4976
      %v5293 = vpop.f32.mrb[0].mxu0
      %v5294 = vadd.f32 %v5173, %v5293
      %v5295 = vpop.f32.mrb[0].mxu0
      %v5296 = vpop.f32.mrb[0].mxu0
      %v5297 = vadd.f32 %v5176, %v5296
      %v5298 = vpop.f32.mrb[0].mxu0
      %5299 = vmatprep.mubr.bf16.mxu0 %v5239
      %5300 = vmatmul.mubr.bf16.gmra.mrb[0].mxu0 %v4978
      %v5301 = vpop.f32.mrb[0].mxu0
      %v5302 = vadd.f32 %v5181, %v5301
      %v5303 = vpop.f32.mrb[0].mxu0
      %v5304 = vpop.f32.mrb[0].mxu0
      %v5305 = vadd.f32 %v5184, %v5304
      %v5306 = vpop.f32.mrb[0].mxu0
      %5307 = vmatprep.mubr.bf16.mxu0 %v5242
      %5308 = vmatmul.mubr.bf16.gmra.mrb[0].mxu0 %v4980
      %v5309 = vpop.f32.mrb[0].mxu0
      %v5310 = vadd.f32 %v5189, %v5309
      %v5311 = vpop.f32.mrb[0].mxu0
      %v5312 = vpop.f32.mrb[0].mxu0
      %v5313 = vadd.f32 %v5192, %v5312
      %v5314 = vpop.f32.mrb[0].mxu0
      %5315 = vmatprep.mubr.bf16.mxu0 %v5245
      %5316 = vmatmul.mubr.bf16.gmra.mrb[0].mxu0 %v4982
      %v5317 = vpop.f32.mrb[0].mxu0
      %v5318 = vadd.f32 %v5197, %v5317
      %v5319 = vpop.f32.mrb[0].mxu0
      %v5320 = vpop.f32.mrb[0].mxu0
      %v5321 = vadd.f32 %v5200, %v5320
      %v5322 = vpop.f32.mrb[0].mxu0
      %5323 = vmatprep.mubr.bf16.mxu0 %v5248
      %5324 = vmatmul.mubr.bf16.gmra.mrb[0].mxu0 %v4984
      %v5325 = vpop.f32.mrb[0].mxu0
      %v5326 = vadd.f32 %v5205, %v5325
      %v5327 = vpop.f32.mrb[0].mxu0
      %v5328 = vpop.f32.mrb[0].mxu0
      %v5329 = vadd.f32 %v5208, %v5328
      %v5330 = vpop.f32.mrb[0].mxu0
      %5331 = vmatprep.mubr.bf16.mxu0 %v5251
      %5332 = vmatmul.mubr.bf16.gmra.mrb[0].mxu0 %v4986
      %v5333 = vpop.f32.mrb[0].mxu0
      %v5334 = vadd.f32 %v5213, %v5333
      %v5335 = vpop.f32.mrb[0].mxu0
      %v5336 = vpop.f32.mrb[0].mxu0
      %v5337 = vadd.f32 %v5216, %v5336
      %v5338 = vpop.f32.mrb[0].mxu0
      %5339 = vmatprep.mubr.bf16.mxu0 %v5254
      %5340 = vmatmul.mubr.bf16.gmra.mrb[0].mxu0 %v4988
      %v5341 = vpop.f32.mrb[0].mxu0
      %v5342 = vadd.f32 %v5221, %v5341
      %v5343 = vpop.f32.mrb[0].mxu0
      %v5344 = vpop.f32.mrb[0].mxu0
      %v5345 = vadd.f32 %v5224, %v5344
      %v5346 = vpop.f32.mrb[0].mxu0
      %5347 = vmatprep.mubr.bf16.mxu0 %v5257
      %5348 = vmatmul.mubr.bf16.gmra.mrb[0].mxu0 %v4990
      %v5349 = vpop.f32.mrb[0].mxu0
      %v5350 = vadd.f32 %v5229, %v5349
      %v5351 = vpop.f32.mrb[0].mxu0
      %v5352 = vpop.f32.mrb[0].mxu0
      %v5353 = vadd.f32 %v5232, %v5352
      %v5354 = vpop.f32.mrb[0].mxu0
      %5355 = vdwg.mxu0
      %s5356 = scalar_lea.vmem [#allocation7], 64
      %v5357 = vld [vmem:[%s5356] sm:$0xff]
      %v5358 = vld [vmem:[%s5356 + $0x8] sm:$0xff]
      %v5359 = vld [vmem:[%s5356 + $0x10] sm:$0xff]
      %v5360 = vld [vmem:[%s5356 + $0x18] sm:$0xff]
      %v5361 = vld [vmem:[%s5356 + $0x20] sm:$0xff]
      %v5362 = vld [vmem:[%s5356 + $0x28] sm:$0xff]
      %v5363 = vld [vmem:[%s5356 + $0x30] sm:$0xff]
      %v5364 = vld [vmem:[%s5356 + $0x38] sm:$0xff]
      %v5365 = vld [vmem:[%s5356 + $0x40] sm:$0xff]
      %v5366 = vld [vmem:[%s5356 + $0x48] sm:$0xff]
      %v5367 = vld [vmem:[%s5356 + $0x50] sm:$0xff]
      %v5368 = vld [vmem:[%s5356 + $0x58] sm:$0xff]
      %v5369 = vld [vmem:[%s5356 + $0x60] sm:$0xff]
      %v5370 = vld [vmem:[%s5356 + $0x68] sm:$0xff]
      %v5371 = vld [vmem:[%s5356 + $0x70] sm:$0xff]
      %v5372 = vld [vmem:[%s5356 + $0x78] sm:$0xff]
      %v5373 = vld [vmem:[%s5356 + $0x80] sm:$0xff]
      %v5374 = vld [vmem:[%s5356 + $0x88] sm:$0xff]
      %v5375 = vld [vmem:[%s5356 + $0x90] sm:$0xff]
      %v5376 = vld [vmem:[%s5356 + $0x98] sm:$0xff]
      %v5377 = vld [vmem:[%s5356 + $0xa0] sm:$0xff]
      %v5378 = vld [vmem:[%s5356 + $0xa8] sm:$0xff]
      %v5379 = vld [vmem:[%s5356 + $0xb0] sm:$0xff]
      %v5380 = vld [vmem:[%s5356 + $0xb8] sm:$0xff]
      %v5381 = vld [vmem:[%s5356 + $0xc0] sm:$0xff]
      %v5382 = vld [vmem:[%s5356 + $0xc8] sm:$0xff]
      %v5383 = vld [vmem:[%s5356 + $0xd0] sm:$0xff]
      %v5384 = vld [vmem:[%s5356 + $0xd8] sm:$0xff]
      %v5385 = vld [vmem:[%s5356 + $0xe0] sm:$0xff]
      %v5386 = vld [vmem:[%s5356 + $0xe8] sm:$0xff]
      %v5387 = vld [vmem:[%s5356 + $0xf0] sm:$0xff]
      %v5388 = vld [vmem:[%s5356 + $0xf8] sm:$0xff]
      %v5389 = vpack.c.bf16 %v5359, %v5357
      %v5390 = vpack.c.bf16 %v5360, %v5358
      %v5391 = vpack.c.bf16 %v5363, %v5361
      %v5392 = vpack.c.bf16 %v5364, %v5362
      %v5393 = vpack.c.bf16 %v5367, %v5365
      %v5394 = vpack.c.bf16 %v5368, %v5366
      %v5395 = vpack.c.bf16 %v5371, %v5369
      %v5396 = vpack.c.bf16 %v5372, %v5370
      %v5397 = vpack.c.bf16 %v5375, %v5373
      %v5398 = vpack.c.bf16 %v5376, %v5374
      %v5399 = vpack.c.bf16 %v5379, %v5377
      %v5400 = vpack.c.bf16 %v5380, %v5378
      %v5401 = vpack.c.bf16 %v5383, %v5381
      %v5402 = vpack.c.bf16 %v5384, %v5382
      %v5403 = vpack.c.bf16 %v5387, %v5385
      %v5404 = vpack.c.bf16 %v5388, %v5386
      %s5405 = scalar_lea.vmem %s5, 384
      %v5406 = vld [vmem:[%s5405] sm:$0xff]
      %v5407 = vld [vmem:[%s5405 + $0x8] sm:$0xff]
      %v5408 = vld [vmem:[%s5405 + $0x10] sm:$0xff]
      %v5409 = vld [vmem:[%s5405 + $0x18] sm:$0xff]
      %v5410 = vld [vmem:[%s5405 + $0x20] sm:$0xff]
      %v5411 = vld [vmem:[%s5405 + $0x28] sm:$0xff]
      %v5412 = vld [vmem:[%s5405 + $0x30] sm:$0xff]
      %v5413 = vld [vmem:[%s5405 + $0x38] sm:$0xff]
      %v5414 = vld [vmem:[%s5405 + $0x40] sm:$0xff]
      %v5415 = vld [vmem:[%s5405 + $0x48] sm:$0xff]
      %v5416 = vld [vmem:[%s5405 + $0x50] sm:$0xff]
      %v5417 = vld [vmem:[%s5405 + $0x58] sm:$0xff]
      %v5418 = vld [vmem:[%s5405 + $0x60] sm:$0xff]
      %v5419 = vld [vmem:[%s5405 + $0x68] sm:$0xff]
      %v5420 = vld [vmem:[%s5405 + $0x70] sm:$0xff]
      %v5421 = vld [vmem:[%s5405 + $0x78] sm:$0xff]
      %v5422 = vld [vmem:[%s5405 + $0x80] sm:$0xff]
      %v5423 = vld [vmem:[%s5405 + $0x88] sm:$0xff]
      %v5424 = vld [vmem:[%s5405 + $0x90] sm:$0xff]
      %v5425 = vld [vmem:[%s5405 + $0x98] sm:$0xff]
      %v5426 = vld [vmem:[%s5405 + $0xa0] sm:$0xff]
      %v5427 = vld [vmem:[%s5405 + $0xa8] sm:$0xff]
      %v5428 = vld [vmem:[%s5405 + $0xb0] sm:$0xff]
      %v5429 = vld [vmem:[%s5405 + $0xb8] sm:$0xff]
      %v5430 = vpack.c.bf16 %v5407, %v5406
      %v5431 = vpack.c.bf16 %v5409, %v5408
      %v5432 = vpack.c.bf16 %v5411, %v5410
      %v5433 = vpack.c.bf16 %v5413, %v5412
      %v5434 = vpack.c.bf16 %v5415, %v5414
      %v5435 = vpack.c.bf16 %v5417, %v5416
      %v5436 = vpack.c.bf16 %v5419, %v5418
      %v5437 = vpack.c.bf16 %v5421, %v5420
      %v5438 = vpack.c.bf16 %v5423, %v5422
      %v5439 = vpack.c.bf16 %v5425, %v5424
      %v5440 = vpack.c.bf16 %v5427, %v5426
      %v5441 = vpack.c.bf16 %v5429, %v5428
      %v5443 = vsel %vm2292, %v5390, 0
      %v5446 = vsel %vm2292, %v5392, 0
      %v5449 = vsel %vm2292, %v5394, 0
      %v5452 = vsel %vm2292, %v5396, 0
      %v5455 = vsel %vm2292, %v5398, 0
      %v5458 = vsel %vm2292, %v5400, 0
      %v5461 = vsel %vm2292, %v5402, 0
      %v5464 = vsel %vm2292, %v5404, 0
      %5466 = vmatprep.subr.bf16.mxu0 0
      %5467 = vmatpush1.bf16.msra.mxu0 %v5430
      %5468 = vmatprep.subr.bf16.mxu0 0
      %5469 = vmatpush1.bf16.msra.mxu0 %v5431
      %5470 = vmatprep.subr.bf16.mxu0 0
      %5471 = vmatpush1.bf16.msra.mxu0 %v5432
      %5472 = vmatprep.subr.bf16.mxu0 0
      %5473 = vmatpush1.bf16.msra.mxu0 %v5433
      %5474 = vmatprep.subr.bf16.mxu0 0
      %5475 = vmatpush1.bf16.msra.mxu0 %v5434
      %5476 = vmatprep.subr.bf16.mxu0 0
      %5477 = vmatpush1.bf16.msra.mxu0 %v5435
      %5478 = vmatprep.subr.bf16.mxu0 0
      %5479 = vmatpush1.bf16.msra.mxu0 %v5436
      %5480 = vmatprep.subr.bf16.mxu0 0
      %5481 = vmatpush1.bf16.msra.mxu0 %v5437
      %5482 = vmatprep.subr.bf16.mxu0 0
      %5483 = vmatpush1.bf16.msra.mxu0 %v5438
      %5484 = vmatprep.subr.bf16.mxu0 0
      %5485 = vmatpush1.bf16.msra.mxu0 %v5439
      %5486 = vmatprep.subr.bf16.mxu0 0
      %5487 = vmatpush1.bf16.msra.mxu0 %v5440
      %5488 = vmatprep.subr.bf16.mxu0 0
      %5489 = vmatpush1.bf16.msra.mxu0 %v5441
      %5490 = vmatprep.subr.bf16.mxu0 0
      %5491 = vmatpush1.bf16.msra.mxu0 0
      %5492 = vmatprep.subr.bf16.mxu0 0
      %5493 = vmatpush1.bf16.msra.mxu0 0
      %5494 = vmatprep.subr.bf16.mxu0 0
      %5495 = vmatpush1.bf16.msra.mxu0 0
      %5496 = vmatprep.subr.bf16.mxu0 0
      %5497 = vmatpush1.bf16.msra.mxu0 0
      %5498 = vmatprep.mubr.bf16.mxu0 %v5443
      %5499 = vmatmul.mubr.bf16.gmra.mrb[0].mxu0 %v5389
      %v5500 = vpop.f32.mrb[0].mxu0
      %v5501 = vadd.f32 0.0, %v5500
      %v5502 = vpop.f32.mrb[0].mxu0
      %v5503 = vpop.f32.mrb[0].mxu0
      %v5504 = vadd.f32 0.0, %v5503
      %v5505 = vpop.f32.mrb[0].mxu0
      %5506 = vmatprep.mubr.bf16.mxu0 %v5446
      %5507 = vmatmul.mubr.bf16.gmra.mrb[0].mxu0 %v5391
      %v5508 = vpop.f32.mrb[0].mxu0
      %v5509 = vadd.f32 0.0, %v5508
      %v5510 = vpop.f32.mrb[0].mxu0
      %v5511 = vpop.f32.mrb[0].mxu0
      %v5512 = vadd.f32 0.0, %v5511
      %v5513 = vpop.f32.mrb[0].mxu0
      %5514 = vmatprep.mubr.bf16.mxu0 %v5449
      %5515 = vmatmul.mubr.bf16.gmra.mrb[0].mxu0 %v5393
      %v5516 = vpop.f32.mrb[0].mxu0
      %v5517 = vadd.f32 0.0, %v5516
      %v5518 = vpop.f32.mrb[0].mxu0
      %v5519 = vpop.f32.mrb[0].mxu0
      %v5520 = vadd.f32 0.0, %v5519
      %v5521 = vpop.f32.mrb[0].mxu0
      %5522 = vmatprep.mubr.bf16.mxu0 %v5452
      %5523 = vmatmul.mubr.bf16.gmra.mrb[0].mxu0 %v5395
      %v5524 = vpop.f32.mrb[0].mxu0
      %v5525 = vadd.f32 0.0, %v5524
      %v5526 = vpop.f32.mrb[0].mxu0
      %v5527 = vpop.f32.mrb[0].mxu0
      %v5528 = vadd.f32 0.0, %v5527
      %v5529 = vpop.f32.mrb[0].mxu0
      %5530 = vmatprep.mubr.bf16.mxu0 %v5455
      %5531 = vmatmul.mubr.bf16.gmra.mrb[0].mxu0 %v5397
      %v5532 = vpop.f32.mrb[0].mxu0
      %v5533 = vadd.f32 0.0, %v5532
      %v5534 = vpop.f32.mrb[0].mxu0
      %v5535 = vpop.f32.mrb[0].mxu0
      %v5536 = vadd.f32 0.0, %v5535
      %v5537 = vpop.f32.mrb[0].mxu0
      %5538 = vmatprep.mubr.bf16.mxu0 %v5458
      %5539 = vmatmul.mubr.bf16.gmra.mrb[0].mxu0 %v5399
      %v5540 = vpop.f32.mrb[0].mxu0
      %v5541 = vadd.f32 0.0, %v5540
      %v5542 = vpop.f32.mrb[0].mxu0
      %v5543 = vpop.f32.mrb[0].mxu0
      %v5544 = vadd.f32 0.0, %v5543
      %v5545 = vpop.f32.mrb[0].mxu0
      %5546 = vmatprep.mubr.bf16.mxu0 %v5461
      %5547 = vmatmul.mubr.bf16.gmra.mrb[0].mxu0 %v5401
      %v5548 = vpop.f32.mrb[0].mxu0
      %v5549 = vadd.f32 0.0, %v5548
      %v5550 = vpop.f32.mrb[0].mxu0
      %v5551 = vpop.f32.mrb[0].mxu0
      %v5552 = vadd.f32 0.0, %v5551
      %v5553 = vpop.f32.mrb[0].mxu0
      %5554 = vmatprep.mubr.bf16.mxu0 %v5464
      %5555 = vmatmul.mubr.bf16.gmra.mrb[0].mxu0 %v5403
      %v5556 = vpop.f32.mrb[0].mxu0
      %v5557 = vadd.f32 0.0, %v5556
      %v5558 = vpop.f32.mrb[0].mxu0
      %v5559 = vpop.f32.mrb[0].mxu0
      %v5560 = vadd.f32 0.0, %v5559
      %v5561 = vpop.f32.mrb[0].mxu0
      %5562 = vdwg.mxu0
      %v5563 = vadd.f32 %v5294, %v5501
      %v5564 = vadd.f32 %v5297, %v5504
      %v5565 = vadd.f32 %v5302, %v5509
      %v5566 = vadd.f32 %v5305, %v5512
      %v5567 = vadd.f32 %v5310, %v5517
      %v5568 = vadd.f32 %v5313, %v5520
      %v5569 = vadd.f32 %v5318, %v5525
      %v5570 = vadd.f32 %v5321, %v5528
      %v5571 = vadd.f32 %v5326, %v5533
      %v5572 = vadd.f32 %v5329, %v5536
      %v5573 = vadd.f32 %v5334, %v5541
      %v5574 = vadd.f32 %v5337, %v5544
      %v5575 = vadd.f32 %v5342, %v5549
      %v5576 = vadd.f32 %v5345, %v5552
      %v5577 = vadd.f32 %v5350, %v5557
      %v5578 = vadd.f32 %v5353, %v5560
      %v5579 = vld [vmem:[%s6] sm:$0x1]
      %v5581 = vlaneseq
      %v5582 = vshrl.u32 %v5581, 7
      %v5583 = vsub.s32 0, %v5582
      %v5584 = vrot.slane %v5579, %v5583
      %v5586 = vadd.f32 %v5563, %v5584
      %v5587 = vadd.f32 %v5564, %v5584
      %v5588 = vadd.f32 %v5565, %v5584
      %v5589 = vadd.f32 %v5566, %v5584
      %v5590 = vadd.f32 %v5567, %v5584
      %v5591 = vadd.f32 %v5568, %v5584
      %v5592 = vadd.f32 %v5569, %v5584
      %v5593 = vadd.f32 %v5570, %v5584
      %v5594 = vadd.f32 %v5571, %v5584
      %v5595 = vadd.f32 %v5572, %v5584
      %v5596 = vadd.f32 %v5573, %v5584
      %v5597 = vadd.f32 %v5574, %v5584
      %v5598 = vadd.f32 %v5575, %v5584
      %v5599 = vadd.f32 %v5576, %v5584
      %v5600 = vadd.f32 %v5577, %v5584
      %v5601 = vadd.f32 %v5578, %v5584
      %v5602 = vmax.f32 %v5586, 0.0
      %v5603 = vmax.f32 %v5587, 0.0
      %v5604 = vmax.f32 %v5588, 0.0
      %v5605 = vmax.f32 %v5589, 0.0
      %v5606 = vmax.f32 %v5590, 0.0
      %v5607 = vmax.f32 %v5591, 0.0
      %v5608 = vmax.f32 %v5592, 0.0
      %v5609 = vmax.f32 %v5593, 0.0
      %v5610 = vmax.f32 %v5594, 0.0
      %v5611 = vmax.f32 %v5595, 0.0
      %v5612 = vmax.f32 %v5596, 0.0
      %v5613 = vmax.f32 %v5597, 0.0
      %v5614 = vmax.f32 %v5598, 0.0
      %v5615 = vmax.f32 %v5599, 0.0
      %v5616 = vmax.f32 %v5600, 0.0
      %v5617 = vmax.f32 %v5601, 0.0
      %s5618 = scalar_lea.vmem [#allocation8], 24
      %5619 = vst.msk [vmem:[%s5618 + $0x1] sm:$0xff] %vm4888, %v5602
      %5620 = vst.msk [vmem:[%s5618 + $0x9] sm:$0xff] %vm4888, %v5603
      %5621 = vst.msk [vmem:[%s5618 + $0x19] sm:$0xff] %vm4888, %v5604
      %5622 = vst.msk [vmem:[%s5618 + $0x21] sm:$0xff] %vm4888, %v5605
      %5623 = vst.msk [vmem:[%s5618 + $0x31] sm:$0xff] %vm4888, %v5606
      %5624 = vst.msk [vmem:[%s5618 + $0x39] sm:$0xff] %vm4888, %v5607
      %5625 = vst.msk [vmem:[%s5618 + $0x49] sm:$0xff] %vm4888, %v5608
      %5626 = vst.msk [vmem:[%s5618 + $0x51] sm:$0xff] %vm4888, %v5609
      %5627 = vst.msk [vmem:[%s5618 + $0x61] sm:$0xff] %vm4888, %v5610
      %5628 = vst.msk [vmem:[%s5618 + $0x69] sm:$0xff] %vm4888, %v5611
      %5629 = vst.msk [vmem:[%s5618 + $0x79] sm:$0xff] %vm4888, %v5612
      %5630 = vst.msk [vmem:[%s5618 + $0x81] sm:$0xff] %vm4888, %v5613
      %5631 = vst.msk [vmem:[%s5618 + $0x91] sm:$0xff] %vm4888, %v5614
      %5632 = vst.msk [vmem:[%s5618 + $0x99] sm:$0xff] %vm4888, %v5615
      %5633 = vst.msk [vmem:[%s5618 + $0xa9] sm:$0xff] %vm4888, %v5616
      %5634 = vst.msk [vmem:[%s5618 + $0xb1] sm:$0xff] %vm4888, %v5617
      %s5635 = scalar_lea.vmem [#allocation7], 256
      %v5636 = vld [vmem:[%s5635] sm:$0xff]
      %v5637 = vld [vmem:[%s5635 + $0x8] sm:$0xff]
      %v5638 = vld [vmem:[%s5635 + $0x10] sm:$0xff]
      %v5639 = vld [vmem:[%s5635 + $0x18] sm:$0xff]
      %v5640 = vld [vmem:[%s5635 + $0x20] sm:$0xff]
      %v5641 = vld [vmem:[%s5635 + $0x28] sm:$0xff]
      %v5642 = vld [vmem:[%s5635 + $0x30] sm:$0xff]
      %v5643 = vld [vmem:[%s5635 + $0x38] sm:$0xff]
      %v5644 = vld [vmem:[%s5635 + $0x40] sm:$0xff]
      %v5645 = vld [vmem:[%s5635 + $0x48] sm:$0xff]
      %v5646 = vld [vmem:[%s5635 + $0x50] sm:$0xff]
      %v5647 = vld [vmem:[%s5635 + $0x58] sm:$0xff]
      %v5648 = vld [vmem:[%s5635 + $0x60] sm:$0xff]
      %v5649 = vld [vmem:[%s5635 + $0x68] sm:$0xff]
      %v5650 = vld [vmem:[%s5635 + $0x70] sm:$0xff]
      %v5651 = vld [vmem:[%s5635 + $0x78] sm:$0xff]
      %v5652 = vld [vmem:[%s5635 + $0x80] sm:$0xff]
      %v5653 = vld [vmem:[%s5635 + $0x88] sm:$0xff]
      %v5654 = vld [vmem:[%s5635 + $0x90] sm:$0xff]
      %v5655 = vld [vmem:[%s5635 + $0x98] sm:$0xff]
      %v5656 = vld [vmem:[%s5635 + $0xa0] sm:$0xff]
      %v5657 = vld [vmem:[%s5635 + $0xa8] sm:$0xff]
      %v5658 = vld [vmem:[%s5635 + $0xb0] sm:$0xff]
      %v5659 = vld [vmem:[%s5635 + $0xb8] sm:$0xff]
      %v5660 = vld [vmem:[%s5635 + $0xc0] sm:$0xff]
      %v5661 = vld [vmem:[%s5635 + $0xc8] sm:$0xff]
      %v5662 = vld [vmem:[%s5635 + $0xd0] sm:$0xff]
      %v5663 = vld [vmem:[%s5635 + $0xd8] sm:$0xff]
      %v5664 = vld [vmem:[%s5635 + $0xe0] sm:$0xff]
      %v5665 = vld [vmem:[%s5635 + $0xe8] sm:$0xff]
      %v5666 = vld [vmem:[%s5635 + $0xf0] sm:$0xff]
      %v5667 = vld [vmem:[%s5635 + $0xf8] sm:$0xff]
      %v5668 = vpack.c.bf16 %v5638, %v5636
      %v5669 = vpack.c.bf16 %v5639, %v5637
      %v5670 = vpack.c.bf16 %v5642, %v5640
      %v5671 = vpack.c.bf16 %v5643, %v5641
      %v5672 = vpack.c.bf16 %v5646, %v5644
      %v5673 = vpack.c.bf16 %v5647, %v5645
      %v5674 = vpack.c.bf16 %v5650, %v5648
      %v5675 = vpack.c.bf16 %v5651, %v5649
      %v5676 = vpack.c.bf16 %v5654, %v5652
      %v5677 = vpack.c.bf16 %v5655, %v5653
      %v5678 = vpack.c.bf16 %v5658, %v5656
      %v5679 = vpack.c.bf16 %v5659, %v5657
      %v5680 = vpack.c.bf16 %v5662, %v5660
      %v5681 = vpack.c.bf16 %v5663, %v5661
      %v5682 = vpack.c.bf16 %v5666, %v5664
      %v5683 = vpack.c.bf16 %v5667, %v5665
      %v5684 = vld [vmem:[%s5] sm:$0xff]
      %v5685 = vld [vmem:[%s5 + $0x8] sm:$0xff]
      %v5686 = vld [vmem:[%s5 + $0x10] sm:$0xff]
      %v5687 = vld [vmem:[%s5 + $0x18] sm:$0xff]
      %v5688 = vld [vmem:[%s5 + $0x20] sm:$0xff]
      %v5689 = vld [vmem:[%s5 + $0x28] sm:$0xff]
      %v5690 = vld [vmem:[%s5 + $0x30] sm:$0xff]
      %v5691 = vld [vmem:[%s5 + $0x38] sm:$0xff]
      %v5692 = vld [vmem:[%s5 + $0x40] sm:$0xff]
      %v5693 = vld [vmem:[%s5 + $0x48] sm:$0xff]
      %v5694 = vld [vmem:[%s5 + $0x50] sm:$0xff]
      %v5695 = vld [vmem:[%s5 + $0x58] sm:$0xff]
      %v5696 = vld [vmem:[%s5 + $0x60] sm:$0xff]
      %v5697 = vld [vmem:[%s5 + $0x68] sm:$0xff]
      %v5698 = vld [vmem:[%s5 + $0x70] sm:$0xff]
      %v5699 = vld [vmem:[%s5 + $0x78] sm:$0xff]
      %v5700 = vld [vmem:[%s5 + $0x80] sm:$0xff]
      %v5701 = vld [vmem:[%s5 + $0x88] sm:$0xff]
      %v5702 = vld [vmem:[%s5 + $0x90] sm:$0xff]
      %v5703 = vld [vmem:[%s5 + $0x98] sm:$0xff]
      %v5704 = vld [vmem:[%s5 + $0xa0] sm:$0xff]
      %v5705 = vld [vmem:[%s5 + $0xa8] sm:$0xff]
      %v5706 = vld [vmem:[%s5 + $0xb0] sm:$0xff]
      %v5707 = vld [vmem:[%s5 + $0xb8] sm:$0xff]
      %v5708 = vpack.c.bf16 %v5685, %v5684
      %v5709 = vpack.c.bf16 %v5687, %v5686
      %v5710 = vpack.c.bf16 %v5689, %v5688
      %v5711 = vpack.c.bf16 %v5691, %v5690
      %v5712 = vpack.c.bf16 %v5693, %v5692
      %v5713 = vpack.c.bf16 %v5695, %v5694
      %v5714 = vpack.c.bf16 %v5697, %v5696
      %v5715 = vpack.c.bf16 %v5699, %v5698
      %v5716 = vpack.c.bf16 %v5701, %v5700
      %v5717 = vpack.c.bf16 %v5703, %v5702
      %v5718 = vpack.c.bf16 %v5705, %v5704
      %v5719 = vpack.c.bf16 %v5707, %v5706
      %s5720 = scalar_lea.vmem [#allocation7], 288
      %v5721 = vld [vmem:[%s5720] sm:$0xff]
      %v5722 = vld [vmem:[%s5720 + $0x8] sm:$0xff]
      %v5723 = vld [vmem:[%s5720 + $0x10] sm:$0xff]
      %v5724 = vld [vmem:[%s5720 + $0x18] sm:$0xff]
      %v5725 = vld [vmem:[%s5720 + $0x20] sm:$0xff]
      %v5726 = vld [vmem:[%s5720 + $0x28] sm:$0xff]
      %v5727 = vld [vmem:[%s5720 + $0x30] sm:$0xff]
      %v5728 = vld [vmem:[%s5720 + $0x38] sm:$0xff]
      %v5729 = vld [vmem:[%s5720 + $0x40] sm:$0xff]
      %v5730 = vld [vmem:[%s5720 + $0x48] sm:$0xff]
      %v5731 = vld [vmem:[%s5720 + $0x50] sm:$0xff]
      %v5732 = vld [vmem:[%s5720 + $0x58] sm:$0xff]
      %v5733 = vld [vmem:[%s5720 + $0x60] sm:$0xff]
      %v5734 = vld [vmem:[%s5720 + $0x68] sm:$0xff]
      %v5735 = vld [vmem:[%s5720 + $0x70] sm:$0xff]
      %v5736 = vld [vmem:[%s5720 + $0x78] sm:$0xff]
      %v5737 = vld [vmem:[%s5720 + $0x80] sm:$0xff]
      %v5738 = vld [vmem:[%s5720 + $0x88] sm:$0xff]
      %v5739 = vld [vmem:[%s5720 + $0x90] sm:$0xff]
      %v5740 = vld [vmem:[%s5720 + $0x98] sm:$0xff]
      %v5741 = vld [vmem:[%s5720 + $0xa0] sm:$0xff]
      %v5742 = vld [vmem:[%s5720 + $0xa8] sm:$0xff]
      %v5743 = vld [vmem:[%s5720 + $0xb0] sm:$0xff]
      %v5744 = vld [vmem:[%s5720 + $0xb8] sm:$0xff]
      %v5745 = vld [vmem:[%s5720 + $0xc0] sm:$0xff]
      %v5746 = vld [vmem:[%s5720 + $0xc8] sm:$0xff]
      %v5747 = vld [vmem:[%s5720 + $0xd0] sm:$0xff]
      %v5748 = vld [vmem:[%s5720 + $0xd8] sm:$0xff]
      %v5749 = vld [vmem:[%s5720 + $0xe0] sm:$0xff]
      %v5750 = vld [vmem:[%s5720 + $0xe8] sm:$0xff]
      %v5751 = vld [vmem:[%s5720 + $0xf0] sm:$0xff]
      %v5752 = vld [vmem:[%s5720 + $0xf8] sm:$0xff]
      %v5753 = vpack.c.bf16 %v5723, %v5721
      %v5754 = vpack.c.bf16 %v5724, %v5722
      %v5755 = vpack.c.bf16 %v5727, %v5725
      %v5756 = vpack.c.bf16 %v5728, %v5726
      %v5757 = vpack.c.bf16 %v5731, %v5729
      %v5758 = vpack.c.bf16 %v5732, %v5730
      %v5759 = vpack.c.bf16 %v5735, %v5733
      %v5760 = vpack.c.bf16 %v5736, %v5734
      %v5761 = vpack.c.bf16 %v5739, %v5737
      %v5762 = vpack.c.bf16 %v5740, %v5738
      %v5763 = vpack.c.bf16 %v5743, %v5741
      %v5764 = vpack.c.bf16 %v5744, %v5742
      %v5765 = vpack.c.bf16 %v5747, %v5745
      %v5766 = vpack.c.bf16 %v5748, %v5746
      %v5767 = vpack.c.bf16 %v5751, %v5749
      %v5768 = vpack.c.bf16 %v5752, %v5750
      %v5769 = vld [vmem:[%s5077] sm:$0xff]
      %v5770 = vld [vmem:[%s5077 + $0x8] sm:$0xff]
      %v5771 = vld [vmem:[%s5077 + $0x10] sm:$0xff]
      %v5772 = vld [vmem:[%s5077 + $0x18] sm:$0xff]
      %v5773 = vld [vmem:[%s5077 + $0x20] sm:$0xff]
      %v5774 = vld [vmem:[%s5077 + $0x28] sm:$0xff]
      %v5775 = vld [vmem:[%s5077 + $0x30] sm:$0xff]
      %v5776 = vld [vmem:[%s5077 + $0x38] sm:$0xff]
      %v5777 = vld [vmem:[%s5077 + $0x40] sm:$0xff]
      %v5778 = vld [vmem:[%s5077 + $0x48] sm:$0xff]
      %v5779 = vld [vmem:[%s5077 + $0x50] sm:$0xff]
      %v5780 = vld [vmem:[%s5077 + $0x58] sm:$0xff]
      %v5781 = vld [vmem:[%s5077 + $0x60] sm:$0xff]
      %v5782 = vld [vmem:[%s5077 + $0x68] sm:$0xff]
      %v5783 = vld [vmem:[%s5077 + $0x70] sm:$0xff]
      %v5784 = vld [vmem:[%s5077 + $0x78] sm:$0xff]
      %v5785 = vld [vmem:[%s5077 + $0x80] sm:$0xff]
      %v5786 = vld [vmem:[%s5077 + $0x88] sm:$0xff]
      %v5787 = vld [vmem:[%s5077 + $0x90] sm:$0xff]
      %v5788 = vld [vmem:[%s5077 + $0x98] sm:$0xff]
      %v5789 = vld [vmem:[%s5077 + $0xa0] sm:$0xff]
      %v5790 = vld [vmem:[%s5077 + $0xa8] sm:$0xff]
      %v5791 = vld [vmem:[%s5077 + $0xb0] sm:$0xff]
      %v5792 = vld [vmem:[%s5077 + $0xb8] sm:$0xff]
      %v5793 = vpack.c.bf16 %v5770, %v5769
      %v5794 = vpack.c.bf16 %v5772, %v5771
      %v5795 = vpack.c.bf16 %v5774, %v5773
      %v5796 = vpack.c.bf16 %v5776, %v5775
      %v5797 = vpack.c.bf16 %v5778, %v5777
      %v5798 = vpack.c.bf16 %v5780, %v5779
      %v5799 = vpack.c.bf16 %v5782, %v5781
      %v5800 = vpack.c.bf16 %v5784, %v5783
      %v5801 = vpack.c.bf16 %v5786, %v5785
      %v5802 = vpack.c.bf16 %v5788, %v5787
      %v5803 = vpack.c.bf16 %v5790, %v5789
      %v5804 = vpack.c.bf16 %v5792, %v5791
      %v5806 = vsel %vm2292, %v5754, 0
      %v5809 = vsel %vm2292, %v5756, 0
      %v5812 = vsel %vm2292, %v5758, 0
      %v5815 = vsel %vm2292, %v5760, 0
      %v5818 = vsel %vm2292, %v5762, 0
      %v5821 = vsel %vm2292, %v5764, 0
      %v5824 = vsel %vm2292, %v5766, 0
      %v5827 = vsel %vm2292, %v5768, 0
      %5829 = vmatprep.subr.bf16.mxu0 0
      %5830 = vmatpush1.bf16.msra.mxu0 %v5793
      %5831 = vmatprep.subr.bf16.mxu0 0
      %5832 = vmatpush1.bf16.msra.mxu0 %v5794
      %5833 = vmatprep.subr.bf16.mxu0 0
      %5834 = vmatpush1.bf16.msra.mxu0 %v5795
      %5835 = vmatprep.subr.bf16.mxu0 0
      %5836 = vmatpush1.bf16.msra.mxu0 %v5796
      %5837 = vmatprep.subr.bf16.mxu0 0
      %5838 = vmatpush1.bf16.msra.mxu0 %v5797
      %5839 = vmatprep.subr.bf16.mxu0 0
      %5840 = vmatpush1.bf16.msra.mxu0 %v5798
      %5841 = vmatprep.subr.bf16.mxu0 0
      %5842 = vmatpush1.bf16.msra.mxu0 %v5799
      %5843 = vmatprep.subr.bf16.mxu0 0
      %5844 = vmatpush1.bf16.msra.mxu0 %v5800
      %5845 = vmatprep.subr.bf16.mxu0 0
      %5846 = vmatpush1.bf16.msra.mxu0 %v5801
      %5847 = vmatprep.subr.bf16.mxu0 0
      %5848 = vmatpush1.bf16.msra.mxu0 %v5802
      %5849 = vmatprep.subr.bf16.mxu0 0
      %5850 = vmatpush1.bf16.msra.mxu0 %v5803
      %5851 = vmatprep.subr.bf16.mxu0 0
      %5852 = vmatpush1.bf16.msra.mxu0 %v5804
      %5853 = vmatprep.subr.bf16.mxu0 0
      %5854 = vmatpush1.bf16.msra.mxu0 0
      %5855 = vmatprep.subr.bf16.mxu0 0
      %5856 = vmatpush1.bf16.msra.mxu0 0
      %5857 = vmatprep.subr.bf16.mxu0 0
      %5858 = vmatpush1.bf16.msra.mxu0 0
      %5859 = vmatprep.subr.bf16.mxu0 0
      %5860 = vmatpush1.bf16.msra.mxu0 0
      %5861 = vmatprep.mubr.bf16.mxu0 %v5806
      %5862 = vmatmul.mubr.bf16.gmra.mrb[0].mxu0 %v5753
      %v5863 = vpop.f32.mrb[0].mxu0
      %v5864 = vadd.f32 0.0, %v5863
      %v5865 = vpop.f32.mrb[0].mxu0
      %v5866 = vpop.f32.mrb[0].mxu0
      %v5867 = vadd.f32 0.0, %v5866
      %v5868 = vpop.f32.mrb[0].mxu0
      %5869 = vmatprep.mubr.bf16.mxu0 %v5809
      %5870 = vmatmul.mubr.bf16.gmra.mrb[0].mxu0 %v5755
      %v5871 = vpop.f32.mrb[0].mxu0
      %v5872 = vadd.f32 0.0, %v5871
      %v5873 = vpop.f32.mrb[0].mxu0
      %v5874 = vpop.f32.mrb[0].mxu0
      %v5875 = vadd.f32 0.0, %v5874
      %v5876 = vpop.f32.mrb[0].mxu0
      %5877 = vmatprep.mubr.bf16.mxu0 %v5812
      %5878 = vmatmul.mubr.bf16.gmra.mrb[0].mxu0 %v5757
      %v5879 = vpop.f32.mrb[0].mxu0
      %v5880 = vadd.f32 0.0, %v5879
      %v5881 = vpop.f32.mrb[0].mxu0
      %v5882 = vpop.f32.mrb[0].mxu0
      %v5883 = vadd.f32 0.0, %v5882
      %v5884 = vpop.f32.mrb[0].mxu0
      %5885 = vmatprep.mubr.bf16.mxu0 %v5815
      %5886 = vmatmul.mubr.bf16.gmra.mrb[0].mxu0 %v5759
      %v5887 = vpop.f32.mrb[0].mxu0
      %v5888 = vadd.f32 0.0, %v5887
      %v5889 = vpop.f32.mrb[0].mxu0
      %v5890 = vpop.f32.mrb[0].mxu0
      %v5891 = vadd.f32 0.0, %v5890
      %v5892 = vpop.f32.mrb[0].mxu0
      %5893 = vmatprep.mubr.bf16.mxu0 %v5818
      %5894 = vmatmul.mubr.bf16.gmra.mrb[0].mxu0 %v5761
      %v5895 = vpop.f32.mrb[0].mxu0
      %v5896 = vadd.f32 0.0, %v5895
      %v5897 = vpop.f32.mrb[0].mxu0
      %v5898 = vpop.f32.mrb[0].mxu0
      %v5899 = vadd.f32 0.0, %v5898
      %v5900 = vpop.f32.mrb[0].mxu0
      %5901 = vmatprep.mubr.bf16.mxu0 %v5821
      %5902 = vmatmul.mubr.bf16.gmra.mrb[0].mxu0 %v5763
      %v5903 = vpop.f32.mrb[0].mxu0
      %v5904 = vadd.f32 0.0, %v5903
      %v5905 = vpop.f32.mrb[0].mxu0
      %v5906 = vpop.f32.mrb[0].mxu0
      %v5907 = vadd.f32 0.0, %v5906
      %v5908 = vpop.f32.mrb[0].mxu0
      %5909 = vmatprep.mubr.bf16.mxu0 %v5824
      %5910 = vmatmul.mubr.bf16.gmra.mrb[0].mxu0 %v5765
      %v5911 = vpop.f32.mrb[0].mxu0
      %v5912 = vadd.f32 0.0, %v5911
      %v5913 = vpop.f32.mrb[0].mxu0
      %v5914 = vpop.f32.mrb[0].mxu0
      %v5915 = vadd.f32 0.0, %v5914
      %v5916 = vpop.f32.mrb[0].mxu0
      %5917 = vmatprep.mubr.bf16.mxu0 %v5827
      %5918 = vmatmul.mubr.bf16.gmra.mrb[0].mxu0 %v5767
      %v5919 = vpop.f32.mrb[0].mxu0
      %v5920 = vadd.f32 0.0, %v5919
      %v5921 = vpop.f32.mrb[0].mxu0
      %v5922 = vpop.f32.mrb[0].mxu0
      %v5923 = vadd.f32 0.0, %v5922
      %v5924 = vpop.f32.mrb[0].mxu0
      %5925 = vdwg.mxu0
      %v5927 = vsel %vm2292, %v5669, 0
      %v5930 = vsel %vm2292, %v5671, 0
      %v5933 = vsel %vm2292, %v5673, 0
      %v5936 = vsel %vm2292, %v5675, 0
      %v5939 = vsel %vm2292, %v5677, 0
      %v5942 = vsel %vm2292, %v5679, 0
      %v5945 = vsel %vm2292, %v5681, 0
      %v5948 = vsel %vm2292, %v5683, 0
      %5950 = vmatprep.subr.bf16.mxu0 0
      %5951 = vmatpush1.bf16.msra.mxu0 %v5708
      %5952 = vmatprep.subr.bf16.mxu0 0
      %5953 = vmatpush1.bf16.msra.mxu0 %v5709
      %5954 = vmatprep.subr.bf16.mxu0 0
      %5955 = vmatpush1.bf16.msra.mxu0 %v5710
      %5956 = vmatprep.subr.bf16.mxu0 0
      %5957 = vmatpush1.bf16.msra.mxu0 %v5711
      %5958 = vmatprep.subr.bf16.mxu0 0
      %5959 = vmatpush1.bf16.msra.mxu0 %v5712
      %5960 = vmatprep.subr.bf16.mxu0 0
      %5961 = vmatpush1.bf16.msra.mxu0 %v5713
      %5962 = vmatprep.subr.bf16.mxu0 0
      %5963 = vmatpush1.bf16.msra.mxu0 %v5714
      %5964 = vmatprep.subr.bf16.mxu0 0
      %5965 = vmatpush1.bf16.msra.mxu0 %v5715
      %5966 = vmatprep.subr.bf16.mxu0 0
      %5967 = vmatpush1.bf16.msra.mxu0 %v5716
      %5968 = vmatprep.subr.bf16.mxu0 0
      %5969 = vmatpush1.bf16.msra.mxu0 %v5717
      %5970 = vmatprep.subr.bf16.mxu0 0
      %5971 = vmatpush1.bf16.msra.mxu0 %v5718
      %5972 = vmatprep.subr.bf16.mxu0 0
      %5973 = vmatpush1.bf16.msra.mxu0 %v5719
      %5974 = vmatprep.subr.bf16.mxu0 0
      %5975 = vmatpush1.bf16.msra.mxu0 0
      %5976 = vmatprep.subr.bf16.mxu0 0
      %5977 = vmatpush1.bf16.msra.mxu0 0
      %5978 = vmatprep.subr.bf16.mxu0 0
      %5979 = vmatpush1.bf16.msra.mxu0 0
      %5980 = vmatprep.subr.bf16.mxu0 0
      %5981 = vmatpush1.bf16.msra.mxu0 0
      %5982 = vmatprep.mubr.bf16.mxu0 %v5927
      %5983 = vmatmul.mubr.bf16.gmra.mrb[0].mxu0 %v5668
      %v5984 = vpop.f32.mrb[0].mxu0
      %v5985 = vadd.f32 %v5864, %v5984
      %v5986 = vpop.f32.mrb[0].mxu0
      %v5987 = vpop.f32.mrb[0].mxu0
      %v5988 = vadd.f32 %v5867, %v5987
      %v5989 = vpop.f32.mrb[0].mxu0
      %5990 = vmatprep.mubr.bf16.mxu0 %v5930
      %5991 = vmatmul.mubr.bf16.gmra.mrb[0].mxu0 %v5670
      %v5992 = vpop.f32.mrb[0].mxu0
      %v5993 = vadd.f32 %v5872, %v5992
      %v5994 = vpop.f32.mrb[0].mxu0
      %v5995 = vpop.f32.mrb[0].mxu0
      %v5996 = vadd.f32 %v5875, %v5995
      %v5997 = vpop.f32.mrb[0].mxu0
      %5998 = vmatprep.mubr.bf16.mxu0 %v5933
      %5999 = vmatmul.mubr.bf16.gmra.mrb[0].mxu0 %v5672
      %v6000 = vpop.f32.mrb[0].mxu0
      %v6001 = vadd.f32 %v5880, %v6000
      %v6002 = vpop.f32.mrb[0].mxu0
      %v6003 = vpop.f32.mrb[0].mxu0
      %v6004 = vadd.f32 %v5883, %v6003
      %v6005 = vpop.f32.mrb[0].mxu0
      %6006 = vmatprep.mubr.bf16.mxu0 %v5936
      %6007 = vmatmul.mubr.bf16.gmra.mrb[0].mxu0 %v5674
      %v6008 = vpop.f32.mrb[0].mxu0
      %v6009 = vadd.f32 %v5888, %v6008
      %v6010 = vpop.f32.mrb[0].mxu0
      %v6011 = vpop.f32.mrb[0].mxu0
      %v6012 = vadd.f32 %v5891, %v6011
      %v6013 = vpop.f32.mrb[0].mxu0
      %6014 = vmatprep.mubr.bf16.mxu0 %v5939
      %6015 = vmatmul.mubr.bf16.gmra.mrb[0].mxu0 %v5676
      %v6016 = vpop.f32.mrb[0].mxu0
      %v6017 = vadd.f32 %v5896, %v6016
      %v6018 = vpop.f32.mrb[0].mxu0
      %v6019 = vpop.f32.mrb[0].mxu0
      %v6020 = vadd.f32 %v5899, %v6019
      %v6021 = vpop.f32.mrb[0].mxu0
      %6022 = vmatprep.mubr.bf16.mxu0 %v5942
      %6023 = vmatmul.mubr.bf16.gmra.mrb[0].mxu0 %v5678
      %v6024 = vpop.f32.mrb[0].mxu0
      %v6025 = vadd.f32 %v5904, %v6024
      %v6026 = vpop.f32.mrb[0].mxu0
      %v6027 = vpop.f32.mrb[0].mxu0
      %v6028 = vadd.f32 %v5907, %v6027
      %v6029 = vpop.f32.mrb[0].mxu0
      %6030 = vmatprep.mubr.bf16.mxu0 %v5945
      %6031 = vmatmul.mubr.bf16.gmra.mrb[0].mxu0 %v5680
      %v6032 = vpop.f32.mrb[0].mxu0
      %v6033 = vadd.f32 %v5912, %v6032
      %v6034 = vpop.f32.mrb[0].mxu0
      %v6035 = vpop.f32.mrb[0].mxu0
      %v6036 = vadd.f32 %v5915, %v6035
      %v6037 = vpop.f32.mrb[0].mxu0
      %6038 = vmatprep.mubr.bf16.mxu0 %v5948
      %6039 = vmatmul.mubr.bf16.gmra.mrb[0].mxu0 %v5682
      %v6040 = vpop.f32.mrb[0].mxu0
      %v6041 = vadd.f32 %v5920, %v6040
      %v6042 = vpop.f32.mrb[0].mxu0
      %v6043 = vpop.f32.mrb[0].mxu0
      %v6044 = vadd.f32 %v5923, %v6043
      %v6045 = vpop.f32.mrb[0].mxu0
      %6046 = vdwg.mxu0
      %s6047 = scalar_lea.vmem [#allocation7], 320
      %v6048 = vld [vmem:[%s6047] sm:$0xff]
      %v6049 = vld [vmem:[%s6047 + $0x8] sm:$0xff]
      %v6050 = vld [vmem:[%s6047 + $0x10] sm:$0xff]
      %v6051 = vld [vmem:[%s6047 + $0x18] sm:$0xff]
      %v6052 = vld [vmem:[%s6047 + $0x20] sm:$0xff]
      %v6053 = vld [vmem:[%s6047 + $0x28] sm:$0xff]
      %v6054 = vld [vmem:[%s6047 + $0x30] sm:$0xff]
      %v6055 = vld [vmem:[%s6047 + $0x38] sm:$0xff]
      %v6056 = vld [vmem:[%s6047 + $0x40] sm:$0xff]
      %v6057 = vld [vmem:[%s6047 + $0x48] sm:$0xff]
      %v6058 = vld [vmem:[%s6047 + $0x50] sm:$0xff]
      %v6059 = vld [vmem:[%s6047 + $0x58] sm:$0xff]
      %v6060 = vld [vmem:[%s6047 + $0x60] sm:$0xff]
      %v6061 = vld [vmem:[%s6047 + $0x68] sm:$0xff]
      %v6062 = vld [vmem:[%s6047 + $0x70] sm:$0xff]
      %v6063 = vld [vmem:[%s6047 + $0x78] sm:$0xff]
      %v6064 = vld [vmem:[%s6047 + $0x80] sm:$0xff]
      %v6065 = vld [vmem:[%s6047 + $0x88] sm:$0xff]
      %v6066 = vld [vmem:[%s6047 + $0x90] sm:$0xff]
      %v6067 = vld [vmem:[%s6047 + $0x98] sm:$0xff]
      %v6068 = vld [vmem:[%s6047 + $0xa0] sm:$0xff]
      %v6069 = vld [vmem:[%s6047 + $0xa8] sm:$0xff]
      %v6070 = vld [vmem:[%s6047 + $0xb0] sm:$0xff]
      %v6071 = vld [vmem:[%s6047 + $0xb8] sm:$0xff]
      %v6072 = vld [vmem:[%s6047 + $0xc0] sm:$0xff]
      %v6073 = vld [vmem:[%s6047 + $0xc8] sm:$0xff]
      %v6074 = vld [vmem:[%s6047 + $0xd0] sm:$0xff]
      %v6075 = vld [vmem:[%s6047 + $0xd8] sm:$0xff]
      %v6076 = vld [vmem:[%s6047 + $0xe0] sm:$0xff]
      %v6077 = vld [vmem:[%s6047 + $0xe8] sm:$0xff]
      %v6078 = vld [vmem:[%s6047 + $0xf0] sm:$0xff]
      %v6079 = vld [vmem:[%s6047 + $0xf8] sm:$0xff]
      %v6080 = vpack.c.bf16 %v6050, %v6048
      %v6081 = vpack.c.bf16 %v6051, %v6049
      %v6082 = vpack.c.bf16 %v6054, %v6052
      %v6083 = vpack.c.bf16 %v6055, %v6053
      %v6084 = vpack.c.bf16 %v6058, %v6056
      %v6085 = vpack.c.bf16 %v6059, %v6057
      %v6086 = vpack.c.bf16 %v6062, %v6060
      %v6087 = vpack.c.bf16 %v6063, %v6061
      %v6088 = vpack.c.bf16 %v6066, %v6064
      %v6089 = vpack.c.bf16 %v6067, %v6065
      %v6090 = vpack.c.bf16 %v6070, %v6068
      %v6091 = vpack.c.bf16 %v6071, %v6069
      %v6092 = vpack.c.bf16 %v6074, %v6072
      %v6093 = vpack.c.bf16 %v6075, %v6073
      %v6094 = vpack.c.bf16 %v6078, %v6076
      %v6095 = vpack.c.bf16 %v6079, %v6077
      %v6096 = vld [vmem:[%s5405] sm:$0xff]
      %v6097 = vld [vmem:[%s5405 + $0x8] sm:$0xff]
      %v6098 = vld [vmem:[%s5405 + $0x10] sm:$0xff]
      %v6099 = vld [vmem:[%s5405 + $0x18] sm:$0xff]
      %v6100 = vld [vmem:[%s5405 + $0x20] sm:$0xff]
      %v6101 = vld [vmem:[%s5405 + $0x28] sm:$0xff]
      %v6102 = vld [vmem:[%s5405 + $0x30] sm:$0xff]
      %v6103 = vld [vmem:[%s5405 + $0x38] sm:$0xff]
      %v6104 = vld [vmem:[%s5405 + $0x40] sm:$0xff]
      %v6105 = vld [vmem:[%s5405 + $0x48] sm:$0xff]
      %v6106 = vld [vmem:[%s5405 + $0x50] sm:$0xff]
      %v6107 = vld [vmem:[%s5405 + $0x58] sm:$0xff]
      %v6108 = vld [vmem:[%s5405 + $0x60] sm:$0xff]
      %v6109 = vld [vmem:[%s5405 + $0x68] sm:$0xff]
      %v6110 = vld [vmem:[%s5405 + $0x70] sm:$0xff]
      %v6111 = vld [vmem:[%s5405 + $0x78] sm:$0xff]
      %v6112 = vld [vmem:[%s5405 + $0x80] sm:$0xff]
      %v6113 = vld [vmem:[%s5405 + $0x88] sm:$0xff]
      %v6114 = vld [vmem:[%s5405 + $0x90] sm:$0xff]
      %v6115 = vld [vmem:[%s5405 + $0x98] sm:$0xff]
      %v6116 = vld [vmem:[%s5405 + $0xa0] sm:$0xff]
      %v6117 = vld [vmem:[%s5405 + $0xa8] sm:$0xff]
      %v6118 = vld [vmem:[%s5405 + $0xb0] sm:$0xff]
      %v6119 = vld [vmem:[%s5405 + $0xb8] sm:$0xff]
      %v6120 = vpack.c.bf16 %v6097, %v6096
      %v6121 = vpack.c.bf16 %v6099, %v6098
      %v6122 = vpack.c.bf16 %v6101, %v6100
      %v6123 = vpack.c.bf16 %v6103, %v6102
      %v6124 = vpack.c.bf16 %v6105, %v6104
      %v6125 = vpack.c.bf16 %v6107, %v6106
      %v6126 = vpack.c.bf16 %v6109, %v6108
      %v6127 = vpack.c.bf16 %v6111, %v6110
      %v6128 = vpack.c.bf16 %v6113, %v6112
      %v6129 = vpack.c.bf16 %v6115, %v6114
      %v6130 = vpack.c.bf16 %v6117, %v6116
      %v6131 = vpack.c.bf16 %v6119, %v6118
      %v6133 = vsel %vm2292, %v6081, 0
      %v6136 = vsel %vm2292, %v6083, 0
      %v6139 = vsel %vm2292, %v6085, 0
      %v6142 = vsel %vm2292, %v6087, 0
      %v6145 = vsel %vm2292, %v6089, 0
      %v6148 = vsel %vm2292, %v6091, 0
      %v6151 = vsel %vm2292, %v6093, 0
      %v6154 = vsel %vm2292, %v6095, 0
      %6156 = vmatprep.subr.bf16.mxu0 0
      %6157 = vmatpush1.bf16.msra.mxu0 %v6120
      %6158 = vmatprep.subr.bf16.mxu0 0
      %6159 = vmatpush1.bf16.msra.mxu0 %v6121
      %6160 = vmatprep.subr.bf16.mxu0 0
      %6161 = vmatpush1.bf16.msra.mxu0 %v6122
      %6162 = vmatprep.subr.bf16.mxu0 0
      %6163 = vmatpush1.bf16.msra.mxu0 %v6123
      %6164 = vmatprep.subr.bf16.mxu0 0
      %6165 = vmatpush1.bf16.msra.mxu0 %v6124
      %6166 = vmatprep.subr.bf16.mxu0 0
      %6167 = vmatpush1.bf16.msra.mxu0 %v6125
      %6168 = vmatprep.subr.bf16.mxu0 0
      %6169 = vmatpush1.bf16.msra.mxu0 %v6126
      %6170 = vmatprep.subr.bf16.mxu0 0
      %6171 = vmatpush1.bf16.msra.mxu0 %v6127
      %6172 = vmatprep.subr.bf16.mxu0 0
      %6173 = vmatpush1.bf16.msra.mxu0 %v6128
      %6174 = vmatprep.subr.bf16.mxu0 0
      %6175 = vmatpush1.bf16.msra.mxu0 %v6129
      %6176 = vmatprep.subr.bf16.mxu0 0
      %6177 = vmatpush1.bf16.msra.mxu0 %v6130
      %6178 = vmatprep.subr.bf16.mxu0 0
      %6179 = vmatpush1.bf16.msra.mxu0 %v6131
      %6180 = vmatprep.subr.bf16.mxu0 0
      %6181 = vmatpush1.bf16.msra.mxu0 0
      %6182 = vmatprep.subr.bf16.mxu0 0
      %6183 = vmatpush1.bf16.msra.mxu0 0
      %6184 = vmatprep.subr.bf16.mxu0 0
      %6185 = vmatpush1.bf16.msra.mxu0 0
      %6186 = vmatprep.subr.bf16.mxu0 0
      %6187 = vmatpush1.bf16.msra.mxu0 0
      %6188 = vmatprep.mubr.bf16.mxu0 %v6133
      %6189 = vmatmul.mubr.bf16.gmra.mrb[0].mxu0 %v6080
      %v6190 = vpop.f32.mrb[0].mxu0
      %v6191 = vadd.f32 0.0, %v6190
      %v6192 = vpop.f32.mrb[0].mxu0
      %v6193 = vpop.f32.mrb[0].mxu0
      %v6194 = vadd.f32 0.0, %v6193
      %v6195 = vpop.f32.mrb[0].mxu0
      %6196 = vmatprep.mubr.bf16.mxu0 %v6136
      %6197 = vmatmul.mubr.bf16.gmra.mrb[0].mxu0 %v6082
      %v6198 = vpop.f32.mrb[0].mxu0
      %v6199 = vadd.f32 0.0, %v6198
      %v6200 = vpop.f32.mrb[0].mxu0
      %v6201 = vpop.f32.mrb[0].mxu0
      %v6202 = vadd.f32 0.0, %v6201
      %v6203 = vpop.f32.mrb[0].mxu0
      %6204 = vmatprep.mubr.bf16.mxu0 %v6139
      %6205 = vmatmul.mubr.bf16.gmra.mrb[0].mxu0 %v6084
      %v6206 = vpop.f32.mrb[0].mxu0
      %v6207 = vadd.f32 0.0, %v6206
      %v6208 = vpop.f32.mrb[0].mxu0
      %v6209 = vpop.f32.mrb[0].mxu0
      %v6210 = vadd.f32 0.0, %v6209
      %v6211 = vpop.f32.mrb[0].mxu0
      %6212 = vmatprep.mubr.bf16.mxu0 %v6142
      %6213 = vmatmul.mubr.bf16.gmra.mrb[0].mxu0 %v6086
      %v6214 = vpop.f32.mrb[0].mxu0
      %v6215 = vadd.f32 0.0, %v6214
      %v6216 = vpop.f32.mrb[0].mxu0
      %v6217 = vpop.f32.mrb[0].mxu0
      %v6218 = vadd.f32 0.0, %v6217
      %v6219 = vpop.f32.mrb[0].mxu0
      %6220 = vmatprep.mubr.bf16.mxu0 %v6145
      %6221 = vmatmul.mubr.bf16.gmra.mrb[0].mxu0 %v6088
      %v6222 = vpop.f32.mrb[0].mxu0
      %v6223 = vadd.f32 0.0, %v6222
      %v6224 = vpop.f32.mrb[0].mxu0
      %v6225 = vpop.f32.mrb[0].mxu0
      %v6226 = vadd.f32 0.0, %v6225
      %v6227 = vpop.f32.mrb[0].mxu0
      %6228 = vmatprep.mubr.bf16.mxu0 %v6148
      %6229 = vmatmul.mubr.bf16.gmra.mrb[0].mxu0 %v6090
      %v6230 = vpop.f32.mrb[0].mxu0
      %v6231 = vadd.f32 0.0, %v6230
      %v6232 = vpop.f32.mrb[0].mxu0
      %v6233 = vpop.f32.mrb[0].mxu0
      %v6234 = vadd.f32 0.0, %v6233
      %v6235 = vpop.f32.mrb[0].mxu0
      %6236 = vmatprep.mubr.bf16.mxu0 %v6151
      %6237 = vmatmul.mubr.bf16.gmra.mrb[0].mxu0 %v6092
      %v6238 = vpop.f32.mrb[0].mxu0
      %v6239 = vadd.f32 0.0, %v6238
      %v6240 = vpop.f32.mrb[0].mxu0
      %v6241 = vpop.f32.mrb[0].mxu0
      %v6242 = vadd.f32 0.0, %v6241
      %v6243 = vpop.f32.mrb[0].mxu0
      %6244 = vmatprep.mubr.bf16.mxu0 %v6154
      %6245 = vmatmul.mubr.bf16.gmra.mrb[0].mxu0 %v6094
      %v6246 = vpop.f32.mrb[0].mxu0
      %v6247 = vadd.f32 0.0, %v6246
      %v6248 = vpop.f32.mrb[0].mxu0
      %v6249 = vpop.f32.mrb[0].mxu0
      %v6250 = vadd.f32 0.0, %v6249
      %v6251 = vpop.f32.mrb[0].mxu0
      %6252 = vdwg.mxu0
      %v6253 = vadd.f32 %v5985, %v6191
      %v6254 = vadd.f32 %v5988, %v6194
      %v6255 = vadd.f32 %v5993, %v6199
      %v6256 = vadd.f32 %v5996, %v6202
      %v6257 = vadd.f32 %v6001, %v6207
      %v6258 = vadd.f32 %v6004, %v6210
      %v6259 = vadd.f32 %v6009, %v6215
      %v6260 = vadd.f32 %v6012, %v6218
      %v6261 = vadd.f32 %v6017, %v6223
      %v6262 = vadd.f32 %v6020, %v6226
      %v6263 = vadd.f32 %v6025, %v6231
      %v6264 = vadd.f32 %v6028, %v6234
      %v6265 = vadd.f32 %v6033, %v6239
      %v6266 = vadd.f32 %v6036, %v6242
      %v6267 = vadd.f32 %v6041, %v6247
      %v6268 = vadd.f32 %v6044, %v6250
      %v6269 = vld [vmem:[%s6] sm:$0x1]
      %v6271 = vlaneseq
      %v6272 = vshrl.u32 %v6271, 7
      %v6273 = vsub.s32 0, %v6272
      %v6274 = vrot.slane %v6269, %v6273
      %v6276 = vadd.f32 %v6253, %v6274
      %v6277 = vadd.f32 %v6254, %v6274
      %v6278 = vadd.f32 %v6255, %v6274
      %v6279 = vadd.f32 %v6256, %v6274
      %v6280 = vadd.f32 %v6257, %v6274
      %v6281 = vadd.f32 %v6258, %v6274
      %v6282 = vadd.f32 %v6259, %v6274
      %v6283 = vadd.f32 %v6260, %v6274
      %v6284 = vadd.f32 %v6261, %v6274
      %v6285 = vadd.f32 %v6262, %v6274
      %v6286 = vadd.f32 %v6263, %v6274
      %v6287 = vadd.f32 %v6264, %v6274
      %v6288 = vadd.f32 %v6265, %v6274
      %v6289 = vadd.f32 %v6266, %v6274
      %v6290 = vadd.f32 %v6267, %v6274
      %v6291 = vadd.f32 %v6268, %v6274
      %v6292 = vmax.f32 %v6276, 0.0
      %v6293 = vmax.f32 %v6277, 0.0
      %v6294 = vmax.f32 %v6278, 0.0
      %v6295 = vmax.f32 %v6279, 0.0
      %v6296 = vmax.f32 %v6280, 0.0
      %v6297 = vmax.f32 %v6281, 0.0
      %v6298 = vmax.f32 %v6282, 0.0
      %v6299 = vmax.f32 %v6283, 0.0
      %v6300 = vmax.f32 %v6284, 0.0
      %v6301 = vmax.f32 %v6285, 0.0
      %v6302 = vmax.f32 %v6286, 0.0
      %v6303 = vmax.f32 %v6287, 0.0
      %v6304 = vmax.f32 %v6288, 0.0
      %v6305 = vmax.f32 %v6289, 0.0
      %v6306 = vmax.f32 %v6290, 0.0
      %v6307 = vmax.f32 %v6291, 0.0
      %s6308 = scalar_lea.vmem [#allocation8], 216
      %6309 = vst.msk [vmem:[%s6308 + $0x1] sm:$0xff] %vm4888, %v6292
      %6310 = vst.msk [vmem:[%s6308 + $0x9] sm:$0xff] %vm4888, %v6293
      %6311 = vst.msk [vmem:[%s6308 + $0x19] sm:$0xff] %vm4888, %v6294
      %6312 = vst.msk [vmem:[%s6308 + $0x21] sm:$0xff] %vm4888, %v6295
      %6313 = vst.msk [vmem:[%s6308 + $0x31] sm:$0xff] %vm4888, %v6296
      %6314 = vst.msk [vmem:[%s6308 + $0x39] sm:$0xff] %vm4888, %v6297
      %6315 = vst.msk [vmem:[%s6308 + $0x49] sm:$0xff] %vm4888, %v6298
      %6316 = vst.msk [vmem:[%s6308 + $0x51] sm:$0xff] %vm4888, %v6299
      %6317 = vst.msk [vmem:[%s6308 + $0x61] sm:$0xff] %vm4888, %v6300
      %6318 = vst.msk [vmem:[%s6308 + $0x69] sm:$0xff] %vm4888, %v6301
      %6319 = vst.msk [vmem:[%s6308 + $0x79] sm:$0xff] %vm4888, %v6302
      %6320 = vst.msk [vmem:[%s6308 + $0x81] sm:$0xff] %vm4888, %v6303
      %6321 = vst.msk [vmem:[%s6308 + $0x91] sm:$0xff] %vm4888, %v6304
      %6322 = vst.msk [vmem:[%s6308 + $0x99] sm:$0xff] %vm4888, %v6305
      %6323 = vst.msk [vmem:[%s6308 + $0xa9] sm:$0xff] %vm4888, %v6306
      %6324 = vst.msk [vmem:[%s6308 + $0xb1] sm:$0xff] %vm4888, %v6307
      %v6325 = vld [vmem:[#allocation8] sm:$0xff]
      %v6326 = vld [vmem:[#allocation8 + $0x8] sm:$0xff]
      %v6327 = vld [vmem:[#allocation8 + $0x18] sm:$0xff]
      %v6328 = vld [vmem:[#allocation8 + $0x20] sm:$0xff]
      %v6329 = vld [vmem:[#allocation8 + $0x30] sm:$0xff]
      %v6330 = vld [vmem:[#allocation8 + $0x38] sm:$0xff]
      %v6331 = vld [vmem:[#allocation8 + $0x48] sm:$0xff]
      %v6332 = vld [vmem:[#allocation8 + $0x50] sm:$0xff]
      %v6333 = vld [vmem:[#allocation8 + $0x60] sm:$0xff]
      %v6334 = vld [vmem:[#allocation8 + $0x68] sm:$0xff]
      %v6335 = vld [vmem:[#allocation8 + $0x78] sm:$0xff]
      %v6336 = vld [vmem:[#allocation8 + $0x80] sm:$0xff]
      %v6337 = vld [vmem:[#allocation8 + $0x90] sm:$0xff]
      %v6338 = vld [vmem:[#allocation8 + $0x98] sm:$0xff]
      %v6339 = vld [vmem:[#allocation8 + $0xa8] sm:$0xff]
      %v6340 = vld [vmem:[#allocation8 + $0xb0] sm:$0xff]
      %v6341 = vld [vmem:[#allocation8 + $0xc0] sm:$0xff]
      %v6342 = vld [vmem:[#allocation8 + $0xc8] sm:$0xff]
      %v6343 = vld [vmem:[#allocation8 + $0xd8] sm:$0xff]
      %v6344 = vld [vmem:[#allocation8 + $0xe0] sm:$0xff]
      %v6345 = vld [vmem:[#allocation8 + $0xf0] sm:$0xff]
      %v6346 = vld [vmem:[#allocation8 + $0xf8] sm:$0xff]
      %v6347 = vld [vmem:[#allocation8 + $0x108] sm:$0xff]
      %v6348 = vld [vmem:[#allocation8 + $0x110] sm:$0xff]
      %v6349 = vld [vmem:[#allocation8 + $0x120] sm:$0xff]
      %v6350 = vld [vmem:[#allocation8 + $0x128] sm:$0xff]
      %v6351 = vld [vmem:[#allocation8 + $0x138] sm:$0xff]
      %v6352 = vld [vmem:[#allocation8 + $0x140] sm:$0xff]
      %v6353 = vld [vmem:[#allocation8 + $0x150] sm:$0xff]
      %v6354 = vld [vmem:[#allocation8 + $0x158] sm:$0xff]
      %v6355 = vld [vmem:[#allocation8 + $0x168] sm:$0xff]
      %v6356 = vld [vmem:[#allocation8 + $0x170] sm:$0xff]
      %v6357 = vld [vmem:[#allocation8 + $0x180] sm:$0xff]
      %v6358 = vld [vmem:[#allocation8 + $0x188] sm:$0xff]
      %v6359 = vld [vmem:[#allocation8 + $0x198] sm:$0xff]
      %v6360 = vld [vmem:[#allocation8 + $0x1a0] sm:$0xff]
      %6361 = vst.msk [vmem:[#allocation9] sm:$0xff] %vm4888, %v6325
      %6362 = vst.msk [vmem:[#allocation9 + $0x8] sm:$0xff] %vm4888, %v6326
      %6363 = vst.msk [vmem:[#allocation9 + $0x10] sm:$0xff] %vm4888, %v6327
      %6364 = vst.msk [vmem:[#allocation9 + $0x18] sm:$0xff] %vm4888, %v6328
      %6365 = vst.msk [vmem:[#allocation9 + $0x20] sm:$0xff] %vm4888, %v6329
      %6366 = vst.msk [vmem:[#allocation9 + $0x28] sm:$0xff] %vm4888, %v6330
      %6367 = vst.msk [vmem:[#allocation9 + $0x30] sm:$0xff] %vm4888, %v6331
      %6368 = vst.msk [vmem:[#allocation9 + $0x38] sm:$0xff] %vm4888, %v6332
      %6369 = vst.msk [vmem:[#allocation9 + $0x40] sm:$0xff] %vm4888, %v6333
      %6370 = vst.msk [vmem:[#allocation9 + $0x48] sm:$0xff] %vm4888, %v6334
      %6371 = vst.msk [vmem:[#allocation9 + $0x50] sm:$0xff] %vm4888, %v6335
      %6372 = vst.msk [vmem:[#allocation9 + $0x58] sm:$0xff] %vm4888, %v6336
      %6373 = vst.msk [vmem:[#allocation9 + $0x60] sm:$0xff] %vm4888, %v6337
      %6374 = vst.msk [vmem:[#allocation9 + $0x68] sm:$0xff] %vm4888, %v6338
      %6375 = vst.msk [vmem:[#allocation9 + $0x70] sm:$0xff] %vm4888, %v6339
      %6376 = vst.msk [vmem:[#allocation9 + $0x78] sm:$0xff] %vm4888, %v6340
      %6377 = vst.msk [vmem:[#allocation9 + $0x80] sm:$0xff] %vm4888, %v6341
      %6378 = vst.msk [vmem:[#allocation9 + $0x88] sm:$0xff] %vm4888, %v6342
      %6379 = vst.msk [vmem:[#allocation9 + $0x90] sm:$0xff] %vm4888, %v6343
      %6380 = vst.msk [vmem:[#allocation9 + $0x98] sm:$0xff] %vm4888, %v6344
      %6381 = vst.msk [vmem:[#allocation9 + $0xa0] sm:$0xff] %vm4888, %v6345
      %6382 = vst.msk [vmem:[#allocation9 + $0xa8] sm:$0xff] %vm4888, %v6346
      %6383 = vst.msk [vmem:[#allocation9 + $0xb0] sm:$0xff] %vm4888, %v6347
      %6384 = vst.msk [vmem:[#allocation9 + $0xb8] sm:$0xff] %vm4888, %v6348
      %6385 = vst.msk [vmem:[#allocation9 + $0xc0] sm:$0xff] %vm4888, %v6349
      %6386 = vst.msk [vmem:[#allocation9 + $0xc8] sm:$0xff] %vm4888, %v6350
      %6387 = vst.msk [vmem:[#allocation9 + $0xd0] sm:$0xff] %vm4888, %v6351
      %6388 = vst.msk [vmem:[#allocation9 + $0xd8] sm:$0xff] %vm4888, %v6352
      %6389 = vst.msk [vmem:[#allocation9 + $0xe0] sm:$0xff] %vm4888, %v6353
      %6390 = vst.msk [vmem:[#allocation9 + $0xe8] sm:$0xff] %vm4888, %v6354
      %6391 = vst.msk [vmem:[#allocation9 + $0xf0] sm:$0xff] %vm4888, %v6355
      %6392 = vst.msk [vmem:[#allocation9 + $0xf8] sm:$0xff] %vm4888, %v6356
      %6393 = vst.msk [vmem:[#allocation9 + $0x100] sm:$0xff] %vm4888, %v6357
      %6394 = vst.msk [vmem:[#allocation9 + $0x108] sm:$0xff] %vm4888, %v6358
      %6395 = vst.msk [vmem:[#allocation9 + $0x110] sm:$0xff] %vm4888, %v6359
      %6396 = vst.msk [vmem:[#allocation9 + $0x118] sm:$0xff] %vm4888, %v6360
      %v6397 = vld [vmem:[#allocation8 + $0x1] sm:$0xff]
      %v6398 = vld [vmem:[#allocation8 + $0x9] sm:$0xff]
      %v6399 = vld [vmem:[#allocation8 + $0x19] sm:$0xff]
      %v6400 = vld [vmem:[#allocation8 + $0x21] sm:$0xff]
      %v6401 = vld [vmem:[#allocation8 + $0x31] sm:$0xff]
      %v6402 = vld [vmem:[#allocation8 + $0x39] sm:$0xff]
      %v6403 = vld [vmem:[#allocation8 + $0x49] sm:$0xff]
      %v6404 = vld [vmem:[#allocation8 + $0x51] sm:$0xff]
      %v6405 = vld [vmem:[#allocation8 + $0x61] sm:$0xff]
      %v6406 = vld [vmem:[#allocation8 + $0x69] sm:$0xff]
      %v6407 = vld [vmem:[#allocation8 + $0x79] sm:$0xff]
      %v6408 = vld [vmem:[#allocation8 + $0x81] sm:$0xff]
      %v6409 = vld [vmem:[#allocation8 + $0x91] sm:$0xff]
      %v6410 = vld [vmem:[#allocation8 + $0x99] sm:$0xff]
      %v6411 = vld [vmem:[#allocation8 + $0xa9] sm:$0xff]
      %v6412 = vld [vmem:[#allocation8 + $0xb1] sm:$0xff]
      %v6413 = vld [vmem:[#allocation8 + $0xc1] sm:$0xff]
      %v6414 = vld [vmem:[#allocation8 + $0xc9] sm:$0xff]
      %v6415 = vld [vmem:[#allocation8 + $0xd9] sm:$0xff]
      %v6416 = vld [vmem:[#allocation8 + $0xe1] sm:$0xff]
      %v6417 = vld [vmem:[#allocation8 + $0xf1] sm:$0xff]
      %v6418 = vld [vmem:[#allocation8 + $0xf9] sm:$0xff]
      %v6419 = vld [vmem:[#allocation8 + $0x109] sm:$0xff]
      %v6420 = vld [vmem:[#allocation8 + $0x111] sm:$0xff]
      %v6421 = vld [vmem:[#allocation8 + $0x121] sm:$0xff]
      %v6422 = vld [vmem:[#allocation8 + $0x129] sm:$0xff]
      %v6423 = vld [vmem:[#allocation8 + $0x139] sm:$0xff]
      %v6424 = vld [vmem:[#allocation8 + $0x141] sm:$0xff]
      %v6425 = vld [vmem:[#allocation8 + $0x151] sm:$0xff]
      %v6426 = vld [vmem:[#allocation8 + $0x159] sm:$0xff]
      %v6427 = vld [vmem:[#allocation8 + $0x169] sm:$0xff]
      %v6428 = vld [vmem:[#allocation8 + $0x171] sm:$0xff]
      %v6429 = vld [vmem:[#allocation8 + $0x181] sm:$0xff]
      %v6430 = vld [vmem:[#allocation8 + $0x189] sm:$0xff]
      %v6431 = vld [vmem:[#allocation8 + $0x199] sm:$0xff]
      %v6432 = vld [vmem:[#allocation8 + $0x1a1] sm:$0xff]
      %6469 = vrot.lane.b32.xlu0 %v6397, 16
      %v6470 = vpop.permute.xlu0 %6469
      %6471 = vrot.lane.b32.xlu0 %v6398, 16
      %v6472 = vpop.permute.xlu0 %6471
      %6473 = vrot.lane.b32.xlu0 %v6399, 16
      %v6474 = vpop.permute.xlu0 %6473
      %6475 = vrot.lane.b32.xlu0 %v6400, 16
      %v6476 = vpop.permute.xlu0 %6475
      %6477 = vrot.lane.b32.xlu0 %v6401, 16
      %v6478 = vpop.permute.xlu0 %6477
      %6479 = vrot.lane.b32.xlu0 %v6402, 16
      %v6480 = vpop.permute.xlu0 %6479
      %6481 = vrot.lane.b32.xlu0 %v6403, 16
      %v6482 = vpop.permute.xlu0 %6481
      %6483 = vrot.lane.b32.xlu0 %v6404, 16
      %v6484 = vpop.permute.xlu0 %6483
      %6485 = vrot.lane.b32.xlu0 %v6405, 16
      %v6486 = vpop.permute.xlu0 %6485
      %6487 = vrot.lane.b32.xlu0 %v6406, 16
      %v6488 = vpop.permute.xlu0 %6487
      %6489 = vrot.lane.b32.xlu0 %v6407, 16
      %v6490 = vpop.permute.xlu0 %6489
      %6491 = vrot.lane.b32.xlu0 %v6408, 16
      %v6492 = vpop.permute.xlu0 %6491
      %6493 = vrot.lane.b32.xlu0 %v6409, 16
      %v6494 = vpop.permute.xlu0 %6493
      %6495 = vrot.lane.b32.xlu0 %v6410, 16
      %v6496 = vpop.permute.xlu0 %6495
      %6497 = vrot.lane.b32.xlu0 %v6411, 16
      %v6498 = vpop.permute.xlu0 %6497
      %6499 = vrot.lane.b32.xlu0 %v6412, 16
      %v6500 = vpop.permute.xlu0 %6499
      %6501 = vrot.lane.b32.xlu0 %v6413, 16
      %v6502 = vpop.permute.xlu0 %6501
      %6503 = vrot.lane.b32.xlu0 %v6414, 16
      %v6504 = vpop.permute.xlu0 %6503
      %6505 = vrot.lane.b32.xlu0 %v6415, 16
      %v6506 = vpop.permute.xlu0 %6505
      %6507 = vrot.lane.b32.xlu0 %v6416, 16
      %v6508 = vpop.permute.xlu0 %6507
      %6509 = vrot.lane.b32.xlu0 %v6417, 16
      %v6510 = vpop.permute.xlu0 %6509
      %6511 = vrot.lane.b32.xlu0 %v6418, 16
      %v6512 = vpop.permute.xlu0 %6511
      %6513 = vrot.lane.b32.xlu0 %v6419, 16
      %v6514 = vpop.permute.xlu0 %6513
      %6515 = vrot.lane.b32.xlu0 %v6420, 16
      %v6516 = vpop.permute.xlu0 %6515
      %6517 = vrot.lane.b32.xlu0 %v6421, 16
      %v6518 = vpop.permute.xlu0 %6517
      %6519 = vrot.lane.b32.xlu0 %v6422, 16
      %v6520 = vpop.permute.xlu0 %6519
      %6521 = vrot.lane.b32.xlu0 %v6423, 16
      %v6522 = vpop.permute.xlu0 %6521
      %6523 = vrot.lane.b32.xlu0 %v6424, 16
      %v6524 = vpop.permute.xlu0 %6523
      %6525 = vrot.lane.b32.xlu0 %v6425, 16
      %v6526 = vpop.permute.xlu0 %6525
      %6527 = vrot.lane.b32.xlu0 %v6426, 16
      %v6528 = vpop.permute.xlu0 %6527
      %6529 = vrot.lane.b32.xlu0 %v6427, 16
      %v6530 = vpop.permute.xlu0 %6529
      %6531 = vrot.lane.b32.xlu0 %v6428, 16
      %v6532 = vpop.permute.xlu0 %6531
      %6533 = vrot.lane.b32.xlu0 %v6429, 16
      %v6534 = vpop.permute.xlu0 %6533
      %6535 = vrot.lane.b32.xlu0 %v6430, 16
      %v6536 = vpop.permute.xlu0 %6535
      %6537 = vrot.lane.b32.xlu0 %v6431, 16
      %v6538 = vpop.permute.xlu0 %6537
      %6539 = vrot.lane.b32.xlu0 %v6432, 16
      %v6540 = vpop.permute.xlu0 %6539
      %vm6577 = vcmask 261248
      %6578 = vst.msk [vmem:[#allocation9] sm:$0xff] %vm6577, %v6470
      %6579 = vst.msk [vmem:[#allocation9 + $0x8] sm:$0xff] %vm6577, %v6472
      %6580 = vst.msk [vmem:[#allocation9 + $0x10] sm:$0xff] %vm6577, %v6474
      %6581 = vst.msk [vmem:[#allocation9 + $0x18] sm:$0xff] %vm6577, %v6476
      %6582 = vst.msk [vmem:[#allocation9 + $0x20] sm:$0xff] %vm6577, %v6478
      %6583 = vst.msk [vmem:[#allocation9 + $0x28] sm:$0xff] %vm6577, %v6480
      %6584 = vst.msk [vmem:[#allocation9 + $0x30] sm:$0xff] %vm6577, %v6482
      %6585 = vst.msk [vmem:[#allocation9 + $0x38] sm:$0xff] %vm6577, %v6484
      %6586 = vst.msk [vmem:[#allocation9 + $0x40] sm:$0xff] %vm6577, %v6486
      %6587 = vst.msk [vmem:[#allocation9 + $0x48] sm:$0xff] %vm6577, %v6488
      %6588 = vst.msk [vmem:[#allocation9 + $0x50] sm:$0xff] %vm6577, %v6490
      %6589 = vst.msk [vmem:[#allocation9 + $0x58] sm:$0xff] %vm6577, %v6492
      %6590 = vst.msk [vmem:[#allocation9 + $0x60] sm:$0xff] %vm6577, %v6494
      %6591 = vst.msk [vmem:[#allocation9 + $0x68] sm:$0xff] %vm6577, %v6496
      %6592 = vst.msk [vmem:[#allocation9 + $0x70] sm:$0xff] %vm6577, %v6498
      %6593 = vst.msk [vmem:[#allocation9 + $0x78] sm:$0xff] %vm6577, %v6500
      %6594 = vst.msk [vmem:[#allocation9 + $0x80] sm:$0xff] %vm6577, %v6502
      %6595 = vst.msk [vmem:[#allocation9 + $0x88] sm:$0xff] %vm6577, %v6504
      %6596 = vst.msk [vmem:[#allocation9 + $0x90] sm:$0xff] %vm6577, %v6506
      %6597 = vst.msk [vmem:[#allocation9 + $0x98] sm:$0xff] %vm6577, %v6508
      %6598 = vst.msk [vmem:[#allocation9 + $0xa0] sm:$0xff] %vm6577, %v6510
      %6599 = vst.msk [vmem:[#allocation9 + $0xa8] sm:$0xff] %vm6577, %v6512
      %6600 = vst.msk [vmem:[#allocation9 + $0xb0] sm:$0xff] %vm6577, %v6514
      %6601 = vst.msk [vmem:[#allocation9 + $0xb8] sm:$0xff] %vm6577, %v6516
      %6602 = vst.msk [vmem:[#allocation9 + $0xc0] sm:$0xff] %vm6577, %v6518
      %6603 = vst.msk [vmem:[#allocation9 + $0xc8] sm:$0xff] %vm6577, %v6520
      %6604 = vst.msk [vmem:[#allocation9 + $0xd0] sm:$0xff] %vm6577, %v6522
      %6605 = vst.msk [vmem:[#allocation9 + $0xd8] sm:$0xff] %vm6577, %v6524
      %6606 = vst.msk [vmem:[#allocation9 + $0xe0] sm:$0xff] %vm6577, %v6526
      %6607 = vst.msk [vmem:[#allocation9 + $0xe8] sm:$0xff] %vm6577, %v6528
      %6608 = vst.msk [vmem:[#allocation9 + $0xf0] sm:$0xff] %vm6577, %v6530
      %6609 = vst.msk [vmem:[#allocation9 + $0xf8] sm:$0xff] %vm6577, %v6532
      %6610 = vst.msk [vmem:[#allocation9 + $0x100] sm:$0xff] %vm6577, %v6534
      %6611 = vst.msk [vmem:[#allocation9 + $0x108] sm:$0xff] %vm6577, %v6536
      %6612 = vst.msk [vmem:[#allocation9 + $0x110] sm:$0xff] %vm6577, %v6538
      %6613 = vst.msk [vmem:[#allocation9 + $0x118] sm:$0xff] %vm6577, %v6540
      %v6614 = vld [vmem:[#allocation8 + $0x2] sm:$0xff]
      %v6615 = vld [vmem:[#allocation8 + $0xa] sm:$0xff]
      %v6616 = vld [vmem:[#allocation8 + $0x1a] sm:$0xff]
      %v6617 = vld [vmem:[#allocation8 + $0x22] sm:$0xff]
      %v6618 = vld [vmem:[#allocation8 + $0x32] sm:$0xff]
      %v6619 = vld [vmem:[#allocation8 + $0x3a] sm:$0xff]
      %v6620 = vld [vmem:[#allocation8 + $0x4a] sm:$0xff]
      %v6621 = vld [vmem:[#allocation8 + $0x52] sm:$0xff]
      %v6622 = vld [vmem:[#allocation8 + $0x62] sm:$0xff]
      %v6623 = vld [vmem:[#allocation8 + $0x6a] sm:$0xff]
      %v6624 = vld [vmem:[#allocation8 + $0x7a] sm:$0xff]
      %v6625 = vld [vmem:[#allocation8 + $0x82] sm:$0xff]
      %v6626 = vld [vmem:[#allocation8 + $0x92] sm:$0xff]
      %v6627 = vld [vmem:[#allocation8 + $0x9a] sm:$0xff]
      %v6628 = vld [vmem:[#allocation8 + $0xaa] sm:$0xff]
      %v6629 = vld [vmem:[#allocation8 + $0xb2] sm:$0xff]
      %v6630 = vld [vmem:[#allocation8 + $0xc2] sm:$0xff]
      %v6631 = vld [vmem:[#allocation8 + $0xca] sm:$0xff]
      %v6632 = vld [vmem:[#allocation8 + $0xda] sm:$0xff]
      %v6633 = vld [vmem:[#allocation8 + $0xe2] sm:$0xff]
      %v6634 = vld [vmem:[#allocation8 + $0xf2] sm:$0xff]
      %v6635 = vld [vmem:[#allocation8 + $0xfa] sm:$0xff]
      %v6636 = vld [vmem:[#allocation8 + $0x10a] sm:$0xff]
      %v6637 = vld [vmem:[#allocation8 + $0x112] sm:$0xff]
      %v6638 = vld [vmem:[#allocation8 + $0x122] sm:$0xff]
      %v6639 = vld [vmem:[#allocation8 + $0x12a] sm:$0xff]
      %v6640 = vld [vmem:[#allocation8 + $0x13a] sm:$0xff]
      %v6641 = vld [vmem:[#allocation8 + $0x142] sm:$0xff]
      %v6642 = vld [vmem:[#allocation8 + $0x152] sm:$0xff]
      %v6643 = vld [vmem:[#allocation8 + $0x15a] sm:$0xff]
      %v6644 = vld [vmem:[#allocation8 + $0x16a] sm:$0xff]
      %v6645 = vld [vmem:[#allocation8 + $0x172] sm:$0xff]
      %v6646 = vld [vmem:[#allocation8 + $0x182] sm:$0xff]
      %v6647 = vld [vmem:[#allocation8 + $0x18a] sm:$0xff]
      %v6648 = vld [vmem:[#allocation8 + $0x19a] sm:$0xff]
      %v6649 = vld [vmem:[#allocation8 + $0x1a2] sm:$0xff]
      %6686 = vrot.lane.b32.xlu0 %v6614, 32
      %v6687 = vpop.permute.xlu0 %6686
      %6688 = vrot.lane.b32.xlu0 %v6615, 32
      %v6689 = vpop.permute.xlu0 %6688
      %6690 = vrot.lane.b32.xlu0 %v6616, 32
      %v6691 = vpop.permute.xlu0 %6690
      %6692 = vrot.lane.b32.xlu0 %v6617, 32
      %v6693 = vpop.permute.xlu0 %6692
      %6694 = vrot.lane.b32.xlu0 %v6618, 32
      %v6695 = vpop.permute.xlu0 %6694
      %6696 = vrot.lane.b32.xlu0 %v6619, 32
      %v6697 = vpop.permute.xlu0 %6696
      %6698 = vrot.lane.b32.xlu0 %v6620, 32
      %v6699 = vpop.permute.xlu0 %6698
      %6700 = vrot.lane.b32.xlu0 %v6621, 32
      %v6701 = vpop.permute.xlu0 %6700
      %6702 = vrot.lane.b32.xlu0 %v6622, 32
      %v6703 = vpop.permute.xlu0 %6702
      %6704 = vrot.lane.b32.xlu0 %v6623, 32
      %v6705 = vpop.permute.xlu0 %6704
      %6706 = vrot.lane.b32.xlu0 %v6624, 32
      %v6707 = vpop.permute.xlu0 %6706
      %6708 = vrot.lane.b32.xlu0 %v6625, 32
      %v6709 = vpop.permute.xlu0 %6708
      %6710 = vrot.lane.b32.xlu0 %v6626, 32
      %v6711 = vpop.permute.xlu0 %6710
      %6712 = vrot.lane.b32.xlu0 %v6627, 32
      %v6713 = vpop.permute.xlu0 %6712
      %6714 = vrot.lane.b32.xlu0 %v6628, 32
      %v6715 = vpop.permute.xlu0 %6714
      %6716 = vrot.lane.b32.xlu0 %v6629, 32
      %v6717 = vpop.permute.xlu0 %6716
      %6718 = vrot.lane.b32.xlu0 %v6630, 32
      %v6719 = vpop.permute.xlu0 %6718
      %6720 = vrot.lane.b32.xlu0 %v6631, 32
      %v6721 = vpop.permute.xlu0 %6720
      %6722 = vrot.lane.b32.xlu0 %v6632, 32
      %v6723 = vpop.permute.xlu0 %6722
      %6724 = vrot.lane.b32.xlu0 %v6633, 32
      %v6725 = vpop.permute.xlu0 %6724
      %6726 = vrot.lane.b32.xlu0 %v6634, 32
      %v6727 = vpop.permute.xlu0 %6726
      %6728 = vrot.lane.b32.xlu0 %v6635, 32
      %v6729 = vpop.permute.xlu0 %6728
      %6730 = vrot.lane.b32.xlu0 %v6636, 32
      %v6731 = vpop.permute.xlu0 %6730
      %6732 = vrot.lane.b32.xlu0 %v6637, 32
      %v6733 = vpop.permute.xlu0 %6732
      %6734 = vrot.lane.b32.xlu0 %v6638, 32
      %v6735 = vpop.permute.xlu0 %6734
      %6736 = vrot.lane.b32.xlu0 %v6639, 32
      %v6737 = vpop.permute.xlu0 %6736
      %6738 = vrot.lane.b32.xlu0 %v6640, 32
      %v6739 = vpop.permute.xlu0 %6738
      %6740 = vrot.lane.b32.xlu0 %v6641, 32
      %v6741 = vpop.permute.xlu0 %6740
      %6742 = vrot.lane.b32.xlu0 %v6642, 32
      %v6743 = vpop.permute.xlu0 %6742
      %6744 = vrot.lane.b32.xlu0 %v6643, 32
      %v6745 = vpop.permute.xlu0 %6744
      %6746 = vrot.lane.b32.xlu0 %v6644, 32
      %v6747 = vpop.permute.xlu0 %6746
      %6748 = vrot.lane.b32.xlu0 %v6645, 32
      %v6749 = vpop.permute.xlu0 %6748
      %6750 = vrot.lane.b32.xlu0 %v6646, 32
      %v6751 = vpop.permute.xlu0 %6750
      %6752 = vrot.lane.b32.xlu0 %v6647, 32
      %v6753 = vpop.permute.xlu0 %6752
      %6754 = vrot.lane.b32.xlu0 %v6648, 32
      %v6755 = vpop.permute.xlu0 %6754
      %6756 = vrot.lane.b32.xlu0 %v6649, 32
      %v6757 = vpop.permute.xlu0 %6756
      %vm6794 = vcmask 392448
      %6795 = vst.msk [vmem:[#allocation9] sm:$0xff] %vm6794, %v6687
      %6796 = vst.msk [vmem:[#allocation9 + $0x8] sm:$0xff] %vm6794, %v6689
      %6797 = vst.msk [vmem:[#allocation9 + $0x10] sm:$0xff] %vm6794, %v6691
      %6798 = vst.msk [vmem:[#allocation9 + $0x18] sm:$0xff] %vm6794, %v6693
      %6799 = vst.msk [vmem:[#allocation9 + $0x20] sm:$0xff] %vm6794, %v6695
      %6800 = vst.msk [vmem:[#allocation9 + $0x28] sm:$0xff] %vm6794, %v6697
      %6801 = vst.msk [vmem:[#allocation9 + $0x30] sm:$0xff] %vm6794, %v6699
      %6802 = vst.msk [vmem:[#allocation9 + $0x38] sm:$0xff] %vm6794, %v6701
      %6803 = vst.msk [vmem:[#allocation9 + $0x40] sm:$0xff] %vm6794, %v6703
      %6804 = vst.msk [vmem:[#allocation9 + $0x48] sm:$0xff] %vm6794, %v6705
      %6805 = vst.msk [vmem:[#allocation9 + $0x50] sm:$0xff] %vm6794, %v6707
      %6806 = vst.msk [vmem:[#allocation9 + $0x58] sm:$0xff] %vm6794, %v6709
      %6807 = vst.msk [vmem:[#allocation9 + $0x60] sm:$0xff] %vm6794, %v6711
      %6808 = vst.msk [vmem:[#allocation9 + $0x68] sm:$0xff] %vm6794, %v6713
      %6809 = vst.msk [vmem:[#allocation9 + $0x70] sm:$0xff] %vm6794, %v6715
      %6810 = vst.msk [vmem:[#allocation9 + $0x78] sm:$0xff] %vm6794, %v6717
      %6811 = vst.msk [vmem:[#allocation9 + $0x80] sm:$0xff] %vm6794, %v6719
      %6812 = vst.msk [vmem:[#allocation9 + $0x88] sm:$0xff] %vm6794, %v6721
      %6813 = vst.msk [vmem:[#allocation9 + $0x90] sm:$0xff] %vm6794, %v6723
      %6814 = vst.msk [vmem:[#allocation9 + $0x98] sm:$0xff] %vm6794, %v6725
      %6815 = vst.msk [vmem:[#allocation9 + $0xa0] sm:$0xff] %vm6794, %v6727
      %6816 = vst.msk [vmem:[#allocation9 + $0xa8] sm:$0xff] %vm6794, %v6729
      %6817 = vst.msk [vmem:[#allocation9 + $0xb0] sm:$0xff] %vm6794, %v6731
      %6818 = vst.msk [vmem:[#allocation9 + $0xb8] sm:$0xff] %vm6794, %v6733
      %6819 = vst.msk [vmem:[#allocation9 + $0xc0] sm:$0xff] %vm6794, %v6735
      %6820 = vst.msk [vmem:[#allocation9 + $0xc8] sm:$0xff] %vm6794, %v6737
      %6821 = vst.msk [vmem:[#allocation9 + $0xd0] sm:$0xff] %vm6794, %v6739
      %6822 = vst.msk [vmem:[#allocation9 + $0xd8] sm:$0xff] %vm6794, %v6741
      %6823 = vst.msk [vmem:[#allocation9 + $0xe0] sm:$0xff] %vm6794, %v6743
      %6824 = vst.msk [vmem:[#allocation9 + $0xe8] sm:$0xff] %vm6794, %v6745
      %6825 = vst.msk [vmem:[#allocation9 + $0xf0] sm:$0xff] %vm6794, %v6747
      %6826 = vst.msk [vmem:[#allocation9 + $0xf8] sm:$0xff] %vm6794, %v6749
      %6827 = vst.msk [vmem:[#allocation9 + $0x100] sm:$0xff] %vm6794, %v6751
      %6828 = vst.msk [vmem:[#allocation9 + $0x108] sm:$0xff] %vm6794, %v6753
      %6829 = vst.msk [vmem:[#allocation9 + $0x110] sm:$0xff] %vm6794, %v6755
      %6830 = vst.msk [vmem:[#allocation9 + $0x118] sm:$0xff] %vm6794, %v6757
      %v6831 = vld [vmem:[#allocation9] sm:$0xff]
      %v6832 = vld [vmem:[#allocation9 + $0x8] sm:$0xff]
      %v6833 = vld [vmem:[#allocation9 + $0x10] sm:$0xff]
      %v6834 = vld [vmem:[#allocation9 + $0x18] sm:$0xff]
      %v6835 = vld [vmem:[#allocation9 + $0x20] sm:$0xff]
      %v6836 = vld [vmem:[#allocation9 + $0x28] sm:$0xff]
      %v6837 = vld [vmem:[#allocation9 + $0x30] sm:$0xff]
      %v6838 = vld [vmem:[#allocation9 + $0x38] sm:$0xff]
      %v6839 = vld [vmem:[#allocation9 + $0x40] sm:$0xff]
      %v6840 = vld [vmem:[#allocation9 + $0x48] sm:$0xff]
      %v6841 = vld [vmem:[#allocation9 + $0x50] sm:$0xff]
      %v6842 = vld [vmem:[#allocation9 + $0x58] sm:$0xff]
      %v6843 = vld [vmem:[#allocation9 + $0x60] sm:$0xff]
      %v6844 = vld [vmem:[#allocation9 + $0x68] sm:$0xff]
      %v6845 = vld [vmem:[#allocation9 + $0x70] sm:$0xff]
      %v6846 = vld [vmem:[#allocation9 + $0x78] sm:$0xff]
      %v6847 = vpack.c.bf16 %v6832, %v6831
      %v6848 = vpack.c.bf16 %v6834, %v6833
      %v6849 = vpack.c.bf16 %v6836, %v6835
      %v6850 = vpack.c.bf16 %v6838, %v6837
      %v6851 = vpack.c.bf16 %v6840, %v6839
      %v6852 = vpack.c.bf16 %v6842, %v6841
      %v6853 = vpack.c.bf16 %v6844, %v6843
      %v6854 = vpack.c.bf16 %v6846, %v6845
      %v6855 = vld [vmem:[%s7] sm:$0xff]
      %v6856 = vld [vmem:[%s7 + $0x8] sm:$0xff]
      %v6857 = vld [vmem:[%s7 + $0x10] sm:$0xff]
      %v6858 = vld [vmem:[%s7 + $0x18] sm:$0xff]
      %v6859 = vld [vmem:[%s7 + $0x20] sm:$0xff]
      %v6860 = vld [vmem:[%s7 + $0x28] sm:$0xff]
      %v6861 = vpack.c.bf16 %v6856, %v6855
      %v6862 = vpack.c.bf16 %v6858, %v6857
      %v6863 = vpack.c.bf16 %v6860, %v6859
      %s6864 = scalar_lea.vmem [#allocation9], 16
      %v6865 = vld [vmem:[%s6864] sm:$0xff]
      %v6866 = vld [vmem:[%s6864 + $0x8] sm:$0xff]
      %v6867 = vld [vmem:[%s6864 + $0x10] sm:$0xff]
      %v6868 = vld [vmem:[%s6864 + $0x18] sm:$0xff]
      %v6869 = vld [vmem:[%s6864 + $0x20] sm:$0xff]
      %v6870 = vld [vmem:[%s6864 + $0x28] sm:$0xff]
      %v6871 = vld [vmem:[%s6864 + $0x30] sm:$0xff]
      %v6872 = vld [vmem:[%s6864 + $0x38] sm:$0xff]
      %v6873 = vld [vmem:[%s6864 + $0x40] sm:$0xff]
      %v6874 = vld [vmem:[%s6864 + $0x48] sm:$0xff]
      %v6875 = vld [vmem:[%s6864 + $0x50] sm:$0xff]
      %v6876 = vld [vmem:[%s6864 + $0x58] sm:$0xff]
      %v6877 = vld [vmem:[%s6864 + $0x60] sm:$0xff]
      %v6878 = vld [vmem:[%s6864 + $0x68] sm:$0xff]
      %v6879 = vld [vmem:[%s6864 + $0x70] sm:$0xff]
      %v6880 = vld [vmem:[%s6864 + $0x78] sm:$0xff]
      %v6881 = vpack.c.bf16 %v6866, %v6865
      %v6882 = vpack.c.bf16 %v6868, %v6867
      %v6883 = vpack.c.bf16 %v6870, %v6869
      %v6884 = vpack.c.bf16 %v6872, %v6871
      %v6885 = vpack.c.bf16 %v6874, %v6873
      %v6886 = vpack.c.bf16 %v6876, %v6875
      %v6887 = vpack.c.bf16 %v6878, %v6877
      %v6888 = vpack.c.bf16 %v6880, %v6879
      %s6889 = scalar_lea.vmem %s7, 48
      %v6890 = vld [vmem:[%s6889] sm:$0xff]
      %v6891 = vld [vmem:[%s6889 + $0x8] sm:$0xff]
      %v6892 = vld [vmem:[%s6889 + $0x10] sm:$0xff]
      %v6893 = vld [vmem:[%s6889 + $0x18] sm:$0xff]
      %v6894 = vld [vmem:[%s6889 + $0x20] sm:$0xff]
      %v6895 = vld [vmem:[%s6889 + $0x28] sm:$0xff]
      %v6896 = vpack.c.bf16 %v6891, %v6890
      %v6897 = vpack.c.bf16 %v6893, %v6892
      %v6898 = vpack.c.bf16 %v6895, %v6894
      %vm6899 = vcmask 392192
      %v6901 = vsel %vm6899, %v6881, 0
      %v6904 = vsel %vm6899, %v6882, 0
      %v6907 = vsel %vm6899, %v6883, 0
      %v6910 = vsel %vm6899, %v6884, 0
      %v6913 = vsel %vm6899, %v6885, 0
      %v6916 = vsel %vm6899, %v6886, 0
      %v6919 = vsel %vm6899, %v6887, 0
      %v6922 = vsel %vm6899, %v6888, 0
      %6924 = vmatprep.subr.bf16.mxu0 0
      %6925 = vmatpush1.bf16.msra.mxu0 %v6896
      %6926 = vmatprep.subr.bf16.mxu0 0
      %6927 = vmatpush1.bf16.msra.mxu0 %v6897
      %6928 = vmatprep.subr.bf16.mxu0 0
      %6929 = vmatpush1.bf16.msra.mxu0 %v6898
      %6930 = vmatprep.subr.bf16.mxu0 0
      %6931 = vmatpush1.bf16.msra.mxu0 0
      %6932 = vmatprep.subr.bf16.mxu0 0
      %6933 = vmatpush1.bf16.msra.mxu0 0
      %6934 = vmatprep.subr.bf16.mxu0 0
      %6935 = vmatpush1.bf16.msra.mxu0 0
      %6936 = vmatprep.subr.bf16.mxu0 0
      %6937 = vmatpush1.bf16.msra.mxu0 0
      %6938 = vmatprep.subr.bf16.mxu0 0
      %6939 = vmatpush1.bf16.msra.mxu0 0
      %6940 = vmatprep.subr.bf16.mxu0 0
      %6941 = vmatpush1.bf16.msra.mxu0 0
      %6942 = vmatprep.subr.bf16.mxu0 0
      %6943 = vmatpush1.bf16.msra.mxu0 0
      %6944 = vmatprep.subr.bf16.mxu0 0
      %6945 = vmatpush1.bf16.msra.mxu0 0
      %6946 = vmatprep.subr.bf16.mxu0 0
      %6947 = vmatpush1.bf16.msra.mxu0 0
      %6948 = vmatprep.subr.bf16.mxu0 0
      %6949 = vmatpush1.bf16.msra.mxu0 0
      %6950 = vmatprep.subr.bf16.mxu0 0
      %6951 = vmatpush1.bf16.msra.mxu0 0
      %6952 = vmatprep.subr.bf16.mxu0 0
      %6953 = vmatpush1.bf16.msra.mxu0 0
      %6954 = vmatprep.subr.bf16.mxu0 0
      %6955 = vmatpush1.bf16.msra.mxu0 0
      %6956 = vmatprep.mubr.bf16.mxu0 0
      %6957 = vmatmul.mubr.bf16.gmra.mrb[0].mxu0 %v6901
      %v6958 = vpop.f32.mrb[0].mxu0
      %v6959 = vadd.f32 0.0, %v6958
      %v6960 = vpop.f32.mrb[0].mxu0
      %v6961 = vpop.f32.mrb[0].mxu0
      %v6962 = vadd.f32 0.0, %v6961
      %v6963 = vpop.f32.mrb[0].mxu0
      %6964 = vmatprep.mubr.bf16.mxu0 0
      %6965 = vmatmul.mubr.bf16.gmra.mrb[0].mxu0 %v6904
      %v6966 = vpop.f32.mrb[0].mxu0
      %v6967 = vadd.f32 0.0, %v6966
      %v6968 = vpop.f32.mrb[0].mxu0
      %v6969 = vpop.f32.mrb[0].mxu0
      %v6970 = vadd.f32 0.0, %v6969
      %v6971 = vpop.f32.mrb[0].mxu0
      %6972 = vmatprep.mubr.bf16.mxu0 0
      %6973 = vmatmul.mubr.bf16.gmra.mrb[0].mxu0 %v6907
      %v6974 = vpop.f32.mrb[0].mxu0
      %v6975 = vadd.f32 0.0, %v6974
      %v6976 = vpop.f32.mrb[0].mxu0
      %v6977 = vpop.f32.mrb[0].mxu0
      %v6978 = vadd.f32 0.0, %v6977
      %v6979 = vpop.f32.mrb[0].mxu0
      %6980 = vmatprep.mubr.bf16.mxu0 0
      %6981 = vmatmul.mubr.bf16.gmra.mrb[0].mxu0 %v6910
      %v6982 = vpop.f32.mrb[0].mxu0
      %v6983 = vadd.f32 0.0, %v6982
      %v6984 = vpop.f32.mrb[0].mxu0
      %v6985 = vpop.f32.mrb[0].mxu0
      %v6986 = vadd.f32 0.0, %v6985
      %v6987 = vpop.f32.mrb[0].mxu0
      %6988 = vmatprep.mubr.bf16.mxu0 0
      %6989 = vmatmul.mubr.bf16.gmra.mrb[0].mxu0 %v6913
      %v6990 = vpop.f32.mrb[0].mxu0
      %v6991 = vadd.f32 0.0, %v6990
      %v6992 = vpop.f32.mrb[0].mxu0
      %v6993 = vpop.f32.mrb[0].mxu0
      %v6994 = vadd.f32 0.0, %v6993
      %v6995 = vpop.f32.mrb[0].mxu0
      %6996 = vmatprep.mubr.bf16.mxu0 0
      %6997 = vmatmul.mubr.bf16.gmra.mrb[0].mxu0 %v6916
      %v6998 = vpop.f32.mrb[0].mxu0
      %v6999 = vadd.f32 0.0, %v6998
      %v7000 = vpop.f32.mrb[0].mxu0
      %v7001 = vpop.f32.mrb[0].mxu0
      %v7002 = vadd.f32 0.0, %v7001
      %v7003 = vpop.f32.mrb[0].mxu0
      %7004 = vmatprep.mubr.bf16.mxu0 0
      %7005 = vmatmul.mubr.bf16.gmra.mrb[0].mxu0 %v6919
      %v7006 = vpop.f32.mrb[0].mxu0
      %v7007 = vadd.f32 0.0, %v7006
      %v7008 = vpop.f32.mrb[0].mxu0
      %v7009 = vpop.f32.mrb[0].mxu0
      %v7010 = vadd.f32 0.0, %v7009
      %v7011 = vpop.f32.mrb[0].mxu0
      %7012 = vmatprep.mubr.bf16.mxu0 0
      %7013 = vmatmul.mubr.bf16.gmra.mrb[0].mxu0 %v6922
      %v7014 = vpop.f32.mrb[0].mxu0
      %v7015 = vadd.f32 0.0, %v7014
      %v7016 = vpop.f32.mrb[0].mxu0
      %v7017 = vpop.f32.mrb[0].mxu0
      %v7018 = vadd.f32 0.0, %v7017
      %v7019 = vpop.f32.mrb[0].mxu0
      %7020 = vdwg.mxu0
      %v7022 = vsel %vm6899, %v6847, 0
      %v7025 = vsel %vm6899, %v6848, 0
      %v7028 = vsel %vm6899, %v6849, 0
      %v7031 = vsel %vm6899, %v6850, 0
      %v7034 = vsel %vm6899, %v6851, 0
      %v7037 = vsel %vm6899, %v6852, 0
      %v7040 = vsel %vm6899, %v6853, 0
      %v7043 = vsel %vm6899, %v6854, 0
      %7045 = vmatprep.subr.bf16.mxu0 0
      %7046 = vmatpush1.bf16.msra.mxu0 %v6861
      %7047 = vmatprep.subr.bf16.mxu0 0
      %7048 = vmatpush1.bf16.msra.mxu0 %v6862
      %7049 = vmatprep.subr.bf16.mxu0 0
      %7050 = vmatpush1.bf16.msra.mxu0 %v6863
      %7051 = vmatprep.subr.bf16.mxu0 0
      %7052 = vmatpush1.bf16.msra.mxu0 0
      %7053 = vmatprep.subr.bf16.mxu0 0
      %7054 = vmatpush1.bf16.msra.mxu0 0
      %7055 = vmatprep.subr.bf16.mxu0 0
      %7056 = vmatpush1.bf16.msra.mxu0 0
      %7057 = vmatprep.subr.bf16.mxu0 0
      %7058 = vmatpush1.bf16.msra.mxu0 0
      %7059 = vmatprep.subr.bf16.mxu0 0
      %7060 = vmatpush1.bf16.msra.mxu0 0
      %7061 = vmatprep.subr.bf16.mxu0 0
      %7062 = vmatpush1.bf16.msra.mxu0 0
      %7063 = vmatprep.subr.bf16.mxu0 0
      %7064 = vmatpush1.bf16.msra.mxu0 0
      %7065 = vmatprep.subr.bf16.mxu0 0
      %7066 = vmatpush1.bf16.msra.mxu0 0
      %7067 = vmatprep.subr.bf16.mxu0 0
      %7068 = vmatpush1.bf16.msra.mxu0 0
      %7069 = vmatprep.subr.bf16.mxu0 0
      %7070 = vmatpush1.bf16.msra.mxu0 0
      %7071 = vmatprep.subr.bf16.mxu0 0
      %7072 = vmatpush1.bf16.msra.mxu0 0
      %7073 = vmatprep.subr.bf16.mxu0 0
      %7074 = vmatpush1.bf16.msra.mxu0 0
      %7075 = vmatprep.subr.bf16.mxu0 0
      %7076 = vmatpush1.bf16.msra.mxu0 0
      %7077 = vmatprep.mubr.bf16.mxu0 0
      %7078 = vmatmul.mubr.bf16.gmra.mrb[0].mxu0 %v7022
      %v7079 = vpop.f32.mrb[0].mxu0
      %v7080 = vadd.f32 %v6959, %v7079
      %v7081 = vpop.f32.mrb[0].mxu0
      %v7082 = vpop.f32.mrb[0].mxu0
      %v7083 = vadd.f32 %v6962, %v7082
      %v7084 = vpop.f32.mrb[0].mxu0
      %7085 = vmatprep.mubr.bf16.mxu0 0
      %7086 = vmatmul.mubr.bf16.gmra.mrb[0].mxu0 %v7025
      %v7087 = vpop.f32.mrb[0].mxu0
      %v7088 = vadd.f32 %v6967, %v7087
      %v7089 = vpop.f32.mrb[0].mxu0
      %v7090 = vpop.f32.mrb[0].mxu0
      %v7091 = vadd.f32 %v6970, %v7090
      %v7092 = vpop.f32.mrb[0].mxu0
      %7093 = vmatprep.mubr.bf16.mxu0 0
      %7094 = vmatmul.mubr.bf16.gmra.mrb[0].mxu0 %v7028
      %v7095 = vpop.f32.mrb[0].mxu0
      %v7096 = vadd.f32 %v6975, %v7095
      %v7097 = vpop.f32.mrb[0].mxu0
      %v7098 = vpop.f32.mrb[0].mxu0
      %v7099 = vadd.f32 %v6978, %v7098
      %v7100 = vpop.f32.mrb[0].mxu0
      %7101 = vmatprep.mubr.bf16.mxu0 0
      %7102 = vmatmul.mubr.bf16.gmra.mrb[0].mxu0 %v7031
      %v7103 = vpop.f32.mrb[0].mxu0
      %v7104 = vadd.f32 %v6983, %v7103
      %v7105 = vpop.f32.mrb[0].mxu0
      %v7106 = vpop.f32.mrb[0].mxu0
      %v7107 = vadd.f32 %v6986, %v7106
      %v7108 = vpop.f32.mrb[0].mxu0
      %7109 = vmatprep.mubr.bf16.mxu0 0
      %7110 = vmatmul.mubr.bf16.gmra.mrb[0].mxu0 %v7034
      %v7111 = vpop.f32.mrb[0].mxu0
      %v7112 = vadd.f32 %v6991, %v7111
      %v7113 = vpop.f32.mrb[0].mxu0
      %v7114 = vpop.f32.mrb[0].mxu0
      %v7115 = vadd.f32 %v6994, %v7114
      %v7116 = vpop.f32.mrb[0].mxu0
      %7117 = vmatprep.mubr.bf16.mxu0 0
      %7118 = vmatmul.mubr.bf16.gmra.mrb[0].mxu0 %v7037
      %v7119 = vpop.f32.mrb[0].mxu0
      %v7120 = vadd.f32 %v6999, %v7119
      %v7121 = vpop.f32.mrb[0].mxu0
      %v7122 = vpop.f32.mrb[0].mxu0
      %v7123 = vadd.f32 %v7002, %v7122
      %v7124 = vpop.f32.mrb[0].mxu0
      %7125 = vmatprep.mubr.bf16.mxu0 0
      %7126 = vmatmul.mubr.bf16.gmra.mrb[0].mxu0 %v7040
      %v7127 = vpop.f32.mrb[0].mxu0
      %v7128 = vadd.f32 %v7007, %v7127
      %v7129 = vpop.f32.mrb[0].mxu0
      %v7130 = vpop.f32.mrb[0].mxu0
      %v7131 = vadd.f32 %v7010, %v7130
      %v7132 = vpop.f32.mrb[0].mxu0
      %7133 = vmatprep.mubr.bf16.mxu0 0
      %7134 = vmatmul.mubr.bf16.gmra.mrb[0].mxu0 %v7043
      %v7135 = vpop.f32.mrb[0].mxu0
      %v7136 = vadd.f32 %v7015, %v7135
      %v7137 = vpop.f32.mrb[0].mxu0
      %v7138 = vpop.f32.mrb[0].mxu0
      %v7139 = vadd.f32 %v7018, %v7138
      %v7140 = vpop.f32.mrb[0].mxu0
      %7141 = vdwg.mxu0
      %s7142 = scalar_lea.vmem [#allocation9], 32
      %v7143 = vld [vmem:[%s7142] sm:$0xff]
      %v7144 = vld [vmem:[%s7142 + $0x8] sm:$0xff]
      %v7145 = vld [vmem:[%s7142 + $0x10] sm:$0xff]
      %v7146 = vld [vmem:[%s7142 + $0x18] sm:$0xff]
      %v7147 = vld [vmem:[%s7142 + $0x20] sm:$0xff]
      %v7148 = vld [vmem:[%s7142 + $0x28] sm:$0xff]
      %v7149 = vld [vmem:[%s7142 + $0x30] sm:$0xff]
      %v7150 = vld [vmem:[%s7142 + $0x38] sm:$0xff]
      %v7151 = vld [vmem:[%s7142 + $0x40] sm:$0xff]
      %v7152 = vld [vmem:[%s7142 + $0x48] sm:$0xff]
      %v7153 = vld [vmem:[%s7142 + $0x50] sm:$0xff]
      %v7154 = vld [vmem:[%s7142 + $0x58] sm:$0xff]
      %v7155 = vld [vmem:[%s7142 + $0x60] sm:$0xff]
      %v7156 = vld [vmem:[%s7142 + $0x68] sm:$0xff]
      %v7157 = vld [vmem:[%s7142 + $0x70] sm:$0xff]
      %v7158 = vld [vmem:[%s7142 + $0x78] sm:$0xff]
      %v7159 = vpack.c.bf16 %v7144, %v7143
      %v7160 = vpack.c.bf16 %v7146, %v7145
      %v7161 = vpack.c.bf16 %v7148, %v7147
      %v7162 = vpack.c.bf16 %v7150, %v7149
      %v7163 = vpack.c.bf16 %v7152, %v7151
      %v7164 = vpack.c.bf16 %v7154, %v7153
      %v7165 = vpack.c.bf16 %v7156, %v7155
      %v7166 = vpack.c.bf16 %v7158, %v7157
      %s7167 = scalar_lea.vmem %s7, 96
      %v7168 = vld [vmem:[%s7167] sm:$0xff]
      %v7169 = vld [vmem:[%s7167 + $0x8] sm:$0xff]
      %v7170 = vld [vmem:[%s7167 + $0x10] sm:$0xff]
      %v7171 = vld [vmem:[%s7167 + $0x18] sm:$0xff]
      %v7172 = vld [vmem:[%s7167 + $0x20] sm:$0xff]
      %v7173 = vld [vmem:[%s7167 + $0x28] sm:$0xff]
      %v7174 = vpack.c.bf16 %v7169, %v7168
      %v7175 = vpack.c.bf16 %v7171, %v7170
      %v7176 = vpack.c.bf16 %v7173, %v7172
      %v7178 = vsel %vm6899, %v7159, 0
      %v7181 = vsel %vm6899, %v7160, 0
      %v7184 = vsel %vm6899, %v7161, 0
      %v7187 = vsel %vm6899, %v7162, 0
      %v7190 = vsel %vm6899, %v7163, 0
      %v7193 = vsel %vm6899, %v7164, 0
      %v7196 = vsel %vm6899, %v7165, 0
      %v7199 = vsel %vm6899, %v7166, 0
      %7201 = vmatprep.subr.bf16.mxu0 0
      %7202 = vmatpush1.bf16.msra.mxu0 %v7174
      %7203 = vmatprep.subr.bf16.mxu0 0
      %7204 = vmatpush1.bf16.msra.mxu0 %v7175
      %7205 = vmatprep.subr.bf16.mxu0 0
      %7206 = vmatpush1.bf16.msra.mxu0 %v7176
      %7207 = vmatprep.subr.bf16.mxu0 0
      %7208 = vmatpush1.bf16.msra.mxu0 0
      %7209 = vmatprep.subr.bf16.mxu0 0
      %7210 = vmatpush1.bf16.msra.mxu0 0
      %7211 = vmatprep.subr.bf16.mxu0 0
      %7212 = vmatpush1.bf16.msra.mxu0 0
      %7213 = vmatprep.subr.bf16.mxu0 0
      %7214 = vmatpush1.bf16.msra.mxu0 0
      %7215 = vmatprep.subr.bf16.mxu0 0
      %7216 = vmatpush1.bf16.msra.mxu0 0
      %7217 = vmatprep.subr.bf16.mxu0 0
      %7218 = vmatpush1.bf16.msra.mxu0 0
      %7219 = vmatprep.subr.bf16.mxu0 0
      %7220 = vmatpush1.bf16.msra.mxu0 0
      %7221 = vmatprep.subr.bf16.mxu0 0
      %7222 = vmatpush1.bf16.msra.mxu0 0
      %7223 = vmatprep.subr.bf16.mxu0 0
      %7224 = vmatpush1.bf16.msra.mxu0 0
      %7225 = vmatprep.subr.bf16.mxu0 0
      %7226 = vmatpush1.bf16.msra.mxu0 0
      %7227 = vmatprep.subr.bf16.mxu0 0
      %7228 = vmatpush1.bf16.msra.mxu0 0
      %7229 = vmatprep.subr.bf16.mxu0 0
      %7230 = vmatpush1.bf16.msra.mxu0 0
      %7231 = vmatprep.subr.bf16.mxu0 0
      %7232 = vmatpush1.bf16.msra.mxu0 0
      %7233 = vmatprep.mubr.bf16.mxu0 0
      %7234 = vmatmul.mubr.bf16.gmra.mrb[0].mxu0 %v7178
      %v7235 = vpop.f32.mrb[0].mxu0
      %v7236 = vadd.f32 0.0, %v7235
      %v7237 = vpop.f32.mrb[0].mxu0
      %v7238 = vpop.f32.mrb[0].mxu0
      %v7239 = vadd.f32 0.0, %v7238
      %v7240 = vpop.f32.mrb[0].mxu0
      %7241 = vmatprep.mubr.bf16.mxu0 0
      %7242 = vmatmul.mubr.bf16.gmra.mrb[0].mxu0 %v7181
      %v7243 = vpop.f32.mrb[0].mxu0
      %v7244 = vadd.f32 0.0, %v7243
      %v7245 = vpop.f32.mrb[0].mxu0
      %v7246 = vpop.f32.mrb[0].mxu0
      %v7247 = vadd.f32 0.0, %v7246
      %v7248 = vpop.f32.mrb[0].mxu0
      %7249 = vmatprep.mubr.bf16.mxu0 0
      %7250 = vmatmul.mubr.bf16.gmra.mrb[0].mxu0 %v7184
      %v7251 = vpop.f32.mrb[0].mxu0
      %v7252 = vadd.f32 0.0, %v7251
      %v7253 = vpop.f32.mrb[0].mxu0
      %v7254 = vpop.f32.mrb[0].mxu0
      %v7255 = vadd.f32 0.0, %v7254
      %v7256 = vpop.f32.mrb[0].mxu0
      %7257 = vmatprep.mubr.bf16.mxu0 0
      %7258 = vmatmul.mubr.bf16.gmra.mrb[0].mxu0 %v7187
      %v7259 = vpop.f32.mrb[0].mxu0
      %v7260 = vadd.f32 0.0, %v7259
      %v7261 = vpop.f32.mrb[0].mxu0
      %v7262 = vpop.f32.mrb[0].mxu0
      %v7263 = vadd.f32 0.0, %v7262
      %v7264 = vpop.f32.mrb[0].mxu0
      %7265 = vmatprep.mubr.bf16.mxu0 0
      %7266 = vmatmul.mubr.bf16.gmra.mrb[0].mxu0 %v7190
      %v7267 = vpop.f32.mrb[0].mxu0
      %v7268 = vadd.f32 0.0, %v7267
      %v7269 = vpop.f32.mrb[0].mxu0
      %v7270 = vpop.f32.mrb[0].mxu0
      %v7271 = vadd.f32 0.0, %v7270
      %v7272 = vpop.f32.mrb[0].mxu0
      %7273 = vmatprep.mubr.bf16.mxu0 0
      %7274 = vmatmul.mubr.bf16.gmra.mrb[0].mxu0 %v7193
      %v7275 = vpop.f32.mrb[0].mxu0
      %v7276 = vadd.f32 0.0, %v7275
      %v7277 = vpop.f32.mrb[0].mxu0
      %v7278 = vpop.f32.mrb[0].mxu0
      %v7279 = vadd.f32 0.0, %v7278
      %v7280 = vpop.f32.mrb[0].mxu0
      %7281 = vmatprep.mubr.bf16.mxu0 0
      %7282 = vmatmul.mubr.bf16.gmra.mrb[0].mxu0 %v7196
      %v7283 = vpop.f32.mrb[0].mxu0
      %v7284 = vadd.f32 0.0, %v7283
      %v7285 = vpop.f32.mrb[0].mxu0
      %v7286 = vpop.f32.mrb[0].mxu0
      %v7287 = vadd.f32 0.0, %v7286
      %v7288 = vpop.f32.mrb[0].mxu0
      %7289 = vmatprep.mubr.bf16.mxu0 0
      %7290 = vmatmul.mubr.bf16.gmra.mrb[0].mxu0 %v7199
      %v7291 = vpop.f32.mrb[0].mxu0
      %v7292 = vadd.f32 0.0, %v7291
      %v7293 = vpop.f32.mrb[0].mxu0
      %v7294 = vpop.f32.mrb[0].mxu0
      %v7295 = vadd.f32 0.0, %v7294
      %v7296 = vpop.f32.mrb[0].mxu0
      %7297 = vdwg.mxu0
      %v7298 = vadd.f32 %v7080, %v7236
      %v7299 = vadd.f32 %v7083, %v7239
      %v7300 = vadd.f32 %v7088, %v7244
      %v7301 = vadd.f32 %v7091, %v7247
      %v7302 = vadd.f32 %v7096, %v7252
      %v7303 = vadd.f32 %v7099, %v7255
      %v7304 = vadd.f32 %v7104, %v7260
      %v7305 = vadd.f32 %v7107, %v7263
      %v7306 = vadd.f32 %v7112, %v7268
      %v7307 = vadd.f32 %v7115, %v7271
      %v7308 = vadd.f32 %v7120, %v7276
      %v7309 = vadd.f32 %v7123, %v7279
      %v7310 = vadd.f32 %v7128, %v7284
      %v7311 = vadd.f32 %v7131, %v7287
      %v7312 = vadd.f32 %v7136, %v7292
      %v7313 = vadd.f32 %v7139, %v7295
      %v7314 = vld [vmem:[#allocation10] sm:$0x1]
      %v7316 = vlaneseq
      %v7317 = vshrl.u32 %v7316, 7
      %v7318 = vsub.s32 0, %v7317
      %v7319 = vrot.slane %v7314, %v7318
      %v7321 = vadd.f32 %v7298, %v7319
      %v7322 = vadd.f32 %v7299, %v7319
      %v7323 = vadd.f32 %v7300, %v7319
      %v7324 = vadd.f32 %v7301, %v7319
      %v7325 = vadd.f32 %v7302, %v7319
      %v7326 = vadd.f32 %v7303, %v7319
      %v7327 = vadd.f32 %v7304, %v7319
      %v7328 = vadd.f32 %v7305, %v7319
      %v7329 = vadd.f32 %v7306, %v7319
      %v7330 = vadd.f32 %v7307, %v7319
      %v7331 = vadd.f32 %v7308, %v7319
      %v7332 = vadd.f32 %v7309, %v7319
      %v7333 = vadd.f32 %v7310, %v7319
      %v7334 = vadd.f32 %v7311, %v7319
      %v7335 = vadd.f32 %v7312, %v7319
      %v7336 = vadd.f32 %v7313, %v7319
      %vm7337 = vcmask 7168
      %7338 = vst.msk [vmem:[%s334] sm:$0xff] %vm7337, %v7321
      %7339 = vst.msk [vmem:[%s334 + $0x8] sm:$0xff] %vm7337, %v7322
      %7340 = vst.msk [vmem:[%s334 + $0x10] sm:$0xff] %vm7337, %v7323
      %7341 = vst.msk [vmem:[%s334 + $0x18] sm:$0xff] %vm7337, %v7324
      %7342 = vst.msk [vmem:[%s334 + $0x20] sm:$0xff] %vm7337, %v7325
      %7343 = vst.msk [vmem:[%s334 + $0x28] sm:$0xff] %vm7337, %v7326
      %7344 = vst.msk [vmem:[%s334 + $0x30] sm:$0xff] %vm7337, %v7327
      %7345 = vst.msk [vmem:[%s334 + $0x38] sm:$0xff] %vm7337, %v7328
      %7346 = vst.msk [vmem:[%s334 + $0x40] sm:$0xff] %vm7337, %v7329
      %7347 = vst.msk [vmem:[%s334 + $0x48] sm:$0xff] %vm7337, %v7330
      %7348 = vst.msk [vmem:[%s334 + $0x50] sm:$0xff] %vm7337, %v7331
      %7349 = vst.msk [vmem:[%s334 + $0x58] sm:$0xff] %vm7337, %v7332
      %7350 = vst.msk [vmem:[%s334 + $0x60] sm:$0xff] %vm7337, %v7333
      %7351 = vst.msk [vmem:[%s334 + $0x68] sm:$0xff] %vm7337, %v7334
      %7352 = vst.msk [vmem:[%s334 + $0x70] sm:$0xff] %vm7337, %v7335
      %7353 = vst.msk [vmem:[%s334 + $0x78] sm:$0xff] %vm7337, %v7336
      %s7354 = scalar_lea.vmem [#allocation9], 128
      %v7355 = vld [vmem:[%s7354] sm:$0xff]
      %v7356 = vld [vmem:[%s7354 + $0x8] sm:$0xff]
      %v7357 = vld [vmem:[%s7354 + $0x10] sm:$0xff]
      %v7358 = vld [vmem:[%s7354 + $0x18] sm:$0xff]
      %v7359 = vld [vmem:[%s7354 + $0x20] sm:$0xff]
      %v7360 = vld [vmem:[%s7354 + $0x28] sm:$0xff]
      %v7361 = vld [vmem:[%s7354 + $0x30] sm:$0xff]
      %v7362 = vld [vmem:[%s7354 + $0x38] sm:$0xff]
      %v7363 = vld [vmem:[%s7354 + $0x40] sm:$0xff]
      %v7364 = vld [vmem:[%s7354 + $0x48] sm:$0xff]
      %v7365 = vld [vmem:[%s7354 + $0x50] sm:$0xff]
      %v7366 = vld [vmem:[%s7354 + $0x58] sm:$0xff]
      %v7367 = vld [vmem:[%s7354 + $0x60] sm:$0xff]
      %v7368 = vld [vmem:[%s7354 + $0x68] sm:$0xff]
      %v7369 = vld [vmem:[%s7354 + $0x70] sm:$0xff]
      %v7370 = vld [vmem:[%s7354 + $0x78] sm:$0xff]
      %v7371 = vpack.c.bf16 %v7356, %v7355
      %v7372 = vpack.c.bf16 %v7358, %v7357
      %v7373 = vpack.c.bf16 %v7360, %v7359
      %v7374 = vpack.c.bf16 %v7362, %v7361
      %v7375 = vpack.c.bf16 %v7364, %v7363
      %v7376 = vpack.c.bf16 %v7366, %v7365
      %v7377 = vpack.c.bf16 %v7368, %v7367
      %v7378 = vpack.c.bf16 %v7370, %v7369
      %v7379 = vld [vmem:[%s7] sm:$0xff]
      %v7380 = vld [vmem:[%s7 + $0x8] sm:$0xff]
      %v7381 = vld [vmem:[%s7 + $0x10] sm:$0xff]
      %v7382 = vld [vmem:[%s7 + $0x18] sm:$0xff]
      %v7383 = vld [vmem:[%s7 + $0x20] sm:$0xff]
      %v7384 = vld [vmem:[%s7 + $0x28] sm:$0xff]
      %v7385 = vpack.c.bf16 %v7380, %v7379
      %v7386 = vpack.c.bf16 %v7382, %v7381
      %v7387 = vpack.c.bf16 %v7384, %v7383
      %s7388 = scalar_lea.vmem [#allocation9], 144
      %v7389 = vld [vmem:[%s7388] sm:$0xff]
      %v7390 = vld [vmem:[%s7388 + $0x8] sm:$0xff]
      %v7391 = vld [vmem:[%s7388 + $0x10] sm:$0xff]
      %v7392 = vld [vmem:[%s7388 + $0x18] sm:$0xff]
      %v7393 = vld [vmem:[%s7388 + $0x20] sm:$0xff]
      %v7394 = vld [vmem:[%s7388 + $0x28] sm:$0xff]
      %v7395 = vld [vmem:[%s7388 + $0x30] sm:$0xff]
      %v7396 = vld [vmem:[%s7388 + $0x38] sm:$0xff]
      %v7397 = vld [vmem:[%s7388 + $0x40] sm:$0xff]
      %v7398 = vld [vmem:[%s7388 + $0x48] sm:$0xff]
      %v7399 = vld [vmem:[%s7388 + $0x50] sm:$0xff]
      %v7400 = vld [vmem:[%s7388 + $0x58] sm:$0xff]
      %v7401 = vld [vmem:[%s7388 + $0x60] sm:$0xff]
      %v7402 = vld [vmem:[%s7388 + $0x68] sm:$0xff]
      %v7403 = vld [vmem:[%s7388 + $0x70] sm:$0xff]
      %v7404 = vld [vmem:[%s7388 + $0x78] sm:$0xff]
      %v7405 = vpack.c.bf16 %v7390, %v7389
      %v7406 = vpack.c.bf16 %v7392, %v7391
      %v7407 = vpack.c.bf16 %v7394, %v7393
      %v7408 = vpack.c.bf16 %v7396, %v7395
      %v7409 = vpack.c.bf16 %v7398, %v7397
      %v7410 = vpack.c.bf16 %v7400, %v7399
      %v7411 = vpack.c.bf16 %v7402, %v7401
      %v7412 = vpack.c.bf16 %v7404, %v7403
      %v7413 = vld [vmem:[%s6889] sm:$0xff]
      %v7414 = vld [vmem:[%s6889 + $0x8] sm:$0xff]
      %v7415 = vld [vmem:[%s6889 + $0x10] sm:$0xff]
      %v7416 = vld [vmem:[%s6889 + $0x18] sm:$0xff]
      %v7417 = vld [vmem:[%s6889 + $0x20] sm:$0xff]
      %v7418 = vld [vmem:[%s6889 + $0x28] sm:$0xff]
      %v7419 = vpack.c.bf16 %v7414, %v7413
      %v7420 = vpack.c.bf16 %v7416, %v7415
      %v7421 = vpack.c.bf16 %v7418, %v7417
      %v7423 = vsel %vm6899, %v7405, 0
      %v7426 = vsel %vm6899, %v7406, 0
      %v7429 = vsel %vm6899, %v7407, 0
      %v7432 = vsel %vm6899, %v7408, 0
      %v7435 = vsel %vm6899, %v7409, 0
      %v7438 = vsel %vm6899, %v7410, 0
      %v7441 = vsel %vm6899, %v7411, 0
      %v7444 = vsel %vm6899, %v7412, 0
      %7446 = vmatprep.subr.bf16.mxu0 0
      %7447 = vmatpush1.bf16.msra.mxu0 %v7419
      %7448 = vmatprep.subr.bf16.mxu0 0
      %7449 = vmatpush1.bf16.msra.mxu0 %v7420
      %7450 = vmatprep.subr.bf16.mxu0 0
      %7451 = vmatpush1.bf16.msra.mxu0 %v7421
      %7452 = vmatprep.subr.bf16.mxu0 0
      %7453 = vmatpush1.bf16.msra.mxu0 0
      %7454 = vmatprep.subr.bf16.mxu0 0
      %7455 = vmatpush1.bf16.msra.mxu0 0
      %7456 = vmatprep.subr.bf16.mxu0 0
      %7457 = vmatpush1.bf16.msra.mxu0 0
      %7458 = vmatprep.subr.bf16.mxu0 0
      %7459 = vmatpush1.bf16.msra.mxu0 0
      %7460 = vmatprep.subr.bf16.mxu0 0
      %7461 = vmatpush1.bf16.msra.mxu0 0
      %7462 = vmatprep.subr.bf16.mxu0 0
      %7463 = vmatpush1.bf16.msra.mxu0 0
      %7464 = vmatprep.subr.bf16.mxu0 0
      %7465 = vmatpush1.bf16.msra.mxu0 0
      %7466 = vmatprep.subr.bf16.mxu0 0
      %7467 = vmatpush1.bf16.msra.mxu0 0
      %7468 = vmatprep.subr.bf16.mxu0 0
      %7469 = vmatpush1.bf16.msra.mxu0 0
      %7470 = vmatprep.subr.bf16.mxu0 0
      %7471 = vmatpush1.bf16.msra.mxu0 0
      %7472 = vmatprep.subr.bf16.mxu0 0
      %7473 = vmatpush1.bf16.msra.mxu0 0
      %7474 = vmatprep.subr.bf16.mxu0 0
      %7475 = vmatpush1.bf16.msra.mxu0 0
      %7476 = vmatprep.subr.bf16.mxu0 0
      %7477 = vmatpush1.bf16.msra.mxu0 0
      %7478 = vmatprep.mubr.bf16.mxu0 0
      %7479 = vmatmul.mubr.bf16.gmra.mrb[0].mxu0 %v7423
      %v7480 = vpop.f32.mrb[0].mxu0
      %v7481 = vadd.f32 0.0, %v7480
      %v7482 = vpop.f32.mrb[0].mxu0
      %v7483 = vpop.f32.mrb[0].mxu0
      %v7484 = vadd.f32 0.0, %v7483
      %v7485 = vpop.f32.mrb[0].mxu0
      %7486 = vmatprep.mubr.bf16.mxu0 0
      %7487 = vmatmul.mubr.bf16.gmra.mrb[0].mxu0 %v7426
      %v7488 = vpop.f32.mrb[0].mxu0
      %v7489 = vadd.f32 0.0, %v7488
      %v7490 = vpop.f32.mrb[0].mxu0
      %v7491 = vpop.f32.mrb[0].mxu0
      %v7492 = vadd.f32 0.0, %v7491
      %v7493 = vpop.f32.mrb[0].mxu0
      %7494 = vmatprep.mubr.bf16.mxu0 0
      %7495 = vmatmul.mubr.bf16.gmra.mrb[0].mxu0 %v7429
      %v7496 = vpop.f32.mrb[0].mxu0
      %v7497 = vadd.f32 0.0, %v7496
      %v7498 = vpop.f32.mrb[0].mxu0
      %v7499 = vpop.f32.mrb[0].mxu0
      %v7500 = vadd.f32 0.0, %v7499
      %v7501 = vpop.f32.mrb[0].mxu0
      %7502 = vmatprep.mubr.bf16.mxu0 0
      %7503 = vmatmul.mubr.bf16.gmra.mrb[0].mxu0 %v7432
      %v7504 = vpop.f32.mrb[0].mxu0
      %v7505 = vadd.f32 0.0, %v7504
      %v7506 = vpop.f32.mrb[0].mxu0
      %v7507 = vpop.f32.mrb[0].mxu0
      %v7508 = vadd.f32 0.0, %v7507
      %v7509 = vpop.f32.mrb[0].mxu0
      %7510 = vmatprep.mubr.bf16.mxu0 0
      %7511 = vmatmul.mubr.bf16.gmra.mrb[0].mxu0 %v7435
      %v7512 = vpop.f32.mrb[0].mxu0
      %v7513 = vadd.f32 0.0, %v7512
      %v7514 = vpop.f32.mrb[0].mxu0
      %v7515 = vpop.f32.mrb[0].mxu0
      %v7516 = vadd.f32 0.0, %v7515
      %v7517 = vpop.f32.mrb[0].mxu0
      %7518 = vmatprep.mubr.bf16.mxu0 0
      %7519 = vmatmul.mubr.bf16.gmra.mrb[0].mxu0 %v7438
      %v7520 = vpop.f32.mrb[0].mxu0
      %v7521 = vadd.f32 0.0, %v7520
      %v7522 = vpop.f32.mrb[0].mxu0
      %v7523 = vpop.f32.mrb[0].mxu0
      %v7524 = vadd.f32 0.0, %v7523
      %v7525 = vpop.f32.mrb[0].mxu0
      %7526 = vmatprep.mubr.bf16.mxu0 0
      %7527 = vmatmul.mubr.bf16.gmra.mrb[0].mxu0 %v7441
      %v7528 = vpop.f32.mrb[0].mxu0
      %v7529 = vadd.f32 0.0, %v7528
      %v7530 = vpop.f32.mrb[0].mxu0
      %v7531 = vpop.f32.mrb[0].mxu0
      %v7532 = vadd.f32 0.0, %v7531
      %v7533 = vpop.f32.mrb[0].mxu0
      %7534 = vmatprep.mubr.bf16.mxu0 0
      %7535 = vmatmul.mubr.bf16.gmra.mrb[0].mxu0 %v7444
      %v7536 = vpop.f32.mrb[0].mxu0
      %v7537 = vadd.f32 0.0, %v7536
      %v7538 = vpop.f32.mrb[0].mxu0
      %v7539 = vpop.f32.mrb[0].mxu0
      %v7540 = vadd.f32 0.0, %v7539
      %v7541 = vpop.f32.mrb[0].mxu0
      %7542 = vdwg.mxu0
      %v7544 = vsel %vm6899, %v7371, 0
      %v7547 = vsel %vm6899, %v7372, 0
      %v7550 = vsel %vm6899, %v7373, 0
      %v7553 = vsel %vm6899, %v7374, 0
      %v7556 = vsel %vm6899, %v7375, 0
      %v7559 = vsel %vm6899, %v7376, 0
      %v7562 = vsel %vm6899, %v7377, 0
      %v7565 = vsel %vm6899, %v7378, 0
      %7567 = vmatprep.subr.bf16.mxu0 0
      %7568 = vmatpush1.bf16.msra.mxu0 %v7385
      %7569 = vmatprep.subr.bf16.mxu0 0
      %7570 = vmatpush1.bf16.msra.mxu0 %v7386
      %7571 = vmatprep.subr.bf16.mxu0 0
      %7572 = vmatpush1.bf16.msra.mxu0 %v7387
      %7573 = vmatprep.subr.bf16.mxu0 0
      %7574 = vmatpush1.bf16.msra.mxu0 0
      %7575 = vmatprep.subr.bf16.mxu0 0
      %7576 = vmatpush1.bf16.msra.mxu0 0
      %7577 = vmatprep.subr.bf16.mxu0 0
      %7578 = vmatpush1.bf16.msra.mxu0 0
      %7579 = vmatprep.subr.bf16.mxu0 0
      %7580 = vmatpush1.bf16.msra.mxu0 0
      %7581 = vmatprep.subr.bf16.mxu0 0
      %7582 = vmatpush1.bf16.msra.mxu0 0
      %7583 = vmatprep.subr.bf16.mxu0 0
      %7584 = vmatpush1.bf16.msra.mxu0 0
      %7585 = vmatprep.subr.bf16.mxu0 0
      %7586 = vmatpush1.bf16.msra.mxu0 0
      %7587 = vmatprep.subr.bf16.mxu0 0
      %7588 = vmatpush1.bf16.msra.mxu0 0
      %7589 = vmatprep.subr.bf16.mxu0 0
      %7590 = vmatpush1.bf16.msra.mxu0 0
      %7591 = vmatprep.subr.bf16.mxu0 0
      %7592 = vmatpush1.bf16.msra.mxu0 0
      %7593 = vmatprep.subr.bf16.mxu0 0
      %7594 = vmatpush1.bf16.msra.mxu0 0
      %7595 = vmatprep.subr.bf16.mxu0 0
      %7596 = vmatpush1.bf16.msra.mxu0 0
      %7597 = vmatprep.subr.bf16.mxu0 0
      %7598 = vmatpush1.bf16.msra.mxu0 0
      %7599 = vmatprep.mubr.bf16.mxu0 0
      %7600 = vmatmul.mubr.bf16.gmra.mrb[0].mxu0 %v7544
      %v7601 = vpop.f32.mrb[0].mxu0
      %v7602 = vadd.f32 %v7481, %v7601
      %v7603 = vpop.f32.mrb[0].mxu0
      %v7604 = vpop.f32.mrb[0].mxu0
      %v7605 = vadd.f32 %v7484, %v7604
      %v7606 = vpop.f32.mrb[0].mxu0
      %7607 = vmatprep.mubr.bf16.mxu0 0
      %7608 = vmatmul.mubr.bf16.gmra.mrb[0].mxu0 %v7547
      %v7609 = vpop.f32.mrb[0].mxu0
      %v7610 = vadd.f32 %v7489, %v7609
      %v7611 = vpop.f32.mrb[0].mxu0
      %v7612 = vpop.f32.mrb[0].mxu0
      %v7613 = vadd.f32 %v7492, %v7612
      %v7614 = vpop.f32.mrb[0].mxu0
      %7615 = vmatprep.mubr.bf16.mxu0 0
      %7616 = vmatmul.mubr.bf16.gmra.mrb[0].mxu0 %v7550
      %v7617 = vpop.f32.mrb[0].mxu0
      %v7618 = vadd.f32 %v7497, %v7617
      %v7619 = vpop.f32.mrb[0].mxu0
      %v7620 = vpop.f32.mrb[0].mxu0
      %v7621 = vadd.f32 %v7500, %v7620
      %v7622 = vpop.f32.mrb[0].mxu0
      %7623 = vmatprep.mubr.bf16.mxu0 0
      %7624 = vmatmul.mubr.bf16.gmra.mrb[0].mxu0 %v7553
      %v7625 = vpop.f32.mrb[0].mxu0
      %v7626 = vadd.f32 %v7505, %v7625
      %v7627 = vpop.f32.mrb[0].mxu0
      %v7628 = vpop.f32.mrb[0].mxu0
      %v7629 = vadd.f32 %v7508, %v7628
      %v7630 = vpop.f32.mrb[0].mxu0
      %7631 = vmatprep.mubr.bf16.mxu0 0
      %7632 = vmatmul.mubr.bf16.gmra.mrb[0].mxu0 %v7556
      %v7633 = vpop.f32.mrb[0].mxu0
      %v7634 = vadd.f32 %v7513, %v7633
      %v7635 = vpop.f32.mrb[0].mxu0
      %v7636 = vpop.f32.mrb[0].mxu0
      %v7637 = vadd.f32 %v7516, %v7636
      %v7638 = vpop.f32.mrb[0].mxu0
      %7639 = vmatprep.mubr.bf16.mxu0 0
      %7640 = vmatmul.mubr.bf16.gmra.mrb[0].mxu0 %v7559
      %v7641 = vpop.f32.mrb[0].mxu0
      %v7642 = vadd.f32 %v7521, %v7641
      %v7643 = vpop.f32.mrb[0].mxu0
      %v7644 = vpop.f32.mrb[0].mxu0
      %v7645 = vadd.f32 %v7524, %v7644
      %v7646 = vpop.f32.mrb[0].mxu0
      %7647 = vmatprep.mubr.bf16.mxu0 0
      %7648 = vmatmul.mubr.bf16.gmra.mrb[0].mxu0 %v7562
      %v7649 = vpop.f32.mrb[0].mxu0
      %v7650 = vadd.f32 %v7529, %v7649
      %v7651 = vpop.f32.mrb[0].mxu0
      %v7652 = vpop.f32.mrb[0].mxu0
      %v7653 = vadd.f32 %v7532, %v7652
      %v7654 = vpop.f32.mrb[0].mxu0
      %7655 = vmatprep.mubr.bf16.mxu0 0
      %7656 = vmatmul.mubr.bf16.gmra.mrb[0].mxu0 %v7565
      %v7657 = vpop.f32.mrb[0].mxu0
      %v7658 = vadd.f32 %v7537, %v7657
      %v7659 = vpop.f32.mrb[0].mxu0
      %v7660 = vpop.f32.mrb[0].mxu0
      %v7661 = vadd.f32 %v7540, %v7660
      %v7662 = vpop.f32.mrb[0].mxu0
      %7663 = vdwg.mxu0
      %s7664 = scalar_lea.vmem [#allocation9], 160
      %v7665 = vld [vmem:[%s7664] sm:$0xff]
      %v7666 = vld [vmem:[%s7664 + $0x8] sm:$0xff]
      %v7667 = vld [vmem:[%s7664 + $0x10] sm:$0xff]
      %v7668 = vld [vmem:[%s7664 + $0x18] sm:$0xff]
      %v7669 = vld [vmem:[%s7664 + $0x20] sm:$0xff]
      %v7670 = vld [vmem:[%s7664 + $0x28] sm:$0xff]
      %v7671 = vld [vmem:[%s7664 + $0x30] sm:$0xff]
      %v7672 = vld [vmem:[%s7664 + $0x38] sm:$0xff]
      %v7673 = vld [vmem:[%s7664 + $0x40] sm:$0xff]
      %v7674 = vld [vmem:[%s7664 + $0x48] sm:$0xff]
      %v7675 = vld [vmem:[%s7664 + $0x50] sm:$0xff]
      %v7676 = vld [vmem:[%s7664 + $0x58] sm:$0xff]
      %v7677 = vld [vmem:[%s7664 + $0x60] sm:$0xff]
      %v7678 = vld [vmem:[%s7664 + $0x68] sm:$0xff]
      %v7679 = vld [vmem:[%s7664 + $0x70] sm:$0xff]
      %v7680 = vld [vmem:[%s7664 + $0x78] sm:$0xff]
      %v7681 = vpack.c.bf16 %v7666, %v7665
      %v7682 = vpack.c.bf16 %v7668, %v7667
      %v7683 = vpack.c.bf16 %v7670, %v7669
      %v7684 = vpack.c.bf16 %v7672, %v7671
      %v7685 = vpack.c.bf16 %v7674, %v7673
      %v7686 = vpack.c.bf16 %v7676, %v7675
      %v7687 = vpack.c.bf16 %v7678, %v7677
      %v7688 = vpack.c.bf16 %v7680, %v7679
      %v7689 = vld [vmem:[%s7167] sm:$0xff]
      %v7690 = vld [vmem:[%s7167 + $0x8] sm:$0xff]
      %v7691 = vld [vmem:[%s7167 + $0x10] sm:$0xff]
      %v7692 = vld [vmem:[%s7167 + $0x18] sm:$0xff]
      %v7693 = vld [vmem:[%s7167 + $0x20] sm:$0xff]
      %v7694 = vld [vmem:[%s7167 + $0x28] sm:$0xff]
      %v7695 = vpack.c.bf16 %v7690, %v7689
      %v7696 = vpack.c.bf16 %v7692, %v7691
      %v7697 = vpack.c.bf16 %v7694, %v7693
      %v7699 = vsel %vm6899, %v7681, 0
      %v7702 = vsel %vm6899, %v7682, 0
      %v7705 = vsel %vm6899, %v7683, 0
      %v7708 = vsel %vm6899, %v7684, 0
      %v7711 = vsel %vm6899, %v7685, 0
      %v7714 = vsel %vm6899, %v7686, 0
      %v7717 = vsel %vm6899, %v7687, 0
      %v7720 = vsel %vm6899, %v7688, 0
      %7722 = vmatprep.subr.bf16.mxu0 0
      %7723 = vmatpush1.bf16.msra.mxu0 %v7695
      %7724 = vmatprep.subr.bf16.mxu0 0
      %7725 = vmatpush1.bf16.msra.mxu0 %v7696
      %7726 = vmatprep.subr.bf16.mxu0 0
      %7727 = vmatpush1.bf16.msra.mxu0 %v7697
      %7728 = vmatprep.subr.bf16.mxu0 0
      %7729 = vmatpush1.bf16.msra.mxu0 0
      %7730 = vmatprep.subr.bf16.mxu0 0
      %7731 = vmatpush1.bf16.msra.mxu0 0
      %7732 = vmatprep.subr.bf16.mxu0 0
      %7733 = vmatpush1.bf16.msra.mxu0 0
      %7734 = vmatprep.subr.bf16.mxu0 0
      %7735 = vmatpush1.bf16.msra.mxu0 0
      %7736 = vmatprep.subr.bf16.mxu0 0
      %7737 = vmatpush1.bf16.msra.mxu0 0
      %7738 = vmatprep.subr.bf16.mxu0 0
      %7739 = vmatpush1.bf16.msra.mxu0 0
      %7740 = vmatprep.subr.bf16.mxu0 0
      %7741 = vmatpush1.bf16.msra.mxu0 0
      %7742 = vmatprep.subr.bf16.mxu0 0
      %7743 = vmatpush1.bf16.msra.mxu0 0
      %7744 = vmatprep.subr.bf16.mxu0 0
      %7745 = vmatpush1.bf16.msra.mxu0 0
      %7746 = vmatprep.subr.bf16.mxu0 0
      %7747 = vmatpush1.bf16.msra.mxu0 0
      %7748 = vmatprep.subr.bf16.mxu0 0
      %7749 = vmatpush1.bf16.msra.mxu0 0
      %7750 = vmatprep.subr.bf16.mxu0 0
      %7751 = vmatpush1.bf16.msra.mxu0 0
      %7752 = vmatprep.subr.bf16.mxu0 0
      %7753 = vmatpush1.bf16.msra.mxu0 0
      %7754 = vmatprep.mubr.bf16.mxu0 0
      %7755 = vmatmul.mubr.bf16.gmra.mrb[0].mxu0 %v7699
      %v7756 = vpop.f32.mrb[0].mxu0
      %v7757 = vadd.f32 0.0, %v7756
      %v7758 = vpop.f32.mrb[0].mxu0
      %v7759 = vpop.f32.mrb[0].mxu0
      %v7760 = vadd.f32 0.0, %v7759
      %v7761 = vpop.f32.mrb[0].mxu0
      %7762 = vmatprep.mubr.bf16.mxu0 0
      %7763 = vmatmul.mubr.bf16.gmra.mrb[0].mxu0 %v7702
      %v7764 = vpop.f32.mrb[0].mxu0
      %v7765 = vadd.f32 0.0, %v7764
      %v7766 = vpop.f32.mrb[0].mxu0
      %v7767 = vpop.f32.mrb[0].mxu0
      %v7768 = vadd.f32 0.0, %v7767
      %v7769 = vpop.f32.mrb[0].mxu0
      %7770 = vmatprep.mubr.bf16.mxu0 0
      %7771 = vmatmul.mubr.bf16.gmra.mrb[0].mxu0 %v7705
      %v7772 = vpop.f32.mrb[0].mxu0
      %v7773 = vadd.f32 0.0, %v7772
      %v7774 = vpop.f32.mrb[0].mxu0
      %v7775 = vpop.f32.mrb[0].mxu0
      %v7776 = vadd.f32 0.0, %v7775
      %v7777 = vpop.f32.mrb[0].mxu0
      %7778 = vmatprep.mubr.bf16.mxu0 0
      %7779 = vmatmul.mubr.bf16.gmra.mrb[0].mxu0 %v7708
      %v7780 = vpop.f32.mrb[0].mxu0
      %v7781 = vadd.f32 0.0, %v7780
      %v7782 = vpop.f32.mrb[0].mxu0
      %v7783 = vpop.f32.mrb[0].mxu0
      %v7784 = vadd.f32 0.0, %v7783
      %v7785 = vpop.f32.mrb[0].mxu0
      %7786 = vmatprep.mubr.bf16.mxu0 0
      %7787 = vmatmul.mubr.bf16.gmra.mrb[0].mxu0 %v7711
      %v7788 = vpop.f32.mrb[0].mxu0
      %v7789 = vadd.f32 0.0, %v7788
      %v7790 = vpop.f32.mrb[0].mxu0
      %v7791 = vpop.f32.mrb[0].mxu0
      %v7792 = vadd.f32 0.0, %v7791
      %v7793 = vpop.f32.mrb[0].mxu0
      %7794 = vmatprep.mubr.bf16.mxu0 0
      %7795 = vmatmul.mubr.bf16.gmra.mrb[0].mxu0 %v7714
      %v7796 = vpop.f32.mrb[0].mxu0
      %v7797 = vadd.f32 0.0, %v7796
      %v7798 = vpop.f32.mrb[0].mxu0
      %v7799 = vpop.f32.mrb[0].mxu0
      %v7800 = vadd.f32 0.0, %v7799
      %v7801 = vpop.f32.mrb[0].mxu0
      %7802 = vmatprep.mubr.bf16.mxu0 0
      %7803 = vmatmul.mubr.bf16.gmra.mrb[0].mxu0 %v7717
      %v7804 = vpop.f32.mrb[0].mxu0
      %v7805 = vadd.f32 0.0, %v7804
      %v7806 = vpop.f32.mrb[0].mxu0
      %v7807 = vpop.f32.mrb[0].mxu0
      %v7808 = vadd.f32 0.0, %v7807
      %v7809 = vpop.f32.mrb[0].mxu0
      %7810 = vmatprep.mubr.bf16.mxu0 0
      %7811 = vmatmul.mubr.bf16.gmra.mrb[0].mxu0 %v7720
      %v7812 = vpop.f32.mrb[0].mxu0
      %v7813 = vadd.f32 0.0, %v7812
      %v7814 = vpop.f32.mrb[0].mxu0
      %v7815 = vpop.f32.mrb[0].mxu0
      %v7816 = vadd.f32 0.0, %v7815
      %v7817 = vpop.f32.mrb[0].mxu0
      %7818 = vdwg.mxu0
      %v7819 = vadd.f32 %v7602, %v7757
      %v7820 = vadd.f32 %v7605, %v7760
      %v7821 = vadd.f32 %v7610, %v7765
      %v7822 = vadd.f32 %v7613, %v7768
      %v7823 = vadd.f32 %v7618, %v7773
      %v7824 = vadd.f32 %v7621, %v7776
      %v7825 = vadd.f32 %v7626, %v7781
      %v7826 = vadd.f32 %v7629, %v7784
      %v7827 = vadd.f32 %v7634, %v7789
      %v7828 = vadd.f32 %v7637, %v7792
      %v7829 = vadd.f32 %v7642, %v7797
      %v7830 = vadd.f32 %v7645, %v7800
      %v7831 = vadd.f32 %v7650, %v7805
      %v7832 = vadd.f32 %v7653, %v7808
      %v7833 = vadd.f32 %v7658, %v7813
      %v7834 = vadd.f32 %v7661, %v7816
      %v7835 = vld [vmem:[#allocation10] sm:$0x1]
      %v7837 = vlaneseq
      %v7838 = vshrl.u32 %v7837, 7
      %v7839 = vsub.s32 0, %v7838
      %v7840 = vrot.slane %v7835, %v7839
      %v7842 = vadd.f32 %v7819, %v7840
      %v7843 = vadd.f32 %v7820, %v7840
      %v7844 = vadd.f32 %v7821, %v7840
      %v7845 = vadd.f32 %v7822, %v7840
      %v7846 = vadd.f32 %v7823, %v7840
      %v7847 = vadd.f32 %v7824, %v7840
      %v7848 = vadd.f32 %v7825, %v7840
      %v7849 = vadd.f32 %v7826, %v7840
      %v7850 = vadd.f32 %v7827, %v7840
      %v7851 = vadd.f32 %v7828, %v7840
      %v7852 = vadd.f32 %v7829, %v7840
      %v7853 = vadd.f32 %v7830, %v7840
      %v7854 = vadd.f32 %v7831, %v7840
      %v7855 = vadd.f32 %v7832, %v7840
      %v7856 = vadd.f32 %v7833, %v7840
      %v7857 = vadd.f32 %v7834, %v7840
      %s7858 = scalar_lea.vmem %s334, 128
      %7859 = vst.msk [vmem:[%s7858] sm:$0xff] %vm7337, %v7842
      %7860 = vst.msk [vmem:[%s7858 + $0x8] sm:$0xff] %vm7337, %v7843
      %7861 = vst.msk [vmem:[%s7858 + $0x10] sm:$0xff] %vm7337, %v7844
      %7862 = vst.msk [vmem:[%s7858 + $0x18] sm:$0xff] %vm7337, %v7845
      %7863 = vst.msk [vmem:[%s7858 + $0x20] sm:$0xff] %vm7337, %v7846
      %7864 = vst.msk [vmem:[%s7858 + $0x28] sm:$0xff] %vm7337, %v7847
      %7865 = vst.msk [vmem:[%s7858 + $0x30] sm:$0xff] %vm7337, %v7848
      %7866 = vst.msk [vmem:[%s7858 + $0x38] sm:$0xff] %vm7337, %v7849
      %7867 = vst.msk [vmem:[%s7858 + $0x40] sm:$0xff] %vm7337, %v7850
      %7868 = vst.msk [vmem:[%s7858 + $0x48] sm:$0xff] %vm7337, %v7851
      %7869 = vst.msk [vmem:[%s7858 + $0x50] sm:$0xff] %vm7337, %v7852
      %7870 = vst.msk [vmem:[%s7858 + $0x58] sm:$0xff] %vm7337, %v7853
      %7871 = vst.msk [vmem:[%s7858 + $0x60] sm:$0xff] %vm7337, %v7854
      %7872 = vst.msk [vmem:[%s7858 + $0x68] sm:$0xff] %vm7337, %v7855
      %7873 = vst.msk [vmem:[%s7858 + $0x70] sm:$0xff] %vm7337, %v7856
      %7874 = vst.msk [vmem:[%s7858 + $0x78] sm:$0xff] %vm7337, %v7857
      %p7875 = scmp.lt.s32.totalorder %s22, 1
      %s7876 = scalar_select %p7875, %s22, 1
      %s7877 = smul.addr %s7876, 32
      %s7878 = smul.addr %s7877, 8
      %s7879 = scalar_lea.vmem %s9, %s7878
      // Predicated region
      $region57: #{a_get_forward.1} parent=55 // pred_check
        %p7880 = pneg %p234
      $region58: #{a_get_forward.1} parent=55 // pred_check_branch
        %7882 = sbr.rel (%p7880) target = $region60
      $region59: #{a_get_forward.1} parent=55 // pred_region
        _
      $region60: #{a_get_forward.1} parent=55 // pred_fallthru
        _
    $region56: #{a_get_forward.1} parent=5 // pred_fallthru
      _
    %p7883 = scmp.le.s32.totalorder 2, %s17
    // Predicated region
    $region61: #{a_get_forward.1} parent=5 // pred_check
      %p7884 = pneg %p7883
    $region62: #{a_get_forward.1} parent=5 // pred_check_branch
      %7886 = sbr.rel (%p7884) target = $region64
    $region63: #{a_get_forward.1} parent=5 // pred_region
      %s7887 = ssub.s32 %s17, 2
      // Predicated region
      $region65: #{a_get_forward.1} parent=63 // pred_check
        %p7888 = pneg %p240
      $region66: #{a_get_forward.1} parent=63 // pred_check_branch
        %7890 = sbr.rel (%p7888) target = $region68
      $region67: #{a_get_forward.1} parent=63 // pred_region
        %p7891 = scmp.lt.s32.totalorder %s23, 1
        %s7892 = scalar_select %p7891, %s23, 1
        %s7893 = smul.addr %s7892, 32
        %s7894 = smul.addr %s7893, 8
        %s7895 = scalar_lea.vmem %s9, %s7894
      $region68: #{a_get_forward.1} parent=63 // pred_fallthru
        _
    $region64: #{a_get_forward.1} parent=5 // pred_fallthru
      _
  $region6: #{a_get_forward.1} parent=0 // loop_footer
    %s21 = sadd.s32 1, %s17
  $region7: #{a_get_forward.1} parent=0 // loop_footer_branch
    %16 = sbr.rel target = $region3
  $region8: #{a_get_forward.1} parent=0 // loop_exit
    _

</llo_original>
